<compile_context>
chip_gen: v6e
topology: v6e:2x2x1
jax: 0.10.0
libtpu: 0.0.40
codegen_flags: <defaults>
</compile_context>

<pallas_src>
import math
import functools

import jax
import jax.numpy as jnp
from jax import lax
from jax.experimental import pallas as pl
from jax.experimental.pallas import tpu as pltpu


def _pick_q_tile(seq_len: int) -> int:
    for cand in (512, 256, 128):
        if seq_len % cand == 0:
            return cand
    return seq_len


# ----------------------------------------------------------------------------
# Fused encoder-layer kernel: grid = (batch, query-tile)
# ----------------------------------------------------------------------------
def _encoder_layer_kernel(
    x_ref, mask_ref,
    wq_ref, bq_ref, wk_ref, bk_ref, wv_ref, bv_ref, wo_ref, bo_ref,
    ln1_a_ref, ln1_b_ref,
    w1_ref, b1_ref, w2_ref, b2_ref,
    ln2_a_ref, ln2_b_ref,
    o_ref,
    k_scr, v_scr,
    *, num_heads: int, eps: float, tq: int,
):
    qi = pl.program_id(1)
    d_model = x_ref.shape[2]
    d_k = d_model // num_heads
    mm_dtype = k_scr.dtype          # bf16 MXU operands

    def layer_norm(v, a, b):
        # Annotated-Transformer LayerNorm: unbiased (N-1) std, eps added to std
        # (matches the PyTorch reference in the spec; differs from nn.LayerNorm).
        mean = jnp.mean(v, axis=-1, keepdims=True)
        c = v - mean
        var = jnp.sum(c * c, axis=-1, keepdims=True) * (1.0 / (d_model - 1))
        inv = pl.reciprocal(jnp.sqrt(var) + eps, approx=True)   # EUP slot
        return a * c * inv + b

    ln1_a = ln1_a_ref[...]
    ln1_b = ln1_b_ref[...]

    # ---- stage full-sequence K / V once per batch row (first q tile) ----
    @pl.when(qi == 0)
    def _stage_kv():
        x_full = x_ref[0].astype(jnp.float32)                       # (S, D)
        xn = layer_norm(x_full, ln1_a, ln1_b).astype(mm_dtype)
        for h in range(num_heads):
            kh = jnp.dot(xn, wk_ref[h],
                         preferred_element_type=jnp.float32) + bk_ref[h]
            vh = jnp.dot(xn, wv_ref[h],
                         preferred_element_type=jnp.float32) + bv_ref[h]
            k_scr[h] = kh.astype(mm_dtype)
            v_scr[h] = vh.astype(mm_dtype)

    # ---- sublayer 0: pre-norm -> multi-head self-attention -> residual ----
    row0 = pl.multiple_of(qi * tq, tq)
    x_q = x_ref[0, pl.ds(row0, tq), :].astype(jnp.float32)          # (tq, D)
    xn_q = layer_norm(x_q, ln1_a, ln1_b).astype(mm_dtype)

    # Mask bias once per tile (additive; identical to masked_fill unless a row
    # is fully masked, which is degenerate in the reference too).
    mask_bias = jnp.where(mask_ref[0] == 0,
                          jnp.float32(-1e9), jnp.float32(0.0))      # (1, S)
    scale = jnp.float32(1.0 / math.sqrt(d_k))

    attn = jnp.zeros((tq, d_model), jnp.float32)
    for h in range(num_heads):       # static unroll; per-head accumulate keeps live ranges bounded
        qh = jnp.dot(xn_q, wq_ref[h],
                     preferred_element_type=jnp.float32) + bq_ref[h]
        qh = (qh * scale).astype(mm_dtype)                          # (tq, d_k)
        # scores = qh @ k_h^T without materializing a transpose (contract on d_k).
        scores = lax.dot_general(
            qh, k_scr[h], dimension_numbers=(((1,), (1,)), ((), ())),
            preferred_element_type=jnp.float32)                     # (tq, S)
        scores = scores + mask_bias
        m = jnp.max(scores, axis=-1, keepdims=True)
        e = jnp.exp(scores - m)                                     # unnormalized probs
        l = jnp.sum(e, axis=-1, keepdims=True)
        pv = jnp.dot(e.astype(mm_dtype), v_scr[h],
                     preferred_element_type=jnp.float32)            # (tq, d_k)
        head = (pv * pl.reciprocal(l, approx=True)).astype(mm_dtype)
        attn = attn + jnp.dot(head, wo_ref[h],
                              preferred_element_type=jnp.float32)   # (tq, D)

    # TODO(synk): dropout == identity (eval mode).
    y = x_q + attn + bo_ref[...]

    # ---- sublayer 1: pre-norm -> position-wise FFN -> residual ----
    xn2 = layer_norm(y, ln2_a_ref[...], ln2_b_ref[...]).astype(mm_dtype)
    h1 = jnp.dot(xn2, w1_ref[...],
                 preferred_element_type=jnp.float32) + b1_ref[...]
    h1 = jnp.maximum(h1, 0.0).astype(mm_dtype)
    ff = jnp.dot(h1, w2_ref[...],
                 preferred_element_type=jnp.float32) + b2_ref[...]
    o_ref[0] = (y + ff).astype(o_ref.dtype)


# ----------------------------------------------------------------------------
# Wrapper: pallas_call with grid over (batch, query tiles)
# ----------------------------------------------------------------------------
def encoder_layer_forward(x, mask, params, *, num_heads: int, eps: float = 1e-6):
    """x: (B, S, D) float32;  mask: (B, 1, S) int32 (0 = masked)."""
    B, S, D = x.shape
    F_ff = params["w1"].shape[1]
    assert D % num_heads == 0
    d_k = D // num_heads
    tq = _pick_q_tile(S)
    num_q_tiles = S // tq

    mm_dtype = jnp.bfloat16
    f32 = lambda a: a.astype(jnp.float32)

    # Pre-split per-head projection weights/biases on the host so the kernel
    # never slices the lane (feature) axis.
    def per_head_w(w):  # (D, D) -> (H, D, d_k)
        return jnp.transpose(w.reshape(D, num_heads, d_k), (1, 0, 2)).astype(mm_dtype)

    def per_head_b(b):  # (1, D) -> (H, 1, d_k)
        return f32(b).reshape(num_heads, 1, d_k)

    wq3, wk3, wv3 = (per_head_w(params[n]) for n in ("wq", "wk", "wv"))
    bq3, bk3, bv3 = (per_head_b(params[n]) for n in ("bq", "bk", "bv"))
    wo3 = params["wo"].reshape(num_heads, d_k, D).astype(mm_dtype)
    w1 = params["w1"].astype(mm_dtype)
    w2 = params["w2"].astype(mm_dtype)
    bo, b1, b2 = f32(params["bo"]), f32(params["b1"]), f32(params["b2"])
    ln1_a, ln1_b = f32(params["ln1_a"]), f32(params["ln1_b"])
    ln2_a, ln2_b = f32(params["ln2_a"]), f32(params["ln2_b"])

    operands = (x, mask, wq3, bq3, wk3, bk3, wv3, bv3, wo3, bo,
                ln1_a, ln1_b, w1, b1, w2, b2, ln2_a, ln2_b)

    # --- explicit VMEM budget & cost estimate ---------------------------------
    nbytes = lambda a: int(a.size) * a.dtype.itemsize
    weight_bytes = sum(nbytes(a) for a in operands[2:])
    act_block_bytes = 2 * (S * D * 4 + S * 4 + tq * D * 4)          # x, mask, out (x2 buffers)
    scratch_bytes = 2 * num_heads * S * d_k * 2                     # bf16 K/V scratch
    interm_bytes = 4 * (4 * tq * S + 3 * tq * F_ff + 8 * tq * D)    # rough live-value bound
    vmem_limit = int(min(64 << 20,
                         max(32 << 20,
                             1.5 * (2 * weight_bytes + act_block_bytes
                                    + scratch_bytes + interm_bytes))))

    flops = 2 * B * S * (4 * D * D + 2 * S * D + 2 * D * F_ff)
    cost = pl.CostEstimate(
        flops=flops,
        transcendentals=B * num_heads * S * S,
        bytes_accessed=(2 * B * S * D + B * S) * 4 + weight_bytes)

    kernel = functools.partial(_encoder_layer_kernel,
                               num_heads=num_heads, eps=eps, tq=tq)

    def build(weight_pipeline_mode):
        def rep(shape):  # small weight: same block every grid step
            return pl.BlockSpec(shape, lambda b, q: (0,) * len(shape),
                                pipeline_mode=weight_pipeline_mode)

        in_specs = [
            pl.BlockSpec((1, S, D), lambda b, q: (b, 0, 0)),   # x (full seq; constant over q tiles)
            pl.BlockSpec((1, 1, S), lambda b, q: (b, 0, 0)),   # mask
            rep((num_heads, D, d_k)), rep((num_heads, 1, d_k)),  # wq, bq (per-head)
            rep((num_heads, D, d_k)), rep((num_heads, 1, d_k)),  # wk, bk
            rep((num_heads, D, d_k)), rep((num_heads, 1, d_k)),  # wv, bv
            rep((num_heads, d_k, D)), rep((1, D)),               # wo (per-head), bo
            rep((1, D)), rep((1, D)),                            # layernorm1 a_2, b_2
            rep((D, F_ff)), rep((1, F_ff)),                      # ffn w1, b1
            rep((F_ff, D)), rep((1, D)),                         # ffn w2, b2
            rep((1, D)), rep((1, D)),                            # layernorm2 a_2, b_2
        ]
        return pl.pallas_call(
            kernel,
            out_shape=jax.ShapeDtypeStruct((B, S, D), x.dtype),
            grid=(B, num_q_tiles),
            in_specs=in_specs,
            out_specs=pl.BlockSpec((1, tq, D), lambda b, q: (b, q, 0)),
            scratch_shapes=[
                pltpu.VMEM((num_heads, S, d_k), mm_dtype),   # K, staged at q-tile 0
                pltpu.VMEM((num_heads, S, d_k), mm_dtype),   # V
            ],
            compiler_params=pltpu.CompilerParams(
                dimension_semantics=("parallel", "arbitrary"),
                vmem_limit_bytes=vmem_limit),
            cost_estimate=cost,
        )

    try:
        # Weights have a constant index_map; single-buffer them so only one
        # copy of the weight set occupies scoped VMEM.
        return build(pl.Buffered(1))(*operands)
    except Exception:
        # Fallback if this jax build rejects pipeline_mode on the top-level
        # pallas_call pipeline: default (double) buffering, same semantics.
        return build(None)(*operands)


# ----------------------------------------------------------------------------
# Pure-JAX reference (mirrors the PyTorch forward, eval mode, f32 HIGHEST)
# ----------------------------------------------------------------------------
def encoder_layer_ref(x, mask, params, *, num_heads: int, eps: float = 1e-6):
    hp = jax.lax.Precision.HIGHEST
    mm = functools.partial(jnp.matmul, precision=hp)
    B, S, d_model = x.shape
    d_k = d_model // num_heads

    def layer_norm(v, a, b):
        mean = v.mean(-1, keepdims=True)
        std = jnp.sqrt(((v - mean) ** 2).sum(-1, keepdims=True) / (d_model - 1))
        return a * (v - mean) / (std + eps) + b

    xn = layer_norm(x, params["ln1_a"], params["ln1_b"])
    q = mm(xn, params["wq"]) + params["bq"]
    k = mm(xn, params["wk"]) + params["bk"]
    v = mm(xn, params["wv"]) + params["bv"]

    def split(t):
        return t.reshape(B, S, num_heads, d_k).transpose(0, 2, 1, 3)

    qh, kh, vh = split(q), split(k), split(v)
    scores = jnp.einsum("bhqd,bhkd->bhqk", qh, kh, precision=hp) / math.sqrt(d_k)
    scores = jnp.where(mask[:, None, :, :] == 0, -1e9, scores)
    p = jax.nn.softmax(scores, axis=-1)
    attn = jnp.einsum("bhqk,bhkd->bhqd", p, vh, precision=hp)
    attn = attn.transpose(0, 2, 1, 3).reshape(B, S, d_model)
    attn = mm(attn, params["wo"]) + params["bo"]
    x = x + attn

    xn2 = layer_norm(x, params["ln2_a"], params["ln2_b"])
    ff = mm(jnp.maximum(mm(xn2, params["w1"]) + params["b1"], 0.0),
            params["w2"]) + params["b2"]
    return x + ff


# ----------------------------------------------------------------------------
# Demo / self-check
# ----------------------------------------------------------------------------
if __name__ == "__main__":
    B, S, D, H, F_ff = 2, 8, 32, 4, 64

    key = jax.random.PRNGKey(0)
    ks = jax.random.split(key, 18)
    sD = 1.0 / math.sqrt(D)
    sF = 1.0 / math.sqrt(F_ff)

    params = {
        "wq": jax.random.normal(ks[0], (D, D), jnp.float32) * sD,
        "bq": jax.random.normal(ks[1], (1, D), jnp.float32) * 0.1,
        "wk": jax.random.normal(ks[2], (D, D), jnp.float32) * sD,
        "bk": jax.random.normal(ks[3], (1, D), jnp.float32) * 0.1,
        "wv": jax.random.normal(ks[4], (D, D), jnp.float32) * sD,
        "bv": jax.random.normal(ks[5], (1, D), jnp.float32) * 0.1,
        "wo": jax.random.normal(ks[6], (D, D), jnp.float32) * sD,
        "bo": jax.random.normal(ks[7], (1, D), jnp.float32) * 0.1,
        "w1": jax.random.normal(ks[8], (D, F_ff), jnp.float32) * sD,
        "b1": jax.random.normal(ks[9], (1, F_ff), jnp.float32) * 0.1,
        "w2": jax.random.normal(ks[10], (F_ff, D), jnp.float32) * sF,
        "b2": jax.random.normal(ks[11], (1, D), jnp.float32) * 0.1,
        "ln1_a": 1.0 + 0.1 * jax.random.normal(ks[12], (1, D), jnp.float32),
        "ln1_b": 0.1 * jax.random.normal(ks[13], (1, D), jnp.float32),
        "ln2_a": 1.0 + 0.1 * jax.random.normal(ks[14], (1, D), jnp.float32),
        "ln2_b": 0.1 * jax.random.normal(ks[15], (1, D), jnp.float32),
    }

    x = jax.random.normal(ks[16], (B, S, D), dtype=jnp.float32)
    mask = jnp.ones((B, 1, S), dtype=jnp.int32)
    mask = mask.at[1, 0, 6:].set(0)       # pad out the tail of the second sequence

    out = encoder_layer_forward(x, mask, params, num_heads=H)
    out = jax.block_until_ready(out)

    ref = encoder_layer_ref(x, mask, params, num_heads=H)

    assert out.shape == (B, S, D)
    assert jnp.all(jnp.isfinite(out)), "non-finite values in kernel output"
    # bf16 MXU operands + approx reciprocals vs. a HIGHEST-precision f32
    # reference -> loosened tolerance (per review).
    max_err = float(jnp.max(jnp.abs(out - ref)))
    assert jnp.allclose(out, ref, atol=1e-1, rtol=5e-2), (
        f"mismatch vs reference: max abs err = {max_err}"
    )

    print("KERNEL_OK")
</pallas_src>

<mosaic_0001>
module attributes {stable_mosaic.version = 11 : i64} {
  func.func @_encoder_layer_kernel(%arg0: i32, %arg1: i32, %arg2: memref<1x8x32xf32, #tpu.memory_space<vmem>>, %arg3: memref<1x1x8xi32, #tpu.memory_space<vmem>>, %arg4: memref<4x32x8xbf16, #tpu.memory_space<vmem>>, %arg5: memref<4x1x8xf32, #tpu.memory_space<vmem>>, %arg6: memref<4x32x8xbf16, #tpu.memory_space<vmem>>, %arg7: memref<4x1x8xf32, #tpu.memory_space<vmem>>, %arg8: memref<4x32x8xbf16, #tpu.memory_space<vmem>>, %arg9: memref<4x1x8xf32, #tpu.memory_space<vmem>>, %arg10: memref<4x8x32xbf16, #tpu.memory_space<vmem>>, %arg11: memref<1x32xf32, #tpu.memory_space<vmem>>, %arg12: memref<1x32xf32, #tpu.memory_space<vmem>>, %arg13: memref<1x32xf32, #tpu.memory_space<vmem>>, %arg14: memref<32x64xbf16, #tpu.memory_space<vmem>>, %arg15: memref<1x64xf32, #tpu.memory_space<vmem>>, %arg16: memref<64x32xbf16, #tpu.memory_space<vmem>>, %arg17: memref<1x32xf32, #tpu.memory_space<vmem>>, %arg18: memref<1x32xf32, #tpu.memory_space<vmem>>, %arg19: memref<1x32xf32, #tpu.memory_space<vmem>>, %arg20: memref<1x8x32xf32, #tpu.memory_space<vmem>>, %arg21: memref<4x8x8xbf16, #tpu.memory_space<vmem>>, %arg22: memref<4x8x8xbf16, #tpu.memory_space<vmem>>) attributes {dimension_semantics = [#tpu.dimension_semantics<parallel>, #tpu.dimension_semantics<arbitrary>], iteration_bounds = array<i64: 2, 1>, scalar_prefetch = 0 : i64, scratch_operands = 2 : i64, tpu.core_type = #tpu.core_type<tc>, window_params = [{transform_indices = @transform_0, window_bounds = array<i64: 1, 8, 32>}, {transform_indices = @transform_1, window_bounds = array<i64: 1, 1, 8>}, {pipeline_mode = #tpu.pipeline_mode<synchronous>, transform_indices = @transform_2, window_bounds = array<i64: 4, 32, 8>}, {pipeline_mode = #tpu.pipeline_mode<synchronous>, transform_indices = @transform_3, window_bounds = array<i64: 4, 1, 8>}, {pipeline_mode = #tpu.pipeline_mode<synchronous>, transform_indices = @transform_4, window_bounds = array<i64: 4, 32, 8>}, {pipeline_mode = #tpu.pipeline_mode<synchronous>, transform_indices = @transform_5, window_bounds = array<i64: 4, 1, 8>}, {pipeline_mode = #tpu.pipeline_mode<synchronous>, transform_indices = @transform_6, window_bounds = array<i64: 4, 32, 8>}, {pipeline_mode = #tpu.pipeline_mode<synchronous>, transform_indices = @transform_7, window_bounds = array<i64: 4, 1, 8>}, {pipeline_mode = #tpu.pipeline_mode<synchronous>, transform_indices = @transform_8, window_bounds = array<i64: 4, 8, 32>}, {pipeline_mode = #tpu.pipeline_mode<synchronous>, transform_indices = @transform_9, window_bounds = array<i64: 1, 32>}, {pipeline_mode = #tpu.pipeline_mode<synchronous>, transform_indices = @transform_10, window_bounds = array<i64: 1, 32>}, {pipeline_mode = #tpu.pipeline_mode<synchronous>, transform_indices = @transform_11, window_bounds = array<i64: 1, 32>}, {pipeline_mode = #tpu.pipeline_mode<synchronous>, transform_indices = @transform_12, window_bounds = array<i64: 32, 64>}, {pipeline_mode = #tpu.pipeline_mode<synchronous>, transform_indices = @transform_13, window_bounds = array<i64: 1, 64>}, {pipeline_mode = #tpu.pipeline_mode<synchronous>, transform_indices = @transform_14, window_bounds = array<i64: 64, 32>}, {pipeline_mode = #tpu.pipeline_mode<synchronous>, transform_indices = @transform_15, window_bounds = array<i64: 1, 32>}, {pipeline_mode = #tpu.pipeline_mode<synchronous>, transform_indices = @transform_16, window_bounds = array<i64: 1, 32>}, {pipeline_mode = #tpu.pipeline_mode<synchronous>, transform_indices = @transform_17, window_bounds = array<i64: 1, 32>}, {transform_indices = @transform_18, window_bounds = array<i64: 1, 8, 32>}]} {
    %c0 = arith.constant 0 : index
    %c0_0 = arith.constant 0 : index
    %0 = vector.load %arg12[%c0, %c0_0] : memref<1x32xf32, #tpu.memory_space<vmem>>, vector<1x32xf32>
    %c0_1 = arith.constant 0 : index
    %c0_2 = arith.constant 0 : index
    %1 = vector.load %arg13[%c0_1, %c0_2] : memref<1x32xf32, #tpu.memory_space<vmem>>, vector<1x32xf32>
    %c0_i32 = arith.constant 0 : i32
    %2 = arith.cmpi eq, %arg1, %c0_i32 : i32
    %3 = arith.extui %2 : i1 to i32
    %c0_i32_3 = arith.constant 0 : i32
    %4 = arith.cmpi ne, %3, %c0_i32_3 : i32
    scf.if %4 {
      %c0_127 = arith.constant 0 : index
      %c0_128 = arith.constant 0 : index
      %c0_129 = arith.constant 0 : index
      %221 = vector.load %arg2[%c0_127, %c0_128, %c0_129] : memref<1x8x32xf32, #tpu.memory_space<vmem>>, vector<1x8x32xf32>
      %222 = vector.shape_cast %221 : vector<1x8x32xf32> to vector<8x32xf32>
      %cst_130 = arith.constant dense<0.000000e+00> : vector<8xf32>
      %223 = vector.multi_reduction <add>, %222, %cst_130 [1] : vector<8x32xf32> to vector<8xf32>
      %224 = vector.shape_cast %223 : vector<8xf32> to vector<8x1xf32>
      %cst_131 = arith.constant 3.200000e+01 : f32
      %225 = vector.broadcast %cst_131 : f32 to vector<8x1xf32>
      %226 = arith.divf %224, %225 : vector<8x1xf32>
      %227 = vector.broadcast %226 : vector<8x1xf32> to vector<8x32xf32>
      %228 = arith.subf %222, %227 : vector<8x32xf32>
      %229 = arith.mulf %228, %228 : vector<8x32xf32>
      %cst_132 = arith.constant dense<0.000000e+00> : vector<8xf32>
      %230 = vector.multi_reduction <add>, %229, %cst_132 [1] : vector<8x32xf32> to vector<8xf32>
      %231 = vector.shape_cast %230 : vector<8xf32> to vector<8x1xf32>
      %cst_133 = arith.constant 0.0322580636 : f32
      %232 = vector.broadcast %cst_133 : f32 to vector<8x1xf32>
      %233 = arith.mulf %231, %232 : vector<8x1xf32>
      %234 = math.sqrt %233 : vector<8x1xf32>
      %cst_134 = arith.constant 9.99999997E-7 : f32
      %235 = vector.broadcast %cst_134 : f32 to vector<8x1xf32>
      %236 = arith.addf %234, %235 : vector<8x1xf32>
      %237 = tpu.reciprocal %236 {approx = true} : vector<8x1xf32> -> vector<8x1xf32>
      %238 = vector.broadcast %0 : vector<1x32xf32> to vector<8x32xf32>
      %239 = arith.mulf %238, %228 : vector<8x32xf32>
      %240 = vector.broadcast %237 : vector<8x1xf32> to vector<8x32xf32>
      %241 = arith.mulf %239, %240 : vector<8x32xf32>
      %242 = vector.broadcast %1 : vector<1x32xf32> to vector<8x32xf32>
      %243 = arith.addf %241, %242 : vector<8x32xf32>
      %244 = arith.truncf %243 : vector<8x32xf32> to vector<8x32xbf16>
      %c0_135 = arith.constant 0 : index
      %c0_136 = arith.constant 0 : index
      %c0_137 = arith.constant 0 : index
      %245 = vector.load %arg6[%c0_135, %c0_136, %c0_137] : memref<4x32x8xbf16, #tpu.memory_space<vmem>>, vector<1x32x8xbf16>
      %246 = vector.shape_cast %245 : vector<1x32x8xbf16> to vector<32x8xbf16>
      %cst_138 = arith.constant dense<0.000000e+00> : vector<8x8xf32>
      %247 = tpu.matmul %244, %246, %cst_138 {dimension_numbers = #tpu.dot_dimension_numbers<[1], [0], [0], [1], [0, 0, 1, 1], [], []>} : vector<8x32xbf16>, vector<32x8xbf16>, vector<8x8xf32> -> vector<8x8xf32>
      %c0_139 = arith.constant 0 : index
      %c0_140 = arith.constant 0 : index
      %c0_141 = arith.constant 0 : index
      %248 = vector.load %arg7[%c0_139, %c0_140, %c0_141] : memref<4x1x8xf32, #tpu.memory_space<vmem>>, vector<1x1x8xf32>
      %249 = vector.shape_cast %248 : vector<1x1x8xf32> to vector<1x8xf32>
      %250 = vector.broadcast %249 : vector<1x8xf32> to vector<8x8xf32>
      %251 = arith.addf %247, %250 : vector<8x8xf32>
      %c0_142 = arith.constant 0 : index
      %c0_143 = arith.constant 0 : index
      %c0_144 = arith.constant 0 : index
      %252 = vector.load %arg8[%c0_142, %c0_143, %c0_144] : memref<4x32x8xbf16, #tpu.memory_space<vmem>>, vector<1x32x8xbf16>
      %253 = vector.shape_cast %252 : vector<1x32x8xbf16> to vector<32x8xbf16>
      %cst_145 = arith.constant dense<0.000000e+00> : vector<8x8xf32>
      %254 = tpu.matmul %244, %253, %cst_145 {dimension_numbers = #tpu.dot_dimension_numbers<[1], [0], [0], [1], [0, 0, 1, 1], [], []>} : vector<8x32xbf16>, vector<32x8xbf16>, vector<8x8xf32> -> vector<8x8xf32>
      %c0_146 = arith.constant 0 : index
      %c0_147 = arith.constant 0 : index
      %c0_148 = arith.constant 0 : index
      %255 = vector.load %arg9[%c0_146, %c0_147, %c0_148] : memref<4x1x8xf32, #tpu.memory_space<vmem>>, vector<1x1x8xf32>
      %256 = vector.shape_cast %255 : vector<1x1x8xf32> to vector<1x8xf32>
      %257 = vector.broadcast %256 : vector<1x8xf32> to vector<8x8xf32>
      %258 = arith.addf %254, %257 : vector<8x8xf32>
      %259 = arith.truncf %251 : vector<8x8xf32> to vector<8x8xbf16>
      %c0_149 = arith.constant 0 : index
      %c0_150 = arith.constant 0 : index
      %c0_151 = arith.constant 0 : index
      %260 = vector.load %arg21[%c0_149, %c0_150, %c0_151] : memref<4x8x8xbf16, #tpu.memory_space<vmem>>, vector<1x8x8xbf16>
      %261 = vector.shape_cast %260 : vector<1x8x8xbf16> to vector<8x8xbf16>
      %262 = vector.shape_cast %259 : vector<8x8xbf16> to vector<1x8x8xbf16>
      tpu.vector_store %arg21[%c0_149, %c0_150, %c0_151], %262 {strides = array<i32>} : memref<4x8x8xbf16, #tpu.memory_space<vmem>>, vector<1x8x8xbf16>,
      %263 = arith.truncf %258 : vector<8x8xf32> to vector<8x8xbf16>
      %c0_152 = arith.constant 0 : index
      %c0_153 = arith.constant 0 : index
      %c0_154 = arith.constant 0 : index
      %264 = vector.load %arg22[%c0_152, %c0_153, %c0_154] : memref<4x8x8xbf16, #tpu.memory_space<vmem>>, vector<1x8x8xbf16>
      %265 = vector.shape_cast %264 : vector<1x8x8xbf16> to vector<8x8xbf16>
      %266 = vector.shape_cast %263 : vector<8x8xbf16> to vector<1x8x8xbf16>
      tpu.vector_store %arg22[%c0_152, %c0_153, %c0_154], %266 {strides = array<i32>} : memref<4x8x8xbf16, #tpu.memory_space<vmem>>, vector<1x8x8xbf16>,
      %c1_155 = arith.constant 1 : index
      %c0_156 = arith.constant 0 : index
      %c0_157 = arith.constant 0 : index
      %267 = vector.load %arg6[%c1_155, %c0_156, %c0_157] : memref<4x32x8xbf16, #tpu.memory_space<vmem>>, vector<1x32x8xbf16>
      %268 = vector.shape_cast %267 : vector<1x32x8xbf16> to vector<32x8xbf16>
      %cst_158 = arith.constant dense<0.000000e+00> : vector<8x8xf32>
      %269 = tpu.matmul %244, %268, %cst_158 {dimension_numbers = #tpu.dot_dimension_numbers<[1], [0], [0], [1], [0, 0, 1, 1], [], []>} : vector<8x32xbf16>, vector<32x8xbf16>, vector<8x8xf32> -> vector<8x8xf32>
      %c1_159 = arith.constant 1 : index
      %c0_160 = arith.constant 0 : index
      %c0_161 = arith.constant 0 : index
      %270 = vector.load %arg7[%c1_159, %c0_160, %c0_161] : memref<4x1x8xf32, #tpu.memory_space<vmem>>, vector<1x1x8xf32>
      %271 = vector.shape_cast %270 : vector<1x1x8xf32> to vector<1x8xf32>
      %272 = vector.broadcast %271 : vector<1x8xf32> to vector<8x8xf32>
      %273 = arith.addf %269, %272 : vector<8x8xf32>
      %c1_162 = arith.constant 1 : index
      %c0_163 = arith.constant 0 : index
      %c0_164 = arith.constant 0 : index
      %274 = vector.load %arg8[%c1_162, %c0_163, %c0_164] : memref<4x32x8xbf16, #tpu.memory_space<vmem>>, vector<1x32x8xbf16>
      %275 = vector.shape_cast %274 : vector<1x32x8xbf16> to vector<32x8xbf16>
      %cst_165 = arith.constant dense<0.000000e+00> : vector<8x8xf32>
      %276 = tpu.matmul %244, %275, %cst_165 {dimension_numbers = #tpu.dot_dimension_numbers<[1], [0], [0], [1], [0, 0, 1, 1], [], []>} : vector<8x32xbf16>, vector<32x8xbf16>, vector<8x8xf32> -> vector<8x8xf32>
      %c1_166 = arith.constant 1 : index
      %c0_167 = arith.constant 0 : index
      %c0_168 = arith.constant 0 : index
      %277 = vector.load %arg9[%c1_166, %c0_167, %c0_168] : memref<4x1x8xf32, #tpu.memory_space<vmem>>, vector<1x1x8xf32>
      %278 = vector.shape_cast %277 : vector<1x1x8xf32> to vector<1x8xf32>
      %279 = vector.broadcast %278 : vector<1x8xf32> to vector<8x8xf32>
      %280 = arith.addf %276, %279 : vector<8x8xf32>
      %281 = arith.truncf %273 : vector<8x8xf32> to vector<8x8xbf16>
      %c1_169 = arith.constant 1 : index
      %c0_170 = arith.constant 0 : index
      %c0_171 = arith.constant 0 : index
      %282 = vector.load %arg21[%c1_169, %c0_170, %c0_171] : memref<4x8x8xbf16, #tpu.memory_space<vmem>>, vector<1x8x8xbf16>
      %283 = vector.shape_cast %282 : vector<1x8x8xbf16> to vector<8x8xbf16>
      %284 = vector.shape_cast %281 : vector<8x8xbf16> to vector<1x8x8xbf16>
      tpu.vector_store %arg21[%c1_169, %c0_170, %c0_171], %284 {strides = array<i32>} : memref<4x8x8xbf16, #tpu.memory_space<vmem>>, vector<1x8x8xbf16>,
      %285 = arith.truncf %280 : vector<8x8xf32> to vector<8x8xbf16>
      %c1_172 = arith.constant 1 : index
      %c0_173 = arith.constant 0 : index
      %c0_174 = arith.constant 0 : index
      %286 = vector.load %arg22[%c1_172, %c0_173, %c0_174] : memref<4x8x8xbf16, #tpu.memory_space<vmem>>, vector<1x8x8xbf16>
      %287 = vector.shape_cast %286 : vector<1x8x8xbf16> to vector<8x8xbf16>
      %288 = vector.shape_cast %285 : vector<8x8xbf16> to vector<1x8x8xbf16>
      tpu.vector_store %arg22[%c1_172, %c0_173, %c0_174], %288 {strides = array<i32>} : memref<4x8x8xbf16, #tpu.memory_space<vmem>>, vector<1x8x8xbf16>,
      %c2_175 = arith.constant 2 : index
      %c0_176 = arith.constant 0 : index
      %c0_177 = arith.constant 0 : index
      %289 = vector.load %arg6[%c2_175, %c0_176, %c0_177] : memref<4x32x8xbf16, #tpu.memory_space<vmem>>, vector<1x32x8xbf16>
      %290 = vector.shape_cast %289 : vector<1x32x8xbf16> to vector<32x8xbf16>
      %cst_178 = arith.constant dense<0.000000e+00> : vector<8x8xf32>
      %291 = tpu.matmul %244, %290, %cst_178 {dimension_numbers = #tpu.dot_dimension_numbers<[1], [0], [0], [1], [0, 0, 1, 1], [], []>} : vector<8x32xbf16>, vector<32x8xbf16>, vector<8x8xf32> -> vector<8x8xf32>
      %c2_179 = arith.constant 2 : index
      %c0_180 = arith.constant 0 : index
      %c0_181 = arith.constant 0 : index
      %292 = vector.load %arg7[%c2_179, %c0_180, %c0_181] : memref<4x1x8xf32, #tpu.memory_space<vmem>>, vector<1x1x8xf32>
      %293 = vector.shape_cast %292 : vector<1x1x8xf32> to vector<1x8xf32>
      %294 = vector.broadcast %293 : vector<1x8xf32> to vector<8x8xf32>
      %295 = arith.addf %291, %294 : vector<8x8xf32>
      %c2_182 = arith.constant 2 : index
      %c0_183 = arith.constant 0 : index
      %c0_184 = arith.constant 0 : index
      %296 = vector.load %arg8[%c2_182, %c0_183, %c0_184] : memref<4x32x8xbf16, #tpu.memory_space<vmem>>, vector<1x32x8xbf16>
      %297 = vector.shape_cast %296 : vector<1x32x8xbf16> to vector<32x8xbf16>
      %cst_185 = arith.constant dense<0.000000e+00> : vector<8x8xf32>
      %298 = tpu.matmul %244, %297, %cst_185 {dimension_numbers = #tpu.dot_dimension_numbers<[1], [0], [0], [1], [0, 0, 1, 1], [], []>} : vector<8x32xbf16>, vector<32x8xbf16>, vector<8x8xf32> -> vector<8x8xf32>
      %c2_186 = arith.constant 2 : index
      %c0_187 = arith.constant 0 : index
      %c0_188 = arith.constant 0 : index
      %299 = vector.load %arg9[%c2_186, %c0_187, %c0_188] : memref<4x1x8xf32, #tpu.memory_space<vmem>>, vector<1x1x8xf32>
      %300 = vector.shape_cast %299 : vector<1x1x8xf32> to vector<1x8xf32>
      %301 = vector.broadcast %300 : vector<1x8xf32> to vector<8x8xf32>
      %302 = arith.addf %298, %301 : vector<8x8xf32>
      %303 = arith.truncf %295 : vector<8x8xf32> to vector<8x8xbf16>
      %c2_189 = arith.constant 2 : index
      %c0_190 = arith.constant 0 : index
      %c0_191 = arith.constant 0 : index
      %304 = vector.load %arg21[%c2_189, %c0_190, %c0_191] : memref<4x8x8xbf16, #tpu.memory_space<vmem>>, vector<1x8x8xbf16>
      %305 = vector.shape_cast %304 : vector<1x8x8xbf16> to vector<8x8xbf16>
      %306 = vector.shape_cast %303 : vector<8x8xbf16> to vector<1x8x8xbf16>
      tpu.vector_store %arg21[%c2_189, %c0_190, %c0_191], %306 {strides = array<i32>} : memref<4x8x8xbf16, #tpu.memory_space<vmem>>, vector<1x8x8xbf16>,
      %307 = arith.truncf %302 : vector<8x8xf32> to vector<8x8xbf16>
      %c2_192 = arith.constant 2 : index
      %c0_193 = arith.constant 0 : index
      %c0_194 = arith.constant 0 : index
      %308 = vector.load %arg22[%c2_192, %c0_193, %c0_194] : memref<4x8x8xbf16, #tpu.memory_space<vmem>>, vector<1x8x8xbf16>
      %309 = vector.shape_cast %308 : vector<1x8x8xbf16> to vector<8x8xbf16>
      %310 = vector.shape_cast %307 : vector<8x8xbf16> to vector<1x8x8xbf16>
      tpu.vector_store %arg22[%c2_192, %c0_193, %c0_194], %310 {strides = array<i32>} : memref<4x8x8xbf16, #tpu.memory_space<vmem>>, vector<1x8x8xbf16>,
      %c3_195 = arith.constant 3 : index
      %c0_196 = arith.constant 0 : index
      %c0_197 = arith.constant 0 : index
      %311 = vector.load %arg6[%c3_195, %c0_196, %c0_197] : memref<4x32x8xbf16, #tpu.memory_space<vmem>>, vector<1x32x8xbf16>
      %312 = vector.shape_cast %311 : vector<1x32x8xbf16> to vector<32x8xbf16>
      %cst_198 = arith.constant dense<0.000000e+00> : vector<8x8xf32>
      %313 = tpu.matmul %244, %312, %cst_198 {dimension_numbers = #tpu.dot_dimension_numbers<[1], [0], [0], [1], [0, 0, 1, 1], [], []>} : vector<8x32xbf16>, vector<32x8xbf16>, vector<8x8xf32> -> vector<8x8xf32>
      %c3_199 = arith.constant 3 : index
      %c0_200 = arith.constant 0 : index
      %c0_201 = arith.constant 0 : index
      %314 = vector.load %arg7[%c3_199, %c0_200, %c0_201] : memref<4x1x8xf32, #tpu.memory_space<vmem>>, vector<1x1x8xf32>
      %315 = vector.shape_cast %314 : vector<1x1x8xf32> to vector<1x8xf32>
      %316 = vector.broadcast %315 : vector<1x8xf32> to vector<8x8xf32>
      %317 = arith.addf %313, %316 : vector<8x8xf32>
      %c3_202 = arith.constant 3 : index
      %c0_203 = arith.constant 0 : index
      %c0_204 = arith.constant 0 : index
      %318 = vector.load %arg8[%c3_202, %c0_203, %c0_204] : memref<4x32x8xbf16, #tpu.memory_space<vmem>>, vector<1x32x8xbf16>
      %319 = vector.shape_cast %318 : vector<1x32x8xbf16> to vector<32x8xbf16>
      %cst_205 = arith.constant dense<0.000000e+00> : vector<8x8xf32>
      %320 = tpu.matmul %244, %319, %cst_205 {dimension_numbers = #tpu.dot_dimension_numbers<[1], [0], [0], [1], [0, 0, 1, 1], [], []>} : vector<8x32xbf16>, vector<32x8xbf16>, vector<8x8xf32> -> vector<8x8xf32>
      %c3_206 = arith.constant 3 : index
      %c0_207 = arith.constant 0 : index
      %c0_208 = arith.constant 0 : index
      %321 = vector.load %arg9[%c3_206, %c0_207, %c0_208] : memref<4x1x8xf32, #tpu.memory_space<vmem>>, vector<1x1x8xf32>
      %322 = vector.shape_cast %321 : vector<1x1x8xf32> to vector<1x8xf32>
      %323 = vector.broadcast %322 : vector<1x8xf32> to vector<8x8xf32>
      %324 = arith.addf %320, %323 : vector<8x8xf32>
      %325 = arith.truncf %317 : vector<8x8xf32> to vector<8x8xbf16>
      %c3_209 = arith.constant 3 : index
      %c0_210 = arith.constant 0 : index
      %c0_211 = arith.constant 0 : index
      %326 = vector.load %arg21[%c3_209, %c0_210, %c0_211] : memref<4x8x8xbf16, #tpu.memory_space<vmem>>, vector<1x8x8xbf16>
      %327 = vector.shape_cast %326 : vector<1x8x8xbf16> to vector<8x8xbf16>
      %328 = vector.shape_cast %325 : vector<8x8xbf16> to vector<1x8x8xbf16>
      tpu.vector_store %arg21[%c3_209, %c0_210, %c0_211], %328 {strides = array<i32>} : memref<4x8x8xbf16, #tpu.memory_space<vmem>>, vector<1x8x8xbf16>,
      %329 = arith.truncf %324 : vector<8x8xf32> to vector<8x8xbf16>
      %c3_212 = arith.constant 3 : index
      %c0_213 = arith.constant 0 : index
      %c0_214 = arith.constant 0 : index
      %330 = vector.load %arg22[%c3_212, %c0_213, %c0_214] : memref<4x8x8xbf16, #tpu.memory_space<vmem>>, vector<1x8x8xbf16>
      %331 = vector.shape_cast %330 : vector<1x8x8xbf16> to vector<8x8xbf16>
      %332 = vector.shape_cast %329 : vector<8x8xbf16> to vector<1x8x8xbf16>
      tpu.vector_store %arg22[%c3_212, %c0_213, %c0_214], %332 {strides = array<i32>} : memref<4x8x8xbf16, #tpu.memory_space<vmem>>, vector<1x8x8xbf16>,
    } else {
    }
    %c8_i32 = arith.constant 8 : i32
    %5 = arith.muli %arg1, %c8_i32 : i32
    %6 = tpu.assume_multiple %5, 8 : i32
    %c0_4 = arith.constant 0 : index
    %7 = arith.index_cast %6 : i32 to index
    %c0_5 = arith.constant 0 : index
    %8 = vector.load %arg2[%c0_4, %7, %c0_5] : memref<1x8x32xf32, #tpu.memory_space<vmem>>, vector<1x8x32xf32>
    %9 = vector.shape_cast %8 : vector<1x8x32xf32> to vector<8x32xf32>
    %cst = arith.constant dense<0.000000e+00> : vector<8xf32>
    %10 = vector.multi_reduction <add>, %9, %cst [1] : vector<8x32xf32> to vector<8xf32>
    %11 = vector.shape_cast %10 : vector<8xf32> to vector<8x1xf32>
    %cst_6 = arith.constant 3.200000e+01 : f32
    %12 = vector.broadcast %cst_6 : f32 to vector<8x1xf32>
    %13 = arith.divf %11, %12 : vector<8x1xf32>
    %14 = vector.broadcast %13 : vector<8x1xf32> to vector<8x32xf32>
    %15 = arith.subf %9, %14 : vector<8x32xf32>
    %16 = arith.mulf %15, %15 : vector<8x32xf32>
    %cst_7 = arith.constant dense<0.000000e+00> : vector<8xf32>
    %17 = vector.multi_reduction <add>, %16, %cst_7 [1] : vector<8x32xf32> to vector<8xf32>
    %18 = vector.shape_cast %17 : vector<8xf32> to vector<8x1xf32>
    %cst_8 = arith.constant 0.0322580636 : f32
    %19 = vector.broadcast %cst_8 : f32 to vector<8x1xf32>
    %20 = arith.mulf %18, %19 : vector<8x1xf32>
    %21 = math.sqrt %20 : vector<8x1xf32>
    %cst_9 = arith.constant 9.99999997E-7 : f32
    %22 = vector.broadcast %cst_9 : f32 to vector<8x1xf32>
    %23 = arith.addf %21, %22 : vector<8x1xf32>
    %24 = tpu.reciprocal %23 {approx = true} : vector<8x1xf32> -> vector<8x1xf32>
    %25 = vector.broadcast %0 : vector<1x32xf32> to vector<8x32xf32>
    %26 = arith.mulf %25, %15 : vector<8x32xf32>
    %27 = vector.broadcast %24 : vector<8x1xf32> to vector<8x32xf32>
    %28 = arith.mulf %26, %27 : vector<8x32xf32>
    %29 = vector.broadcast %1 : vector<1x32xf32> to vector<8x32xf32>
    %30 = arith.addf %28, %29 : vector<8x32xf32>
    %31 = arith.truncf %30 : vector<8x32xf32> to vector<8x32xbf16>
    %c0_10 = arith.constant 0 : index
    %c0_11 = arith.constant 0 : index
    %c0_12 = arith.constant 0 : index
    %32 = vector.load %arg3[%c0_10, %c0_11, %c0_12] : memref<1x1x8xi32, #tpu.memory_space<vmem>>, vector<1x1x8xi32>
    %33 = vector.shape_cast %32 : vector<1x1x8xi32> to vector<1x8xi32>
    %c0_i32_13 = arith.constant 0 : i32
    %34 = vector.broadcast %c0_i32_13 : i32 to vector<1x8xi32>
    %35 = arith.cmpi eq, %33, %34 : vector<1x8xi32>
    %cst_14 = arith.constant -1.000000e+09 : f32
    %cst_15 = arith.constant 0.000000e+00 : f32
    %36 = vector.broadcast %cst_14 : f32 to vector<1x8xf32>
    %37 = vector.broadcast %cst_15 : f32 to vector<1x8xf32>
    %38 = arith.select %35, %36, %37 : vector<1x8xi1>, vector<1x8xf32>
    %cst_16 = arith.constant 0.000000e+00 : f32
    %39 = vector.broadcast %cst_16 : f32 to vector<8x32xf32>
    %c0_17 = arith.constant 0 : index
    %c0_18 = arith.constant 0 : index
    %c0_19 = arith.constant 0 : index
    %40 = vector.load %arg4[%c0_17, %c0_18, %c0_19] : memref<4x32x8xbf16, #tpu.memory_space<vmem>>, vector<1x32x8xbf16>
    %41 = vector.shape_cast %40 : vector<1x32x8xbf16> to vector<32x8xbf16>
    %cst_20 = arith.constant dense<0.000000e+00> : vector<8x8xf32>
    %42 = tpu.matmul %31, %41, %cst_20 {dimension_numbers = #tpu.dot_dimension_numbers<[1], [0], [0], [1], [0, 0, 1, 1], [], []>} : vector<8x32xbf16>, vector<32x8xbf16>, vector<8x8xf32> -> vector<8x8xf32>
    %c0_21 = arith.constant 0 : index
    %c0_22 = arith.constant 0 : index
    %c0_23 = arith.constant 0 : index
    %43 = vector.load %arg5[%c0_21, %c0_22, %c0_23] : memref<4x1x8xf32, #tpu.memory_space<vmem>>, vector<1x1x8xf32>
    %44 = vector.shape_cast %43 : vector<1x1x8xf32> to vector<1x8xf32>
    %45 = vector.broadcast %44 : vector<1x8xf32> to vector<8x8xf32>
    %46 = arith.addf %42, %45 : vector<8x8xf32>
    %cst_24 = arith.constant 0.353553385 : f32
    %47 = vector.broadcast %cst_24 : f32 to vector<8x8xf32>
    %48 = arith.mulf %46, %47 : vector<8x8xf32>
    %49 = arith.truncf %48 : vector<8x8xf32> to vector<8x8xbf16>
    %c0_25 = arith.constant 0 : index
    %c0_26 = arith.constant 0 : index
    %c0_27 = arith.constant 0 : index
    %50 = vector.load %arg21[%c0_25, %c0_26, %c0_27] : memref<4x8x8xbf16, #tpu.memory_space<vmem>>, vector<1x8x8xbf16>
    %51 = vector.shape_cast %50 : vector<1x8x8xbf16> to vector<8x8xbf16>
    %cst_28 = arith.constant dense<0.000000e+00> : vector<8x8xf32>
    %52 = tpu.matmul %49, %51, %cst_28 {dimension_numbers = #tpu.dot_dimension_numbers<[1], [1], [0], [0], [0, 0, 1, 0], [], []>} : vector<8x8xbf16>, vector<8x8xbf16>, vector<8x8xf32> -> vector<8x8xf32>
    %53 = vector.broadcast %38 : vector<1x8xf32> to vector<8x8xf32>
    %54 = arith.addf %52, %53 : vector<8x8xf32>
    %cst_29 = arith.constant dense<0xFF800000> : vector<8xf32>
    %55 = vector.multi_reduction <maximumf>, %54, %cst_29 [1] : vector<8x8xf32> to vector<8xf32>
    %56 = vector.shape_cast %55 : vector<8xf32> to vector<8x1xf32>
    %57 = vector.broadcast %56 : vector<8x1xf32> to vector<8x8xf32>
    %58 = arith.subf %54, %57 : vector<8x8xf32>
    %59 = math.exp %58 : vector<8x8xf32>
    %cst_30 = arith.constant dense<0.000000e+00> : vector<8xf32>
    %60 = vector.multi_reduction <add>, %59, %cst_30 [1] : vector<8x8xf32> to vector<8xf32>
    %61 = vector.shape_cast %60 : vector<8xf32> to vector<8x1xf32>
    %62 = arith.truncf %59 : vector<8x8xf32> to vector<8x8xbf16>
    %c0_31 = arith.constant 0 : index
    %c0_32 = arith.constant 0 : index
    %c0_33 = arith.constant 0 : index
    %63 = vector.load %arg22[%c0_31, %c0_32, %c0_33] : memref<4x8x8xbf16, #tpu.memory_space<vmem>>, vector<1x8x8xbf16>
    %64 = vector.shape_cast %63 : vector<1x8x8xbf16> to vector<8x8xbf16>
    %cst_34 = arith.constant dense<0.000000e+00> : vector<8x8xf32>
    %65 = tpu.matmul %62, %64, %cst_34 {dimension_numbers = #tpu.dot_dimension_numbers<[1], [0], [0], [1], [0, 0, 1, 1], [], []>} : vector<8x8xbf16>, vector<8x8xbf16>, vector<8x8xf32> -> vector<8x8xf32>
    %66 = tpu.reciprocal %61 {approx = true} : vector<8x1xf32> -> vector<8x1xf32>
    %67 = vector.broadcast %66 : vector<8x1xf32> to vector<8x8xf32>
    %68 = arith.mulf %65, %67 : vector<8x8xf32>
    %69 = arith.truncf %68 : vector<8x8xf32> to vector<8x8xbf16>
    %c0_35 = arith.constant 0 : index
    %c0_36 = arith.constant 0 : index
    %c0_37 = arith.constant 0 : index
    %70 = vector.load %arg10[%c0_35, %c0_36, %c0_37] : memref<4x8x32xbf16, #tpu.memory_space<vmem>>, vector<1x8x32xbf16>
    %71 = vector.shape_cast %70 : vector<1x8x32xbf16> to vector<8x32xbf16>
    %cst_38 = arith.constant dense<0.000000e+00> : vector<8x32xf32>
    %72 = tpu.matmul %69, %71, %cst_38 {dimension_numbers = #tpu.dot_dimension_numbers<[1], [0], [0], [1], [0, 0, 1, 1], [], []>} : vector<8x8xbf16>, vector<8x32xbf16>, vector<8x32xf32> -> vector<8x32xf32>
    %73 = arith.addf %39, %72 : vector<8x32xf32>
    %c1 = arith.constant 1 : index
    %c0_39 = arith.constant 0 : index
    %c0_40 = arith.constant 0 : index
    %74 = vector.load %arg4[%c1, %c0_39, %c0_40] : memref<4x32x8xbf16, #tpu.memory_space<vmem>>, vector<1x32x8xbf16>
    %75 = vector.shape_cast %74 : vector<1x32x8xbf16> to vector<32x8xbf16>
    %cst_41 = arith.constant dense<0.000000e+00> : vector<8x8xf32>
    %76 = tpu.matmul %31, %75, %cst_41 {dimension_numbers = #tpu.dot_dimension_numbers<[1], [0], [0], [1], [0, 0, 1, 1], [], []>} : vector<8x32xbf16>, vector<32x8xbf16>, vector<8x8xf32> -> vector<8x8xf32>
    %c1_42 = arith.constant 1 : index
    %c0_43 = arith.constant 0 : index
    %c0_44 = arith.constant 0 : index
    %77 = vector.load %arg5[%c1_42, %c0_43, %c0_44] : memref<4x1x8xf32, #tpu.memory_space<vmem>>, vector<1x1x8xf32>
    %78 = vector.shape_cast %77 : vector<1x1x8xf32> to vector<1x8xf32>
    %79 = vector.broadcast %78 : vector<1x8xf32> to vector<8x8xf32>
    %80 = arith.addf %76, %79 : vector<8x8xf32>
    %cst_45 = arith.constant 0.353553385 : f32
    %81 = vector.broadcast %cst_45 : f32 to vector<8x8xf32>
    %82 = arith.mulf %80, %81 : vector<8x8xf32>
    %83 = arith.truncf %82 : vector<8x8xf32> to vector<8x8xbf16>
    %c1_46 = arith.constant 1 : index
    %c0_47 = arith.constant 0 : index
    %c0_48 = arith.constant 0 : index
    %84 = vector.load %arg21[%c1_46, %c0_47, %c0_48] : memref<4x8x8xbf16, #tpu.memory_space<vmem>>, vector<1x8x8xbf16>
    %85 = vector.shape_cast %84 : vector<1x8x8xbf16> to vector<8x8xbf16>
    %cst_49 = arith.constant dense<0.000000e+00> : vector<8x8xf32>
    %86 = tpu.matmul %83, %85, %cst_49 {dimension_numbers = #tpu.dot_dimension_numbers<[1], [1], [0], [0], [0, 0, 1, 0], [], []>} : vector<8x8xbf16>, vector<8x8xbf16>, vector<8x8xf32> -> vector<8x8xf32>
    %87 = vector.broadcast %38 : vector<1x8xf32> to vector<8x8xf32>
    %88 = arith.addf %86, %87 : vector<8x8xf32>
    %cst_50 = arith.constant dense<0xFF800000> : vector<8xf32>
    %89 = vector.multi_reduction <maximumf>, %88, %cst_50 [1] : vector<8x8xf32> to vector<8xf32>
    %90 = vector.shape_cast %89 : vector<8xf32> to vector<8x1xf32>
    %91 = vector.broadcast %90 : vector<8x1xf32> to vector<8x8xf32>
    %92 = arith.subf %88, %91 : vector<8x8xf32>
    %93 = math.exp %92 : vector<8x8xf32>
    %cst_51 = arith.constant dense<0.000000e+00> : vector<8xf32>
    %94 = vector.multi_reduction <add>, %93, %cst_51 [1] : vector<8x8xf32> to vector<8xf32>
    %95 = vector.shape_cast %94 : vector<8xf32> to vector<8x1xf32>
    %96 = arith.truncf %93 : vector<8x8xf32> to vector<8x8xbf16>
    %c1_52 = arith.constant 1 : index
    %c0_53 = arith.constant 0 : index
    %c0_54 = arith.constant 0 : index
    %97 = vector.load %arg22[%c1_52, %c0_53, %c0_54] : memref<4x8x8xbf16, #tpu.memory_space<vmem>>, vector<1x8x8xbf16>
    %98 = vector.shape_cast %97 : vector<1x8x8xbf16> to vector<8x8xbf16>
    %cst_55 = arith.constant dense<0.000000e+00> : vector<8x8xf32>
    %99 = tpu.matmul %96, %98, %cst_55 {dimension_numbers = #tpu.dot_dimension_numbers<[1], [0], [0], [1], [0, 0, 1, 1], [], []>} : vector<8x8xbf16>, vector<8x8xbf16>, vector<8x8xf32> -> vector<8x8xf32>
    %100 = tpu.reciprocal %95 {approx = true} : vector<8x1xf32> -> vector<8x1xf32>
    %101 = vector.broadcast %100 : vector<8x1xf32> to vector<8x8xf32>
    %102 = arith.mulf %99, %101 : vector<8x8xf32>
    %103 = arith.truncf %102 : vector<8x8xf32> to vector<8x8xbf16>
    %c1_56 = arith.constant 1 : index
    %c0_57 = arith.constant 0 : index
    %c0_58 = arith.constant 0 : index
    %104 = vector.load %arg10[%c1_56, %c0_57, %c0_58] : memref<4x8x32xbf16, #tpu.memory_space<vmem>>, vector<1x8x32xbf16>
    %105 = vector.shape_cast %104 : vector<1x8x32xbf16> to vector<8x32xbf16>
    %cst_59 = arith.constant dense<0.000000e+00> : vector<8x32xf32>
    %106 = tpu.matmul %103, %105, %cst_59 {dimension_numbers = #tpu.dot_dimension_numbers<[1], [0], [0], [1], [0, 0, 1, 1], [], []>} : vector<8x8xbf16>, vector<8x32xbf16>, vector<8x32xf32> -> vector<8x32xf32>
    %107 = arith.addf %73, %106 : vector<8x32xf32>
    %c2 = arith.constant 2 : index
    %c0_60 = arith.constant 0 : index
    %c0_61 = arith.constant 0 : index
    %108 = vector.load %arg4[%c2, %c0_60, %c0_61] : memref<4x32x8xbf16, #tpu.memory_space<vmem>>, vector<1x32x8xbf16>
    %109 = vector.shape_cast %108 : vector<1x32x8xbf16> to vector<32x8xbf16>
    %cst_62 = arith.constant dense<0.000000e+00> : vector<8x8xf32>
    %110 = tpu.matmul %31, %109, %cst_62 {dimension_numbers = #tpu.dot_dimension_numbers<[1], [0], [0], [1], [0, 0, 1, 1], [], []>} : vector<8x32xbf16>, vector<32x8xbf16>, vector<8x8xf32> -> vector<8x8xf32>
    %c2_63 = arith.constant 2 : index
    %c0_64 = arith.constant 0 : index
    %c0_65 = arith.constant 0 : index
    %111 = vector.load %arg5[%c2_63, %c0_64, %c0_65] : memref<4x1x8xf32, #tpu.memory_space<vmem>>, vector<1x1x8xf32>
    %112 = vector.shape_cast %111 : vector<1x1x8xf32> to vector<1x8xf32>
    %113 = vector.broadcast %112 : vector<1x8xf32> to vector<8x8xf32>
    %114 = arith.addf %110, %113 : vector<8x8xf32>
    %cst_66 = arith.constant 0.353553385 : f32
    %115 = vector.broadcast %cst_66 : f32 to vector<8x8xf32>
    %116 = arith.mulf %114, %115 : vector<8x8xf32>
    %117 = arith.truncf %116 : vector<8x8xf32> to vector<8x8xbf16>
    %c2_67 = arith.constant 2 : index
    %c0_68 = arith.constant 0 : index
    %c0_69 = arith.constant 0 : index
    %118 = vector.load %arg21[%c2_67, %c0_68, %c0_69] : memref<4x8x8xbf16, #tpu.memory_space<vmem>>, vector<1x8x8xbf16>
    %119 = vector.shape_cast %118 : vector<1x8x8xbf16> to vector<8x8xbf16>
    %cst_70 = arith.constant dense<0.000000e+00> : vector<8x8xf32>
    %120 = tpu.matmul %117, %119, %cst_70 {dimension_numbers = #tpu.dot_dimension_numbers<[1], [1], [0], [0], [0, 0, 1, 0], [], []>} : vector<8x8xbf16>, vector<8x8xbf16>, vector<8x8xf32> -> vector<8x8xf32>
    %121 = vector.broadcast %38 : vector<1x8xf32> to vector<8x8xf32>
    %122 = arith.addf %120, %121 : vector<8x8xf32>
    %cst_71 = arith.constant dense<0xFF800000> : vector<8xf32>
    %123 = vector.multi_reduction <maximumf>, %122, %cst_71 [1] : vector<8x8xf32> to vector<8xf32>
    %124 = vector.shape_cast %123 : vector<8xf32> to vector<8x1xf32>
    %125 = vector.broadcast %124 : vector<8x1xf32> to vector<8x8xf32>
    %126 = arith.subf %122, %125 : vector<8x8xf32>
    %127 = math.exp %126 : vector<8x8xf32>
    %cst_72 = arith.constant dense<0.000000e+00> : vector<8xf32>
    %128 = vector.multi_reduction <add>, %127, %cst_72 [1] : vector<8x8xf32> to vector<8xf32>
    %129 = vector.shape_cast %128 : vector<8xf32> to vector<8x1xf32>
    %130 = arith.truncf %127 : vector<8x8xf32> to vector<8x8xbf16>
    %c2_73 = arith.constant 2 : index
    %c0_74 = arith.constant 0 : index
    %c0_75 = arith.constant 0 : index
    %131 = vector.load %arg22[%c2_73, %c0_74, %c0_75] : memref<4x8x8xbf16, #tpu.memory_space<vmem>>, vector<1x8x8xbf16>
    %132 = vector.shape_cast %131 : vector<1x8x8xbf16> to vector<8x8xbf16>
    %cst_76 = arith.constant dense<0.000000e+00> : vector<8x8xf32>
    %133 = tpu.matmul %130, %132, %cst_76 {dimension_numbers = #tpu.dot_dimension_numbers<[1], [0], [0], [1], [0, 0, 1, 1], [], []>} : vector<8x8xbf16>, vector<8x8xbf16>, vector<8x8xf32> -> vector<8x8xf32>
    %134 = tpu.reciprocal %129 {approx = true} : vector<8x1xf32> -> vector<8x1xf32>
    %135 = vector.broadcast %134 : vector<8x1xf32> to vector<8x8xf32>
    %136 = arith.mulf %133, %135 : vector<8x8xf32>
    %137 = arith.truncf %136 : vector<8x8xf32> to vector<8x8xbf16>
    %c2_77 = arith.constant 2 : index
    %c0_78 = arith.constant 0 : index
    %c0_79 = arith.constant 0 : index
    %138 = vector.load %arg10[%c2_77, %c0_78, %c0_79] : memref<4x8x32xbf16, #tpu.memory_space<vmem>>, vector<1x8x32xbf16>
    %139 = vector.shape_cast %138 : vector<1x8x32xbf16> to vector<8x32xbf16>
    %cst_80 = arith.constant dense<0.000000e+00> : vector<8x32xf32>
    %140 = tpu.matmul %137, %139, %cst_80 {dimension_numbers = #tpu.dot_dimension_numbers<[1], [0], [0], [1], [0, 0, 1, 1], [], []>} : vector<8x8xbf16>, vector<8x32xbf16>, vector<8x32xf32> -> vector<8x32xf32>
    %141 = arith.addf %107, %140 : vector<8x32xf32>
    %c3 = arith.constant 3 : index
    %c0_81 = arith.constant 0 : index
    %c0_82 = arith.constant 0 : index
    %142 = vector.load %arg4[%c3, %c0_81, %c0_82] : memref<4x32x8xbf16, #tpu.memory_space<vmem>>, vector<1x32x8xbf16>
    %143 = vector.shape_cast %142 : vector<1x32x8xbf16> to vector<32x8xbf16>
    %cst_83 = arith.constant dense<0.000000e+00> : vector<8x8xf32>
    %144 = tpu.matmul %31, %143, %cst_83 {dimension_numbers = #tpu.dot_dimension_numbers<[1], [0], [0], [1], [0, 0, 1, 1], [], []>} : vector<8x32xbf16>, vector<32x8xbf16>, vector<8x8xf32> -> vector<8x8xf32>
    %c3_84 = arith.constant 3 : index
    %c0_85 = arith.constant 0 : index
    %c0_86 = arith.constant 0 : index
    %145 = vector.load %arg5[%c3_84, %c0_85, %c0_86] : memref<4x1x8xf32, #tpu.memory_space<vmem>>, vector<1x1x8xf32>
    %146 = vector.shape_cast %145 : vector<1x1x8xf32> to vector<1x8xf32>
    %147 = vector.broadcast %146 : vector<1x8xf32> to vector<8x8xf32>
    %148 = arith.addf %144, %147 : vector<8x8xf32>
    %cst_87 = arith.constant 0.353553385 : f32
    %149 = vector.broadcast %cst_87 : f32 to vector<8x8xf32>
    %150 = arith.mulf %148, %149 : vector<8x8xf32>
    %151 = arith.truncf %150 : vector<8x8xf32> to vector<8x8xbf16>
    %c3_88 = arith.constant 3 : index
    %c0_89 = arith.constant 0 : index
    %c0_90 = arith.constant 0 : index
    %152 = vector.load %arg21[%c3_88, %c0_89, %c0_90] : memref<4x8x8xbf16, #tpu.memory_space<vmem>>, vector<1x8x8xbf16>
    %153 = vector.shape_cast %152 : vector<1x8x8xbf16> to vector<8x8xbf16>
    %cst_91 = arith.constant dense<0.000000e+00> : vector<8x8xf32>
    %154 = tpu.matmul %151, %153, %cst_91 {dimension_numbers = #tpu.dot_dimension_numbers<[1], [1], [0], [0], [0, 0, 1, 0], [], []>} : vector<8x8xbf16>, vector<8x8xbf16>, vector<8x8xf32> -> vector<8x8xf32>
    %155 = vector.broadcast %38 : vector<1x8xf32> to vector<8x8xf32>
    %156 = arith.addf %154, %155 : vector<8x8xf32>
    %cst_92 = arith.constant dense<0xFF800000> : vector<8xf32>
    %157 = vector.multi_reduction <maximumf>, %156, %cst_92 [1] : vector<8x8xf32> to vector<8xf32>
    %158 = vector.shape_cast %157 : vector<8xf32> to vector<8x1xf32>
    %159 = vector.broadcast %158 : vector<8x1xf32> to vector<8x8xf32>
    %160 = arith.subf %156, %159 : vector<8x8xf32>
    %161 = math.exp %160 : vector<8x8xf32>
    %cst_93 = arith.constant dense<0.000000e+00> : vector<8xf32>
    %162 = vector.multi_reduction <add>, %161, %cst_93 [1] : vector<8x8xf32> to vector<8xf32>
    %163 = vector.shape_cast %162 : vector<8xf32> to vector<8x1xf32>
    %164 = arith.truncf %161 : vector<8x8xf32> to vector<8x8xbf16>
    %c3_94 = arith.constant 3 : index
    %c0_95 = arith.constant 0 : index
    %c0_96 = arith.constant 0 : index
    %165 = vector.load %arg22[%c3_94, %c0_95, %c0_96] : memref<4x8x8xbf16, #tpu.memory_space<vmem>>, vector<1x8x8xbf16>
    %166 = vector.shape_cast %165 : vector<1x8x8xbf16> to vector<8x8xbf16>
    %cst_97 = arith.constant dense<0.000000e+00> : vector<8x8xf32>
    %167 = tpu.matmul %164, %166, %cst_97 {dimension_numbers = #tpu.dot_dimension_numbers<[1], [0], [0], [1], [0, 0, 1, 1], [], []>} : vector<8x8xbf16>, vector<8x8xbf16>, vector<8x8xf32> -> vector<8x8xf32>
    %168 = tpu.reciprocal %163 {approx = true} : vector<8x1xf32> -> vector<8x1xf32>
    %169 = vector.broadcast %168 : vector<8x1xf32> to vector<8x8xf32>
    %170 = arith.mulf %167, %169 : vector<8x8xf32>
    %171 = arith.truncf %170 : vector<8x8xf32> to vector<8x8xbf16>
    %c3_98 = arith.constant 3 : index
    %c0_99 = arith.constant 0 : index
    %c0_100 = arith.constant 0 : index
    %172 = vector.load %arg10[%c3_98, %c0_99, %c0_100] : memref<4x8x32xbf16, #tpu.memory_space<vmem>>, vector<1x8x32xbf16>
    %173 = vector.shape_cast %172 : vector<1x8x32xbf16> to vector<8x32xbf16>
    %cst_101 = arith.constant dense<0.000000e+00> : vector<8x32xf32>
    %174 = tpu.matmul %171, %173, %cst_101 {dimension_numbers = #tpu.dot_dimension_numbers<[1], [0], [0], [1], [0, 0, 1, 1], [], []>} : vector<8x8xbf16>, vector<8x32xbf16>, vector<8x32xf32> -> vector<8x32xf32>
    %175 = arith.addf %141, %174 : vector<8x32xf32>
    %176 = arith.addf %9, %175 : vector<8x32xf32>
    %c0_102 = arith.constant 0 : index
    %c0_103 = arith.constant 0 : index
    %177 = vector.load %arg11[%c0_102, %c0_103] : memref<1x32xf32, #tpu.memory_space<vmem>>, vector<1x32xf32>
    %178 = vector.broadcast %177 : vector<1x32xf32> to vector<8x32xf32>
    %179 = arith.addf %176, %178 : vector<8x32xf32>
    %c0_104 = arith.constant 0 : index
    %c0_105 = arith.constant 0 : index
    %180 = vector.load %arg18[%c0_104, %c0_105] : memref<1x32xf32, #tpu.memory_space<vmem>>, vector<1x32xf32>
    %c0_106 = arith.constant 0 : index
    %c0_107 = arith.constant 0 : index
    %181 = vector.load %arg19[%c0_106, %c0_107] : memref<1x32xf32, #tpu.memory_space<vmem>>, vector<1x32xf32>
    %cst_108 = arith.constant dense<0.000000e+00> : vector<8xf32>
    %182 = vector.multi_reduction <add>, %179, %cst_108 [1] : vector<8x32xf32> to vector<8xf32>
    %183 = vector.shape_cast %182 : vector<8xf32> to vector<8x1xf32>
    %cst_109 = arith.constant 3.200000e+01 : f32
    %184 = vector.broadcast %cst_109 : f32 to vector<8x1xf32>
    %185 = arith.divf %183, %184 : vector<8x1xf32>
    %186 = vector.broadcast %185 : vector<8x1xf32> to vector<8x32xf32>
    %187 = arith.subf %179, %186 : vector<8x32xf32>
    %188 = arith.mulf %187, %187 : vector<8x32xf32>
    %cst_110 = arith.constant dense<0.000000e+00> : vector<8xf32>
    %189 = vector.multi_reduction <add>, %188, %cst_110 [1] : vector<8x32xf32> to vector<8xf32>
    %190 = vector.shape_cast %189 : vector<8xf32> to vector<8x1xf32>
    %cst_111 = arith.constant 0.0322580636 : f32
    %191 = vector.broadcast %cst_111 : f32 to vector<8x1xf32>
    %192 = arith.mulf %190, %191 : vector<8x1xf32>
    %193 = math.sqrt %192 : vector<8x1xf32>
    %cst_112 = arith.constant 9.99999997E-7 : f32
    %194 = vector.broadcast %cst_112 : f32 to vector<8x1xf32>
    %195 = arith.addf %193, %194 : vector<8x1xf32>
    %196 = tpu.reciprocal %195 {approx = true} : vector<8x1xf32> -> vector<8x1xf32>
    %197 = vector.broadcast %180 : vector<1x32xf32> to vector<8x32xf32>
    %198 = arith.mulf %197, %187 : vector<8x32xf32>
    %199 = vector.broadcast %196 : vector<8x1xf32> to vector<8x32xf32>
    %200 = arith.mulf %198, %199 : vector<8x32xf32>
    %201 = vector.broadcast %181 : vector<1x32xf32> to vector<8x32xf32>
    %202 = arith.addf %200, %201 : vector<8x32xf32>
    %203 = arith.truncf %202 : vector<8x32xf32> to vector<8x32xbf16>
    %c0_113 = arith.constant 0 : index
    %c0_114 = arith.constant 0 : index
    %204 = vector.load %arg14[%c0_113, %c0_114] : memref<32x64xbf16, #tpu.memory_space<vmem>>, vector<32x64xbf16>
    %cst_115 = arith.constant dense<0.000000e+00> : vector<8x64xf32>
    %205 = tpu.matmul %203, %204, %cst_115 {dimension_numbers = #tpu.dot_dimension_numbers<[1], [0], [0], [1], [0, 0, 1, 1], [], []>} : vector<8x32xbf16>, vector<32x64xbf16>, vector<8x64xf32> -> vector<8x64xf32>
    %c0_116 = arith.constant 0 : index
    %c0_117 = arith.constant 0 : index
    %206 = vector.load %arg15[%c0_116, %c0_117] : memref<1x64xf32, #tpu.memory_space<vmem>>, vector<1x64xf32>
    %207 = vector.broadcast %206 : vector<1x64xf32> to vector<8x64xf32>
    %208 = arith.addf %205, %207 : vector<8x64xf32>
    %cst_118 = arith.constant 0.000000e+00 : f32
    %209 = vector.broadcast %cst_118 : f32 to vector<8x64xf32>
    %210 = arith.maximumf %208, %209 : vector<8x64xf32>
    %211 = arith.truncf %210 : vector<8x64xf32> to vector<8x64xbf16>
    %c0_119 = arith.constant 0 : index
    %c0_120 = arith.constant 0 : index
    %212 = vector.load %arg16[%c0_119, %c0_120] : memref<64x32xbf16, #tpu.memory_space<vmem>>, vector<64x32xbf16>
    %cst_121 = arith.constant dense<0.000000e+00> : vector<8x32xf32>
    %213 = tpu.matmul %211, %212, %cst_121 {dimension_numbers = #tpu.dot_dimension_numbers<[1], [0], [0], [1], [0, 0, 1, 1], [], []>} : vector<8x64xbf16>, vector<64x32xbf16>, vector<8x32xf32> -> vector<8x32xf32>
    %c0_122 = arith.constant 0 : index
    %c0_123 = arith.constant 0 : index
    %214 = vector.load %arg17[%c0_122, %c0_123] : memref<1x32xf32, #tpu.memory_space<vmem>>, vector<1x32xf32>
    %215 = vector.broadcast %214 : vector<1x32xf32> to vector<8x32xf32>
    %216 = arith.addf %213, %215 : vector<8x32xf32>
    %217 = arith.addf %179, %216 : vector<8x32xf32>
    %c0_124 = arith.constant 0 : index
    %c0_125 = arith.constant 0 : index
    %c0_126 = arith.constant 0 : index
    %218 = vector.load %arg20[%c0_124, %c0_125, %c0_126] : memref<1x8x32xf32, #tpu.memory_space<vmem>>, vector<1x8x32xf32>
    %219 = vector.shape_cast %218 : vector<1x8x32xf32> to vector<8x32xf32>
    %220 = vector.shape_cast %217 : vector<8x32xf32> to vector<1x8x32xf32>
    tpu.vector_store %arg20[%c0_124, %c0_125, %c0_126], %220 {strides = array<i32>} : memref<1x8x32xf32, #tpu.memory_space<vmem>>, vector<1x8x32xf32>,
    return
  }
  func.func @transform_0(%arg0: i32, %arg1: i32) -> (i32, i32, i32) {
    %c0_i32 = arith.constant 0 : i32
    %c0_i32_0 = arith.constant 0 : i32
    %c0_i32_1 = arith.constant 0 : i32
    return %arg0, %c0_i32, %c0_i32_0 : i32, i32, i32
  }
  func.func @transform_1(%arg0: i32, %arg1: i32) -> (i32, i32, i32) {
    %c0_i32 = arith.constant 0 : i32
    %c0_i32_0 = arith.constant 0 : i32
    %c0_i32_1 = arith.constant 0 : i32
    return %arg0, %c0_i32, %c0_i32_0 : i32, i32, i32
  }
  func.func @transform_2(%arg0: i32, %arg1: i32) -> (i32, i32, i32) {
    %c0_i32 = arith.constant 0 : i32
    %c0_i32_0 = arith.constant 0 : i32
    %c0_i32_1 = arith.constant 0 : i32
    %c0_i32_2 = arith.constant 0 : i32
    return %c0_i32, %c0_i32_0, %c0_i32_1 : i32, i32, i32
  }
  func.func @transform_3(%arg0: i32, %arg1: i32) -> (i32, i32, i32) {
    %c0_i32 = arith.constant 0 : i32
    %c0_i32_0 = arith.constant 0 : i32
    %c0_i32_1 = arith.constant 0 : i32
    %c0_i32_2 = arith.constant 0 : i32
    return %c0_i32, %c0_i32_0, %c0_i32_1 : i32, i32, i32
  }
  func.func @transform_4(%arg0: i32, %arg1: i32) -> (i32, i32, i32) {
    %c0_i32 = arith.constant 0 : i32
    %c0_i32_0 = arith.constant 0 : i32
    %c0_i32_1 = arith.constant 0 : i32
    %c0_i32_2 = arith.constant 0 : i32
    return %c0_i32, %c0_i32_0, %c0_i32_1 : i32, i32, i32
  }
  func.func @transform_5(%arg0: i32, %arg1: i32) -> (i32, i32, i32) {
    %c0_i32 = arith.constant 0 : i32
    %c0_i32_0 = arith.constant 0 : i32
    %c0_i32_1 = arith.constant 0 : i32
    %c0_i32_2 = arith.constant 0 : i32
    return %c0_i32, %c0_i32_0, %c0_i32_1 : i32, i32, i32
  }
  func.func @transform_6(%arg0: i32, %arg1: i32) -> (i32, i32, i32) {
    %c0_i32 = arith.constant 0 : i32
    %c0_i32_0 = arith.constant 0 : i32
    %c0_i32_1 = arith.constant 0 : i32
    %c0_i32_2 = arith.constant 0 : i32
    return %c0_i32, %c0_i32_0, %c0_i32_1 : i32, i32, i32
  }
  func.func @transform_7(%arg0: i32, %arg1: i32) -> (i32, i32, i32) {
    %c0_i32 = arith.constant 0 : i32
    %c0_i32_0 = arith.constant 0 : i32
    %c0_i32_1 = arith.constant 0 : i32
    %c0_i32_2 = arith.constant 0 : i32
    return %c0_i32, %c0_i32_0, %c0_i32_1 : i32, i32, i32
  }
  func.func @transform_8(%arg0: i32, %arg1: i32) -> (i32, i32, i32) {
    %c0_i32 = arith.constant 0 : i32
    %c0_i32_0 = arith.constant 0 : i32
    %c0_i32_1 = arith.constant 0 : i32
    %c0_i32_2 = arith.constant 0 : i32
    return %c0_i32, %c0_i32_0, %c0_i32_1 : i32, i32, i32
  }
  func.func @transform_9(%arg0: i32, %arg1: i32) -> (i32, i32) {
    %c0_i32 = arith.constant 0 : i32
    %c0_i32_0 = arith.constant 0 : i32
    %c0_i32_1 = arith.constant 0 : i32
    return %c0_i32, %c0_i32_0 : i32, i32
  }
  func.func @transform_10(%arg0: i32, %arg1: i32) -> (i32, i32) {
    %c0_i32 = arith.constant 0 : i32
    %c0_i32_0 = arith.constant 0 : i32
    %c0_i32_1 = arith.constant 0 : i32
    return %c0_i32, %c0_i32_0 : i32, i32
  }
  func.func @transform_11(%arg0: i32, %arg1: i32) -> (i32, i32) {
    %c0_i32 = arith.constant 0 : i32
    %c0_i32_0 = arith.constant 0 : i32
    %c0_i32_1 = arith.constant 0 : i32
    return %c0_i32, %c0_i32_0 : i32, i32
  }
  func.func @transform_12(%arg0: i32, %arg1: i32) -> (i32, i32) {
    %c0_i32 = arith.constant 0 : i32
    %c0_i32_0 = arith.constant 0 : i32
    %c0_i32_1 = arith.constant 0 : i32
    return %c0_i32, %c0_i32_0 : i32, i32
  }
  func.func @transform_13(%arg0: i32, %arg1: i32) -> (i32, i32) {
    %c0_i32 = arith.constant 0 : i32
    %c0_i32_0 = arith.constant 0 : i32
    %c0_i32_1 = arith.constant 0 : i32
    return %c0_i32, %c0_i32_0 : i32, i32
  }
  func.func @transform_14(%arg0: i32, %arg1: i32) -> (i32, i32) {
    %c0_i32 = arith.constant 0 : i32
    %c0_i32_0 = arith.constant 0 : i32
    %c0_i32_1 = arith.constant 0 : i32
    return %c0_i32, %c0_i32_0 : i32, i32
  }
  func.func @transform_15(%arg0: i32, %arg1: i32) -> (i32, i32) {
    %c0_i32 = arith.constant 0 : i32
    %c0_i32_0 = arith.constant 0 : i32
    %c0_i32_1 = arith.constant 0 : i32
    return %c0_i32, %c0_i32_0 : i32, i32
  }
  func.func @transform_16(%arg0: i32, %arg1: i32) -> (i32, i32) {
    %c0_i32 = arith.constant 0 : i32
    %c0_i32_0 = arith.constant 0 : i32
    %c0_i32_1 = arith.constant 0 : i32
    return %c0_i32, %c0_i32_0 : i32, i32
  }
  func.func @transform_17(%arg0: i32, %arg1: i32) -> (i32, i32) {
    %c0_i32 = arith.constant 0 : i32
    %c0_i32_0 = arith.constant 0 : i32
    %c0_i32_1 = arith.constant 0 : i32
    return %c0_i32, %c0_i32_0 : i32, i32
  }
  func.func @transform_18(%arg0: i32, %arg1: i32) -> (i32, i32, i32) {
    %c0_i32 = arith.constant 0 : i32
    %c0_i32_0 = arith.constant 0 : i32
    return %arg0, %arg1, %c0_i32 : i32, i32, i32
  }
}

module attributes {stable_mosaic.version = 11 : i64} {
  func.func @_encoder_layer_kernel(%arg0: i32, %arg1: i32, %arg2: memref<1x8x32xf32, #tpu.memory_space<vmem>>, %arg3: memref<1x1x8xi32, #tpu.memory_space<vmem>>, %arg4: memref<4x32x8xbf16, #tpu.memory_space<vmem>>, %arg5: memref<4x1x8xf32, #tpu.memory_space<vmem>>, %arg6: memref<4x32x8xbf16, #tpu.memory_space<vmem>>, %arg7: memref<4x1x8xf32, #tpu.memory_space<vmem>>, %arg8: memref<4x32x8xbf16, #tpu.memory_space<vmem>>, %arg9: memref<4x1x8xf32, #tpu.memory_space<vmem>>, %arg10: memref<4x8x32xbf16, #tpu.memory_space<vmem>>, %arg11: memref<1x32xf32, #tpu.memory_space<vmem>>, %arg12: memref<1x32xf32, #tpu.memory_space<vmem>>, %arg13: memref<1x32xf32, #tpu.memory_space<vmem>>, %arg14: memref<32x64xbf16, #tpu.memory_space<vmem>>, %arg15: memref<1x64xf32, #tpu.memory_space<vmem>>, %arg16: memref<64x32xbf16, #tpu.memory_space<vmem>>, %arg17: memref<1x32xf32, #tpu.memory_space<vmem>>, %arg18: memref<1x32xf32, #tpu.memory_space<vmem>>, %arg19: memref<1x32xf32, #tpu.memory_space<vmem>>, %arg20: memref<1x8x32xf32, #tpu.memory_space<vmem>>, %arg21: memref<4x8x8xbf16, #tpu.memory_space<vmem>>, %arg22: memref<4x8x8xbf16, #tpu.memory_space<vmem>>) attributes {dimension_semantics = [#tpu.dimension_semantics<parallel>, #tpu.dimension_semantics<arbitrary>], iteration_bounds = array<i64: 2, 1>, scalar_prefetch = 0 : i64, scratch_operands = 2 : i64, tpu.core_type = #tpu.core_type<tc>, window_params = [{transform_indices = @transform_0, window_bounds = array<i64: 1, 8, 32>}, {transform_indices = @transform_1, window_bounds = array<i64: 1, 1, 8>}, {pipeline_mode = #tpu.pipeline_mode<synchronous>, transform_indices = @transform_2, window_bounds = array<i64: 4, 32, 8>}, {pipeline_mode = #tpu.pipeline_mode<synchronous>, transform_indices = @transform_3, window_bounds = array<i64: 4, 1, 8>}, {pipeline_mode = #tpu.pipeline_mode<synchronous>, transform_indices = @transform_4, window_bounds = array<i64: 4, 32, 8>}, {pipeline_mode = #tpu.pipeline_mode<synchronous>, transform_indices = @transform_5, window_bounds = array<i64: 4, 1, 8>}, {pipeline_mode = #tpu.pipeline_mode<synchronous>, transform_indices = @transform_6, window_bounds = array<i64: 4, 32, 8>}, {pipeline_mode = #tpu.pipeline_mode<synchronous>, transform_indices = @transform_7, window_bounds = array<i64: 4, 1, 8>}, {pipeline_mode = #tpu.pipeline_mode<synchronous>, transform_indices = @transform_8, window_bounds = array<i64: 4, 8, 32>}, {pipeline_mode = #tpu.pipeline_mode<synchronous>, transform_indices = @transform_9, window_bounds = array<i64: 1, 32>}, {pipeline_mode = #tpu.pipeline_mode<synchronous>, transform_indices = @transform_10, window_bounds = array<i64: 1, 32>}, {pipeline_mode = #tpu.pipeline_mode<synchronous>, transform_indices = @transform_11, window_bounds = array<i64: 1, 32>}, {pipeline_mode = #tpu.pipeline_mode<synchronous>, transform_indices = @transform_12, window_bounds = array<i64: 32, 64>}, {pipeline_mode = #tpu.pipeline_mode<synchronous>, transform_indices = @transform_13, window_bounds = array<i64: 1, 64>}, {pipeline_mode = #tpu.pipeline_mode<synchronous>, transform_indices = @transform_14, window_bounds = array<i64: 64, 32>}, {pipeline_mode = #tpu.pipeline_mode<synchronous>, transform_indices = @transform_15, window_bounds = array<i64: 1, 32>}, {pipeline_mode = #tpu.pipeline_mode<synchronous>, transform_indices = @transform_16, window_bounds = array<i64: 1, 32>}, {pipeline_mode = #tpu.pipeline_mode<synchronous>, transform_indices = @transform_17, window_bounds = array<i64: 1, 32>}, {transform_indices = @transform_18, window_bounds = array<i64: 1, 8, 32>}]} {
    %c0 = arith.constant 0 : index
    %c0_0 = arith.constant 0 : index
    %0 = vector.load %arg12[%c0, %c0_0] : memref<1x32xf32, #tpu.memory_space<vmem>>, vector<1x32xf32>
    %c0_1 = arith.constant 0 : index
    %c0_2 = arith.constant 0 : index
    %1 = vector.load %arg13[%c0_1, %c0_2] : memref<1x32xf32, #tpu.memory_space<vmem>>, vector<1x32xf32>
    %c0_i32 = arith.constant 0 : i32
    %2 = arith.cmpi eq, %arg1, %c0_i32 : i32
    %3 = arith.extui %2 : i1 to i32
    %c0_i32_3 = arith.constant 0 : i32
    %4 = arith.cmpi ne, %3, %c0_i32_3 : i32
    scf.if %4 {
      %c0_127 = arith.constant 0 : index
      %c0_128 = arith.constant 0 : index
      %c0_129 = arith.constant 0 : index
      %221 = vector.load %arg2[%c0_127, %c0_128, %c0_129] : memref<1x8x32xf32, #tpu.memory_space<vmem>>, vector<1x8x32xf32>
      %222 = vector.shape_cast %221 : vector<1x8x32xf32> to vector<8x32xf32>
      %cst_130 = arith.constant dense<0.000000e+00> : vector<8xf32>
      %223 = vector.multi_reduction <add>, %222, %cst_130 [1] : vector<8x32xf32> to vector<8xf32>
      %224 = vector.shape_cast %223 : vector<8xf32> to vector<8x1xf32>
      %cst_131 = arith.constant 3.200000e+01 : f32
      %225 = vector.broadcast %cst_131 : f32 to vector<8x1xf32>
      %226 = arith.divf %224, %225 : vector<8x1xf32>
      %227 = vector.broadcast %226 : vector<8x1xf32> to vector<8x32xf32>
      %228 = arith.subf %222, %227 : vector<8x32xf32>
      %229 = arith.mulf %228, %228 : vector<8x32xf32>
      %cst_132 = arith.constant dense<0.000000e+00> : vector<8xf32>
      %230 = vector.multi_reduction <add>, %229, %cst_132 [1] : vector<8x32xf32> to vector<8xf32>
      %231 = vector.shape_cast %230 : vector<8xf32> to vector<8x1xf32>
      %cst_133 = arith.constant 0.0322580636 : f32
      %232 = vector.broadcast %cst_133 : f32 to vector<8x1xf32>
      %233 = arith.mulf %231, %232 : vector<8x1xf32>
      %234 = math.sqrt %233 : vector<8x1xf32>
      %cst_134 = arith.constant 9.99999997E-7 : f32
      %235 = vector.broadcast %cst_134 : f32 to vector<8x1xf32>
      %236 = arith.addf %234, %235 : vector<8x1xf32>
      %237 = tpu.reciprocal %236 {approx = true} : vector<8x1xf32> -> vector<8x1xf32>
      %238 = vector.broadcast %0 : vector<1x32xf32> to vector<8x32xf32>
      %239 = arith.mulf %238, %228 : vector<8x32xf32>
      %240 = vector.broadcast %237 : vector<8x1xf32> to vector<8x32xf32>
      %241 = arith.mulf %239, %240 : vector<8x32xf32>
      %242 = vector.broadcast %1 : vector<1x32xf32> to vector<8x32xf32>
      %243 = arith.addf %241, %242 : vector<8x32xf32>
      %244 = arith.truncf %243 : vector<8x32xf32> to vector<8x32xbf16>
      %c0_135 = arith.constant 0 : index
      %c0_136 = arith.constant 0 : index
      %c0_137 = arith.constant 0 : index
      %245 = vector.load %arg6[%c0_135, %c0_136, %c0_137] : memref<4x32x8xbf16, #tpu.memory_space<vmem>>, vector<1x32x8xbf16>
      %246 = vector.shape_cast %245 : vector<1x32x8xbf16> to vector<32x8xbf16>
      %cst_138 = arith.constant dense<0.000000e+00> : vector<8x8xf32>
      %247 = tpu.matmul %244, %246, %cst_138 {dimension_numbers = #tpu.dot_dimension_numbers<[1], [0], [0], [1], [0, 0, 1, 1], [], []>} : vector<8x32xbf16>, vector<32x8xbf16>, vector<8x8xf32> -> vector<8x8xf32>
      %c0_139 = arith.constant 0 : index
      %c0_140 = arith.constant 0 : index
      %c0_141 = arith.constant 0 : index
      %248 = vector.load %arg7[%c0_139, %c0_140, %c0_141] : memref<4x1x8xf32, #tpu.memory_space<vmem>>, vector<1x1x8xf32>
      %249 = vector.shape_cast %248 : vector<1x1x8xf32> to vector<1x8xf32>
      %250 = vector.broadcast %249 : vector<1x8xf32> to vector<8x8xf32>
      %251 = arith.addf %247, %250 : vector<8x8xf32>
      %c0_142 = arith.constant 0 : index
      %c0_143 = arith.constant 0 : index
      %c0_144 = arith.constant 0 : index
      %252 = vector.load %arg8[%c0_142, %c0_143, %c0_144] : memref<4x32x8xbf16, #tpu.memory_space<vmem>>, vector<1x32x8xbf16>
      %253 = vector.shape_cast %252 : vector<1x32x8xbf16> to vector<32x8xbf16>
      %cst_145 = arith.constant dense<0.000000e+00> : vector<8x8xf32>
      %254 = tpu.matmul %244, %253, %cst_145 {dimension_numbers = #tpu.dot_dimension_numbers<[1], [0], [0], [1], [0, 0, 1, 1], [], []>} : vector<8x32xbf16>, vector<32x8xbf16>, vector<8x8xf32> -> vector<8x8xf32>
      %c0_146 = arith.constant 0 : index
      %c0_147 = arith.constant 0 : index
      %c0_148 = arith.constant 0 : index
      %255 = vector.load %arg9[%c0_146, %c0_147, %c0_148] : memref<4x1x8xf32, #tpu.memory_space<vmem>>, vector<1x1x8xf32>
      %256 = vector.shape_cast %255 : vector<1x1x8xf32> to vector<1x8xf32>
      %257 = vector.broadcast %256 : vector<1x8xf32> to vector<8x8xf32>
      %258 = arith.addf %254, %257 : vector<8x8xf32>
      %259 = arith.truncf %251 : vector<8x8xf32> to vector<8x8xbf16>
      %c0_149 = arith.constant 0 : index
      %c0_150 = arith.constant 0 : index
      %c0_151 = arith.constant 0 : index
      %260 = vector.load %arg21[%c0_149, %c0_150, %c0_151] : memref<4x8x8xbf16, #tpu.memory_space<vmem>>, vector<1x8x8xbf16>
      %261 = vector.shape_cast %260 : vector<1x8x8xbf16> to vector<8x8xbf16>
      %262 = vector.shape_cast %259 : vector<8x8xbf16> to vector<1x8x8xbf16>
      tpu.vector_store %arg21[%c0_149, %c0_150, %c0_151], %262 {strides = array<i32>} : memref<4x8x8xbf16, #tpu.memory_space<vmem>>, vector<1x8x8xbf16>,
      %263 = arith.truncf %258 : vector<8x8xf32> to vector<8x8xbf16>
      %c0_152 = arith.constant 0 : index
      %c0_153 = arith.constant 0 : index
      %c0_154 = arith.constant 0 : index
      %264 = vector.load %arg22[%c0_152, %c0_153, %c0_154] : memref<4x8x8xbf16, #tpu.memory_space<vmem>>, vector<1x8x8xbf16>
      %265 = vector.shape_cast %264 : vector<1x8x8xbf16> to vector<8x8xbf16>
      %266 = vector.shape_cast %263 : vector<8x8xbf16> to vector<1x8x8xbf16>
      tpu.vector_store %arg22[%c0_152, %c0_153, %c0_154], %266 {strides = array<i32>} : memref<4x8x8xbf16, #tpu.memory_space<vmem>>, vector<1x8x8xbf16>,
      %c1_155 = arith.constant 1 : index
      %c0_156 = arith.constant 0 : index
      %c0_157 = arith.constant 0 : index
      %267 = vector.load %arg6[%c1_155, %c0_156, %c0_157] : memref<4x32x8xbf16, #tpu.memory_space<vmem>>, vector<1x32x8xbf16>
      %268 = vector.shape_cast %267 : vector<1x32x8xbf16> to vector<32x8xbf16>
      %cst_158 = arith.constant dense<0.000000e+00> : vector<8x8xf32>
      %269 = tpu.matmul %244, %268, %cst_158 {dimension_numbers = #tpu.dot_dimension_numbers<[1], [0], [0], [1], [0, 0, 1, 1], [], []>} : vector<8x32xbf16>, vector<32x8xbf16>, vector<8x8xf32> -> vector<8x8xf32>
      %c1_159 = arith.constant 1 : index
      %c0_160 = arith.constant 0 : index
      %c0_161 = arith.constant 0 : index
      %270 = vector.load %arg7[%c1_159, %c0_160, %c0_161] : memref<4x1x8xf32, #tpu.memory_space<vmem>>, vector<1x1x8xf32>
      %271 = vector.shape_cast %270 : vector<1x1x8xf32> to vector<1x8xf32>
      %272 = vector.broadcast %271 : vector<1x8xf32> to vector<8x8xf32>
      %273 = arith.addf %269, %272 : vector<8x8xf32>
      %c1_162 = arith.constant 1 : index
      %c0_163 = arith.constant 0 : index
      %c0_164 = arith.constant 0 : index
      %274 = vector.load %arg8[%c1_162, %c0_163, %c0_164] : memref<4x32x8xbf16, #tpu.memory_space<vmem>>, vector<1x32x8xbf16>
      %275 = vector.shape_cast %274 : vector<1x32x8xbf16> to vector<32x8xbf16>
      %cst_165 = arith.constant dense<0.000000e+00> : vector<8x8xf32>
      %276 = tpu.matmul %244, %275, %cst_165 {dimension_numbers = #tpu.dot_dimension_numbers<[1], [0], [0], [1], [0, 0, 1, 1], [], []>} : vector<8x32xbf16>, vector<32x8xbf16>, vector<8x8xf32> -> vector<8x8xf32>
      %c1_166 = arith.constant 1 : index
      %c0_167 = arith.constant 0 : index
      %c0_168 = arith.constant 0 : index
      %277 = vector.load %arg9[%c1_166, %c0_167, %c0_168] : memref<4x1x8xf32, #tpu.memory_space<vmem>>, vector<1x1x8xf32>
      %278 = vector.shape_cast %277 : vector<1x1x8xf32> to vector<1x8xf32>
      %279 = vector.broadcast %278 : vector<1x8xf32> to vector<8x8xf32>
      %280 = arith.addf %276, %279 : vector<8x8xf32>
      %281 = arith.truncf %273 : vector<8x8xf32> to vector<8x8xbf16>
      %c1_169 = arith.constant 1 : index
      %c0_170 = arith.constant 0 : index
      %c0_171 = arith.constant 0 : index
      %282 = vector.load %arg21[%c1_169, %c0_170, %c0_171] : memref<4x8x8xbf16, #tpu.memory_space<vmem>>, vector<1x8x8xbf16>
      %283 = vector.shape_cast %282 : vector<1x8x8xbf16> to vector<8x8xbf16>
      %284 = vector.shape_cast %281 : vector<8x8xbf16> to vector<1x8x8xbf16>
      tpu.vector_store %arg21[%c1_169, %c0_170, %c0_171], %284 {strides = array<i32>} : memref<4x8x8xbf16, #tpu.memory_space<vmem>>, vector<1x8x8xbf16>,
      %285 = arith.truncf %280 : vector<8x8xf32> to vector<8x8xbf16>
      %c1_172 = arith.constant 1 : index
      %c0_173 = arith.constant 0 : index
      %c0_174 = arith.constant 0 : index
      %286 = vector.load %arg22[%c1_172, %c0_173, %c0_174] : memref<4x8x8xbf16, #tpu.memory_space<vmem>>, vector<1x8x8xbf16>
      %287 = vector.shape_cast %286 : vector<1x8x8xbf16> to vector<8x8xbf16>
      %288 = vector.shape_cast %285 : vector<8x8xbf16> to vector<1x8x8xbf16>
      tpu.vector_store %arg22[%c1_172, %c0_173, %c0_174], %288 {strides = array<i32>} : memref<4x8x8xbf16, #tpu.memory_space<vmem>>, vector<1x8x8xbf16>,
      %c2_175 = arith.constant 2 : index
      %c0_176 = arith.constant 0 : index
      %c0_177 = arith.constant 0 : index
      %289 = vector.load %arg6[%c2_175, %c0_176, %c0_177] : memref<4x32x8xbf16, #tpu.memory_space<vmem>>, vector<1x32x8xbf16>
      %290 = vector.shape_cast %289 : vector<1x32x8xbf16> to vector<32x8xbf16>
      %cst_178 = arith.constant dense<0.000000e+00> : vector<8x8xf32>
      %291 = tpu.matmul %244, %290, %cst_178 {dimension_numbers = #tpu.dot_dimension_numbers<[1], [0], [0], [1], [0, 0, 1, 1], [], []>} : vector<8x32xbf16>, vector<32x8xbf16>, vector<8x8xf32> -> vector<8x8xf32>
      %c2_179 = arith.constant 2 : index
      %c0_180 = arith.constant 0 : index
      %c0_181 = arith.constant 0 : index
      %292 = vector.load %arg7[%c2_179, %c0_180, %c0_181] : memref<4x1x8xf32, #tpu.memory_space<vmem>>, vector<1x1x8xf32>
      %293 = vector.shape_cast %292 : vector<1x1x8xf32> to vector<1x8xf32>
      %294 = vector.broadcast %293 : vector<1x8xf32> to vector<8x8xf32>
      %295 = arith.addf %291, %294 : vector<8x8xf32>
      %c2_182 = arith.constant 2 : index
      %c0_183 = arith.constant 0 : index
      %c0_184 = arith.constant 0 : index
      %296 = vector.load %arg8[%c2_182, %c0_183, %c0_184] : memref<4x32x8xbf16, #tpu.memory_space<vmem>>, vector<1x32x8xbf16>
      %297 = vector.shape_cast %296 : vector<1x32x8xbf16> to vector<32x8xbf16>
      %cst_185 = arith.constant dense<0.000000e+00> : vector<8x8xf32>
      %298 = tpu.matmul %244, %297, %cst_185 {dimension_numbers = #tpu.dot_dimension_numbers<[1], [0], [0], [1], [0, 0, 1, 1], [], []>} : vector<8x32xbf16>, vector<32x8xbf16>, vector<8x8xf32> -> vector<8x8xf32>
      %c2_186 = arith.constant 2 : index
      %c0_187 = arith.constant 0 : index
      %c0_188 = arith.constant 0 : index
      %299 = vector.load %arg9[%c2_186, %c0_187, %c0_188] : memref<4x1x8xf32, #tpu.memory_space<vmem>>, vector<1x1x8xf32>
      %300 = vector.shape_cast %299 : vector<1x1x8xf32> to vector<1x8xf32>
      %301 = vector.broadcast %300 : vector<1x8xf32> to vector<8x8xf32>
      %302 = arith.addf %298, %301 : vector<8x8xf32>
      %303 = arith.truncf %295 : vector<8x8xf32> to vector<8x8xbf16>
      %c2_189 = arith.constant 2 : index
      %c0_190 = arith.constant 0 : index
      %c0_191 = arith.constant 0 : index
      %304 = vector.load %arg21[%c2_189, %c0_190, %c0_191] : memref<4x8x8xbf16, #tpu.memory_space<vmem>>, vector<1x8x8xbf16>
      %305 = vector.shape_cast %304 : vector<1x8x8xbf16> to vector<8x8xbf16>
      %306 = vector.shape_cast %303 : vector<8x8xbf16> to vector<1x8x8xbf16>
      tpu.vector_store %arg21[%c2_189, %c0_190, %c0_191], %306 {strides = array<i32>} : memref<4x8x8xbf16, #tpu.memory_space<vmem>>, vector<1x8x8xbf16>,
      %307 = arith.truncf %302 : vector<8x8xf32> to vector<8x8xbf16>
      %c2_192 = arith.constant 2 : index
      %c0_193 = arith.constant 0 : index
      %c0_194 = arith.constant 0 : index
      %308 = vector.load %arg22[%c2_192, %c0_193, %c0_194] : memref<4x8x8xbf16, #tpu.memory_space<vmem>>, vector<1x8x8xbf16>
      %309 = vector.shape_cast %308 : vector<1x8x8xbf16> to vector<8x8xbf16>
      %310 = vector.shape_cast %307 : vector<8x8xbf16> to vector<1x8x8xbf16>
      tpu.vector_store %arg22[%c2_192, %c0_193, %c0_194], %310 {strides = array<i32>} : memref<4x8x8xbf16, #tpu.memory_space<vmem>>, vector<1x8x8xbf16>,
      %c3_195 = arith.constant 3 : index
      %c0_196 = arith.constant 0 : index
      %c0_197 = arith.constant 0 : index
      %311 = vector.load %arg6[%c3_195, %c0_196, %c0_197] : memref<4x32x8xbf16, #tpu.memory_space<vmem>>, vector<1x32x8xbf16>
      %312 = vector.shape_cast %311 : vector<1x32x8xbf16> to vector<32x8xbf16>
      %cst_198 = arith.constant dense<0.000000e+00> : vector<8x8xf32>
      %313 = tpu.matmul %244, %312, %cst_198 {dimension_numbers = #tpu.dot_dimension_numbers<[1], [0], [0], [1], [0, 0, 1, 1], [], []>} : vector<8x32xbf16>, vector<32x8xbf16>, vector<8x8xf32> -> vector<8x8xf32>
      %c3_199 = arith.constant 3 : index
      %c0_200 = arith.constant 0 : index
      %c0_201 = arith.constant 0 : index
      %314 = vector.load %arg7[%c3_199, %c0_200, %c0_201] : memref<4x1x8xf32, #tpu.memory_space<vmem>>, vector<1x1x8xf32>
      %315 = vector.shape_cast %314 : vector<1x1x8xf32> to vector<1x8xf32>
      %316 = vector.broadcast %315 : vector<1x8xf32> to vector<8x8xf32>
      %317 = arith.addf %313, %316 : vector<8x8xf32>
      %c3_202 = arith.constant 3 : index
      %c0_203 = arith.constant 0 : index
      %c0_204 = arith.constant 0 : index
      %318 = vector.load %arg8[%c3_202, %c0_203, %c0_204] : memref<4x32x8xbf16, #tpu.memory_space<vmem>>, vector<1x32x8xbf16>
      %319 = vector.shape_cast %318 : vector<1x32x8xbf16> to vector<32x8xbf16>
      %cst_205 = arith.constant dense<0.000000e+00> : vector<8x8xf32>
      %320 = tpu.matmul %244, %319, %cst_205 {dimension_numbers = #tpu.dot_dimension_numbers<[1], [0], [0], [1], [0, 0, 1, 1], [], []>} : vector<8x32xbf16>, vector<32x8xbf16>, vector<8x8xf32> -> vector<8x8xf32>
      %c3_206 = arith.constant 3 : index
      %c0_207 = arith.constant 0 : index
      %c0_208 = arith.constant 0 : index
      %321 = vector.load %arg9[%c3_206, %c0_207, %c0_208] : memref<4x1x8xf32, #tpu.memory_space<vmem>>, vector<1x1x8xf32>
      %322 = vector.shape_cast %321 : vector<1x1x8xf32> to vector<1x8xf32>
      %323 = vector.broadcast %322 : vector<1x8xf32> to vector<8x8xf32>
      %324 = arith.addf %320, %323 : vector<8x8xf32>
      %325 = arith.truncf %317 : vector<8x8xf32> to vector<8x8xbf16>
      %c3_209 = arith.constant 3 : index
      %c0_210 = arith.constant 0 : index
      %c0_211 = arith.constant 0 : index
      %326 = vector.load %arg21[%c3_209, %c0_210, %c0_211] : memref<4x8x8xbf16, #tpu.memory_space<vmem>>, vector<1x8x8xbf16>
      %327 = vector.shape_cast %326 : vector<1x8x8xbf16> to vector<8x8xbf16>
      %328 = vector.shape_cast %325 : vector<8x8xbf16> to vector<1x8x8xbf16>
      tpu.vector_store %arg21[%c3_209, %c0_210, %c0_211], %328 {strides = array<i32>} : memref<4x8x8xbf16, #tpu.memory_space<vmem>>, vector<1x8x8xbf16>,
      %329 = arith.truncf %324 : vector<8x8xf32> to vector<8x8xbf16>
      %c3_212 = arith.constant 3 : index
      %c0_213 = arith.constant 0 : index
      %c0_214 = arith.constant 0 : index
      %330 = vector.load %arg22[%c3_212, %c0_213, %c0_214] : memref<4x8x8xbf16, #tpu.memory_space<vmem>>, vector<1x8x8xbf16>
      %331 = vector.shape_cast %330 : vector<1x8x8xbf16> to vector<8x8xbf16>
      %332 = vector.shape_cast %329 : vector<8x8xbf16> to vector<1x8x8xbf16>
      tpu.vector_store %arg22[%c3_212, %c0_213, %c0_214], %332 {strides = array<i32>} : memref<4x8x8xbf16, #tpu.memory_space<vmem>>, vector<1x8x8xbf16>,
    } else {
    }
    %c8_i32 = arith.constant 8 : i32
    %5 = arith.muli %arg1, %c8_i32 : i32
    %6 = tpu.assume_multiple %5, 8 : i32
    %c0_4 = arith.constant 0 : index
    %7 = arith.index_cast %6 : i32 to index
    %c0_5 = arith.constant 0 : index
    %8 = vector.load %arg2[%c0_4, %7, %c0_5] : memref<1x8x32xf32, #tpu.memory_space<vmem>>, vector<1x8x32xf32>
    %9 = vector.shape_cast %8 : vector<1x8x32xf32> to vector<8x32xf32>
    %cst = arith.constant dense<0.000000e+00> : vector<8xf32>
    %10 = vector.multi_reduction <add>, %9, %cst [1] : vector<8x32xf32> to vector<8xf32>
    %11 = vector.shape_cast %10 : vector<8xf32> to vector<8x1xf32>
    %cst_6 = arith.constant 3.200000e+01 : f32
    %12 = vector.broadcast %cst_6 : f32 to vector<8x1xf32>
    %13 = arith.divf %11, %12 : vector<8x1xf32>
    %14 = vector.broadcast %13 : vector<8x1xf32> to vector<8x32xf32>
    %15 = arith.subf %9, %14 : vector<8x32xf32>
    %16 = arith.mulf %15, %15 : vector<8x32xf32>
    %cst_7 = arith.constant dense<0.000000e+00> : vector<8xf32>
    %17 = vector.multi_reduction <add>, %16, %cst_7 [1] : vector<8x32xf32> to vector<8xf32>
    %18 = vector.shape_cast %17 : vector<8xf32> to vector<8x1xf32>
    %cst_8 = arith.constant 0.0322580636 : f32
    %19 = vector.broadcast %cst_8 : f32 to vector<8x1xf32>
    %20 = arith.mulf %18, %19 : vector<8x1xf32>
    %21 = math.sqrt %20 : vector<8x1xf32>
    %cst_9 = arith.constant 9.99999997E-7 : f32
    %22 = vector.broadcast %cst_9 : f32 to vector<8x1xf32>
    %23 = arith.addf %21, %22 : vector<8x1xf32>
    %24 = tpu.reciprocal %23 {approx = true} : vector<8x1xf32> -> vector<8x1xf32>
    %25 = vector.broadcast %0 : vector<1x32xf32> to vector<8x32xf32>
    %26 = arith.mulf %25, %15 : vector<8x32xf32>
    %27 = vector.broadcast %24 : vector<8x1xf32> to vector<8x32xf32>
    %28 = arith.mulf %26, %27 : vector<8x32xf32>
    %29 = vector.broadcast %1 : vector<1x32xf32> to vector<8x32xf32>
    %30 = arith.addf %28, %29 : vector<8x32xf32>
    %31 = arith.truncf %30 : vector<8x32xf32> to vector<8x32xbf16>
    %c0_10 = arith.constant 0 : index
    %c0_11 = arith.constant 0 : index
    %c0_12 = arith.constant 0 : index
    %32 = vector.load %arg3[%c0_10, %c0_11, %c0_12] : memref<1x1x8xi32, #tpu.memory_space<vmem>>, vector<1x1x8xi32>
    %33 = vector.shape_cast %32 : vector<1x1x8xi32> to vector<1x8xi32>
    %c0_i32_13 = arith.constant 0 : i32
    %34 = vector.broadcast %c0_i32_13 : i32 to vector<1x8xi32>
    %35 = arith.cmpi eq, %33, %34 : vector<1x8xi32>
    %cst_14 = arith.constant -1.000000e+09 : f32
    %cst_15 = arith.constant 0.000000e+00 : f32
    %36 = vector.broadcast %cst_14 : f32 to vector<1x8xf32>
    %37 = vector.broadcast %cst_15 : f32 to vector<1x8xf32>
    %38 = arith.select %35, %36, %37 : vector<1x8xi1>, vector<1x8xf32>
    %cst_16 = arith.constant 0.000000e+00 : f32
    %39 = vector.broadcast %cst_16 : f32 to vector<8x32xf32>
    %c0_17 = arith.constant 0 : index
    %c0_18 = arith.constant 0 : index
    %c0_19 = arith.constant 0 : index
    %40 = vector.load %arg4[%c0_17, %c0_18, %c0_19] : memref<4x32x8xbf16, #tpu.memory_space<vmem>>, vector<1x32x8xbf16>
    %41 = vector.shape_cast %40 : vector<1x32x8xbf16> to vector<32x8xbf16>
    %cst_20 = arith.constant dense<0.000000e+00> : vector<8x8xf32>
    %42 = tpu.matmul %31, %41, %cst_20 {dimension_numbers = #tpu.dot_dimension_numbers<[1], [0], [0], [1], [0, 0, 1, 1], [], []>} : vector<8x32xbf16>, vector<32x8xbf16>, vector<8x8xf32> -> vector<8x8xf32>
    %c0_21 = arith.constant 0 : index
    %c0_22 = arith.constant 0 : index
    %c0_23 = arith.constant 0 : index
    %43 = vector.load %arg5[%c0_21, %c0_22, %c0_23] : memref<4x1x8xf32, #tpu.memory_space<vmem>>, vector<1x1x8xf32>
    %44 = vector.shape_cast %43 : vector<1x1x8xf32> to vector<1x8xf32>
    %45 = vector.broadcast %44 : vector<1x8xf32> to vector<8x8xf32>
    %46 = arith.addf %42, %45 : vector<8x8xf32>
    %cst_24 = arith.constant 0.353553385 : f32
    %47 = vector.broadcast %cst_24 : f32 to vector<8x8xf32>
    %48 = arith.mulf %46, %47 : vector<8x8xf32>
    %49 = arith.truncf %48 : vector<8x8xf32> to vector<8x8xbf16>
    %c0_25 = arith.constant 0 : index
    %c0_26 = arith.constant 0 : index
    %c0_27 = arith.constant 0 : index
    %50 = vector.load %arg21[%c0_25, %c0_26, %c0_27] : memref<4x8x8xbf16, #tpu.memory_space<vmem>>, vector<1x8x8xbf16>
    %51 = vector.shape_cast %50 : vector<1x8x8xbf16> to vector<8x8xbf16>
    %cst_28 = arith.constant dense<0.000000e+00> : vector<8x8xf32>
    %52 = tpu.matmul %49, %51, %cst_28 {dimension_numbers = #tpu.dot_dimension_numbers<[1], [1], [0], [0], [0, 0, 1, 0], [], []>} : vector<8x8xbf16>, vector<8x8xbf16>, vector<8x8xf32> -> vector<8x8xf32>
    %53 = vector.broadcast %38 : vector<1x8xf32> to vector<8x8xf32>
    %54 = arith.addf %52, %53 : vector<8x8xf32>
    %cst_29 = arith.constant dense<0xFF800000> : vector<8xf32>
    %55 = vector.multi_reduction <maximumf>, %54, %cst_29 [1] : vector<8x8xf32> to vector<8xf32>
    %56 = vector.shape_cast %55 : vector<8xf32> to vector<8x1xf32>
    %57 = vector.broadcast %56 : vector<8x1xf32> to vector<8x8xf32>
    %58 = arith.subf %54, %57 : vector<8x8xf32>
    %59 = math.exp %58 : vector<8x8xf32>
    %cst_30 = arith.constant dense<0.000000e+00> : vector<8xf32>
    %60 = vector.multi_reduction <add>, %59, %cst_30 [1] : vector<8x8xf32> to vector<8xf32>
    %61 = vector.shape_cast %60 : vector<8xf32> to vector<8x1xf32>
    %62 = arith.truncf %59 : vector<8x8xf32> to vector<8x8xbf16>
    %c0_31 = arith.constant 0 : index
    %c0_32 = arith.constant 0 : index
    %c0_33 = arith.constant 0 : index
    %63 = vector.load %arg22[%c0_31, %c0_32, %c0_33] : memref<4x8x8xbf16, #tpu.memory_space<vmem>>, vector<1x8x8xbf16>
    %64 = vector.shape_cast %63 : vector<1x8x8xbf16> to vector<8x8xbf16>
    %cst_34 = arith.constant dense<0.000000e+00> : vector<8x8xf32>
    %65 = tpu.matmul %62, %64, %cst_34 {dimension_numbers = #tpu.dot_dimension_numbers<[1], [0], [0], [1], [0, 0, 1, 1], [], []>} : vector<8x8xbf16>, vector<8x8xbf16>, vector<8x8xf32> -> vector<8x8xf32>
    %66 = tpu.reciprocal %61 {approx = true} : vector<8x1xf32> -> vector<8x1xf32>
    %67 = vector.broadcast %66 : vector<8x1xf32> to vector<8x8xf32>
    %68 = arith.mulf %65, %67 : vector<8x8xf32>
    %69 = arith.truncf %68 : vector<8x8xf32> to vector<8x8xbf16>
    %c0_35 = arith.constant 0 : index
    %c0_36 = arith.constant 0 : index
    %c0_37 = arith.constant 0 : index
    %70 = vector.load %arg10[%c0_35, %c0_36, %c0_37] : memref<4x8x32xbf16, #tpu.memory_space<vmem>>, vector<1x8x32xbf16>
    %71 = vector.shape_cast %70 : vector<1x8x32xbf16> to vector<8x32xbf16>
    %cst_38 = arith.constant dense<0.000000e+00> : vector<8x32xf32>
    %72 = tpu.matmul %69, %71, %cst_38 {dimension_numbers = #tpu.dot_dimension_numbers<[1], [0], [0], [1], [0, 0, 1, 1], [], []>} : vector<8x8xbf16>, vector<8x32xbf16>, vector<8x32xf32> -> vector<8x32xf32>
    %73 = arith.addf %39, %72 : vector<8x32xf32>
    %c1 = arith.constant 1 : index
    %c0_39 = arith.constant 0 : index
    %c0_40 = arith.constant 0 : index
    %74 = vector.load %arg4[%c1, %c0_39, %c0_40] : memref<4x32x8xbf16, #tpu.memory_space<vmem>>, vector<1x32x8xbf16>
    %75 = vector.shape_cast %74 : vector<1x32x8xbf16> to vector<32x8xbf16>
    %cst_41 = arith.constant dense<0.000000e+00> : vector<8x8xf32>
    %76 = tpu.matmul %31, %75, %cst_41 {dimension_numbers = #tpu.dot_dimension_numbers<[1], [0], [0], [1], [0, 0, 1, 1], [], []>} : vector<8x32xbf16>, vector<32x8xbf16>, vector<8x8xf32> -> vector<8x8xf32>
    %c1_42 = arith.constant 1 : index
    %c0_43 = arith.constant 0 : index
    %c0_44 = arith.constant 0 : index
    %77 = vector.load %arg5[%c1_42, %c0_43, %c0_44] : memref<4x1x8xf32, #tpu.memory_space<vmem>>, vector<1x1x8xf32>
    %78 = vector.shape_cast %77 : vector<1x1x8xf32> to vector<1x8xf32>
    %79 = vector.broadcast %78 : vector<1x8xf32> to vector<8x8xf32>
    %80 = arith.addf %76, %79 : vector<8x8xf32>
    %cst_45 = arith.constant 0.353553385 : f32
    %81 = vector.broadcast %cst_45 : f32 to vector<8x8xf32>
    %82 = arith.mulf %80, %81 : vector<8x8xf32>
    %83 = arith.truncf %82 : vector<8x8xf32> to vector<8x8xbf16>
    %c1_46 = arith.constant 1 : index
    %c0_47 = arith.constant 0 : index
    %c0_48 = arith.constant 0 : index
    %84 = vector.load %arg21[%c1_46, %c0_47, %c0_48] : memref<4x8x8xbf16, #tpu.memory_space<vmem>>, vector<1x8x8xbf16>
    %85 = vector.shape_cast %84 : vector<1x8x8xbf16> to vector<8x8xbf16>
    %cst_49 = arith.constant dense<0.000000e+00> : vector<8x8xf32>
    %86 = tpu.matmul %83, %85, %cst_49 {dimension_numbers = #tpu.dot_dimension_numbers<[1], [1], [0], [0], [0, 0, 1, 0], [], []>} : vector<8x8xbf16>, vector<8x8xbf16>, vector<8x8xf32> -> vector<8x8xf32>
    %87 = vector.broadcast %38 : vector<1x8xf32> to vector<8x8xf32>
    %88 = arith.addf %86, %87 : vector<8x8xf32>
    %cst_50 = arith.constant dense<0xFF800000> : vector<8xf32>
    %89 = vector.multi_reduction <maximumf>, %88, %cst_50 [1] : vector<8x8xf32> to vector<8xf32>
    %90 = vector.shape_cast %89 : vector<8xf32> to vector<8x1xf32>
    %91 = vector.broadcast %90 : vector<8x1xf32> to vector<8x8xf32>
    %92 = arith.subf %88, %91 : vector<8x8xf32>
    %93 = math.exp %92 : vector<8x8xf32>
    %cst_51 = arith.constant dense<0.000000e+00> : vector<8xf32>
    %94 = vector.multi_reduction <add>, %93, %cst_51 [1] : vector<8x8xf32> to vector<8xf32>
    %95 = vector.shape_cast %94 : vector<8xf32> to vector<8x1xf32>
    %96 = arith.truncf %93 : vector<8x8xf32> to vector<8x8xbf16>
    %c1_52 = arith.constant 1 : index
    %c0_53 = arith.constant 0 : index
    %c0_54 = arith.constant 0 : index
    %97 = vector.load %arg22[%c1_52, %c0_53, %c0_54] : memref<4x8x8xbf16, #tpu.memory_space<vmem>>, vector<1x8x8xbf16>
    %98 = vector.shape_cast %97 : vector<1x8x8xbf16> to vector<8x8xbf16>
    %cst_55 = arith.constant dense<0.000000e+00> : vector<8x8xf32>
    %99 = tpu.matmul %96, %98, %cst_55 {dimension_numbers = #tpu.dot_dimension_numbers<[1], [0], [0], [1], [0, 0, 1, 1], [], []>} : vector<8x8xbf16>, vector<8x8xbf16>, vector<8x8xf32> -> vector<8x8xf32>
    %100 = tpu.reciprocal %95 {approx = true} : vector<8x1xf32> -> vector<8x1xf32>
    %101 = vector.broadcast %100 : vector<8x1xf32> to vector<8x8xf32>
    %102 = arith.mulf %99, %101 : vector<8x8xf32>
    %103 = arith.truncf %102 : vector<8x8xf32> to vector<8x8xbf16>
    %c1_56 = arith.constant 1 : index
    %c0_57 = arith.constant 0 : index
    %c0_58 = arith.constant 0 : index
    %104 = vector.load %arg10[%c1_56, %c0_57, %c0_58] : memref<4x8x32xbf16, #tpu.memory_space<vmem>>, vector<1x8x32xbf16>
    %105 = vector.shape_cast %104 : vector<1x8x32xbf16> to vector<8x32xbf16>
    %cst_59 = arith.constant dense<0.000000e+00> : vector<8x32xf32>
    %106 = tpu.matmul %103, %105, %cst_59 {dimension_numbers = #tpu.dot_dimension_numbers<[1], [0], [0], [1], [0, 0, 1, 1], [], []>} : vector<8x8xbf16>, vector<8x32xbf16>, vector<8x32xf32> -> vector<8x32xf32>
    %107 = arith.addf %73, %106 : vector<8x32xf32>
    %c2 = arith.constant 2 : index
    %c0_60 = arith.constant 0 : index
    %c0_61 = arith.constant 0 : index
    %108 = vector.load %arg4[%c2, %c0_60, %c0_61] : memref<4x32x8xbf16, #tpu.memory_space<vmem>>, vector<1x32x8xbf16>
    %109 = vector.shape_cast %108 : vector<1x32x8xbf16> to vector<32x8xbf16>
    %cst_62 = arith.constant dense<0.000000e+00> : vector<8x8xf32>
    %110 = tpu.matmul %31, %109, %cst_62 {dimension_numbers = #tpu.dot_dimension_numbers<[1], [0], [0], [1], [0, 0, 1, 1], [], []>} : vector<8x32xbf16>, vector<32x8xbf16>, vector<8x8xf32> -> vector<8x8xf32>
    %c2_63 = arith.constant 2 : index
    %c0_64 = arith.constant 0 : index
    %c0_65 = arith.constant 0 : index
    %111 = vector.load %arg5[%c2_63, %c0_64, %c0_65] : memref<4x1x8xf32, #tpu.memory_space<vmem>>, vector<1x1x8xf32>
    %112 = vector.shape_cast %111 : vector<1x1x8xf32> to vector<1x8xf32>
    %113 = vector.broadcast %112 : vector<1x8xf32> to vector<8x8xf32>
    %114 = arith.addf %110, %113 : vector<8x8xf32>
    %cst_66 = arith.constant 0.353553385 : f32
    %115 = vector.broadcast %cst_66 : f32 to vector<8x8xf32>
    %116 = arith.mulf %114, %115 : vector<8x8xf32>
    %117 = arith.truncf %116 : vector<8x8xf32> to vector<8x8xbf16>
    %c2_67 = arith.constant 2 : index
    %c0_68 = arith.constant 0 : index
    %c0_69 = arith.constant 0 : index
    %118 = vector.load %arg21[%c2_67, %c0_68, %c0_69] : memref<4x8x8xbf16, #tpu.memory_space<vmem>>, vector<1x8x8xbf16>
    %119 = vector.shape_cast %118 : vector<1x8x8xbf16> to vector<8x8xbf16>
    %cst_70 = arith.constant dense<0.000000e+00> : vector<8x8xf32>
    %120 = tpu.matmul %117, %119, %cst_70 {dimension_numbers = #tpu.dot_dimension_numbers<[1], [1], [0], [0], [0, 0, 1, 0], [], []>} : vector<8x8xbf16>, vector<8x8xbf16>, vector<8x8xf32> -> vector<8x8xf32>
    %121 = vector.broadcast %38 : vector<1x8xf32> to vector<8x8xf32>
    %122 = arith.addf %120, %121 : vector<8x8xf32>
    %cst_71 = arith.constant dense<0xFF800000> : vector<8xf32>
    %123 = vector.multi_reduction <maximumf>, %122, %cst_71 [1] : vector<8x8xf32> to vector<8xf32>
    %124 = vector.shape_cast %123 : vector<8xf32> to vector<8x1xf32>
    %125 = vector.broadcast %124 : vector<8x1xf32> to vector<8x8xf32>
    %126 = arith.subf %122, %125 : vector<8x8xf32>
    %127 = math.exp %126 : vector<8x8xf32>
    %cst_72 = arith.constant dense<0.000000e+00> : vector<8xf32>
    %128 = vector.multi_reduction <add>, %127, %cst_72 [1] : vector<8x8xf32> to vector<8xf32>
    %129 = vector.shape_cast %128 : vector<8xf32> to vector<8x1xf32>
    %130 = arith.truncf %127 : vector<8x8xf32> to vector<8x8xbf16>
    %c2_73 = arith.constant 2 : index
    %c0_74 = arith.constant 0 : index
    %c0_75 = arith.constant 0 : index
    %131 = vector.load %arg22[%c2_73, %c0_74, %c0_75] : memref<4x8x8xbf16, #tpu.memory_space<vmem>>, vector<1x8x8xbf16>
    %132 = vector.shape_cast %131 : vector<1x8x8xbf16> to vector<8x8xbf16>
    %cst_76 = arith.constant dense<0.000000e+00> : vector<8x8xf32>
    %133 = tpu.matmul %130, %132, %cst_76 {dimension_numbers = #tpu.dot_dimension_numbers<[1], [0], [0], [1], [0, 0, 1, 1], [], []>} : vector<8x8xbf16>, vector<8x8xbf16>, vector<8x8xf32> -> vector<8x8xf32>
    %134 = tpu.reciprocal %129 {approx = true} : vector<8x1xf32> -> vector<8x1xf32>
    %135 = vector.broadcast %134 : vector<8x1xf32> to vector<8x8xf32>
    %136 = arith.mulf %133, %135 : vector<8x8xf32>
    %137 = arith.truncf %136 : vector<8x8xf32> to vector<8x8xbf16>
    %c2_77 = arith.constant 2 : index
    %c0_78 = arith.constant 0 : index
    %c0_79 = arith.constant 0 : index
    %138 = vector.load %arg10[%c2_77, %c0_78, %c0_79] : memref<4x8x32xbf16, #tpu.memory_space<vmem>>, vector<1x8x32xbf16>
    %139 = vector.shape_cast %138 : vector<1x8x32xbf16> to vector<8x32xbf16>
    %cst_80 = arith.constant dense<0.000000e+00> : vector<8x32xf32>
    %140 = tpu.matmul %137, %139, %cst_80 {dimension_numbers = #tpu.dot_dimension_numbers<[1], [0], [0], [1], [0, 0, 1, 1], [], []>} : vector<8x8xbf16>, vector<8x32xbf16>, vector<8x32xf32> -> vector<8x32xf32>
    %141 = arith.addf %107, %140 : vector<8x32xf32>
    %c3 = arith.constant 3 : index
    %c0_81 = arith.constant 0 : index
    %c0_82 = arith.constant 0 : index
    %142 = vector.load %arg4[%c3, %c0_81, %c0_82] : memref<4x32x8xbf16, #tpu.memory_space<vmem>>, vector<1x32x8xbf16>
    %143 = vector.shape_cast %142 : vector<1x32x8xbf16> to vector<32x8xbf16>
    %cst_83 = arith.constant dense<0.000000e+00> : vector<8x8xf32>
    %144 = tpu.matmul %31, %143, %cst_83 {dimension_numbers = #tpu.dot_dimension_numbers<[1], [0], [0], [1], [0, 0, 1, 1], [], []>} : vector<8x32xbf16>, vector<32x8xbf16>, vector<8x8xf32> -> vector<8x8xf32>
    %c3_84 = arith.constant 3 : index
    %c0_85 = arith.constant 0 : index
    %c0_86 = arith.constant 0 : index
    %145 = vector.load %arg5[%c3_84, %c0_85, %c0_86] : memref<4x1x8xf32, #tpu.memory_space<vmem>>, vector<1x1x8xf32>
    %146 = vector.shape_cast %145 : vector<1x1x8xf32> to vector<1x8xf32>
    %147 = vector.broadcast %146 : vector<1x8xf32> to vector<8x8xf32>
    %148 = arith.addf %144, %147 : vector<8x8xf32>
    %cst_87 = arith.constant 0.353553385 : f32
    %149 = vector.broadcast %cst_87 : f32 to vector<8x8xf32>
    %150 = arith.mulf %148, %149 : vector<8x8xf32>
    %151 = arith.truncf %150 : vector<8x8xf32> to vector<8x8xbf16>
    %c3_88 = arith.constant 3 : index
    %c0_89 = arith.constant 0 : index
    %c0_90 = arith.constant 0 : index
    %152 = vector.load %arg21[%c3_88, %c0_89, %c0_90] : memref<4x8x8xbf16, #tpu.memory_space<vmem>>, vector<1x8x8xbf16>
    %153 = vector.shape_cast %152 : vector<1x8x8xbf16> to vector<8x8xbf16>
    %cst_91 = arith.constant dense<0.000000e+00> : vector<8x8xf32>
    %154 = tpu.matmul %151, %153, %cst_91 {dimension_numbers = #tpu.dot_dimension_numbers<[1], [1], [0], [0], [0, 0, 1, 0], [], []>} : vector<8x8xbf16>, vector<8x8xbf16>, vector<8x8xf32> -> vector<8x8xf32>
    %155 = vector.broadcast %38 : vector<1x8xf32> to vector<8x8xf32>
    %156 = arith.addf %154, %155 : vector<8x8xf32>
    %cst_92 = arith.constant dense<0xFF800000> : vector<8xf32>
    %157 = vector.multi_reduction <maximumf>, %156, %cst_92 [1] : vector<8x8xf32> to vector<8xf32>
    %158 = vector.shape_cast %157 : vector<8xf32> to vector<8x1xf32>
    %159 = vector.broadcast %158 : vector<8x1xf32> to vector<8x8xf32>
    %160 = arith.subf %156, %159 : vector<8x8xf32>
    %161 = math.exp %160 : vector<8x8xf32>
    %cst_93 = arith.constant dense<0.000000e+00> : vector<8xf32>
    %162 = vector.multi_reduction <add>, %161, %cst_93 [1] : vector<8x8xf32> to vector<8xf32>
    %163 = vector.shape_cast %162 : vector<8xf32> to vector<8x1xf32>
    %164 = arith.truncf %161 : vector<8x8xf32> to vector<8x8xbf16>
    %c3_94 = arith.constant 3 : index
    %c0_95 = arith.constant 0 : index
    %c0_96 = arith.constant 0 : index
    %165 = vector.load %arg22[%c3_94, %c0_95, %c0_96] : memref<4x8x8xbf16, #tpu.memory_space<vmem>>, vector<1x8x8xbf16>
    %166 = vector.shape_cast %165 : vector<1x8x8xbf16> to vector<8x8xbf16>
    %cst_97 = arith.constant dense<0.000000e+00> : vector<8x8xf32>
    %167 = tpu.matmul %164, %166, %cst_97 {dimension_numbers = #tpu.dot_dimension_numbers<[1], [0], [0], [1], [0, 0, 1, 1], [], []>} : vector<8x8xbf16>, vector<8x8xbf16>, vector<8x8xf32> -> vector<8x8xf32>
    %168 = tpu.reciprocal %163 {approx = true} : vector<8x1xf32> -> vector<8x1xf32>
    %169 = vector.broadcast %168 : vector<8x1xf32> to vector<8x8xf32>
    %170 = arith.mulf %167, %169 : vector<8x8xf32>
    %171 = arith.truncf %170 : vector<8x8xf32> to vector<8x8xbf16>
    %c3_98 = arith.constant 3 : index
    %c0_99 = arith.constant 0 : index
    %c0_100 = arith.constant 0 : index
    %172 = vector.load %arg10[%c3_98, %c0_99, %c0_100] : memref<4x8x32xbf16, #tpu.memory_space<vmem>>, vector<1x8x32xbf16>
    %173 = vector.shape_cast %172 : vector<1x8x32xbf16> to vector<8x32xbf16>
    %cst_101 = arith.constant dense<0.000000e+00> : vector<8x32xf32>
    %174 = tpu.matmul %171, %173, %cst_101 {dimension_numbers = #tpu.dot_dimension_numbers<[1], [0], [0], [1], [0, 0, 1, 1], [], []>} : vector<8x8xbf16>, vector<8x32xbf16>, vector<8x32xf32> -> vector<8x32xf32>
    %175 = arith.addf %141, %174 : vector<8x32xf32>
    %176 = arith.addf %9, %175 : vector<8x32xf32>
    %c0_102 = arith.constant 0 : index
    %c0_103 = arith.constant 0 : index
    %177 = vector.load %arg11[%c0_102, %c0_103] : memref<1x32xf32, #tpu.memory_space<vmem>>, vector<1x32xf32>
    %178 = vector.broadcast %177 : vector<1x32xf32> to vector<8x32xf32>
    %179 = arith.addf %176, %178 : vector<8x32xf32>
    %c0_104 = arith.constant 0 : index
    %c0_105 = arith.constant 0 : index
    %180 = vector.load %arg18[%c0_104, %c0_105] : memref<1x32xf32, #tpu.memory_space<vmem>>, vector<1x32xf32>
    %c0_106 = arith.constant 0 : index
    %c0_107 = arith.constant 0 : index
    %181 = vector.load %arg19[%c0_106, %c0_107] : memref<1x32xf32, #tpu.memory_space<vmem>>, vector<1x32xf32>
    %cst_108 = arith.constant dense<0.000000e+00> : vector<8xf32>
    %182 = vector.multi_reduction <add>, %179, %cst_108 [1] : vector<8x32xf32> to vector<8xf32>
    %183 = vector.shape_cast %182 : vector<8xf32> to vector<8x1xf32>
    %cst_109 = arith.constant 3.200000e+01 : f32
    %184 = vector.broadcast %cst_109 : f32 to vector<8x1xf32>
    %185 = arith.divf %183, %184 : vector<8x1xf32>
    %186 = vector.broadcast %185 : vector<8x1xf32> to vector<8x32xf32>
    %187 = arith.subf %179, %186 : vector<8x32xf32>
    %188 = arith.mulf %187, %187 : vector<8x32xf32>
    %cst_110 = arith.constant dense<0.000000e+00> : vector<8xf32>
    %189 = vector.multi_reduction <add>, %188, %cst_110 [1] : vector<8x32xf32> to vector<8xf32>
    %190 = vector.shape_cast %189 : vector<8xf32> to vector<8x1xf32>
    %cst_111 = arith.constant 0.0322580636 : f32
    %191 = vector.broadcast %cst_111 : f32 to vector<8x1xf32>
    %192 = arith.mulf %190, %191 : vector<8x1xf32>
    %193 = math.sqrt %192 : vector<8x1xf32>
    %cst_112 = arith.constant 9.99999997E-7 : f32
    %194 = vector.broadcast %cst_112 : f32 to vector<8x1xf32>
    %195 = arith.addf %193, %194 : vector<8x1xf32>
    %196 = tpu.reciprocal %195 {approx = true} : vector<8x1xf32> -> vector<8x1xf32>
    %197 = vector.broadcast %180 : vector<1x32xf32> to vector<8x32xf32>
    %198 = arith.mulf %197, %187 : vector<8x32xf32>
    %199 = vector.broadcast %196 : vector<8x1xf32> to vector<8x32xf32>
    %200 = arith.mulf %198, %199 : vector<8x32xf32>
    %201 = vector.broadcast %181 : vector<1x32xf32> to vector<8x32xf32>
    %202 = arith.addf %200, %201 : vector<8x32xf32>
    %203 = arith.truncf %202 : vector<8x32xf32> to vector<8x32xbf16>
    %c0_113 = arith.constant 0 : index
    %c0_114 = arith.constant 0 : index
    %204 = vector.load %arg14[%c0_113, %c0_114] : memref<32x64xbf16, #tpu.memory_space<vmem>>, vector<32x64xbf16>
    %cst_115 = arith.constant dense<0.000000e+00> : vector<8x64xf32>
    %205 = tpu.matmul %203, %204, %cst_115 {dimension_numbers = #tpu.dot_dimension_numbers<[1], [0], [0], [1], [0, 0, 1, 1], [], []>} : vector<8x32xbf16>, vector<32x64xbf16>, vector<8x64xf32> -> vector<8x64xf32>
    %c0_116 = arith.constant 0 : index
    %c0_117 = arith.constant 0 : index
    %206 = vector.load %arg15[%c0_116, %c0_117] : memref<1x64xf32, #tpu.memory_space<vmem>>, vector<1x64xf32>
    %207 = vector.broadcast %206 : vector<1x64xf32> to vector<8x64xf32>
    %208 = arith.addf %205, %207 : vector<8x64xf32>
    %cst_118 = arith.constant 0.000000e+00 : f32
    %209 = vector.broadcast %cst_118 : f32 to vector<8x64xf32>
    %210 = arith.maximumf %208, %209 : vector<8x64xf32>
    %211 = arith.truncf %210 : vector<8x64xf32> to vector<8x64xbf16>
    %c0_119 = arith.constant 0 : index
    %c0_120 = arith.constant 0 : index
    %212 = vector.load %arg16[%c0_119, %c0_120] : memref<64x32xbf16, #tpu.memory_space<vmem>>, vector<64x32xbf16>
    %cst_121 = arith.constant dense<0.000000e+00> : vector<8x32xf32>
    %213 = tpu.matmul %211, %212, %cst_121 {dimension_numbers = #tpu.dot_dimension_numbers<[1], [0], [0], [1], [0, 0, 1, 1], [], []>} : vector<8x64xbf16>, vector<64x32xbf16>, vector<8x32xf32> -> vector<8x32xf32>
    %c0_122 = arith.constant 0 : index
    %c0_123 = arith.constant 0 : index
    %214 = vector.load %arg17[%c0_122, %c0_123] : memref<1x32xf32, #tpu.memory_space<vmem>>, vector<1x32xf32>
    %215 = vector.broadcast %214 : vector<1x32xf32> to vector<8x32xf32>
    %216 = arith.addf %213, %215 : vector<8x32xf32>
    %217 = arith.addf %179, %216 : vector<8x32xf32>
    %c0_124 = arith.constant 0 : index
    %c0_125 = arith.constant 0 : index
    %c0_126 = arith.constant 0 : index
    %218 = vector.load %arg20[%c0_124, %c0_125, %c0_126] : memref<1x8x32xf32, #tpu.memory_space<vmem>>, vector<1x8x32xf32>
    %219 = vector.shape_cast %218 : vector<1x8x32xf32> to vector<8x32xf32>
    %220 = vector.shape_cast %217 : vector<8x32xf32> to vector<1x8x32xf32>
    tpu.vector_store %arg20[%c0_124, %c0_125, %c0_126], %220 {strides = array<i32>} : memref<1x8x32xf32, #tpu.memory_space<vmem>>, vector<1x8x32xf32>,
    return
  }
  func.func @transform_0(%arg0: i32, %arg1: i32) -> (i32, i32, i32) {
    %c0_i32 = arith.constant 0 : i32
    %c0_i32_0 = arith.constant 0 : i32
    %c0_i32_1 = arith.constant 0 : i32
    return %arg0, %c0_i32, %c0_i32_0 : i32, i32, i32
  }
  func.func @transform_1(%arg0: i32, %arg1: i32) -> (i32, i32, i32) {
    %c0_i32 = arith.constant 0 : i32
    %c0_i32_0 = arith.constant 0 : i32
    %c0_i32_1 = arith.constant 0 : i32
    return %arg0, %c0_i32, %c0_i32_0 : i32, i32, i32
  }
  func.func @transform_2(%arg0: i32, %arg1: i32) -> (i32, i32, i32) {
    %c0_i32 = arith.constant 0 : i32
    %c0_i32_0 = arith.constant 0 : i32
    %c0_i32_1 = arith.constant 0 : i32
    %c0_i32_2 = arith.constant 0 : i32
    return %c0_i32, %c0_i32_0, %c0_i32_1 : i32, i32, i32
  }
  func.func @transform_3(%arg0: i32, %arg1: i32) -> (i32, i32, i32) {
    %c0_i32 = arith.constant 0 : i32
    %c0_i32_0 = arith.constant 0 : i32
    %c0_i32_1 = arith.constant 0 : i32
    %c0_i32_2 = arith.constant 0 : i32
    return %c0_i32, %c0_i32_0, %c0_i32_1 : i32, i32, i32
  }
  func.func @transform_4(%arg0: i32, %arg1: i32) -> (i32, i32, i32) {
    %c0_i32 = arith.constant 0 : i32
    %c0_i32_0 = arith.constant 0 : i32
    %c0_i32_1 = arith.constant 0 : i32
    %c0_i32_2 = arith.constant 0 : i32
    return %c0_i32, %c0_i32_0, %c0_i32_1 : i32, i32, i32
  }
  func.func @transform_5(%arg0: i32, %arg1: i32) -> (i32, i32, i32) {
    %c0_i32 = arith.constant 0 : i32
    %c0_i32_0 = arith.constant 0 : i32
    %c0_i32_1 = arith.constant 0 : i32
    %c0_i32_2 = arith.constant 0 : i32
    return %c0_i32, %c0_i32_0, %c0_i32_1 : i32, i32, i32
  }
  func.func @transform_6(%arg0: i32, %arg1: i32) -> (i32, i32, i32) {
    %c0_i32 = arith.constant 0 : i32
    %c0_i32_0 = arith.constant 0 : i32
    %c0_i32_1 = arith.constant 0 : i32
    %c0_i32_2 = arith.constant 0 : i32
    return %c0_i32, %c0_i32_0, %c0_i32_1 : i32, i32, i32
  }
  func.func @transform_7(%arg0: i32, %arg1: i32) -> (i32, i32, i32) {
    %c0_i32 = arith.constant 0 : i32
    %c0_i32_0 = arith.constant 0 : i32
    %c0_i32_1 = arith.constant 0 : i32
    %c0_i32_2 = arith.constant 0 : i32
    return %c0_i32, %c0_i32_0, %c0_i32_1 : i32, i32, i32
  }
  func.func @transform_8(%arg0: i32, %arg1: i32) -> (i32, i32, i32) {
    %c0_i32 = arith.constant 0 : i32
    %c0_i32_0 = arith.constant 0 : i32
    %c0_i32_1 = arith.constant 0 : i32
    %c0_i32_2 = arith.constant 0 : i32
    return %c0_i32, %c0_i32_0, %c0_i32_1 : i32, i32, i32
  }
  func.func @transform_9(%arg0: i32, %arg1: i32) -> (i32, i32) {
    %c0_i32 = arith.constant 0 : i32
    %c0_i32_0 = arith.constant 0 : i32
    %c0_i32_1 = arith.constant 0 : i32
    return %c0_i32, %c0_i32_0 : i32, i32
  }
  func.func @transform_10(%arg0: i32, %arg1: i32) -> (i32, i32) {
    %c0_i32 = arith.constant 0 : i32
    %c0_i32_0 = arith.constant 0 : i32
    %c0_i32_1 = arith.constant 0 : i32
    return %c0_i32, %c0_i32_0 : i32, i32
  }
  func.func @transform_11(%arg0: i32, %arg1: i32) -> (i32, i32) {
    %c0_i32 = arith.constant 0 : i32
    %c0_i32_0 = arith.constant 0 : i32
    %c0_i32_1 = arith.constant 0 : i32
    return %c0_i32, %c0_i32_0 : i32, i32
  }
  func.func @transform_12(%arg0: i32, %arg1: i32) -> (i32, i32) {
    %c0_i32 = arith.constant 0 : i32
    %c0_i32_0 = arith.constant 0 : i32
    %c0_i32_1 = arith.constant 0 : i32
    return %c0_i32, %c0_i32_0 : i32, i32
  }
  func.func @transform_13(%arg0: i32, %arg1: i32) -> (i32, i32) {
    %c0_i32 = arith.constant 0 : i32
    %c0_i32_0 = arith.constant 0 : i32
    %c0_i32_1 = arith.constant 0 : i32
    return %c0_i32, %c0_i32_0 : i32, i32
  }
  func.func @transform_14(%arg0: i32, %arg1: i32) -> (i32, i32) {
    %c0_i32 = arith.constant 0 : i32
    %c0_i32_0 = arith.constant 0 : i32
    %c0_i32_1 = arith.constant 0 : i32
    return %c0_i32, %c0_i32_0 : i32, i32
  }
  func.func @transform_15(%arg0: i32, %arg1: i32) -> (i32, i32) {
    %c0_i32 = arith.constant 0 : i32
    %c0_i32_0 = arith.constant 0 : i32
    %c0_i32_1 = arith.constant 0 : i32
    return %c0_i32, %c0_i32_0 : i32, i32
  }
  func.func @transform_16(%arg0: i32, %arg1: i32) -> (i32, i32) {
    %c0_i32 = arith.constant 0 : i32
    %c0_i32_0 = arith.constant 0 : i32
    %c0_i32_1 = arith.constant 0 : i32
    return %c0_i32, %c0_i32_0 : i32, i32
  }
  func.func @transform_17(%arg0: i32, %arg1: i32) -> (i32, i32) {
    %c0_i32 = arith.constant 0 : i32
    %c0_i32_0 = arith.constant 0 : i32
    %c0_i32_1 = arith.constant 0 : i32
    return %c0_i32, %c0_i32_0 : i32, i32
  }
  func.func @transform_18(%arg0: i32, %arg1: i32) -> (i32, i32, i32) {
    %c0_i32 = arith.constant 0 : i32
    %c0_i32_0 = arith.constant 0 : i32
    return %arg0, %arg1, %c0_i32 : i32, i32, i32
  }
}

</mosaic_0001>

<llo_original>
// kernel: tpu_custom_call.1
$region0: #{tpu_custom_call.1}
  #allocation0 [shape = 'u32[]', space=smem, size = 0x4, offset = 0x4, fixed_abs, tag = 'smem constant byte address 0x4 - core index']
  #allocation1 [shape = 'u32[144,128]{1,0:T(1,128)}', space=vmem, size = 0x12000, scoped, tag = 'internal scratch']
  #allocation2 [shape = 'bf16[4,8,8]{2,1,0:T(8,128)(2,1)}', space=vmem, size = 0x2000, scoped, tag = 'scratch operand']
  #allocation3 [shape = 'bf16[4,8,8]{2,1,0:T(8,128)(2,1)}', space=vmem, size = 0x2000, scoped, tag = 'scratch operand']
  %s0 = inlined_call_operand.vmem [shape: f32[2,8,32], index: 0, kind: input, shape index: {}]
  %s1 = inlined_call_operand.vmem [shape: s32[2,1,8], index: 1, kind: input, shape index: {}]
  %s2 = inlined_call_operand.vmem [shape: bf16[4,32,8], index: 2, kind: input, shape index: {}]
  %s3 = inlined_call_operand.vmem [shape: f32[4,1,8], index: 3, kind: input, shape index: {}]
  %s4 = inlined_call_operand.vmem [shape: bf16[4,32,8], index: 4, kind: input, shape index: {}]
  %s5 = inlined_call_operand.vmem [shape: f32[4,1,8], index: 5, kind: input, shape index: {}]
  %s6 = inlined_call_operand.vmem [shape: bf16[4,32,8], index: 6, kind: input, shape index: {}]
  %s7 = inlined_call_operand.vmem [shape: f32[4,1,8], index: 7, kind: input, shape index: {}]
  %s8 = inlined_call_operand.vmem [shape: bf16[4,8,32], index: 8, kind: input, shape index: {}]
  %s9 = inlined_call_operand.vmem [shape: f32[1,32], index: 9, kind: input, shape index: {}]
  %s10 = inlined_call_operand.vmem [shape: f32[1,32], index: 10, kind: input, shape index: {}]
  %s11 = inlined_call_operand.vmem [shape: f32[1,32], index: 11, kind: input, shape index: {}]
  %s12 = inlined_call_operand.vmem [shape: bf16[32,64], index: 12, kind: input, shape index: {}]
  %s13 = inlined_call_operand.vmem [shape: f32[1,64], index: 13, kind: input, shape index: {}]
  %s14 = inlined_call_operand.vmem [shape: bf16[64,32], index: 14, kind: input, shape index: {}]
  %s15 = inlined_call_operand.vmem [shape: f32[1,32], index: 15, kind: input, shape index: {}]
  %s16 = inlined_call_operand.vmem [shape: f32[1,32], index: 16, kind: input, shape index: {}]
  %s17 = inlined_call_operand.vmem [shape: f32[1,32], index: 17, kind: input, shape index: {}]
  %s18 = inlined_call_operand.hbm [shape: f32[2,8,32], index: 18, kind: output, shape index: {}]
  %s19 = sld [smem:[#allocation0]]
  $region109: #{tpu_custom_call.1} parent=0
    _
  %s21 = ssub.s32 1, %s19
  %s22 = scalar_select 0, %s21, %s19
  $region1: #{tpu_custom_call.1} parent=0
    #allocation4 [shape = 'u8[8192]{0}', space=vmem, size = 0x2000, scoped, tag = 'output window, operand 0']
    #allocation5 [shape = 's32[2]{0}', space=sflag, size = 0x8, scoped, tag = 'scoped memory for tpu_custom_call.1']
    %23 = vsyncpa [#allocation5], 0
    %s24 = scalar_lea.sflag [#allocation5], 1
    %25 = vsyncpa %s24, 0
    loop: start=0, step=1, limit=4
    $region2: #{tpu_custom_call.1} parent=1 // loop_pre_header
      _
    $region3: #{tpu_custom_call.1} parent=1 // loop_header
      %s27 = sphi 0, %s31
      %p28 = scmp.ge.s32.totalorder %s27, 4
      %s34 = sphi 0, %s46
      %s35 = sphi 0, %s42
      %s36 = sphi 0, %s34
      %s37 = sphi 0, %s35
      %s38 = sphi 0, %s36
      %s39 = sphi 0, %s37
      %s49 = sphi 0, %s51
      %s52 = sphi 0, %s49
      %s53 = sphi 0, %s52
      %s69 = sphi 0, %s53
      %s75 = sphi 0, %s77
      %s78 = sphi 0, %s75
      %s79 = sphi 0, %s78
      %s95 = sphi 0, %s79
      %s99 = sphi 0, %s99
      %s101 = sphi 0, %s99
      %s102 = sphi 0, %s101
      %s116 = sphi 0, %s102
      %s120 = sphi 0, %s120
      %s122 = sphi 0, %s120
      %s123 = sphi 0, %s122
      %s137 = sphi 0, %s123
      %s141 = sphi 0, %s141
      %s143 = sphi 0, %s141
      %s144 = sphi 0, %s143
      %s158 = sphi 0, %s144
      %s162 = sphi 0, %s162
      %s164 = sphi 0, %s162
      %s165 = sphi 0, %s164
      %s179 = sphi 0, %s165
      %s183 = sphi 0, %s183
      %s185 = sphi 0, %s183
      %s186 = sphi 0, %s185
      %s200 = sphi 0, %s186
      %s204 = sphi 0, %s204
      %s206 = sphi 0, %s204
      %s207 = sphi 0, %s206
      %s221 = sphi 0, %s207
      %s225 = sphi 0, %s225
      %s227 = sphi 0, %s225
      %s228 = sphi 0, %s227
      %s242 = sphi 0, %s228
      %s246 = sphi 0, %s246
      %s248 = sphi 0, %s246
      %s249 = sphi 0, %s248
      %s263 = sphi 0, %s249
      %s267 = sphi 0, %s267
      %s269 = sphi 0, %s267
      %s270 = sphi 0, %s269
      %s284 = sphi 0, %s270
      %s288 = sphi 0, %s288
      %s290 = sphi 0, %s288
      %s291 = sphi 0, %s290
      %s305 = sphi 0, %s291
      %s309 = sphi 0, %s309
      %s311 = sphi 0, %s309
      %s312 = sphi 0, %s311
      %s326 = sphi 0, %s312
      %s330 = sphi 0, %s330
      %s332 = sphi 0, %s330
      %s333 = sphi 0, %s332
      %s347 = sphi 0, %s333
      %s351 = sphi 0, %s351
      %s353 = sphi 0, %s351
      %s354 = sphi 0, %s353
      %s368 = sphi 0, %s354
      %s372 = sphi 0, %s372
      %s374 = sphi 0, %s372
      %s375 = sphi 0, %s374
      %s389 = sphi 0, %s375
      %s393 = sphi 0, %s393
      %s395 = sphi 0, %s393
      %s396 = sphi 0, %s395
      %s410 = sphi 0, %s396
      %s414 = sphi 0, %s414
      %s416 = sphi 0, %s414
      %s417 = sphi 0, %s416
      %s431 = sphi 0, %s417
      %s439 = sphi 0, %s441
      %s442 = sphi 0, %s439
      %s443 = sphi 0, %s442
      %s459 = sphi 0, %s443
    $region4: #{tpu_custom_call.1} parent=1 // loop_header_branch
      %30 = sbr.rel (%p28) target = $region8
    $region5: #{tpu_custom_call.1} parent=1 // loop_body
      %s32 = ssub.s32 %s27, 1
      %s33 = ssub.s32 %s27, 2
      %s40 = sadd.s32 1, %s35
      %p41 = scmp.ge.s32.totalorder %s40, 1
      %s42 = scalar_select %p41, 0, %s40
      %s43 = sadd.s32 1, %s34
      %s44 = scalar_select %p41, %s43, %s34
      %p45 = scmp.ge.s32.totalorder %s44, 2
      %s46 = scalar_select %p45, 0, %s44
      %s47 = ssub.s32 %s34, %s46
      %p48 = scmp.eq.s32.totalorder %s47, 0
      %s50 = sadd.s32 %s49, 1
      %s51 = scalar_select %p48, %s49, %s50
      %p54 = pneg %p48
      %p55 = scmp.eq.s32.totalorder %s27, 1
      %p56 = por %p54, %p55
      %p57 = scmp.ne.s32.totalorder %s49, %s52
      %p58 = scmp.eq.s32.totalorder %s27, 0
      %p59 = por %p57, %p58
      %p60 = scmp.ne.s32.totalorder %s49, %s52
      %p61 = scmp.eq.s32.totalorder %s32, 1
      %p62 = por %p60, %p61
      %p63 = scmp.ne.s32.totalorder %s52, %s53
      %p64 = scmp.eq.s32.totalorder %s32, 0
      %p65 = por %p63, %p64
      %p66 = scmp.ne.s32.totalorder %s52, %s53
      %p67 = scmp.eq.s32.totalorder %s33, 1
      %p68 = por %p66, %p67
      %p70 = scmp.ne.s32.totalorder %s53, %s69
      %p71 = scmp.eq.s32.totalorder %s33, 0
      %p72 = por %p70, %p71
      %s73 = ssub.s32 %s34, %s46
      %p74 = scmp.eq.s32.totalorder %s73, 0
      %s76 = sadd.s32 %s75, 1
      %s77 = scalar_select %p74, %s75, %s76
      %p80 = pneg %p74
      %p81 = scmp.eq.s32.totalorder %s27, 1
      %p82 = por %p80, %p81
      %p83 = scmp.ne.s32.totalorder %s75, %s78
      %p84 = scmp.eq.s32.totalorder %s27, 0
      %p85 = por %p83, %p84
      %p86 = scmp.ne.s32.totalorder %s75, %s78
      %p87 = scmp.eq.s32.totalorder %s32, 1
      %p88 = por %p86, %p87
      %p89 = scmp.ne.s32.totalorder %s78, %s79
      %p90 = scmp.eq.s32.totalorder %s32, 0
      %p91 = por %p89, %p90
      %p92 = scmp.ne.s32.totalorder %s78, %s79
      %p93 = scmp.eq.s32.totalorder %s33, 1
      %p94 = por %p92, %p93
      %p96 = scmp.ne.s32.totalorder %s79, %s95
      %p97 = scmp.eq.s32.totalorder %s33, 0
      %p98 = por %p96, %p97
      %s100 = sadd.s32 %s99, 1
      %p103 = scmp.eq.s32.totalorder %s27, 1
      %p104 = scmp.ne.s32.totalorder %s99, %s101
      %p105 = scmp.eq.s32.totalorder %s27, 0
      %p106 = por %p104, %p105
      %p107 = scmp.ne.s32.totalorder %s99, %s101
      %p108 = scmp.eq.s32.totalorder %s32, 1
      %p109 = por %p107, %p108
      %p110 = scmp.ne.s32.totalorder %s101, %s102
      %p111 = scmp.eq.s32.totalorder %s32, 0
      %p112 = por %p110, %p111
      %p113 = scmp.ne.s32.totalorder %s101, %s102
      %p114 = scmp.eq.s32.totalorder %s33, 1
      %p115 = por %p113, %p114
      %p117 = scmp.ne.s32.totalorder %s102, %s116
      %p118 = scmp.eq.s32.totalorder %s33, 0
      %p119 = por %p117, %p118
      %s121 = sadd.s32 %s120, 1
      %p124 = scmp.eq.s32.totalorder %s27, 1
      %p125 = scmp.ne.s32.totalorder %s120, %s122
      %p126 = scmp.eq.s32.totalorder %s27, 0
      %p127 = por %p125, %p126
      %p128 = scmp.ne.s32.totalorder %s120, %s122
      %p129 = scmp.eq.s32.totalorder %s32, 1
      %p130 = por %p128, %p129
      %p131 = scmp.ne.s32.totalorder %s122, %s123
      %p132 = scmp.eq.s32.totalorder %s32, 0
      %p133 = por %p131, %p132
      %p134 = scmp.ne.s32.totalorder %s122, %s123
      %p135 = scmp.eq.s32.totalorder %s33, 1
      %p136 = por %p134, %p135
      %p138 = scmp.ne.s32.totalorder %s123, %s137
      %p139 = scmp.eq.s32.totalorder %s33, 0
      %p140 = por %p138, %p139
      %s142 = sadd.s32 %s141, 1
      %p145 = scmp.eq.s32.totalorder %s27, 1
      %p146 = scmp.ne.s32.totalorder %s141, %s143
      %p147 = scmp.eq.s32.totalorder %s27, 0
      %p148 = por %p146, %p147
      %p149 = scmp.ne.s32.totalorder %s141, %s143
      %p150 = scmp.eq.s32.totalorder %s32, 1
      %p151 = por %p149, %p150
      %p152 = scmp.ne.s32.totalorder %s143, %s144
      %p153 = scmp.eq.s32.totalorder %s32, 0
      %p154 = por %p152, %p153
      %p155 = scmp.ne.s32.totalorder %s143, %s144
      %p156 = scmp.eq.s32.totalorder %s33, 1
      %p157 = por %p155, %p156
      %p159 = scmp.ne.s32.totalorder %s144, %s158
      %p160 = scmp.eq.s32.totalorder %s33, 0
      %p161 = por %p159, %p160
      %s163 = sadd.s32 %s162, 1
      %p166 = scmp.eq.s32.totalorder %s27, 1
      %p167 = scmp.ne.s32.totalorder %s162, %s164
      %p168 = scmp.eq.s32.totalorder %s27, 0
      %p169 = por %p167, %p168
      %p170 = scmp.ne.s32.totalorder %s162, %s164
      %p171 = scmp.eq.s32.totalorder %s32, 1
      %p172 = por %p170, %p171
      %p173 = scmp.ne.s32.totalorder %s164, %s165
      %p174 = scmp.eq.s32.totalorder %s32, 0
      %p175 = por %p173, %p174
      %p176 = scmp.ne.s32.totalorder %s164, %s165
      %p177 = scmp.eq.s32.totalorder %s33, 1
      %p178 = por %p176, %p177
      %p180 = scmp.ne.s32.totalorder %s165, %s179
      %p181 = scmp.eq.s32.totalorder %s33, 0
      %p182 = por %p180, %p181
      %s184 = sadd.s32 %s183, 1
      %p187 = scmp.eq.s32.totalorder %s27, 1
      %p188 = scmp.ne.s32.totalorder %s183, %s185
      %p189 = scmp.eq.s32.totalorder %s27, 0
      %p190 = por %p188, %p189
      %p191 = scmp.ne.s32.totalorder %s183, %s185
      %p192 = scmp.eq.s32.totalorder %s32, 1
      %p193 = por %p191, %p192
      %p194 = scmp.ne.s32.totalorder %s185, %s186
      %p195 = scmp.eq.s32.totalorder %s32, 0
      %p196 = por %p194, %p195
      %p197 = scmp.ne.s32.totalorder %s185, %s186
      %p198 = scmp.eq.s32.totalorder %s33, 1
      %p199 = por %p197, %p198
      %p201 = scmp.ne.s32.totalorder %s186, %s200
      %p202 = scmp.eq.s32.totalorder %s33, 0
      %p203 = por %p201, %p202
      %s205 = sadd.s32 %s204, 1
      %p208 = scmp.eq.s32.totalorder %s27, 1
      %p209 = scmp.ne.s32.totalorder %s204, %s206
      %p210 = scmp.eq.s32.totalorder %s27, 0
      %p211 = por %p209, %p210
      %p212 = scmp.ne.s32.totalorder %s204, %s206
      %p213 = scmp.eq.s32.totalorder %s32, 1
      %p214 = por %p212, %p213
      %p215 = scmp.ne.s32.totalorder %s206, %s207
      %p216 = scmp.eq.s32.totalorder %s32, 0
      %p217 = por %p215, %p216
      %p218 = scmp.ne.s32.totalorder %s206, %s207
      %p219 = scmp.eq.s32.totalorder %s33, 1
      %p220 = por %p218, %p219
      %p222 = scmp.ne.s32.totalorder %s207, %s221
      %p223 = scmp.eq.s32.totalorder %s33, 0
      %p224 = por %p222, %p223
      %s226 = sadd.s32 %s225, 1
      %p229 = scmp.eq.s32.totalorder %s27, 1
      %p230 = scmp.ne.s32.totalorder %s225, %s227
      %p231 = scmp.eq.s32.totalorder %s27, 0
      %p232 = por %p230, %p231
      %p233 = scmp.ne.s32.totalorder %s225, %s227
      %p234 = scmp.eq.s32.totalorder %s32, 1
      %p235 = por %p233, %p234
      %p236 = scmp.ne.s32.totalorder %s227, %s228
      %p237 = scmp.eq.s32.totalorder %s32, 0
      %p238 = por %p236, %p237
      %p239 = scmp.ne.s32.totalorder %s227, %s228
      %p240 = scmp.eq.s32.totalorder %s33, 1
      %p241 = por %p239, %p240
      %p243 = scmp.ne.s32.totalorder %s228, %s242
      %p244 = scmp.eq.s32.totalorder %s33, 0
      %p245 = por %p243, %p244
      %s247 = sadd.s32 %s246, 1
      %p250 = scmp.eq.s32.totalorder %s27, 1
      %p251 = scmp.ne.s32.totalorder %s246, %s248
      %p252 = scmp.eq.s32.totalorder %s27, 0
      %p253 = por %p251, %p252
      %p254 = scmp.ne.s32.totalorder %s246, %s248
      %p255 = scmp.eq.s32.totalorder %s32, 1
      %p256 = por %p254, %p255
      %p257 = scmp.ne.s32.totalorder %s248, %s249
      %p258 = scmp.eq.s32.totalorder %s32, 0
      %p259 = por %p257, %p258
      %p260 = scmp.ne.s32.totalorder %s248, %s249
      %p261 = scmp.eq.s32.totalorder %s33, 1
      %p262 = por %p260, %p261
      %p264 = scmp.ne.s32.totalorder %s249, %s263
      %p265 = scmp.eq.s32.totalorder %s33, 0
      %p266 = por %p264, %p265
      %s268 = sadd.s32 %s267, 1
      %p271 = scmp.eq.s32.totalorder %s27, 1
      %p272 = scmp.ne.s32.totalorder %s267, %s269
      %p273 = scmp.eq.s32.totalorder %s27, 0
      %p274 = por %p272, %p273
      %p275 = scmp.ne.s32.totalorder %s267, %s269
      %p276 = scmp.eq.s32.totalorder %s32, 1
      %p277 = por %p275, %p276
      %p278 = scmp.ne.s32.totalorder %s269, %s270
      %p279 = scmp.eq.s32.totalorder %s32, 0
      %p280 = por %p278, %p279
      %p281 = scmp.ne.s32.totalorder %s269, %s270
      %p282 = scmp.eq.s32.totalorder %s33, 1
      %p283 = por %p281, %p282
      %p285 = scmp.ne.s32.totalorder %s270, %s284
      %p286 = scmp.eq.s32.totalorder %s33, 0
      %p287 = por %p285, %p286
      %s289 = sadd.s32 %s288, 1
      %p292 = scmp.eq.s32.totalorder %s27, 1
      %p293 = scmp.ne.s32.totalorder %s288, %s290
      %p294 = scmp.eq.s32.totalorder %s27, 0
      %p295 = por %p293, %p294
      %p296 = scmp.ne.s32.totalorder %s288, %s290
      %p297 = scmp.eq.s32.totalorder %s32, 1
      %p298 = por %p296, %p297
      %p299 = scmp.ne.s32.totalorder %s290, %s291
      %p300 = scmp.eq.s32.totalorder %s32, 0
      %p301 = por %p299, %p300
      %p302 = scmp.ne.s32.totalorder %s290, %s291
      %p303 = scmp.eq.s32.totalorder %s33, 1
      %p304 = por %p302, %p303
      %p306 = scmp.ne.s32.totalorder %s291, %s305
      %p307 = scmp.eq.s32.totalorder %s33, 0
      %p308 = por %p306, %p307
      %s310 = sadd.s32 %s309, 1
      %p313 = scmp.eq.s32.totalorder %s27, 1
      %p314 = scmp.ne.s32.totalorder %s309, %s311
      %p315 = scmp.eq.s32.totalorder %s27, 0
      %p316 = por %p314, %p315
      %p317 = scmp.ne.s32.totalorder %s309, %s311
      %p318 = scmp.eq.s32.totalorder %s32, 1
      %p319 = por %p317, %p318
      %p320 = scmp.ne.s32.totalorder %s311, %s312
      %p321 = scmp.eq.s32.totalorder %s32, 0
      %p322 = por %p320, %p321
      %p323 = scmp.ne.s32.totalorder %s311, %s312
      %p324 = scmp.eq.s32.totalorder %s33, 1
      %p325 = por %p323, %p324
      %p327 = scmp.ne.s32.totalorder %s312, %s326
      %p328 = scmp.eq.s32.totalorder %s33, 0
      %p329 = por %p327, %p328
      %s331 = sadd.s32 %s330, 1
      %p334 = scmp.eq.s32.totalorder %s27, 1
      %p335 = scmp.ne.s32.totalorder %s330, %s332
      %p336 = scmp.eq.s32.totalorder %s27, 0
      %p337 = por %p335, %p336
      %p338 = scmp.ne.s32.totalorder %s330, %s332
      %p339 = scmp.eq.s32.totalorder %s32, 1
      %p340 = por %p338, %p339
      %p341 = scmp.ne.s32.totalorder %s332, %s333
      %p342 = scmp.eq.s32.totalorder %s32, 0
      %p343 = por %p341, %p342
      %p344 = scmp.ne.s32.totalorder %s332, %s333
      %p345 = scmp.eq.s32.totalorder %s33, 1
      %p346 = por %p344, %p345
      %p348 = scmp.ne.s32.totalorder %s333, %s347
      %p349 = scmp.eq.s32.totalorder %s33, 0
      %p350 = por %p348, %p349
      %s352 = sadd.s32 %s351, 1
      %p355 = scmp.eq.s32.totalorder %s27, 1
      %p356 = scmp.ne.s32.totalorder %s351, %s353
      %p357 = scmp.eq.s32.totalorder %s27, 0
      %p358 = por %p356, %p357
      %p359 = scmp.ne.s32.totalorder %s351, %s353
      %p360 = scmp.eq.s32.totalorder %s32, 1
      %p361 = por %p359, %p360
      %p362 = scmp.ne.s32.totalorder %s353, %s354
      %p363 = scmp.eq.s32.totalorder %s32, 0
      %p364 = por %p362, %p363
      %p365 = scmp.ne.s32.totalorder %s353, %s354
      %p366 = scmp.eq.s32.totalorder %s33, 1
      %p367 = por %p365, %p366
      %p369 = scmp.ne.s32.totalorder %s354, %s368
      %p370 = scmp.eq.s32.totalorder %s33, 0
      %p371 = por %p369, %p370
      %s373 = sadd.s32 %s372, 1
      %p376 = scmp.eq.s32.totalorder %s27, 1
      %p377 = scmp.ne.s32.totalorder %s372, %s374
      %p378 = scmp.eq.s32.totalorder %s27, 0
      %p379 = por %p377, %p378
      %p380 = scmp.ne.s32.totalorder %s372, %s374
      %p381 = scmp.eq.s32.totalorder %s32, 1
      %p382 = por %p380, %p381
      %p383 = scmp.ne.s32.totalorder %s374, %s375
      %p384 = scmp.eq.s32.totalorder %s32, 0
      %p385 = por %p383, %p384
      %p386 = scmp.ne.s32.totalorder %s374, %s375
      %p387 = scmp.eq.s32.totalorder %s33, 1
      %p388 = por %p386, %p387
      %p390 = scmp.ne.s32.totalorder %s375, %s389
      %p391 = scmp.eq.s32.totalorder %s33, 0
      %p392 = por %p390, %p391
      %s394 = sadd.s32 %s393, 1
      %p397 = scmp.eq.s32.totalorder %s27, 1
      %p398 = scmp.ne.s32.totalorder %s393, %s395
      %p399 = scmp.eq.s32.totalorder %s27, 0
      %p400 = por %p398, %p399
      %p401 = scmp.ne.s32.totalorder %s393, %s395
      %p402 = scmp.eq.s32.totalorder %s32, 1
      %p403 = por %p401, %p402
      %p404 = scmp.ne.s32.totalorder %s395, %s396
      %p405 = scmp.eq.s32.totalorder %s32, 0
      %p406 = por %p404, %p405
      %p407 = scmp.ne.s32.totalorder %s395, %s396
      %p408 = scmp.eq.s32.totalorder %s33, 1
      %p409 = por %p407, %p408
      %p411 = scmp.ne.s32.totalorder %s396, %s410
      %p412 = scmp.eq.s32.totalorder %s33, 0
      %p413 = por %p411, %p412
      %s415 = sadd.s32 %s414, 1
      %p418 = scmp.eq.s32.totalorder %s27, 1
      %p419 = scmp.ne.s32.totalorder %s414, %s416
      %p420 = scmp.eq.s32.totalorder %s27, 0
      %p421 = por %p419, %p420
      %p422 = scmp.ne.s32.totalorder %s414, %s416
      %p423 = scmp.eq.s32.totalorder %s32, 1
      %p424 = por %p422, %p423
      %p425 = scmp.ne.s32.totalorder %s416, %s417
      %p426 = scmp.eq.s32.totalorder %s32, 0
      %p427 = por %p425, %p426
      %p428 = scmp.ne.s32.totalorder %s416, %s417
      %p429 = scmp.eq.s32.totalorder %s33, 1
      %p430 = por %p428, %p429
      %p432 = scmp.ne.s32.totalorder %s417, %s431
      %p433 = scmp.eq.s32.totalorder %s33, 0
      %p434 = por %p432, %p433
      %s435 = ssub.s32 %s34, %s46
      %s436 = ssub.s32 %s35, %s42
      %s437 = sor.u32 %s435, %s436
      %p438 = scmp.eq.s32.totalorder %s437, 0
      %s440 = sadd.s32 %s439, 1
      %s441 = scalar_select %p438, %s439, %s440
      %p444 = pneg %p438
      %p445 = scmp.eq.s32.totalorder %s27, 1
      %p446 = por %p444, %p445
      %p447 = scmp.ne.s32.totalorder %s439, %s442
      %p448 = scmp.eq.s32.totalorder %s27, 0
      %p449 = por %p447, %p448
      %p450 = scmp.ne.s32.totalorder %s439, %s442
      %p451 = scmp.eq.s32.totalorder %s32, 1
      %p452 = por %p450, %p451
      %p453 = scmp.ne.s32.totalorder %s442, %s443
      %p454 = scmp.eq.s32.totalorder %s32, 0
      %p455 = por %p453, %p454
      %p456 = scmp.ne.s32.totalorder %s442, %s443
      %p457 = scmp.eq.s32.totalorder %s33, 1
      %p458 = por %p456, %p457
      %p460 = scmp.ne.s32.totalorder %s443, %s459
      %p461 = scmp.eq.s32.totalorder %s33, 0
      %p462 = por %p460, %p461
      %p463 = scmp.le.s32.totalorder 1, %s27
      %p464 = scmp.lt.s32.totalorder %s27, 3
      %p465 = pnand %p463, %p464
      %p466 = pneg %p465
      // Predicated region
      $region9: #{tpu_custom_call.1} parent=5 // pred_check
        _
      $region10: #{tpu_custom_call.1} parent=5 // pred_check_branch
        %468 = sbr.rel (%p465) target = $region12
      $region11: #{tpu_custom_call.1} parent=5 // pred_region
        %s469 = ssub.s32 %s27, 1
        // Predicated region
        $region13: #{tpu_custom_call.1} parent=11 // pred_check
          %p470 = pneg %p112
        $region14: #{tpu_custom_call.1} parent=11 // pred_check_branch
          %472 = sbr.rel (%p470) target = $region16
        $region15: #{tpu_custom_call.1} parent=11 // pred_region
          _
        $region16: #{tpu_custom_call.1} parent=11 // pred_fallthru
          _
        // Predicated region
        $region17: #{tpu_custom_call.1} parent=11 // pred_check
          %p473 = pneg %p133
        $region18: #{tpu_custom_call.1} parent=11 // pred_check_branch
          %475 = sbr.rel (%p473) target = $region20
        $region19: #{tpu_custom_call.1} parent=11 // pred_region
          _
        $region20: #{tpu_custom_call.1} parent=11 // pred_fallthru
          _
        // Predicated region
        $region21: #{tpu_custom_call.1} parent=11 // pred_check
          %p476 = pneg %p154
        $region22: #{tpu_custom_call.1} parent=11 // pred_check_branch
          %478 = sbr.rel (%p476) target = $region24
        $region23: #{tpu_custom_call.1} parent=11 // pred_region
          _
        $region24: #{tpu_custom_call.1} parent=11 // pred_fallthru
          _
        // Predicated region
        $region25: #{tpu_custom_call.1} parent=11 // pred_check
          %p479 = pneg %p175
        $region26: #{tpu_custom_call.1} parent=11 // pred_check_branch
          %481 = sbr.rel (%p479) target = $region28
        $region27: #{tpu_custom_call.1} parent=11 // pred_region
          _
        $region28: #{tpu_custom_call.1} parent=11 // pred_fallthru
          _
        // Predicated region
        $region29: #{tpu_custom_call.1} parent=11 // pred_check
          %p482 = pneg %p196
        $region30: #{tpu_custom_call.1} parent=11 // pred_check_branch
          %484 = sbr.rel (%p482) target = $region32
        $region31: #{tpu_custom_call.1} parent=11 // pred_region
          _
        $region32: #{tpu_custom_call.1} parent=11 // pred_fallthru
          _
        // Predicated region
        $region33: #{tpu_custom_call.1} parent=11 // pred_check
          %p485 = pneg %p217
        $region34: #{tpu_custom_call.1} parent=11 // pred_check_branch
          %487 = sbr.rel (%p485) target = $region36
        $region35: #{tpu_custom_call.1} parent=11 // pred_region
          _
        $region36: #{tpu_custom_call.1} parent=11 // pred_fallthru
          _
        // Predicated region
        $region37: #{tpu_custom_call.1} parent=11 // pred_check
          %p488 = pneg %p238
        $region38: #{tpu_custom_call.1} parent=11 // pred_check_branch
          %490 = sbr.rel (%p488) target = $region40
        $region39: #{tpu_custom_call.1} parent=11 // pred_region
          _
        $region40: #{tpu_custom_call.1} parent=11 // pred_fallthru
          _
        // Predicated region
        $region41: #{tpu_custom_call.1} parent=11 // pred_check
          %p491 = pneg %p259
        $region42: #{tpu_custom_call.1} parent=11 // pred_check_branch
          %493 = sbr.rel (%p491) target = $region44
        $region43: #{tpu_custom_call.1} parent=11 // pred_region
          _
        $region44: #{tpu_custom_call.1} parent=11 // pred_fallthru
          _
        // Predicated region
        $region45: #{tpu_custom_call.1} parent=11 // pred_check
          %p494 = pneg %p280
        $region46: #{tpu_custom_call.1} parent=11 // pred_check_branch
          %496 = sbr.rel (%p494) target = $region48
        $region47: #{tpu_custom_call.1} parent=11 // pred_region
          _
        $region48: #{tpu_custom_call.1} parent=11 // pred_fallthru
          _
        // Predicated region
        $region49: #{tpu_custom_call.1} parent=11 // pred_check
          %p497 = pneg %p301
        $region50: #{tpu_custom_call.1} parent=11 // pred_check_branch
          %499 = sbr.rel (%p497) target = $region52
        $region51: #{tpu_custom_call.1} parent=11 // pred_region
          _
        $region52: #{tpu_custom_call.1} parent=11 // pred_fallthru
          _
        // Predicated region
        $region53: #{tpu_custom_call.1} parent=11 // pred_check
          %p500 = pneg %p322
        $region54: #{tpu_custom_call.1} parent=11 // pred_check_branch
          %502 = sbr.rel (%p500) target = $region56
        $region55: #{tpu_custom_call.1} parent=11 // pred_region
          _
        $region56: #{tpu_custom_call.1} parent=11 // pred_fallthru
          _
        // Predicated region
        $region57: #{tpu_custom_call.1} parent=11 // pred_check
          %p503 = pneg %p343
        $region58: #{tpu_custom_call.1} parent=11 // pred_check_branch
          %505 = sbr.rel (%p503) target = $region60
        $region59: #{tpu_custom_call.1} parent=11 // pred_region
          _
        $region60: #{tpu_custom_call.1} parent=11 // pred_fallthru
          _
        // Predicated region
        $region61: #{tpu_custom_call.1} parent=11 // pred_check
          %p506 = pneg %p364
        $region62: #{tpu_custom_call.1} parent=11 // pred_check_branch
          %508 = sbr.rel (%p506) target = $region64
        $region63: #{tpu_custom_call.1} parent=11 // pred_region
          _
        $region64: #{tpu_custom_call.1} parent=11 // pred_fallthru
          _
        // Predicated region
        $region65: #{tpu_custom_call.1} parent=11 // pred_check
          %p509 = pneg %p385
        $region66: #{tpu_custom_call.1} parent=11 // pred_check_branch
          %511 = sbr.rel (%p509) target = $region68
        $region67: #{tpu_custom_call.1} parent=11 // pred_region
          _
        $region68: #{tpu_custom_call.1} parent=11 // pred_fallthru
          _
        // Predicated region
        $region69: #{tpu_custom_call.1} parent=11 // pred_check
          %p512 = pneg %p406
        $region70: #{tpu_custom_call.1} parent=11 // pred_check_branch
          %514 = sbr.rel (%p512) target = $region72
        $region71: #{tpu_custom_call.1} parent=11 // pred_region
          _
        $region72: #{tpu_custom_call.1} parent=11 // pred_fallthru
          _
        // Predicated region
        $region73: #{tpu_custom_call.1} parent=11 // pred_check
          %p515 = pneg %p427
        $region74: #{tpu_custom_call.1} parent=11 // pred_check_branch
          %517 = sbr.rel (%p515) target = $region76
        $region75: #{tpu_custom_call.1} parent=11 // pred_region
          _
        $region76: #{tpu_custom_call.1} parent=11 // pred_fallthru
          _
      $region12: #{tpu_custom_call.1} parent=5 // pred_fallthru
        _
      %p518 = scmp.lt.s32.totalorder %s27, 2
      // Predicated region
      $region77: #{tpu_custom_call.1} parent=5 // pred_check
        %p519 = pneg %p518
      $region78: #{tpu_custom_call.1} parent=5 // pred_check_branch
        %521 = sbr.rel (%p519) target = $region80
      $region79: #{tpu_custom_call.1} parent=5 // pred_region
        // Predicated region
        $region81: #{tpu_custom_call.1} parent=79 // pred_check
          %p522 = pneg %p59
        $region82: #{tpu_custom_call.1} parent=79 // pred_check_branch
          %524 = sbr.rel (%p522) target = $region84
        $region83: #{tpu_custom_call.1} parent=79 // pred_region
          %p525 = scmp.lt.s32.totalorder %s34, 1
          %s526 = scalar_select %p525, %s34, 1
          %s527 = smul.addr %s526, 8
          %s528 = scalar_lea.vmem %s0, %s527
        $region84: #{tpu_custom_call.1} parent=79 // pred_fallthru
          _
        // Predicated region
        $region85: #{tpu_custom_call.1} parent=79 // pred_check
          %p529 = pneg %p85
        $region86: #{tpu_custom_call.1} parent=79 // pred_check_branch
          %531 = sbr.rel (%p529) target = $region88
        $region87: #{tpu_custom_call.1} parent=79 // pred_region
          %p532 = scmp.lt.s32.totalorder %s34, 1
          %s533 = scalar_select %p532, %s34, 1
          %s534 = scalar_lea.vmem %s1, %s533
        $region88: #{tpu_custom_call.1} parent=79 // pred_fallthru
          _
      $region80: #{tpu_custom_call.1} parent=5 // pred_fallthru
        _
      %p535 = scmp.le.s32.totalorder 1, %s27
      %p536 = scmp.lt.s32.totalorder %s27, 3
      %p537 = pnand %p535, %p536
      %p538 = pneg %p537
      // Predicated region
      $region89: #{tpu_custom_call.1} parent=5 // pred_check
        _
      $region90: #{tpu_custom_call.1} parent=5 // pred_check_branch
        %540 = sbr.rel (%p537) target = $region92
      $region91: #{tpu_custom_call.1} parent=5 // pred_region
        %s541 = ssub.s32 %s27, 1
        %p542 = scmp.lt.s32.totalorder %s36, 1
        %s543 = scalar_select %p542, %s36, 1
        %s544 = smul.addr %s543, 8
        %s545 = scalar_lea.vmem %s0, %s544
        %p546 = pneg %p65
        %p547 = pneg %p62
        %p548 = scmp.lt.s32.totalorder %s36, 1
        %s549 = scalar_select %p548, %s36, 1
        %s550 = scalar_lea.vmem %s1, %s549
        %p551 = pneg %p91
        %p552 = pneg %p88
        %p553 = pneg %p112
        %p554 = pneg %p109
        %p555 = pneg %p133
        %p556 = pneg %p130
        %p557 = pneg %p154
        %p558 = pneg %p151
        %p559 = pneg %p175
        %p560 = pneg %p172
        %p561 = pneg %p196
        %p562 = pneg %p193
        %p563 = pneg %p217
        %p564 = pneg %p214
        %p565 = pneg %p238
        %p566 = pneg %p235
        %p567 = pneg %p259
        %p568 = pneg %p256
        %p569 = pneg %p280
        %p570 = pneg %p277
        %p571 = pneg %p301
        %p572 = pneg %p298
        %p573 = pneg %p322
        %p574 = pneg %p319
        %p575 = pneg %p343
        %p576 = pneg %p340
        %p577 = pneg %p364
        %p578 = pneg %p361
        %p579 = pneg %p385
        %p580 = pneg %p382
        %p581 = pneg %p406
        %p582 = pneg %p403
        %p583 = pneg %p427
        %p584 = pneg %p424
        %p585 = pneg %p455
        %p586 = pneg %p452
        %s587 = sand.u32 %s442, 1
        %s588 = scalar_lea.sflag [#allocation5], %s587
        %s589 = sand.u32 %s442, 1
        %s590 = smul.addr %s589, 8
        %s591 = scalar_lea.vmem [#allocation4], %s590
        %p592 = scmp.lt.s32.totalorder %s36, 1
        %s593 = scalar_select %p592, %s36, 1
        %s594 = smul.addr %s593, 8
        %s595 = scalar_lea.vmem %s0, %s594
        %p596 = scmp.lt.s32.totalorder %s36, 1
        %s597 = scalar_select %p596, %s36, 1
        %s598 = scalar_lea.vmem %s1, %s597
        %v600 = vld [vmem:[%s10] sm:$0x1]
        %v601 = vld [vmem:[%s11] sm:$0x1]
        %p602 = scmp.eq.s32.totalorder %s37, 0
        // Predicated region
        $region93: #{tpu_custom_call.1} parent=91 // pred_check
          %p603 = pneg %p602
        $region94: #{tpu_custom_call.1} parent=91 // pred_check_branch
          %605 = sbr.rel (%p603) target = $region96
        $region95: #{tpu_custom_call.1} parent=91 // pred_region
          %v606 = vld [vmem:[%s595] sm:$0xff]
          %vm607 = vcmask 261120
          %v608 = vsel %vm607, %v606, 0.0
          %609 = vadd.xlane.f32.xlu0 %v608
          %v610 = vpop.xlane.xlu0 %609
          %v611 = vrcp.pop 32.0
          %v612 = vmul.f32 %v610, %v611
          %v613 = vsub.f32 %v606, %v612
          %v614 = vmul.f32 %v613, %v613
          %v615 = vsel %vm607, %v614, 0.0
          %616 = vadd.xlane.f32.xlu0 %v615
          %v617 = vpop.xlane.xlu0 %616
          %v618 = vmul.f32 %v617, 0.032258064
          %v619 = vrsqrt.pop %v618
          %v620 = vmul.f32 %v618, %v619
          %vm621 = vcmp.eq.f32.partialorder %v618, inf
          %v622 = vsel %vm621, %v618, %v620
          %vm623 = vcmp.eq.f32.partialorder %v618, 0.0
          %v624 = vand.u32 %v618, 2147483648
          %v625 = vsel %vm623, %v624, %v622
          %v626 = vadd.f32 %v625, 1e-06
          %v627 = vrcp.pop %v626
          %v629 = vlaneseq
          %v630 = vshrl.u32 %v629, 7
          %v631 = vsub.s32 0, %v630
          %v632 = vrot.slane %v600, %v631
          %v634 = vmul.f32 %v632, %v613
          %v635 = vmul.f32 %v634, %v627
          %v637 = vlaneseq
          %v638 = vshrl.u32 %v637, 7
          %v639 = vsub.s32 0, %v638
          %v640 = vrot.slane %v601, %v639
          %v642 = vadd.f32 %v635, %v640
          %v643 = vpack.c.bf16 %v642, %v642
          %v644 = vld [vmem:[%s4] sm:$0xf]
          %v645 = vld [vmem:[%s4 + $0x4] sm:$0xf]
          %v646 = vld [vmem:[%s4 + $0x8] sm:$0xf]
          %v647 = vld [vmem:[%s4 + $0xc] sm:$0xf]
          %v648 = vld [vmem:[%s5] sm:$0x1]
          %v650 = vlaneseq
          %v651 = vshrl.u32 %v650, 7
          %v652 = vsub.s32 0, %v651
          %v653 = vrot.slane %v648, %v652
          %v659 = vunpack.c.l.b16 %v644
          %v660 = vunpack.c.l.b16 %v645
          %v661 = vunpack.c.l.b16 %v646
          %v662 = vunpack.c.l.b16 %v647
          %v663 = vpack.c.b16 %v660, %v659
          %v664 = vpack.c.b16 %v662, %v661
          %v668 = vsel %vm607, %v643, 0
          %670 = vmatprep.subr.bf16.mxu0 0
          %671 = vmatpush1.bf16.msra.mxu0 0
          %672 = vmatprep.subr.bf16.mxu0 0
          %673 = vmatpush1.bf16.msra.mxu0 0
          %674 = vmatprep.subr.bf16.mxu0 0
          %675 = vmatpush1.bf16.msra.mxu0 0
          %676 = vmatprep.subr.bf16.mxu0 0
          %677 = vmatpush1.bf16.msra.mxu0 0
          %678 = vmatprep.subr.bf16.mxu0 0
          %679 = vmatpush1.bf16.msra.mxu0 0
          %680 = vmatprep.subr.bf16.mxu0 0
          %681 = vmatpush1.bf16.msra.mxu0 0
          %682 = vmatprep.subr.bf16.mxu0 0
          %683 = vmatpush1.bf16.msra.mxu0 %v664
          %684 = vmatprep.subr.bf16.mxu0 0
          %685 = vmatpush1.bf16.msra.mxu0 %v663
          %686 = vmatprep.subr.bf16.mxu0 0
          %687 = vmatpush2.bf16.msra.mxu0 0
          %688 = vmatprep.subr.bf16.mxu0 0
          %689 = vmatpush2.bf16.msra.mxu0 0
          %690 = vmatprep.subr.bf16.mxu0 0
          %691 = vmatpush2.bf16.msra.mxu0 0
          %692 = vmatprep.subr.bf16.mxu0 0
          %693 = vmatpush2.bf16.msra.mxu0 0
          %694 = vmatprep.subr.bf16.mxu0 0
          %695 = vmatpush2.bf16.msra.mxu0 0
          %696 = vmatprep.subr.bf16.mxu0 0
          %697 = vmatpush2.bf16.msra.mxu0 0
          %698 = vmatprep.subr.bf16.mxu0 0
          %699 = vmatpush2.bf16.msra.mxu0 0
          %700 = vmatprep.subr.bf16.mxu0 0
          %701 = vmatpush2.bf16.msra.mxu0 0
          %702 = vmatprep.mubr.bf16.mxu0 0
          %703 = vmatmul.mubr.bf16.gmra.mxu0 %v668
          %v704 = vpop.f32.mrf.mxu0
          %v705 = vadd.f32 %v653, %v704
          %v706 = vpop.f32.mrf.mxu0
          %v707 = vpop.f32.mrf.mxu0
          %v708 = vpop.f32.mrf.mxu0
          %709 = vdwg.mxu0
          %v710 = vld [vmem:[%s6] sm:$0xf]
          %v711 = vld [vmem:[%s6 + $0x4] sm:$0xf]
          %v712 = vld [vmem:[%s6 + $0x8] sm:$0xf]
          %v713 = vld [vmem:[%s6 + $0xc] sm:$0xf]
          %v714 = vld [vmem:[%s7] sm:$0x1]
          %v716 = vlaneseq
          %v717 = vshrl.u32 %v716, 7
          %v718 = vsub.s32 0, %v717
          %v719 = vrot.slane %v714, %v718
          %v725 = vunpack.c.l.b16 %v710
          %v726 = vunpack.c.l.b16 %v711
          %v727 = vunpack.c.l.b16 %v712
          %v728 = vunpack.c.l.b16 %v713
          %v729 = vpack.c.b16 %v726, %v725
          %v730 = vpack.c.b16 %v728, %v727
          %733 = vmatprep.subr.bf16.mxu0 0
          %734 = vmatpush1.bf16.msra.mxu0 0
          %735 = vmatprep.subr.bf16.mxu0 0
          %736 = vmatpush1.bf16.msra.mxu0 0
          %737 = vmatprep.subr.bf16.mxu0 0
          %738 = vmatpush1.bf16.msra.mxu0 0
          %739 = vmatprep.subr.bf16.mxu0 0
          %740 = vmatpush1.bf16.msra.mxu0 0
          %741 = vmatprep.subr.bf16.mxu0 0
          %742 = vmatpush1.bf16.msra.mxu0 0
          %743 = vmatprep.subr.bf16.mxu0 0
          %744 = vmatpush1.bf16.msra.mxu0 0
          %745 = vmatprep.subr.bf16.mxu0 0
          %746 = vmatpush1.bf16.msra.mxu0 %v730
          %747 = vmatprep.subr.bf16.mxu0 0
          %748 = vmatpush1.bf16.msra.mxu0 %v729
          %749 = vmatprep.subr.bf16.mxu0 0
          %750 = vmatpush2.bf16.msra.mxu0 0
          %751 = vmatprep.subr.bf16.mxu0 0
          %752 = vmatpush2.bf16.msra.mxu0 0
          %753 = vmatprep.subr.bf16.mxu0 0
          %754 = vmatpush2.bf16.msra.mxu0 0
          %755 = vmatprep.subr.bf16.mxu0 0
          %756 = vmatpush2.bf16.msra.mxu0 0
          %757 = vmatprep.subr.bf16.mxu0 0
          %758 = vmatpush2.bf16.msra.mxu0 0
          %759 = vmatprep.subr.bf16.mxu0 0
          %760 = vmatpush2.bf16.msra.mxu0 0
          %761 = vmatprep.subr.bf16.mxu0 0
          %762 = vmatpush2.bf16.msra.mxu0 0
          %763 = vmatprep.subr.bf16.mxu0 0
          %764 = vmatpush2.bf16.msra.mxu0 0
          %765 = vmatprep.mubr.bf16.mxu0 0
          %766 = vmatmul.mubr.bf16.gmra.mxu0 %v668
          %v767 = vpop.f32.mrf.mxu0
          %v768 = vadd.f32 %v719, %v767
          %v769 = vpop.f32.mrf.mxu0
          %v770 = vpop.f32.mrf.mxu0
          %v771 = vpop.f32.mrf.mxu0
          %772 = vdwg.mxu0
          %v773 = vpack.c.bf16 %v705, %v705
          %vm774 = vcmask 60416
          %775 = vst.msk [vmem:[#allocation2] sm:$0xf] %vm774, %v773
          %v776 = vpack.c.bf16 %v768, %v768
          %777 = vst.msk [vmem:[#allocation3] sm:$0xf] %vm774, %v776
          %s778 = scalar_lea.vmem %s4, 16
          %v779 = vld [vmem:[%s778] sm:$0xf]
          %v780 = vld [vmem:[%s778 + $0x4] sm:$0xf]
          %v781 = vld [vmem:[%s778 + $0x8] sm:$0xf]
          %v782 = vld [vmem:[%s778 + $0xc] sm:$0xf]
          %s783 = scalar_lea.vmem %s5, 1
          %v784 = vld [vmem:[%s783] sm:$0x1]
          %v786 = vlaneseq
          %v787 = vshrl.u32 %v786, 7
          %v788 = vsub.s32 0, %v787
          %v789 = vrot.slane %v784, %v788
          %v795 = vunpack.c.l.b16 %v779
          %v796 = vunpack.c.l.b16 %v780
          %v797 = vunpack.c.l.b16 %v781
          %v798 = vunpack.c.l.b16 %v782
          %v799 = vpack.c.b16 %v796, %v795
          %v800 = vpack.c.b16 %v798, %v797
          %803 = vmatprep.subr.bf16.mxu0 0
          %804 = vmatpush1.bf16.msra.mxu0 0
          %805 = vmatprep.subr.bf16.mxu0 0
          %806 = vmatpush1.bf16.msra.mxu0 0
          %807 = vmatprep.subr.bf16.mxu0 0
          %808 = vmatpush1.bf16.msra.mxu0 0
          %809 = vmatprep.subr.bf16.mxu0 0
          %810 = vmatpush1.bf16.msra.mxu0 0
          %811 = vmatprep.subr.bf16.mxu0 0
          %812 = vmatpush1.bf16.msra.mxu0 0
          %813 = vmatprep.subr.bf16.mxu0 0
          %814 = vmatpush1.bf16.msra.mxu0 0
          %815 = vmatprep.subr.bf16.mxu0 0
          %816 = vmatpush1.bf16.msra.mxu0 %v800
          %817 = vmatprep.subr.bf16.mxu0 0
          %818 = vmatpush1.bf16.msra.mxu0 %v799
          %819 = vmatprep.subr.bf16.mxu0 0
          %820 = vmatpush2.bf16.msra.mxu0 0
          %821 = vmatprep.subr.bf16.mxu0 0
          %822 = vmatpush2.bf16.msra.mxu0 0
          %823 = vmatprep.subr.bf16.mxu0 0
          %824 = vmatpush2.bf16.msra.mxu0 0
          %825 = vmatprep.subr.bf16.mxu0 0
          %826 = vmatpush2.bf16.msra.mxu0 0
          %827 = vmatprep.subr.bf16.mxu0 0
          %828 = vmatpush2.bf16.msra.mxu0 0
          %829 = vmatprep.subr.bf16.mxu0 0
          %830 = vmatpush2.bf16.msra.mxu0 0
          %831 = vmatprep.subr.bf16.mxu0 0
          %832 = vmatpush2.bf16.msra.mxu0 0
          %833 = vmatprep.subr.bf16.mxu0 0
          %834 = vmatpush2.bf16.msra.mxu0 0
          %835 = vmatprep.mubr.bf16.mxu0 0
          %836 = vmatmul.mubr.bf16.gmra.mxu0 %v668
          %v837 = vpop.f32.mrf.mxu0
          %v838 = vadd.f32 %v789, %v837
          %v839 = vpop.f32.mrf.mxu0
          %v840 = vpop.f32.mrf.mxu0
          %v841 = vpop.f32.mrf.mxu0
          %842 = vdwg.mxu0
          %s843 = scalar_lea.vmem %s6, 16
          %v844 = vld [vmem:[%s843] sm:$0xf]
          %v845 = vld [vmem:[%s843 + $0x4] sm:$0xf]
          %v846 = vld [vmem:[%s843 + $0x8] sm:$0xf]
          %v847 = vld [vmem:[%s843 + $0xc] sm:$0xf]
          %s848 = scalar_lea.vmem %s7, 1
          %v849 = vld [vmem:[%s848] sm:$0x1]
          %v851 = vlaneseq
          %v852 = vshrl.u32 %v851, 7
          %v853 = vsub.s32 0, %v852
          %v854 = vrot.slane %v849, %v853
          %v860 = vunpack.c.l.b16 %v844
          %v861 = vunpack.c.l.b16 %v845
          %v862 = vunpack.c.l.b16 %v846
          %v863 = vunpack.c.l.b16 %v847
          %v864 = vpack.c.b16 %v861, %v860
          %v865 = vpack.c.b16 %v863, %v862
          %868 = vmatprep.subr.bf16.mxu0 0
          %869 = vmatpush1.bf16.msra.mxu0 0
          %870 = vmatprep.subr.bf16.mxu0 0
          %871 = vmatpush1.bf16.msra.mxu0 0
          %872 = vmatprep.subr.bf16.mxu0 0
          %873 = vmatpush1.bf16.msra.mxu0 0
          %874 = vmatprep.subr.bf16.mxu0 0
          %875 = vmatpush1.bf16.msra.mxu0 0
          %876 = vmatprep.subr.bf16.mxu0 0
          %877 = vmatpush1.bf16.msra.mxu0 0
          %878 = vmatprep.subr.bf16.mxu0 0
          %879 = vmatpush1.bf16.msra.mxu0 0
          %880 = vmatprep.subr.bf16.mxu0 0
          %881 = vmatpush1.bf16.msra.mxu0 %v865
          %882 = vmatprep.subr.bf16.mxu0 0
          %883 = vmatpush1.bf16.msra.mxu0 %v864
          %884 = vmatprep.subr.bf16.mxu0 0
          %885 = vmatpush2.bf16.msra.mxu0 0
          %886 = vmatprep.subr.bf16.mxu0 0
          %887 = vmatpush2.bf16.msra.mxu0 0
          %888 = vmatprep.subr.bf16.mxu0 0
          %889 = vmatpush2.bf16.msra.mxu0 0
          %890 = vmatprep.subr.bf16.mxu0 0
          %891 = vmatpush2.bf16.msra.mxu0 0
          %892 = vmatprep.subr.bf16.mxu0 0
          %893 = vmatpush2.bf16.msra.mxu0 0
          %894 = vmatprep.subr.bf16.mxu0 0
          %895 = vmatpush2.bf16.msra.mxu0 0
          %896 = vmatprep.subr.bf16.mxu0 0
          %897 = vmatpush2.bf16.msra.mxu0 0
          %898 = vmatprep.subr.bf16.mxu0 0
          %899 = vmatpush2.bf16.msra.mxu0 0
          %900 = vmatprep.mubr.bf16.mxu0 0
          %901 = vmatmul.mubr.bf16.gmra.mxu0 %v668
          %v902 = vpop.f32.mrf.mxu0
          %v903 = vadd.f32 %v854, %v902
          %v904 = vpop.f32.mrf.mxu0
          %v905 = vpop.f32.mrf.mxu0
          %v906 = vpop.f32.mrf.mxu0
          %907 = vdwg.mxu0
          %v908 = vpack.c.bf16 %v838, %v838
          %s909 = scalar_lea.vmem [#allocation2], 4
          %910 = vst.msk [vmem:[%s909] sm:$0xf] %vm774, %v908
          %v911 = vpack.c.bf16 %v903, %v903
          %s912 = scalar_lea.vmem [#allocation3], 4
          %913 = vst.msk [vmem:[%s912] sm:$0xf] %vm774, %v911
          %s914 = scalar_lea.vmem %s4, 32
          %v915 = vld [vmem:[%s914] sm:$0xf]
          %v916 = vld [vmem:[%s914 + $0x4] sm:$0xf]
          %v917 = vld [vmem:[%s914 + $0x8] sm:$0xf]
          %v918 = vld [vmem:[%s914 + $0xc] sm:$0xf]
          %s919 = scalar_lea.vmem %s5, 2
          %v920 = vld [vmem:[%s919] sm:$0x1]
          %v922 = vlaneseq
          %v923 = vshrl.u32 %v922, 7
          %v924 = vsub.s32 0, %v923
          %v925 = vrot.slane %v920, %v924
          %v931 = vunpack.c.l.b16 %v915
          %v932 = vunpack.c.l.b16 %v916
          %v933 = vunpack.c.l.b16 %v917
          %v934 = vunpack.c.l.b16 %v918
          %v935 = vpack.c.b16 %v932, %v931
          %v936 = vpack.c.b16 %v934, %v933
          %939 = vmatprep.subr.bf16.mxu0 0
          %940 = vmatpush1.bf16.msra.mxu0 0
          %941 = vmatprep.subr.bf16.mxu0 0
          %942 = vmatpush1.bf16.msra.mxu0 0
          %943 = vmatprep.subr.bf16.mxu0 0
          %944 = vmatpush1.bf16.msra.mxu0 0
          %945 = vmatprep.subr.bf16.mxu0 0
          %946 = vmatpush1.bf16.msra.mxu0 0
          %947 = vmatprep.subr.bf16.mxu0 0
          %948 = vmatpush1.bf16.msra.mxu0 0
          %949 = vmatprep.subr.bf16.mxu0 0
          %950 = vmatpush1.bf16.msra.mxu0 0
          %951 = vmatprep.subr.bf16.mxu0 0
          %952 = vmatpush1.bf16.msra.mxu0 %v936
          %953 = vmatprep.subr.bf16.mxu0 0
          %954 = vmatpush1.bf16.msra.mxu0 %v935
          %955 = vmatprep.subr.bf16.mxu0 0
          %956 = vmatpush2.bf16.msra.mxu0 0
          %957 = vmatprep.subr.bf16.mxu0 0
          %958 = vmatpush2.bf16.msra.mxu0 0
          %959 = vmatprep.subr.bf16.mxu0 0
          %960 = vmatpush2.bf16.msra.mxu0 0
          %961 = vmatprep.subr.bf16.mxu0 0
          %962 = vmatpush2.bf16.msra.mxu0 0
          %963 = vmatprep.subr.bf16.mxu0 0
          %964 = vmatpush2.bf16.msra.mxu0 0
          %965 = vmatprep.subr.bf16.mxu0 0
          %966 = vmatpush2.bf16.msra.mxu0 0
          %967 = vmatprep.subr.bf16.mxu0 0
          %968 = vmatpush2.bf16.msra.mxu0 0
          %969 = vmatprep.subr.bf16.mxu0 0
          %970 = vmatpush2.bf16.msra.mxu0 0
          %971 = vmatprep.mubr.bf16.mxu0 0
          %972 = vmatmul.mubr.bf16.gmra.mxu0 %v668
          %v973 = vpop.f32.mrf.mxu0
          %v974 = vadd.f32 %v925, %v973
          %v975 = vpop.f32.mrf.mxu0
          %v976 = vpop.f32.mrf.mxu0
          %v977 = vpop.f32.mrf.mxu0
          %978 = vdwg.mxu0
          %s979 = scalar_lea.vmem %s6, 32
          %v980 = vld [vmem:[%s979] sm:$0xf]
          %v981 = vld [vmem:[%s979 + $0x4] sm:$0xf]
          %v982 = vld [vmem:[%s979 + $0x8] sm:$0xf]
          %v983 = vld [vmem:[%s979 + $0xc] sm:$0xf]
          %s984 = scalar_lea.vmem %s7, 2
          %v985 = vld [vmem:[%s984] sm:$0x1]
          %v987 = vlaneseq
          %v988 = vshrl.u32 %v987, 7
          %v989 = vsub.s32 0, %v988
          %v990 = vrot.slane %v985, %v989
          %v996 = vunpack.c.l.b16 %v980
          %v997 = vunpack.c.l.b16 %v981
          %v998 = vunpack.c.l.b16 %v982
          %v999 = vunpack.c.l.b16 %v983
          %v1000 = vpack.c.b16 %v997, %v996
          %v1001 = vpack.c.b16 %v999, %v998
          %1004 = vmatprep.subr.bf16.mxu0 0
          %1005 = vmatpush1.bf16.msra.mxu0 0
          %1006 = vmatprep.subr.bf16.mxu0 0
          %1007 = vmatpush1.bf16.msra.mxu0 0
          %1008 = vmatprep.subr.bf16.mxu0 0
          %1009 = vmatpush1.bf16.msra.mxu0 0
          %1010 = vmatprep.subr.bf16.mxu0 0
          %1011 = vmatpush1.bf16.msra.mxu0 0
          %1012 = vmatprep.subr.bf16.mxu0 0
          %1013 = vmatpush1.bf16.msra.mxu0 0
          %1014 = vmatprep.subr.bf16.mxu0 0
          %1015 = vmatpush1.bf16.msra.mxu0 0
          %1016 = vmatprep.subr.bf16.mxu0 0
          %1017 = vmatpush1.bf16.msra.mxu0 %v1001
          %1018 = vmatprep.subr.bf16.mxu0 0
          %1019 = vmatpush1.bf16.msra.mxu0 %v1000
          %1020 = vmatprep.subr.bf16.mxu0 0
          %1021 = vmatpush2.bf16.msra.mxu0 0
          %1022 = vmatprep.subr.bf16.mxu0 0
          %1023 = vmatpush2.bf16.msra.mxu0 0
          %1024 = vmatprep.subr.bf16.mxu0 0
          %1025 = vmatpush2.bf16.msra.mxu0 0
          %1026 = vmatprep.subr.bf16.mxu0 0
          %1027 = vmatpush2.bf16.msra.mxu0 0
          %1028 = vmatprep.subr.bf16.mxu0 0
          %1029 = vmatpush2.bf16.msra.mxu0 0
          %1030 = vmatprep.subr.bf16.mxu0 0
          %1031 = vmatpush2.bf16.msra.mxu0 0
          %1032 = vmatprep.subr.bf16.mxu0 0
          %1033 = vmatpush2.bf16.msra.mxu0 0
          %1034 = vmatprep.subr.bf16.mxu0 0
          %1035 = vmatpush2.bf16.msra.mxu0 0
          %1036 = vmatprep.mubr.bf16.mxu0 0
          %1037 = vmatmul.mubr.bf16.gmra.mxu0 %v668
          %v1038 = vpop.f32.mrf.mxu0
          %v1039 = vadd.f32 %v990, %v1038
          %v1040 = vpop.f32.mrf.mxu0
          %v1041 = vpop.f32.mrf.mxu0
          %v1042 = vpop.f32.mrf.mxu0
          %1043 = vdwg.mxu0
          %v1044 = vpack.c.bf16 %v974, %v974
          %s1045 = scalar_lea.vmem [#allocation2], 8
          %1046 = vst.msk [vmem:[%s1045] sm:$0xf] %vm774, %v1044
          %v1047 = vpack.c.bf16 %v1039, %v1039
          %s1048 = scalar_lea.vmem [#allocation3], 8
          %1049 = vst.msk [vmem:[%s1048] sm:$0xf] %vm774, %v1047
          %s1050 = scalar_lea.vmem %s4, 48
          %v1051 = vld [vmem:[%s1050] sm:$0xf]
          %v1052 = vld [vmem:[%s1050 + $0x4] sm:$0xf]
          %v1053 = vld [vmem:[%s1050 + $0x8] sm:$0xf]
          %v1054 = vld [vmem:[%s1050 + $0xc] sm:$0xf]
          %s1055 = scalar_lea.vmem %s5, 3
          %v1056 = vld [vmem:[%s1055] sm:$0x1]
          %v1058 = vlaneseq
          %v1059 = vshrl.u32 %v1058, 7
          %v1060 = vsub.s32 0, %v1059
          %v1061 = vrot.slane %v1056, %v1060
          %v1067 = vunpack.c.l.b16 %v1051
          %v1068 = vunpack.c.l.b16 %v1052
          %v1069 = vunpack.c.l.b16 %v1053
          %v1070 = vunpack.c.l.b16 %v1054
          %v1071 = vpack.c.b16 %v1068, %v1067
          %v1072 = vpack.c.b16 %v1070, %v1069
          %1075 = vmatprep.subr.bf16.mxu0 0
          %1076 = vmatpush1.bf16.msra.mxu0 0
          %1077 = vmatprep.subr.bf16.mxu0 0
          %1078 = vmatpush1.bf16.msra.mxu0 0
          %1079 = vmatprep.subr.bf16.mxu0 0
          %1080 = vmatpush1.bf16.msra.mxu0 0
          %1081 = vmatprep.subr.bf16.mxu0 0
          %1082 = vmatpush1.bf16.msra.mxu0 0
          %1083 = vmatprep.subr.bf16.mxu0 0
          %1084 = vmatpush1.bf16.msra.mxu0 0
          %1085 = vmatprep.subr.bf16.mxu0 0
          %1086 = vmatpush1.bf16.msra.mxu0 0
          %1087 = vmatprep.subr.bf16.mxu0 0
          %1088 = vmatpush1.bf16.msra.mxu0 %v1072
          %1089 = vmatprep.subr.bf16.mxu0 0
          %1090 = vmatpush1.bf16.msra.mxu0 %v1071
          %1091 = vmatprep.subr.bf16.mxu0 0
          %1092 = vmatpush2.bf16.msra.mxu0 0
          %1093 = vmatprep.subr.bf16.mxu0 0
          %1094 = vmatpush2.bf16.msra.mxu0 0
          %1095 = vmatprep.subr.bf16.mxu0 0
          %1096 = vmatpush2.bf16.msra.mxu0 0
          %1097 = vmatprep.subr.bf16.mxu0 0
          %1098 = vmatpush2.bf16.msra.mxu0 0
          %1099 = vmatprep.subr.bf16.mxu0 0
          %1100 = vmatpush2.bf16.msra.mxu0 0
          %1101 = vmatprep.subr.bf16.mxu0 0
          %1102 = vmatpush2.bf16.msra.mxu0 0
          %1103 = vmatprep.subr.bf16.mxu0 0
          %1104 = vmatpush2.bf16.msra.mxu0 0
          %1105 = vmatprep.subr.bf16.mxu0 0
          %1106 = vmatpush2.bf16.msra.mxu0 0
          %1107 = vmatprep.mubr.bf16.mxu0 0
          %1108 = vmatmul.mubr.bf16.gmra.mxu0 %v668
          %v1109 = vpop.f32.mrf.mxu0
          %v1110 = vadd.f32 %v1061, %v1109
          %v1111 = vpop.f32.mrf.mxu0
          %v1112 = vpop.f32.mrf.mxu0
          %v1113 = vpop.f32.mrf.mxu0
          %1114 = vdwg.mxu0
          %s1115 = scalar_lea.vmem %s6, 48
          %v1116 = vld [vmem:[%s1115] sm:$0xf]
          %v1117 = vld [vmem:[%s1115 + $0x4] sm:$0xf]
          %v1118 = vld [vmem:[%s1115 + $0x8] sm:$0xf]
          %v1119 = vld [vmem:[%s1115 + $0xc] sm:$0xf]
          %s1120 = scalar_lea.vmem %s7, 3
          %v1121 = vld [vmem:[%s1120] sm:$0x1]
          %v1123 = vlaneseq
          %v1124 = vshrl.u32 %v1123, 7
          %v1125 = vsub.s32 0, %v1124
          %v1126 = vrot.slane %v1121, %v1125
          %v1132 = vunpack.c.l.b16 %v1116
          %v1133 = vunpack.c.l.b16 %v1117
          %v1134 = vunpack.c.l.b16 %v1118
          %v1135 = vunpack.c.l.b16 %v1119
          %v1136 = vpack.c.b16 %v1133, %v1132
          %v1137 = vpack.c.b16 %v1135, %v1134
          %1140 = vmatprep.subr.bf16.mxu0 0
          %1141 = vmatpush1.bf16.msra.mxu0 0
          %1142 = vmatprep.subr.bf16.mxu0 0
          %1143 = vmatpush1.bf16.msra.mxu0 0
          %1144 = vmatprep.subr.bf16.mxu0 0
          %1145 = vmatpush1.bf16.msra.mxu0 0
          %1146 = vmatprep.subr.bf16.mxu0 0
          %1147 = vmatpush1.bf16.msra.mxu0 0
          %1148 = vmatprep.subr.bf16.mxu0 0
          %1149 = vmatpush1.bf16.msra.mxu0 0
          %1150 = vmatprep.subr.bf16.mxu0 0
          %1151 = vmatpush1.bf16.msra.mxu0 0
          %1152 = vmatprep.subr.bf16.mxu0 0
          %1153 = vmatpush1.bf16.msra.mxu0 %v1137
          %1154 = vmatprep.subr.bf16.mxu0 0
          %1155 = vmatpush1.bf16.msra.mxu0 %v1136
          %1156 = vmatprep.subr.bf16.mxu0 0
          %1157 = vmatpush2.bf16.msra.mxu0 0
          %1158 = vmatprep.subr.bf16.mxu0 0
          %1159 = vmatpush2.bf16.msra.mxu0 0
          %1160 = vmatprep.subr.bf16.mxu0 0
          %1161 = vmatpush2.bf16.msra.mxu0 0
          %1162 = vmatprep.subr.bf16.mxu0 0
          %1163 = vmatpush2.bf16.msra.mxu0 0
          %1164 = vmatprep.subr.bf16.mxu0 0
          %1165 = vmatpush2.bf16.msra.mxu0 0
          %1166 = vmatprep.subr.bf16.mxu0 0
          %1167 = vmatpush2.bf16.msra.mxu0 0
          %1168 = vmatprep.subr.bf16.mxu0 0
          %1169 = vmatpush2.bf16.msra.mxu0 0
          %1170 = vmatprep.subr.bf16.mxu0 0
          %1171 = vmatpush2.bf16.msra.mxu0 0
          %1172 = vmatprep.mubr.bf16.mxu0 0
          %1173 = vmatmul.mubr.bf16.gmra.mxu0 %v668
          %v1174 = vpop.f32.mrf.mxu0
          %v1175 = vadd.f32 %v1126, %v1174
          %v1176 = vpop.f32.mrf.mxu0
          %v1177 = vpop.f32.mrf.mxu0
          %v1178 = vpop.f32.mrf.mxu0
          %1179 = vdwg.mxu0
          %v1180 = vpack.c.bf16 %v1110, %v1110
          %s1181 = scalar_lea.vmem [#allocation2], 12
          %1182 = vst.msk [vmem:[%s1181] sm:$0xf] %vm774, %v1180
          %v1183 = vpack.c.bf16 %v1175, %v1175
          %s1184 = scalar_lea.vmem [#allocation3], 12
          %1185 = vst.msk [vmem:[%s1184] sm:$0xf] %vm774, %v1183
        $region96: #{tpu_custom_call.1} parent=91 // pred_fallthru
          _
        %s1186 = smul.u32 %s37, 8
        %s1187 = scalar_lea.vmem %s595, %s1186
        %v1188 = vld [vmem:[%s1187] sm:$0xff]
        %vm1189 = vcmask 261120
        %v1190 = vsel %vm1189, %v1188, 0.0
        %1191 = vadd.xlane.f32.xlu0 %v1190
        %v1192 = vpop.xlane.xlu0 %1191
        %v1193 = vrcp.pop 32.0
        %v1194 = vmul.f32 %v1192, %v1193
        %v1195 = vsub.f32 %v1188, %v1194
        %v1196 = vmul.f32 %v1195, %v1195
        %v1197 = vsel %vm1189, %v1196, 0.0
        %1198 = vadd.xlane.f32.xlu0 %v1197
        %v1199 = vpop.xlane.xlu0 %1198
        %v1200 = vmul.f32 %v1199, 0.032258064
        %v1201 = vrsqrt.pop %v1200
        %v1202 = vmul.f32 %v1200, %v1201
        %vm1203 = vcmp.eq.f32.partialorder %v1200, inf
        %v1204 = vsel %vm1203, %v1200, %v1202
        %vm1205 = vcmp.eq.f32.partialorder %v1200, 0.0
        %v1206 = vand.u32 %v1200, 2147483648
        %v1207 = vsel %vm1205, %v1206, %v1204
        %v1208 = vadd.f32 %v1207, 1e-06
        %v1209 = vrcp.pop %v1208
        %v1211 = vlaneseq
        %v1212 = vshrl.u32 %v1211, 7
        %v1213 = vsub.s32 0, %v1212
        %v1214 = vrot.slane %v600, %v1213
        %v1216 = vmul.f32 %v1214, %v1195
        %v1217 = vmul.f32 %v1216, %v1209
        %v1219 = vlaneseq
        %v1220 = vshrl.u32 %v1219, 7
        %v1221 = vsub.s32 0, %v1220
        %v1222 = vrot.slane %v601, %v1221
        %v1224 = vadd.f32 %v1217, %v1222
        %v1225 = vpack.c.bf16 %v1224, %v1224
        %v1226 = vld [vmem:[%s598] sm:$0x1]
        %vm1227 = vcmp.eq.s32.totalorder %v1226, 0
        %v1228 = vsel %vm1227, -1e+09, 0.0
        %v1229 = vld [vmem:[%s2] sm:$0xf]
        %v1230 = vld [vmem:[%s2 + $0x4] sm:$0xf]
        %v1231 = vld [vmem:[%s2 + $0x8] sm:$0xf]
        %v1232 = vld [vmem:[%s2 + $0xc] sm:$0xf]
        %v1233 = vld [vmem:[%s3] sm:$0x1]
        %v1235 = vlaneseq
        %v1236 = vshrl.u32 %v1235, 7
        %v1237 = vsub.s32 0, %v1236
        %v1238 = vrot.slane %v1233, %v1237
        %v1244 = vunpack.c.l.b16 %v1229
        %v1245 = vunpack.c.l.b16 %v1230
        %v1246 = vunpack.c.l.b16 %v1231
        %v1247 = vunpack.c.l.b16 %v1232
        %v1248 = vpack.c.b16 %v1245, %v1244
        %v1249 = vpack.c.b16 %v1247, %v1246
        %v1253 = vsel %vm1189, %v1225, 0
        %1255 = vmatprep.subr.bf16.mxu0 0
        %1256 = vmatpush1.bf16.msra.mxu0 0
        %1257 = vmatprep.subr.bf16.mxu0 0
        %1258 = vmatpush1.bf16.msra.mxu0 0
        %1259 = vmatprep.subr.bf16.mxu0 0
        %1260 = vmatpush1.bf16.msra.mxu0 0
        %1261 = vmatprep.subr.bf16.mxu0 0
        %1262 = vmatpush1.bf16.msra.mxu0 0
        %1263 = vmatprep.subr.bf16.mxu0 0
        %1264 = vmatpush1.bf16.msra.mxu0 0
        %1265 = vmatprep.subr.bf16.mxu0 0
        %1266 = vmatpush1.bf16.msra.mxu0 0
        %1267 = vmatprep.subr.bf16.mxu0 0
        %1268 = vmatpush1.bf16.msra.mxu0 %v1249
        %1269 = vmatprep.subr.bf16.mxu0 0
        %1270 = vmatpush1.bf16.msra.mxu0 %v1248
        %1271 = vmatprep.subr.bf16.mxu0 0
        %1272 = vmatpush2.bf16.msra.mxu0 0
        %1273 = vmatprep.subr.bf16.mxu0 0
        %1274 = vmatpush2.bf16.msra.mxu0 0
        %1275 = vmatprep.subr.bf16.mxu0 0
        %1276 = vmatpush2.bf16.msra.mxu0 0
        %1277 = vmatprep.subr.bf16.mxu0 0
        %1278 = vmatpush2.bf16.msra.mxu0 0
        %1279 = vmatprep.subr.bf16.mxu0 0
        %1280 = vmatpush2.bf16.msra.mxu0 0
        %1281 = vmatprep.subr.bf16.mxu0 0
        %1282 = vmatpush2.bf16.msra.mxu0 0
        %1283 = vmatprep.subr.bf16.mxu0 0
        %1284 = vmatpush2.bf16.msra.mxu0 0
        %1285 = vmatprep.subr.bf16.mxu0 0
        %1286 = vmatpush2.bf16.msra.mxu0 0
        %1287 = vmatprep.mubr.bf16.mxu0 0
        %1288 = vmatmul.mubr.bf16.gmra.mxu0 %v1253
        %v1289 = vpop.f32.mrf.mxu0
        %v1290 = vadd.f32 %v1238, %v1289
        %v1291 = vpop.f32.mrf.mxu0
        %v1292 = vpop.f32.mrf.mxu0
        %v1293 = vpop.f32.mrf.mxu0
        %1294 = vdwg.mxu0
        %v1295 = vmul.f32 %v1290, 0.35355338
        %v1296 = vpack.c.bf16 %v1295, %v1295
        %v1297 = vld [vmem:[#allocation2] sm:$0xf]
        %v1299 = vlaneseq
        %v1300 = vshrl.u32 %v1299, 7
        %v1301 = vsub.s32 0, %v1300
        %v1302 = vrot.slane %v1228, %v1301
        %vm1304 = vcmask 64512
        %v1306 = vsel %vm1304, %v1296, 0
        %v1309 = vsel %vm1304, %v1297, 0
        %1311 = vmatprep.subr.bf16.mxu0 0
        %1312 = vmatpush1.bf16.xpose.msra.mxu0 0
        %1313 = vmatprep.subr.bf16.mxu0 0
        %1314 = vmatpush1.bf16.xpose.msra.mxu0 0
        %1315 = vmatprep.subr.bf16.mxu0 0
        %1316 = vmatpush1.bf16.xpose.msra.mxu0 0
        %1317 = vmatprep.subr.bf16.mxu0 0
        %1318 = vmatpush1.bf16.xpose.msra.mxu0 0
        %1319 = vmatprep.subr.bf16.mxu0 0
        %1320 = vmatpush1.bf16.xpose.msra.mxu0 0
        %1321 = vmatprep.subr.bf16.mxu0 0
        %1322 = vmatpush1.bf16.xpose.msra.mxu0 0
        %1323 = vmatprep.subr.bf16.mxu0 0
        %1324 = vmatpush1.bf16.xpose.msra.mxu0 0
        %1325 = vmatprep.subr.bf16.mxu0 0
        %1326 = vmatpush1.bf16.xpose.msra.mxu0 %v1309
        %1327 = vmatprep.subr.bf16.mxu0 0
        %1328 = vmatpush2.bf16.xpose.msra.mxu0 0
        %1329 = vmatprep.subr.bf16.mxu0 0
        %1330 = vmatpush2.bf16.xpose.msra.mxu0 0
        %1331 = vmatprep.subr.bf16.mxu0 0
        %1332 = vmatpush2.bf16.xpose.msra.mxu0 0
        %1333 = vmatprep.subr.bf16.mxu0 0
        %1334 = vmatpush2.bf16.xpose.msra.mxu0 0
        %1335 = vmatprep.subr.bf16.mxu0 0
        %1336 = vmatpush2.bf16.xpose.msra.mxu0 0
        %1337 = vmatprep.subr.bf16.mxu0 0
        %1338 = vmatpush2.bf16.xpose.msra.mxu0 0
        %1339 = vmatprep.subr.bf16.mxu0 0
        %1340 = vmatpush2.bf16.xpose.msra.mxu0 0
        %1341 = vmatprep.subr.bf16.mxu0 0
        %1342 = vmatpush2.bf16.xpose.msra.mxu0 0
        %1343 = vmatprep.mubr.bf16.mxu0 0
        %1344 = vmatmul.mubr.bf16.gmra.mxu0 %v1306
        %v1345 = vpop.f32.mrf.mxu0
        %v1346 = vadd.f32 %v1302, %v1345
        %v1347 = vpop.f32.mrf.mxu0
        %v1348 = vpop.f32.mrf.mxu0
        %v1349 = vpop.f32.mrf.mxu0
        %1350 = vdwg.mxu0
        %v1351 = vsel %vm1304, %v1346, -inf
        %1352 = vmax.xlane.f32.xlu0 %v1351
        %v1353 = vpop.xlane.xlu0 %1352
        %v1354 = vsub.f32 %v1346, %v1353
        %v1355 = vmul.f32 %v1354, 1.442695
        %v1356 = vpow.pop %v1355
        %v1357 = vsel %vm1304, %v1356, 0.0
        %1358 = vadd.xlane.f32.xlu0 %v1357
        %v1359 = vpop.xlane.xlu0 %1358
        %v1360 = vpack.c.bf16 %v1356, %v1356
        %v1361 = vld [vmem:[#allocation3] sm:$0xf]
        %v1363 = vsel %vm1304, %v1360, 0
        %vm1365 = vcmask 1043456
        %v1367 = vsel %vm1365, %v1361, 0
        %1369 = vmatprep.subr.bf16.mxu0 0
        %1370 = vmatpush1.bf16.msra.mxu0 0
        %1371 = vmatprep.subr.bf16.mxu0 0
        %1372 = vmatpush1.bf16.msra.mxu0 0
        %1373 = vmatprep.subr.bf16.mxu0 0
        %1374 = vmatpush1.bf16.msra.mxu0 0
        %1375 = vmatprep.subr.bf16.mxu0 0
        %1376 = vmatpush1.bf16.msra.mxu0 0
        %1377 = vmatprep.subr.bf16.mxu0 0
        %1378 = vmatpush1.bf16.msra.mxu0 0
        %1379 = vmatprep.subr.bf16.mxu0 0
        %1380 = vmatpush1.bf16.msra.mxu0 0
        %1381 = vmatprep.subr.bf16.mxu0 0
        %1382 = vmatpush1.bf16.msra.mxu0 0
        %1383 = vmatprep.subr.bf16.mxu0 0
        %1384 = vmatpush1.bf16.msra.mxu0 %v1367
        %1385 = vmatprep.subr.bf16.mxu0 0
        %1386 = vmatpush2.bf16.msra.mxu0 0
        %1387 = vmatprep.subr.bf16.mxu0 0
        %1388 = vmatpush2.bf16.msra.mxu0 0
        %1389 = vmatprep.subr.bf16.mxu0 0
        %1390 = vmatpush2.bf16.msra.mxu0 0
        %1391 = vmatprep.subr.bf16.mxu0 0
        %1392 = vmatpush2.bf16.msra.mxu0 0
        %1393 = vmatprep.subr.bf16.mxu0 0
        %1394 = vmatpush2.bf16.msra.mxu0 0
        %1395 = vmatprep.subr.bf16.mxu0 0
        %1396 = vmatpush2.bf16.msra.mxu0 0
        %1397 = vmatprep.subr.bf16.mxu0 0
        %1398 = vmatpush2.bf16.msra.mxu0 0
        %1399 = vmatprep.subr.bf16.mxu0 0
        %1400 = vmatpush2.bf16.msra.mxu0 0
        %1401 = vmatprep.mubr.bf16.mxu0 0
        %1402 = vmatmul.mubr.bf16.gmra.mxu0 %v1363
        %v1403 = vpop.f32.mrf.mxu0
        %v1404 = vadd.f32 0.0, %v1403
        %v1405 = vpop.f32.mrf.mxu0
        %v1406 = vpop.f32.mrf.mxu0
        %v1407 = vpop.f32.mrf.mxu0
        %1408 = vdwg.mxu0
        %v1409 = vrcp.pop %v1359
        %v1410 = vmul.f32 %v1404, %v1409
        %v1411 = vpack.c.bf16 %v1410, %v1410
        %v1412 = vld [vmem:[%s8] sm:$0xf]
        %s1413 = scalar_lea.vmem %s2, 16
        %v1414 = vld [vmem:[%s1413] sm:$0xf]
        %v1415 = vld [vmem:[%s1413 + $0x4] sm:$0xf]
        %v1416 = vld [vmem:[%s1413 + $0x8] sm:$0xf]
        %v1417 = vld [vmem:[%s1413 + $0xc] sm:$0xf]
        %s1418 = scalar_lea.vmem %s3, 1
        %v1419 = vld [vmem:[%s1418] sm:$0x1]
        %v1421 = vlaneseq
        %v1422 = vshrl.u32 %v1421, 7
        %v1423 = vsub.s32 0, %v1422
        %v1424 = vrot.slane %v1419, %v1423
        %v1430 = vunpack.c.l.b16 %v1414
        %v1431 = vunpack.c.l.b16 %v1415
        %v1432 = vunpack.c.l.b16 %v1416
        %v1433 = vunpack.c.l.b16 %v1417
        %v1434 = vpack.c.b16 %v1431, %v1430
        %v1435 = vpack.c.b16 %v1433, %v1432
        %1438 = vmatprep.subr.bf16.mxu0 0
        %1439 = vmatpush1.bf16.msra.mxu0 0
        %1440 = vmatprep.subr.bf16.mxu0 0
        %1441 = vmatpush1.bf16.msra.mxu0 0
        %1442 = vmatprep.subr.bf16.mxu0 0
        %1443 = vmatpush1.bf16.msra.mxu0 0
        %1444 = vmatprep.subr.bf16.mxu0 0
        %1445 = vmatpush1.bf16.msra.mxu0 0
        %1446 = vmatprep.subr.bf16.mxu0 0
        %1447 = vmatpush1.bf16.msra.mxu0 0
        %1448 = vmatprep.subr.bf16.mxu0 0
        %1449 = vmatpush1.bf16.msra.mxu0 0
        %1450 = vmatprep.subr.bf16.mxu0 0
        %1451 = vmatpush1.bf16.msra.mxu0 %v1435
        %1452 = vmatprep.subr.bf16.mxu0 0
        %1453 = vmatpush1.bf16.msra.mxu0 %v1434
        %1454 = vmatprep.subr.bf16.mxu0 0
        %1455 = vmatpush2.bf16.msra.mxu0 0
        %1456 = vmatprep.subr.bf16.mxu0 0
        %1457 = vmatpush2.bf16.msra.mxu0 0
        %1458 = vmatprep.subr.bf16.mxu0 0
        %1459 = vmatpush2.bf16.msra.mxu0 0
        %1460 = vmatprep.subr.bf16.mxu0 0
        %1461 = vmatpush2.bf16.msra.mxu0 0
        %1462 = vmatprep.subr.bf16.mxu0 0
        %1463 = vmatpush2.bf16.msra.mxu0 0
        %1464 = vmatprep.subr.bf16.mxu0 0
        %1465 = vmatpush2.bf16.msra.mxu0 0
        %1466 = vmatprep.subr.bf16.mxu0 0
        %1467 = vmatpush2.bf16.msra.mxu0 0
        %1468 = vmatprep.subr.bf16.mxu0 0
        %1469 = vmatpush2.bf16.msra.mxu0 0
        %1470 = vmatprep.mubr.bf16.mxu0 0
        %1471 = vmatmul.mubr.bf16.gmra.mxu0 %v1253
        %v1472 = vpop.f32.mrf.mxu0
        %v1473 = vadd.f32 %v1424, %v1472
        %v1474 = vpop.f32.mrf.mxu0
        %v1475 = vpop.f32.mrf.mxu0
        %v1476 = vpop.f32.mrf.mxu0
        %1477 = vdwg.mxu0
        %v1478 = vmul.f32 %v1473, 0.35355338
        %v1479 = vpack.c.bf16 %v1478, %v1478
        %s1480 = scalar_lea.vmem [#allocation2], 4
        %v1481 = vld [vmem:[%s1480] sm:$0xf]
        %v1483 = vsel %vm1304, %v1479, 0
        %v1486 = vsel %vm1304, %v1481, 0
        %1488 = vmatprep.subr.bf16.mxu0 0
        %1489 = vmatpush1.bf16.xpose.msra.mxu0 0
        %1490 = vmatprep.subr.bf16.mxu0 0
        %1491 = vmatpush1.bf16.xpose.msra.mxu0 0
        %1492 = vmatprep.subr.bf16.mxu0 0
        %1493 = vmatpush1.bf16.xpose.msra.mxu0 0
        %1494 = vmatprep.subr.bf16.mxu0 0
        %1495 = vmatpush1.bf16.xpose.msra.mxu0 0
        %1496 = vmatprep.subr.bf16.mxu0 0
        %1497 = vmatpush1.bf16.xpose.msra.mxu0 0
        %1498 = vmatprep.subr.bf16.mxu0 0
        %1499 = vmatpush1.bf16.xpose.msra.mxu0 0
        %1500 = vmatprep.subr.bf16.mxu0 0
        %1501 = vmatpush1.bf16.xpose.msra.mxu0 0
        %1502 = vmatprep.subr.bf16.mxu0 0
        %1503 = vmatpush1.bf16.xpose.msra.mxu0 %v1486
        %1504 = vmatprep.subr.bf16.mxu0 0
        %1505 = vmatpush2.bf16.xpose.msra.mxu0 0
        %1506 = vmatprep.subr.bf16.mxu0 0
        %1507 = vmatpush2.bf16.xpose.msra.mxu0 0
        %1508 = vmatprep.subr.bf16.mxu0 0
        %1509 = vmatpush2.bf16.xpose.msra.mxu0 0
        %1510 = vmatprep.subr.bf16.mxu0 0
        %1511 = vmatpush2.bf16.xpose.msra.mxu0 0
        %1512 = vmatprep.subr.bf16.mxu0 0
        %1513 = vmatpush2.bf16.xpose.msra.mxu0 0
        %1514 = vmatprep.subr.bf16.mxu0 0
        %1515 = vmatpush2.bf16.xpose.msra.mxu0 0
        %1516 = vmatprep.subr.bf16.mxu0 0
        %1517 = vmatpush2.bf16.xpose.msra.mxu0 0
        %1518 = vmatprep.subr.bf16.mxu0 0
        %1519 = vmatpush2.bf16.xpose.msra.mxu0 0
        %1520 = vmatprep.mubr.bf16.mxu0 0
        %1521 = vmatmul.mubr.bf16.gmra.mxu0 %v1483
        %v1522 = vpop.f32.mrf.mxu0
        %v1523 = vadd.f32 %v1302, %v1522
        %v1524 = vpop.f32.mrf.mxu0
        %v1525 = vpop.f32.mrf.mxu0
        %v1526 = vpop.f32.mrf.mxu0
        %1527 = vdwg.mxu0
        %v1528 = vsel %vm1304, %v1523, -inf
        %1529 = vmax.xlane.f32.xlu0 %v1528
        %v1530 = vpop.xlane.xlu0 %1529
        %v1531 = vsub.f32 %v1523, %v1530
        %v1532 = vmul.f32 %v1531, 1.442695
        %v1533 = vpow.pop %v1532
        %v1534 = vsel %vm1304, %v1533, 0.0
        %1535 = vadd.xlane.f32.xlu0 %v1534
        %v1536 = vpop.xlane.xlu0 %1535
        %v1537 = vpack.c.bf16 %v1533, %v1533
        %s1538 = scalar_lea.vmem [#allocation3], 4
        %v1539 = vld [vmem:[%s1538] sm:$0xf]
        %v1541 = vsel %vm1304, %v1537, 0
        %v1544 = vsel %vm1365, %v1539, 0
        %1546 = vmatprep.subr.bf16.mxu0 0
        %1547 = vmatpush1.bf16.msra.mxu0 0
        %1548 = vmatprep.subr.bf16.mxu0 0
        %1549 = vmatpush1.bf16.msra.mxu0 0
        %1550 = vmatprep.subr.bf16.mxu0 0
        %1551 = vmatpush1.bf16.msra.mxu0 0
        %1552 = vmatprep.subr.bf16.mxu0 0
        %1553 = vmatpush1.bf16.msra.mxu0 0
        %1554 = vmatprep.subr.bf16.mxu0 0
        %1555 = vmatpush1.bf16.msra.mxu0 0
        %1556 = vmatprep.subr.bf16.mxu0 0
        %1557 = vmatpush1.bf16.msra.mxu0 0
        %1558 = vmatprep.subr.bf16.mxu0 0
        %1559 = vmatpush1.bf16.msra.mxu0 0
        %1560 = vmatprep.subr.bf16.mxu0 0
        %1561 = vmatpush1.bf16.msra.mxu0 %v1544
        %1562 = vmatprep.subr.bf16.mxu0 0
        %1563 = vmatpush2.bf16.msra.mxu0 0
        %1564 = vmatprep.subr.bf16.mxu0 0
        %1565 = vmatpush2.bf16.msra.mxu0 0
        %1566 = vmatprep.subr.bf16.mxu0 0
        %1567 = vmatpush2.bf16.msra.mxu0 0
        %1568 = vmatprep.subr.bf16.mxu0 0
        %1569 = vmatpush2.bf16.msra.mxu0 0
        %1570 = vmatprep.subr.bf16.mxu0 0
        %1571 = vmatpush2.bf16.msra.mxu0 0
        %1572 = vmatprep.subr.bf16.mxu0 0
        %1573 = vmatpush2.bf16.msra.mxu0 0
        %1574 = vmatprep.subr.bf16.mxu0 0
        %1575 = vmatpush2.bf16.msra.mxu0 0
        %1576 = vmatprep.subr.bf16.mxu0 0
        %1577 = vmatpush2.bf16.msra.mxu0 0
        %1578 = vmatprep.mubr.bf16.mxu0 0
        %1579 = vmatmul.mubr.bf16.gmra.mxu0 %v1541
        %v1580 = vpop.f32.mrf.mxu0
        %v1581 = vadd.f32 0.0, %v1580
        %v1582 = vpop.f32.mrf.mxu0
        %v1583 = vpop.f32.mrf.mxu0
        %v1584 = vpop.f32.mrf.mxu0
        %1585 = vdwg.mxu0
        %v1586 = vrcp.pop %v1536
        %v1587 = vmul.f32 %v1581, %v1586
        %v1588 = vpack.c.bf16 %v1587, %v1587
        %s1589 = scalar_lea.vmem %s8, 4
        %v1590 = vld [vmem:[%s1589] sm:$0xf]
        %v1592 = vsel %vm1304, %v1588, 0
        %v1595 = vsel %vm1365, %v1590, 0
        %1597 = vmatprep.subr.bf16.mxu0 0
        %1598 = vmatpush1.bf16.msra.mxu0 0
        %1599 = vmatprep.subr.bf16.mxu0 0
        %1600 = vmatpush1.bf16.msra.mxu0 0
        %1601 = vmatprep.subr.bf16.mxu0 0
        %1602 = vmatpush1.bf16.msra.mxu0 0
        %1603 = vmatprep.subr.bf16.mxu0 0
        %1604 = vmatpush1.bf16.msra.mxu0 0
        %1605 = vmatprep.subr.bf16.mxu0 0
        %1606 = vmatpush1.bf16.msra.mxu0 0
        %1607 = vmatprep.subr.bf16.mxu0 0
        %1608 = vmatpush1.bf16.msra.mxu0 0
        %1609 = vmatprep.subr.bf16.mxu0 0
        %1610 = vmatpush1.bf16.msra.mxu0 0
        %1611 = vmatprep.subr.bf16.mxu0 0
        %1612 = vmatpush1.bf16.msra.mxu0 %v1595
        %1613 = vmatprep.subr.bf16.mxu0 0
        %1614 = vmatpush2.bf16.msra.mxu0 0
        %1615 = vmatprep.subr.bf16.mxu0 0
        %1616 = vmatpush2.bf16.msra.mxu0 0
        %1617 = vmatprep.subr.bf16.mxu0 0
        %1618 = vmatpush2.bf16.msra.mxu0 0
        %1619 = vmatprep.subr.bf16.mxu0 0
        %1620 = vmatpush2.bf16.msra.mxu0 0
        %1621 = vmatprep.subr.bf16.mxu0 0
        %1622 = vmatpush2.bf16.msra.mxu0 0
        %1623 = vmatprep.subr.bf16.mxu0 0
        %1624 = vmatpush2.bf16.msra.mxu0 0
        %1625 = vmatprep.subr.bf16.mxu0 0
        %1626 = vmatpush2.bf16.msra.mxu0 0
        %1627 = vmatprep.subr.bf16.mxu0 0
        %1628 = vmatpush2.bf16.msra.mxu0 0
        %1629 = vmatprep.mubr.bf16.mxu0 0
        %1630 = vmatmul.mubr.bf16.gmra.mxu0 %v1592
        %v1631 = vpop.f32.mrf.mxu0
        %v1632 = vadd.f32 0.0, %v1631
        %v1633 = vpop.f32.mrf.mxu0
        %v1634 = vpop.f32.mrf.mxu0
        %v1635 = vpop.f32.mrf.mxu0
        %1636 = vdwg.mxu0
        %v1638 = vsel %vm1304, %v1411, 0
        %v1641 = vsel %vm1365, %v1412, 0
        %1643 = vmatprep.subr.bf16.mxu0 0
        %1644 = vmatpush1.bf16.msra.mxu0 0
        %1645 = vmatprep.subr.bf16.mxu0 0
        %1646 = vmatpush1.bf16.msra.mxu0 0
        %1647 = vmatprep.subr.bf16.mxu0 0
        %1648 = vmatpush1.bf16.msra.mxu0 0
        %1649 = vmatprep.subr.bf16.mxu0 0
        %1650 = vmatpush1.bf16.msra.mxu0 0
        %1651 = vmatprep.subr.bf16.mxu0 0
        %1652 = vmatpush1.bf16.msra.mxu0 0
        %1653 = vmatprep.subr.bf16.mxu0 0
        %1654 = vmatpush1.bf16.msra.mxu0 0
        %1655 = vmatprep.subr.bf16.mxu0 0
        %1656 = vmatpush1.bf16.msra.mxu0 0
        %1657 = vmatprep.subr.bf16.mxu0 0
        %1658 = vmatpush1.bf16.msra.mxu0 %v1641
        %1659 = vmatprep.subr.bf16.mxu0 0
        %1660 = vmatpush2.bf16.msra.mxu0 0
        %1661 = vmatprep.subr.bf16.mxu0 0
        %1662 = vmatpush2.bf16.msra.mxu0 0
        %1663 = vmatprep.subr.bf16.mxu0 0
        %1664 = vmatpush2.bf16.msra.mxu0 0
        %1665 = vmatprep.subr.bf16.mxu0 0
        %1666 = vmatpush2.bf16.msra.mxu0 0
        %1667 = vmatprep.subr.bf16.mxu0 0
        %1668 = vmatpush2.bf16.msra.mxu0 0
        %1669 = vmatprep.subr.bf16.mxu0 0
        %1670 = vmatpush2.bf16.msra.mxu0 0
        %1671 = vmatprep.subr.bf16.mxu0 0
        %1672 = vmatpush2.bf16.msra.mxu0 0
        %1673 = vmatprep.subr.bf16.mxu0 0
        %1674 = vmatpush2.bf16.msra.mxu0 0
        %1675 = vmatprep.mubr.bf16.mxu0 0
        %1676 = vmatmul.mubr.bf16.gmra.mxu0 %v1638
        %v1677 = vpop.f32.mrf.mxu0
        %v1678 = vadd.f32 %v1632, %v1677
        %v1679 = vpop.f32.mrf.mxu0
        %v1680 = vpop.f32.mrf.mxu0
        %v1681 = vpop.f32.mrf.mxu0
        %1682 = vdwg.mxu0
        %s1683 = scalar_lea.vmem %s2, 32
        %v1684 = vld [vmem:[%s1683] sm:$0xf]
        %v1685 = vld [vmem:[%s1683 + $0x4] sm:$0xf]
        %v1686 = vld [vmem:[%s1683 + $0x8] sm:$0xf]
        %v1687 = vld [vmem:[%s1683 + $0xc] sm:$0xf]
        %s1688 = scalar_lea.vmem %s3, 2
        %v1689 = vld [vmem:[%s1688] sm:$0x1]
        %v1691 = vlaneseq
        %v1692 = vshrl.u32 %v1691, 7
        %v1693 = vsub.s32 0, %v1692
        %v1694 = vrot.slane %v1689, %v1693
        %v1700 = vunpack.c.l.b16 %v1684
        %v1701 = vunpack.c.l.b16 %v1685
        %v1702 = vunpack.c.l.b16 %v1686
        %v1703 = vunpack.c.l.b16 %v1687
        %v1704 = vpack.c.b16 %v1701, %v1700
        %v1705 = vpack.c.b16 %v1703, %v1702
        %1708 = vmatprep.subr.bf16.mxu0 0
        %1709 = vmatpush1.bf16.msra.mxu0 0
        %1710 = vmatprep.subr.bf16.mxu0 0
        %1711 = vmatpush1.bf16.msra.mxu0 0
        %1712 = vmatprep.subr.bf16.mxu0 0
        %1713 = vmatpush1.bf16.msra.mxu0 0
        %1714 = vmatprep.subr.bf16.mxu0 0
        %1715 = vmatpush1.bf16.msra.mxu0 0
        %1716 = vmatprep.subr.bf16.mxu0 0
        %1717 = vmatpush1.bf16.msra.mxu0 0
        %1718 = vmatprep.subr.bf16.mxu0 0
        %1719 = vmatpush1.bf16.msra.mxu0 0
        %1720 = vmatprep.subr.bf16.mxu0 0
        %1721 = vmatpush1.bf16.msra.mxu0 %v1705
        %1722 = vmatprep.subr.bf16.mxu0 0
        %1723 = vmatpush1.bf16.msra.mxu0 %v1704
        %1724 = vmatprep.subr.bf16.mxu0 0
        %1725 = vmatpush2.bf16.msra.mxu0 0
        %1726 = vmatprep.subr.bf16.mxu0 0
        %1727 = vmatpush2.bf16.msra.mxu0 0
        %1728 = vmatprep.subr.bf16.mxu0 0
        %1729 = vmatpush2.bf16.msra.mxu0 0
        %1730 = vmatprep.subr.bf16.mxu0 0
        %1731 = vmatpush2.bf16.msra.mxu0 0
        %1732 = vmatprep.subr.bf16.mxu0 0
        %1733 = vmatpush2.bf16.msra.mxu0 0
        %1734 = vmatprep.subr.bf16.mxu0 0
        %1735 = vmatpush2.bf16.msra.mxu0 0
        %1736 = vmatprep.subr.bf16.mxu0 0
        %1737 = vmatpush2.bf16.msra.mxu0 0
        %1738 = vmatprep.subr.bf16.mxu0 0
        %1739 = vmatpush2.bf16.msra.mxu0 0
        %1740 = vmatprep.mubr.bf16.mxu0 0
        %1741 = vmatmul.mubr.bf16.gmra.mxu0 %v1253
        %v1742 = vpop.f32.mrf.mxu0
        %v1743 = vadd.f32 %v1694, %v1742
        %v1744 = vpop.f32.mrf.mxu0
        %v1745 = vpop.f32.mrf.mxu0
        %v1746 = vpop.f32.mrf.mxu0
        %1747 = vdwg.mxu0
        %v1748 = vmul.f32 %v1743, 0.35355338
        %v1749 = vpack.c.bf16 %v1748, %v1748
        %s1750 = scalar_lea.vmem [#allocation2], 8
        %v1751 = vld [vmem:[%s1750] sm:$0xf]
        %v1753 = vsel %vm1304, %v1749, 0
        %v1756 = vsel %vm1304, %v1751, 0
        %1758 = vmatprep.subr.bf16.mxu0 0
        %1759 = vmatpush1.bf16.xpose.msra.mxu0 0
        %1760 = vmatprep.subr.bf16.mxu0 0
        %1761 = vmatpush1.bf16.xpose.msra.mxu0 0
        %1762 = vmatprep.subr.bf16.mxu0 0
        %1763 = vmatpush1.bf16.xpose.msra.mxu0 0
        %1764 = vmatprep.subr.bf16.mxu0 0
        %1765 = vmatpush1.bf16.xpose.msra.mxu0 0
        %1766 = vmatprep.subr.bf16.mxu0 0
        %1767 = vmatpush1.bf16.xpose.msra.mxu0 0
        %1768 = vmatprep.subr.bf16.mxu0 0
        %1769 = vmatpush1.bf16.xpose.msra.mxu0 0
        %1770 = vmatprep.subr.bf16.mxu0 0
        %1771 = vmatpush1.bf16.xpose.msra.mxu0 0
        %1772 = vmatprep.subr.bf16.mxu0 0
        %1773 = vmatpush1.bf16.xpose.msra.mxu0 %v1756
        %1774 = vmatprep.subr.bf16.mxu0 0
        %1775 = vmatpush2.bf16.xpose.msra.mxu0 0
        %1776 = vmatprep.subr.bf16.mxu0 0
        %1777 = vmatpush2.bf16.xpose.msra.mxu0 0
        %1778 = vmatprep.subr.bf16.mxu0 0
        %1779 = vmatpush2.bf16.xpose.msra.mxu0 0
        %1780 = vmatprep.subr.bf16.mxu0 0
        %1781 = vmatpush2.bf16.xpose.msra.mxu0 0
        %1782 = vmatprep.subr.bf16.mxu0 0
        %1783 = vmatpush2.bf16.xpose.msra.mxu0 0
        %1784 = vmatprep.subr.bf16.mxu0 0
        %1785 = vmatpush2.bf16.xpose.msra.mxu0 0
        %1786 = vmatprep.subr.bf16.mxu0 0
        %1787 = vmatpush2.bf16.xpose.msra.mxu0 0
        %1788 = vmatprep.subr.bf16.mxu0 0
        %1789 = vmatpush2.bf16.xpose.msra.mxu0 0
        %1790 = vmatprep.mubr.bf16.mxu0 0
        %1791 = vmatmul.mubr.bf16.gmra.mxu0 %v1753
        %v1792 = vpop.f32.mrf.mxu0
        %v1793 = vadd.f32 %v1302, %v1792
        %v1794 = vpop.f32.mrf.mxu0
        %v1795 = vpop.f32.mrf.mxu0
        %v1796 = vpop.f32.mrf.mxu0
        %1797 = vdwg.mxu0
        %v1798 = vsel %vm1304, %v1793, -inf
        %1799 = vmax.xlane.f32.xlu0 %v1798
        %v1800 = vpop.xlane.xlu0 %1799
        %v1801 = vsub.f32 %v1793, %v1800
        %v1802 = vmul.f32 %v1801, 1.442695
        %v1803 = vpow.pop %v1802
        %v1804 = vsel %vm1304, %v1803, 0.0
        %1805 = vadd.xlane.f32.xlu0 %v1804
        %v1806 = vpop.xlane.xlu0 %1805
        %v1807 = vpack.c.bf16 %v1803, %v1803
        %s1808 = scalar_lea.vmem [#allocation3], 8
        %v1809 = vld [vmem:[%s1808] sm:$0xf]
        %v1811 = vsel %vm1304, %v1807, 0
        %v1814 = vsel %vm1365, %v1809, 0
        %1816 = vmatprep.subr.bf16.mxu0 0
        %1817 = vmatpush1.bf16.msra.mxu0 0
        %1818 = vmatprep.subr.bf16.mxu0 0
        %1819 = vmatpush1.bf16.msra.mxu0 0
        %1820 = vmatprep.subr.bf16.mxu0 0
        %1821 = vmatpush1.bf16.msra.mxu0 0
        %1822 = vmatprep.subr.bf16.mxu0 0
        %1823 = vmatpush1.bf16.msra.mxu0 0
        %1824 = vmatprep.subr.bf16.mxu0 0
        %1825 = vmatpush1.bf16.msra.mxu0 0
        %1826 = vmatprep.subr.bf16.mxu0 0
        %1827 = vmatpush1.bf16.msra.mxu0 0
        %1828 = vmatprep.subr.bf16.mxu0 0
        %1829 = vmatpush1.bf16.msra.mxu0 0
        %1830 = vmatprep.subr.bf16.mxu0 0
        %1831 = vmatpush1.bf16.msra.mxu0 %v1814
        %1832 = vmatprep.subr.bf16.mxu0 0
        %1833 = vmatpush2.bf16.msra.mxu0 0
        %1834 = vmatprep.subr.bf16.mxu0 0
        %1835 = vmatpush2.bf16.msra.mxu0 0
        %1836 = vmatprep.subr.bf16.mxu0 0
        %1837 = vmatpush2.bf16.msra.mxu0 0
        %1838 = vmatprep.subr.bf16.mxu0 0
        %1839 = vmatpush2.bf16.msra.mxu0 0
        %1840 = vmatprep.subr.bf16.mxu0 0
        %1841 = vmatpush2.bf16.msra.mxu0 0
        %1842 = vmatprep.subr.bf16.mxu0 0
        %1843 = vmatpush2.bf16.msra.mxu0 0
        %1844 = vmatprep.subr.bf16.mxu0 0
        %1845 = vmatpush2.bf16.msra.mxu0 0
        %1846 = vmatprep.subr.bf16.mxu0 0
        %1847 = vmatpush2.bf16.msra.mxu0 0
        %1848 = vmatprep.mubr.bf16.mxu0 0
        %1849 = vmatmul.mubr.bf16.gmra.mxu0 %v1811
        %v1850 = vpop.f32.mrf.mxu0
        %v1851 = vadd.f32 0.0, %v1850
        %v1852 = vpop.f32.mrf.mxu0
        %v1853 = vpop.f32.mrf.mxu0
        %v1854 = vpop.f32.mrf.mxu0
        %1855 = vdwg.mxu0
        %v1856 = vrcp.pop %v1806
        %v1857 = vmul.f32 %v1851, %v1856
        %v1858 = vpack.c.bf16 %v1857, %v1857
        %s1859 = scalar_lea.vmem %s8, 8
        %v1860 = vld [vmem:[%s1859] sm:$0xf]
        %v1862 = vsel %vm1304, %v1858, 0
        %v1865 = vsel %vm1365, %v1860, 0
        %1867 = vmatprep.subr.bf16.mxu0 0
        %1868 = vmatpush1.bf16.msra.mxu0 0
        %1869 = vmatprep.subr.bf16.mxu0 0
        %1870 = vmatpush1.bf16.msra.mxu0 0
        %1871 = vmatprep.subr.bf16.mxu0 0
        %1872 = vmatpush1.bf16.msra.mxu0 0
        %1873 = vmatprep.subr.bf16.mxu0 0
        %1874 = vmatpush1.bf16.msra.mxu0 0
        %1875 = vmatprep.subr.bf16.mxu0 0
        %1876 = vmatpush1.bf16.msra.mxu0 0
        %1877 = vmatprep.subr.bf16.mxu0 0
        %1878 = vmatpush1.bf16.msra.mxu0 0
        %1879 = vmatprep.subr.bf16.mxu0 0
        %1880 = vmatpush1.bf16.msra.mxu0 0
        %1881 = vmatprep.subr.bf16.mxu0 0
        %1882 = vmatpush1.bf16.msra.mxu0 %v1865
        %1883 = vmatprep.subr.bf16.mxu0 0
        %1884 = vmatpush2.bf16.msra.mxu0 0
        %1885 = vmatprep.subr.bf16.mxu0 0
        %1886 = vmatpush2.bf16.msra.mxu0 0
        %1887 = vmatprep.subr.bf16.mxu0 0
        %1888 = vmatpush2.bf16.msra.mxu0 0
        %1889 = vmatprep.subr.bf16.mxu0 0
        %1890 = vmatpush2.bf16.msra.mxu0 0
        %1891 = vmatprep.subr.bf16.mxu0 0
        %1892 = vmatpush2.bf16.msra.mxu0 0
        %1893 = vmatprep.subr.bf16.mxu0 0
        %1894 = vmatpush2.bf16.msra.mxu0 0
        %1895 = vmatprep.subr.bf16.mxu0 0
        %1896 = vmatpush2.bf16.msra.mxu0 0
        %1897 = vmatprep.subr.bf16.mxu0 0
        %1898 = vmatpush2.bf16.msra.mxu0 0
        %1899 = vmatprep.mubr.bf16.mxu0 0
        %1900 = vmatmul.mubr.bf16.gmra.mxu0 %v1862
        %v1901 = vpop.f32.mrf.mxu0
        %v1902 = vadd.f32 0.0, %v1901
        %v1903 = vpop.f32.mrf.mxu0
        %v1904 = vpop.f32.mrf.mxu0
        %v1905 = vpop.f32.mrf.mxu0
        %1906 = vdwg.mxu0
        %v1907 = vadd.f32 %v1678, %v1902
        %s1908 = scalar_lea.vmem %s2, 48
        %v1909 = vld [vmem:[%s1908] sm:$0xf]
        %v1910 = vld [vmem:[%s1908 + $0x4] sm:$0xf]
        %v1911 = vld [vmem:[%s1908 + $0x8] sm:$0xf]
        %v1912 = vld [vmem:[%s1908 + $0xc] sm:$0xf]
        %s1913 = scalar_lea.vmem %s3, 3
        %v1914 = vld [vmem:[%s1913] sm:$0x1]
        %v1916 = vlaneseq
        %v1917 = vshrl.u32 %v1916, 7
        %v1918 = vsub.s32 0, %v1917
        %v1919 = vrot.slane %v1914, %v1918
        %v1925 = vunpack.c.l.b16 %v1909
        %v1926 = vunpack.c.l.b16 %v1910
        %v1927 = vunpack.c.l.b16 %v1911
        %v1928 = vunpack.c.l.b16 %v1912
        %v1929 = vpack.c.b16 %v1926, %v1925
        %v1930 = vpack.c.b16 %v1928, %v1927
        %1933 = vmatprep.subr.bf16.mxu0 0
        %1934 = vmatpush1.bf16.msra.mxu0 0
        %1935 = vmatprep.subr.bf16.mxu0 0
        %1936 = vmatpush1.bf16.msra.mxu0 0
        %1937 = vmatprep.subr.bf16.mxu0 0
        %1938 = vmatpush1.bf16.msra.mxu0 0
        %1939 = vmatprep.subr.bf16.mxu0 0
        %1940 = vmatpush1.bf16.msra.mxu0 0
        %1941 = vmatprep.subr.bf16.mxu0 0
        %1942 = vmatpush1.bf16.msra.mxu0 0
        %1943 = vmatprep.subr.bf16.mxu0 0
        %1944 = vmatpush1.bf16.msra.mxu0 0
        %1945 = vmatprep.subr.bf16.mxu0 0
        %1946 = vmatpush1.bf16.msra.mxu0 %v1930
        %1947 = vmatprep.subr.bf16.mxu0 0
        %1948 = vmatpush1.bf16.msra.mxu0 %v1929
        %1949 = vmatprep.subr.bf16.mxu0 0
        %1950 = vmatpush2.bf16.msra.mxu0 0
        %1951 = vmatprep.subr.bf16.mxu0 0
        %1952 = vmatpush2.bf16.msra.mxu0 0
        %1953 = vmatprep.subr.bf16.mxu0 0
        %1954 = vmatpush2.bf16.msra.mxu0 0
        %1955 = vmatprep.subr.bf16.mxu0 0
        %1956 = vmatpush2.bf16.msra.mxu0 0
        %1957 = vmatprep.subr.bf16.mxu0 0
        %1958 = vmatpush2.bf16.msra.mxu0 0
        %1959 = vmatprep.subr.bf16.mxu0 0
        %1960 = vmatpush2.bf16.msra.mxu0 0
        %1961 = vmatprep.subr.bf16.mxu0 0
        %1962 = vmatpush2.bf16.msra.mxu0 0
        %1963 = vmatprep.subr.bf16.mxu0 0
        %1964 = vmatpush2.bf16.msra.mxu0 0
        %1965 = vmatprep.mubr.bf16.mxu0 0
        %1966 = vmatmul.mubr.bf16.gmra.mxu0 %v1253
        %v1967 = vpop.f32.mrf.mxu0
        %v1968 = vadd.f32 %v1919, %v1967
        %v1969 = vpop.f32.mrf.mxu0
        %v1970 = vpop.f32.mrf.mxu0
        %v1971 = vpop.f32.mrf.mxu0
        %1972 = vdwg.mxu0
        %v1973 = vmul.f32 %v1968, 0.35355338
        %v1974 = vpack.c.bf16 %v1973, %v1973
        %s1975 = scalar_lea.vmem [#allocation2], 12
        %v1976 = vld [vmem:[%s1975] sm:$0xf]
        %v1978 = vsel %vm1304, %v1974, 0
        %v1981 = vsel %vm1304, %v1976, 0
        %1983 = vmatprep.subr.bf16.mxu0 0
        %1984 = vmatpush1.bf16.xpose.msra.mxu0 0
        %1985 = vmatprep.subr.bf16.mxu0 0
        %1986 = vmatpush1.bf16.xpose.msra.mxu0 0
        %1987 = vmatprep.subr.bf16.mxu0 0
        %1988 = vmatpush1.bf16.xpose.msra.mxu0 0
        %1989 = vmatprep.subr.bf16.mxu0 0
        %1990 = vmatpush1.bf16.xpose.msra.mxu0 0
        %1991 = vmatprep.subr.bf16.mxu0 0
        %1992 = vmatpush1.bf16.xpose.msra.mxu0 0
        %1993 = vmatprep.subr.bf16.mxu0 0
        %1994 = vmatpush1.bf16.xpose.msra.mxu0 0
        %1995 = vmatprep.subr.bf16.mxu0 0
        %1996 = vmatpush1.bf16.xpose.msra.mxu0 0
        %1997 = vmatprep.subr.bf16.mxu0 0
        %1998 = vmatpush1.bf16.xpose.msra.mxu0 %v1981
        %1999 = vmatprep.subr.bf16.mxu0 0
        %2000 = vmatpush2.bf16.xpose.msra.mxu0 0
        %2001 = vmatprep.subr.bf16.mxu0 0
        %2002 = vmatpush2.bf16.xpose.msra.mxu0 0
        %2003 = vmatprep.subr.bf16.mxu0 0
        %2004 = vmatpush2.bf16.xpose.msra.mxu0 0
        %2005 = vmatprep.subr.bf16.mxu0 0
        %2006 = vmatpush2.bf16.xpose.msra.mxu0 0
        %2007 = vmatprep.subr.bf16.mxu0 0
        %2008 = vmatpush2.bf16.xpose.msra.mxu0 0
        %2009 = vmatprep.subr.bf16.mxu0 0
        %2010 = vmatpush2.bf16.xpose.msra.mxu0 0
        %2011 = vmatprep.subr.bf16.mxu0 0
        %2012 = vmatpush2.bf16.xpose.msra.mxu0 0
        %2013 = vmatprep.subr.bf16.mxu0 0
        %2014 = vmatpush2.bf16.xpose.msra.mxu0 0
        %2015 = vmatprep.mubr.bf16.mxu0 0
        %2016 = vmatmul.mubr.bf16.gmra.mxu0 %v1978
        %v2017 = vpop.f32.mrf.mxu0
        %v2018 = vadd.f32 %v1302, %v2017
        %v2019 = vpop.f32.mrf.mxu0
        %v2020 = vpop.f32.mrf.mxu0
        %v2021 = vpop.f32.mrf.mxu0
        %2022 = vdwg.mxu0
        %v2023 = vsel %vm1304, %v2018, -inf
        %2024 = vmax.xlane.f32.xlu0 %v2023
        %v2025 = vpop.xlane.xlu0 %2024
        %v2026 = vsub.f32 %v2018, %v2025
        %v2027 = vmul.f32 %v2026, 1.442695
        %v2028 = vpow.pop %v2027
        %v2029 = vsel %vm1304, %v2028, 0.0
        %2030 = vadd.xlane.f32.xlu0 %v2029
        %v2031 = vpop.xlane.xlu0 %2030
        %v2032 = vpack.c.bf16 %v2028, %v2028
        %s2033 = scalar_lea.vmem [#allocation3], 12
        %v2034 = vld [vmem:[%s2033] sm:$0xf]
        %v2036 = vsel %vm1304, %v2032, 0
        %v2039 = vsel %vm1365, %v2034, 0
        %2041 = vmatprep.subr.bf16.mxu0 0
        %2042 = vmatpush1.bf16.msra.mxu0 0
        %2043 = vmatprep.subr.bf16.mxu0 0
        %2044 = vmatpush1.bf16.msra.mxu0 0
        %2045 = vmatprep.subr.bf16.mxu0 0
        %2046 = vmatpush1.bf16.msra.mxu0 0
        %2047 = vmatprep.subr.bf16.mxu0 0
        %2048 = vmatpush1.bf16.msra.mxu0 0
        %2049 = vmatprep.subr.bf16.mxu0 0
        %2050 = vmatpush1.bf16.msra.mxu0 0
        %2051 = vmatprep.subr.bf16.mxu0 0
        %2052 = vmatpush1.bf16.msra.mxu0 0
        %2053 = vmatprep.subr.bf16.mxu0 0
        %2054 = vmatpush1.bf16.msra.mxu0 0
        %2055 = vmatprep.subr.bf16.mxu0 0
        %2056 = vmatpush1.bf16.msra.mxu0 %v2039
        %2057 = vmatprep.subr.bf16.mxu0 0
        %2058 = vmatpush2.bf16.msra.mxu0 0
        %2059 = vmatprep.subr.bf16.mxu0 0
        %2060 = vmatpush2.bf16.msra.mxu0 0
        %2061 = vmatprep.subr.bf16.mxu0 0
        %2062 = vmatpush2.bf16.msra.mxu0 0
        %2063 = vmatprep.subr.bf16.mxu0 0
        %2064 = vmatpush2.bf16.msra.mxu0 0
        %2065 = vmatprep.subr.bf16.mxu0 0
        %2066 = vmatpush2.bf16.msra.mxu0 0
        %2067 = vmatprep.subr.bf16.mxu0 0
        %2068 = vmatpush2.bf16.msra.mxu0 0
        %2069 = vmatprep.subr.bf16.mxu0 0
        %2070 = vmatpush2.bf16.msra.mxu0 0
        %2071 = vmatprep.subr.bf16.mxu0 0
        %2072 = vmatpush2.bf16.msra.mxu0 0
        %2073 = vmatprep.mubr.bf16.mxu0 0
        %2074 = vmatmul.mubr.bf16.gmra.mxu0 %v2036
        %v2075 = vpop.f32.mrf.mxu0
        %v2076 = vadd.f32 0.0, %v2075
        %v2077 = vpop.f32.mrf.mxu0
        %v2078 = vpop.f32.mrf.mxu0
        %v2079 = vpop.f32.mrf.mxu0
        %2080 = vdwg.mxu0
        %v2081 = vrcp.pop %v2031
        %v2082 = vmul.f32 %v2076, %v2081
        %v2083 = vpack.c.bf16 %v2082, %v2082
        %s2084 = scalar_lea.vmem %s8, 12
        %v2085 = vld [vmem:[%s2084] sm:$0xf]
        %v2087 = vsel %vm1304, %v2083, 0
        %v2090 = vsel %vm1365, %v2085, 0
        %2092 = vmatprep.subr.bf16.mxu0 0
        %2093 = vmatpush1.bf16.msra.mxu0 0
        %2094 = vmatprep.subr.bf16.mxu0 0
        %2095 = vmatpush1.bf16.msra.mxu0 0
        %2096 = vmatprep.subr.bf16.mxu0 0
        %2097 = vmatpush1.bf16.msra.mxu0 0
        %2098 = vmatprep.subr.bf16.mxu0 0
        %2099 = vmatpush1.bf16.msra.mxu0 0
        %2100 = vmatprep.subr.bf16.mxu0 0
        %2101 = vmatpush1.bf16.msra.mxu0 0
        %2102 = vmatprep.subr.bf16.mxu0 0
        %2103 = vmatpush1.bf16.msra.mxu0 0
        %2104 = vmatprep.subr.bf16.mxu0 0
        %2105 = vmatpush1.bf16.msra.mxu0 0
        %2106 = vmatprep.subr.bf16.mxu0 0
        %2107 = vmatpush1.bf16.msra.mxu0 %v2090
        %2108 = vmatprep.subr.bf16.mxu0 0
        %2109 = vmatpush2.bf16.msra.mxu0 0
        %2110 = vmatprep.subr.bf16.mxu0 0
        %2111 = vmatpush2.bf16.msra.mxu0 0
        %2112 = vmatprep.subr.bf16.mxu0 0
        %2113 = vmatpush2.bf16.msra.mxu0 0
        %2114 = vmatprep.subr.bf16.mxu0 0
        %2115 = vmatpush2.bf16.msra.mxu0 0
        %2116 = vmatprep.subr.bf16.mxu0 0
        %2117 = vmatpush2.bf16.msra.mxu0 0
        %2118 = vmatprep.subr.bf16.mxu0 0
        %2119 = vmatpush2.bf16.msra.mxu0 0
        %2120 = vmatprep.subr.bf16.mxu0 0
        %2121 = vmatpush2.bf16.msra.mxu0 0
        %2122 = vmatprep.subr.bf16.mxu0 0
        %2123 = vmatpush2.bf16.msra.mxu0 0
        %2124 = vmatprep.mubr.bf16.mxu0 0
        %2125 = vmatmul.mubr.bf16.gmra.mxu0 %v2087
        %v2126 = vpop.f32.mrf.mxu0
        %v2127 = vadd.f32 0.0, %v2126
        %v2128 = vpop.f32.mrf.mxu0
        %v2129 = vpop.f32.mrf.mxu0
        %v2130 = vpop.f32.mrf.mxu0
        %2131 = vdwg.mxu0
        %v2132 = vadd.f32 %v1907, %v2127
        %v2133 = vadd.f32 %v1188, %v2132
        %v2134 = vld [vmem:[%s9] sm:$0x1]
        %v2136 = vlaneseq
        %v2137 = vshrl.u32 %v2136, 7
        %v2138 = vsub.s32 0, %v2137
        %v2139 = vrot.slane %v2134, %v2138
        %v2141 = vadd.f32 %v2133, %v2139
        %v2142 = vld [vmem:[%s16] sm:$0x1]
        %v2143 = vld [vmem:[%s17] sm:$0x1]
        %v2144 = vsel %vm1189, %v2141, 0.0
        %2145 = vadd.xlane.f32.xlu0 %v2144
        %v2146 = vpop.xlane.xlu0 %2145
        %v2147 = vmul.f32 %v2146, %v1193
        %v2148 = vsub.f32 %v2141, %v2147
        %v2149 = vmul.f32 %v2148, %v2148
        %v2150 = vsel %vm1189, %v2149, 0.0
        %2151 = vadd.xlane.f32.xlu0 %v2150
        %v2152 = vpop.xlane.xlu0 %2151
        %v2153 = vmul.f32 %v2152, 0.032258064
        %v2154 = vrsqrt.pop %v2153
        %v2155 = vmul.f32 %v2153, %v2154
        %vm2156 = vcmp.eq.f32.partialorder %v2153, inf
        %v2157 = vsel %vm2156, %v2153, %v2155
        %vm2158 = vcmp.eq.f32.partialorder %v2153, 0.0
        %v2159 = vand.u32 %v2153, 2147483648
        %v2160 = vsel %vm2158, %v2159, %v2157
        %v2161 = vadd.f32 %v2160, 1e-06
        %v2162 = vrcp.pop %v2161
        %v2164 = vlaneseq
        %v2165 = vshrl.u32 %v2164, 7
        %v2166 = vsub.s32 0, %v2165
        %v2167 = vrot.slane %v2142, %v2166
        %v2169 = vmul.f32 %v2167, %v2148
        %v2170 = vmul.f32 %v2169, %v2162
        %v2172 = vlaneseq
        %v2173 = vshrl.u32 %v2172, 7
        %v2174 = vsub.s32 0, %v2173
        %v2175 = vrot.slane %v2143, %v2174
        %v2177 = vadd.f32 %v2170, %v2175
        %v2178 = vpack.c.bf16 %v2177, %v2177
        %v2179 = vld [vmem:[%s12] sm:$0xf]
        %v2180 = vld [vmem:[%s12 + $0x4] sm:$0xf]
        %v2181 = vld [vmem:[%s12 + $0x8] sm:$0xf]
        %v2182 = vld [vmem:[%s12 + $0xc] sm:$0xf]
        %v2183 = vld [vmem:[%s13] sm:$0x1]
        %v2185 = vlaneseq
        %v2186 = vshrl.u32 %v2185, 7
        %v2187 = vsub.s32 0, %v2186
        %v2188 = vrot.slane %v2183, %v2187
        %v2194 = vunpack.c.l.b16 %v2179
        %v2195 = vunpack.c.l.b16 %v2180
        %v2196 = vunpack.c.l.b16 %v2181
        %v2197 = vunpack.c.l.b16 %v2182
        %v2198 = vpack.c.b16 %v2195, %v2194
        %v2199 = vpack.c.b16 %v2197, %v2196
        %v2203 = vsel %vm1189, %v2178, 0
        %2205 = vmatprep.subr.bf16.mxu0 0
        %2206 = vmatpush1.bf16.msra.mxu0 0
        %2207 = vmatprep.subr.bf16.mxu0 0
        %2208 = vmatpush1.bf16.msra.mxu0 0
        %2209 = vmatprep.subr.bf16.mxu0 0
        %2210 = vmatpush1.bf16.msra.mxu0 0
        %2211 = vmatprep.subr.bf16.mxu0 0
        %2212 = vmatpush1.bf16.msra.mxu0 0
        %2213 = vmatprep.subr.bf16.mxu0 0
        %2214 = vmatpush1.bf16.msra.mxu0 0
        %2215 = vmatprep.subr.bf16.mxu0 0
        %2216 = vmatpush1.bf16.msra.mxu0 0
        %2217 = vmatprep.subr.bf16.mxu0 0
        %2218 = vmatpush1.bf16.msra.mxu0 %v2199
        %2219 = vmatprep.subr.bf16.mxu0 0
        %2220 = vmatpush1.bf16.msra.mxu0 %v2198
        %2221 = vmatprep.subr.bf16.mxu0 0
        %2222 = vmatpush2.bf16.msra.mxu0 0
        %2223 = vmatprep.subr.bf16.mxu0 0
        %2224 = vmatpush2.bf16.msra.mxu0 0
        %2225 = vmatprep.subr.bf16.mxu0 0
        %2226 = vmatpush2.bf16.msra.mxu0 0
        %2227 = vmatprep.subr.bf16.mxu0 0
        %2228 = vmatpush2.bf16.msra.mxu0 0
        %2229 = vmatprep.subr.bf16.mxu0 0
        %2230 = vmatpush2.bf16.msra.mxu0 0
        %2231 = vmatprep.subr.bf16.mxu0 0
        %2232 = vmatpush2.bf16.msra.mxu0 0
        %2233 = vmatprep.subr.bf16.mxu0 0
        %2234 = vmatpush2.bf16.msra.mxu0 0
        %2235 = vmatprep.subr.bf16.mxu0 0
        %2236 = vmatpush2.bf16.msra.mxu0 0
        %2237 = vmatprep.mubr.bf16.mxu0 0
        %2238 = vmatmul.mubr.bf16.gmra.mxu0 %v2203
        %v2239 = vpop.f32.mrf.mxu0
        %v2240 = vadd.f32 %v2188, %v2239
        %v2241 = vpop.f32.mrf.mxu0
        %v2242 = vpop.f32.mrf.mxu0
        %v2243 = vpop.f32.mrf.mxu0
        %2244 = vdwg.mxu0
        %v2245 = vmax.f32 %v2240, 0.0
        %v2246 = vpack.c.bf16 %v2245, %v2245
        %v2247 = vld [vmem:[%s14] sm:$0xf]
        %v2248 = vld [vmem:[%s14 + $0x4] sm:$0xf]
        %v2249 = vld [vmem:[%s14 + $0x8] sm:$0xf]
        %v2250 = vld [vmem:[%s14 + $0xc] sm:$0xf]
        %v2251 = vld [vmem:[%s14 + $0x10] sm:$0xf]
        %v2252 = vld [vmem:[%s14 + $0x14] sm:$0xf]
        %v2253 = vld [vmem:[%s14 + $0x18] sm:$0xf]
        %v2254 = vld [vmem:[%s14 + $0x1c] sm:$0xf]
        %v2255 = vld [vmem:[%s15] sm:$0x1]
        %v2257 = vlaneseq
        %v2258 = vshrl.u32 %v2257, 7
        %v2259 = vsub.s32 0, %v2258
        %v2260 = vrot.slane %v2255, %v2259
        %v2270 = vunpack.c.l.b16 %v2247
        %v2271 = vunpack.c.l.b16 %v2248
        %v2272 = vunpack.c.l.b16 %v2249
        %v2273 = vunpack.c.l.b16 %v2250
        %v2274 = vunpack.c.l.b16 %v2251
        %v2275 = vunpack.c.l.b16 %v2252
        %v2276 = vunpack.c.l.b16 %v2253
        %v2277 = vunpack.c.l.b16 %v2254
        %v2278 = vpack.c.b16 %v2271, %v2270
        %v2279 = vpack.c.b16 %v2273, %v2272
        %v2280 = vpack.c.b16 %v2275, %v2274
        %v2281 = vpack.c.b16 %v2277, %v2276
        %vm2286 = vcmask 523264
        %v2288 = vsel %vm2286, %v2246, 0
        %2290 = vmatprep.subr.bf16.mxu0 0
        %2291 = vmatpush1.bf16.msra.mxu0 0
        %2292 = vmatprep.subr.bf16.mxu0 0
        %2293 = vmatpush1.bf16.msra.mxu0 0
        %2294 = vmatprep.subr.bf16.mxu0 0
        %2295 = vmatpush1.bf16.msra.mxu0 0
        %2296 = vmatprep.subr.bf16.mxu0 0
        %2297 = vmatpush1.bf16.msra.mxu0 0
        %2298 = vmatprep.subr.bf16.mxu0 0
        %2299 = vmatpush1.bf16.msra.mxu0 %v2281
        %2300 = vmatprep.subr.bf16.mxu0 0
        %2301 = vmatpush1.bf16.msra.mxu0 %v2280
        %2302 = vmatprep.subr.bf16.mxu0 0
        %2303 = vmatpush1.bf16.msra.mxu0 %v2279
        %2304 = vmatprep.subr.bf16.mxu0 0
        %2305 = vmatpush1.bf16.msra.mxu0 %v2278
        %2306 = vmatprep.subr.bf16.mxu0 0
        %2307 = vmatpush2.bf16.msra.mxu0 0
        %2308 = vmatprep.subr.bf16.mxu0 0
        %2309 = vmatpush2.bf16.msra.mxu0 0
        %2310 = vmatprep.subr.bf16.mxu0 0
        %2311 = vmatpush2.bf16.msra.mxu0 0
        %2312 = vmatprep.subr.bf16.mxu0 0
        %2313 = vmatpush2.bf16.msra.mxu0 0
        %2314 = vmatprep.subr.bf16.mxu0 0
        %2315 = vmatpush2.bf16.msra.mxu0 0
        %2316 = vmatprep.subr.bf16.mxu0 0
        %2317 = vmatpush2.bf16.msra.mxu0 0
        %2318 = vmatprep.subr.bf16.mxu0 0
        %2319 = vmatpush2.bf16.msra.mxu0 0
        %2320 = vmatprep.subr.bf16.mxu0 0
        %2321 = vmatpush2.bf16.msra.mxu0 0
        %2322 = vmatprep.mubr.bf16.mxu0 0
        %2323 = vmatmul.mubr.bf16.gmra.mxu0 %v2288
        %v2324 = vpop.f32.mrf.mxu0
        %v2325 = vadd.f32 %v2260, %v2324
        %v2326 = vpop.f32.mrf.mxu0
        %v2327 = vpop.f32.mrf.mxu0
        %v2328 = vpop.f32.mrf.mxu0
        %2329 = vdwg.mxu0
        %v2330 = vadd.f32 %v2141, %v2325
        %2331 = vst.msk [vmem:[%s591] sm:$0xff] %vm1189, %v2330
        %s2332 = sand.u32 %s442, 1
        %s2333 = scalar_lea.sflag [#allocation5], %s2332
        %s2334 = sand.u32 %s442, 1
        %s2335 = smul.addr %s2334, 8
        %s2336 = scalar_lea.vmem [#allocation4], %s2335
        // Predicated region
        $region97: #{tpu_custom_call.1} parent=91 // pred_check
          %p2337 = pneg %p452
        $region98: #{tpu_custom_call.1} parent=91 // pred_check_branch
          %2339 = sbr.rel (%p2337) target = $region100
        $region99: #{tpu_custom_call.1} parent=91 // pred_region
          %s2341 = ssub.s32 128, 128
          %2342 = vsyncadd %s2333, %s2341
          %s2343 = sadd.s32 %s37, %s36
          %s2344 = smul.addr %s2343, 128
          %s2345 = scalar_lea.hbm %s18, %s2344
          %s2347 = sshll.u32 %s2336, 4
          %s2348 = int_to_ptr.vmem [resolvable:$true] %s2347
          %2350 = dma.vmem_to_hbm [thread:$0]  %s2348, 128, %s2345, %s2333
        $region100: #{tpu_custom_call.1} parent=91 // pred_fallthru
          _
      $region92: #{tpu_custom_call.1} parent=5 // pred_fallthru
        _
      %p2351 = scmp.le.s32.totalorder 2, %s27
      // Predicated region
      $region101: #{tpu_custom_call.1} parent=5 // pred_check
        %p2352 = pneg %p2351
      $region102: #{tpu_custom_call.1} parent=5 // pred_check_branch
        %2354 = sbr.rel (%p2352) target = $region104
      $region103: #{tpu_custom_call.1} parent=5 // pred_region
        %s2355 = ssub.s32 %s27, 2
        // Predicated region
        $region105: #{tpu_custom_call.1} parent=103 // pred_check
          %p2356 = pneg %p458
        $region106: #{tpu_custom_call.1} parent=103 // pred_check_branch
          %2358 = sbr.rel (%p2356) target = $region108
        $region107: #{tpu_custom_call.1} parent=103 // pred_region
          %s2359 = sand.u32 %s443, 1
          %s2360 = scalar_lea.sflag [#allocation5], %s2359
          %s2361 = sand.u32 %s443, 1
          %s2362 = smul.addr %s2361, 8
          %s2363 = scalar_lea.vmem [#allocation4], %s2362
          %2364 = dma.done %s2360, 128
        $region108: #{tpu_custom_call.1} parent=103 // pred_fallthru
          _
      $region104: #{tpu_custom_call.1} parent=5 // pred_fallthru
        _
    $region6: #{tpu_custom_call.1} parent=1 // loop_footer
      %s31 = sadd.s32 1, %s27
    $region7: #{tpu_custom_call.1} parent=1 // loop_footer_branch
      %26 = sbr.rel target = $region3
    $region8: #{tpu_custom_call.1} parent=1 // loop_exit
      _
    %2365 = vsyncpa [#allocation5], 1
    %s2366 = scalar_lea.sflag [#allocation5], 1
    %2367 = vsyncpa %s2366, 1

// kernel: tpu_custom_call.1
$region0: #{tpu_custom_call.1}
  #allocation0 [shape = 'u32[]', space=smem, size = 0x4, offset = 0x4, fixed_abs, tag = 'smem constant byte address 0x4 - core index']
  #allocation1 [shape = 'u32[144,128]{1,0:T(1,128)}', space=vmem, size = 0x12000, scoped, tag = 'internal scratch']
  #allocation2 [shape = 'bf16[4,8,8]{2,1,0:T(8,128)(2,1)}', space=vmem, size = 0x2000, scoped, tag = 'scratch operand']
  #allocation3 [shape = 'bf16[4,8,8]{2,1,0:T(8,128)(2,1)}', space=vmem, size = 0x2000, scoped, tag = 'scratch operand']
  %s0 = inlined_call_operand.vmem [shape: f32[2,8,32], index: 0, kind: input, shape index: {}]
  %s1 = inlined_call_operand.vmem [shape: s32[2,1,8], index: 1, kind: input, shape index: {}]
  %s2 = inlined_call_operand.vmem [shape: bf16[4,32,8], index: 2, kind: input, shape index: {}]
  %s3 = inlined_call_operand.vmem [shape: f32[4,1,8], index: 3, kind: input, shape index: {}]
  %s4 = inlined_call_operand.vmem [shape: bf16[4,32,8], index: 4, kind: input, shape index: {}]
  %s5 = inlined_call_operand.vmem [shape: f32[4,1,8], index: 5, kind: input, shape index: {}]
  %s6 = inlined_call_operand.vmem [shape: bf16[4,32,8], index: 6, kind: input, shape index: {}]
  %s7 = inlined_call_operand.vmem [shape: f32[4,1,8], index: 7, kind: input, shape index: {}]
  %s8 = inlined_call_operand.vmem [shape: bf16[4,8,32], index: 8, kind: input, shape index: {}]
  %s9 = inlined_call_operand.vmem [shape: f32[1,32], index: 9, kind: input, shape index: {}]
  %s10 = inlined_call_operand.vmem [shape: f32[1,32], index: 10, kind: input, shape index: {}]
  %s11 = inlined_call_operand.vmem [shape: f32[1,32], index: 11, kind: input, shape index: {}]
  %s12 = inlined_call_operand.vmem [shape: bf16[32,64], index: 12, kind: input, shape index: {}]
  %s13 = inlined_call_operand.vmem [shape: f32[1,64], index: 13, kind: input, shape index: {}]
  %s14 = inlined_call_operand.vmem [shape: bf16[64,32], index: 14, kind: input, shape index: {}]
  %s15 = inlined_call_operand.vmem [shape: f32[1,32], index: 15, kind: input, shape index: {}]
  %s16 = inlined_call_operand.vmem [shape: f32[1,32], index: 16, kind: input, shape index: {}]
  %s17 = inlined_call_operand.vmem [shape: f32[1,32], index: 17, kind: input, shape index: {}]
  %s18 = inlined_call_operand.hbm [shape: f32[2,8,32], index: 18, kind: output, shape index: {}]
  %s19 = sld [smem:[#allocation0]]
  $region109: #{tpu_custom_call.1} parent=0
    _
  %s21 = ssub.s32 1, %s19
  %s22 = scalar_select 0, %s21, %s19
  $region1: #{tpu_custom_call.1} parent=0
    #allocation4 [shape = 'u8[8192]{0}', space=vmem, size = 0x2000, scoped, tag = 'output window, operand 0']
    #allocation5 [shape = 's32[2]{0}', space=sflag, size = 0x8, scoped, tag = 'scoped memory for tpu_custom_call.1']
    %23 = vsyncpa [#allocation5], 0
    %s24 = scalar_lea.sflag [#allocation5], 1
    %25 = vsyncpa %s24, 0
    loop: start=0, step=1, limit=4
    $region2: #{tpu_custom_call.1} parent=1 // loop_pre_header
      _
    $region3: #{tpu_custom_call.1} parent=1 // loop_header
      %s27 = sphi 0, %s31
      %p28 = scmp.ge.s32.totalorder %s27, 4
      %s34 = sphi 0, %s46
      %s35 = sphi 0, %s42
      %s36 = sphi 0, %s34
      %s37 = sphi 0, %s35
      %s38 = sphi 0, %s36
      %s39 = sphi 0, %s37
      %s49 = sphi 0, %s51
      %s52 = sphi 0, %s49
      %s53 = sphi 0, %s52
      %s69 = sphi 0, %s53
      %s75 = sphi 0, %s77
      %s78 = sphi 0, %s75
      %s79 = sphi 0, %s78
      %s95 = sphi 0, %s79
      %s99 = sphi 0, %s99
      %s101 = sphi 0, %s99
      %s102 = sphi 0, %s101
      %s116 = sphi 0, %s102
      %s120 = sphi 0, %s120
      %s122 = sphi 0, %s120
      %s123 = sphi 0, %s122
      %s137 = sphi 0, %s123
      %s141 = sphi 0, %s141
      %s143 = sphi 0, %s141
      %s144 = sphi 0, %s143
      %s158 = sphi 0, %s144
      %s162 = sphi 0, %s162
      %s164 = sphi 0, %s162
      %s165 = sphi 0, %s164
      %s179 = sphi 0, %s165
      %s183 = sphi 0, %s183
      %s185 = sphi 0, %s183
      %s186 = sphi 0, %s185
      %s200 = sphi 0, %s186
      %s204 = sphi 0, %s204
      %s206 = sphi 0, %s204
      %s207 = sphi 0, %s206
      %s221 = sphi 0, %s207
      %s225 = sphi 0, %s225
      %s227 = sphi 0, %s225
      %s228 = sphi 0, %s227
      %s242 = sphi 0, %s228
      %s246 = sphi 0, %s246
      %s248 = sphi 0, %s246
      %s249 = sphi 0, %s248
      %s263 = sphi 0, %s249
      %s267 = sphi 0, %s267
      %s269 = sphi 0, %s267
      %s270 = sphi 0, %s269
      %s284 = sphi 0, %s270
      %s288 = sphi 0, %s288
      %s290 = sphi 0, %s288
      %s291 = sphi 0, %s290
      %s305 = sphi 0, %s291
      %s309 = sphi 0, %s309
      %s311 = sphi 0, %s309
      %s312 = sphi 0, %s311
      %s326 = sphi 0, %s312
      %s330 = sphi 0, %s330
      %s332 = sphi 0, %s330
      %s333 = sphi 0, %s332
      %s347 = sphi 0, %s333
      %s351 = sphi 0, %s351
      %s353 = sphi 0, %s351
      %s354 = sphi 0, %s353
      %s368 = sphi 0, %s354
      %s372 = sphi 0, %s372
      %s374 = sphi 0, %s372
      %s375 = sphi 0, %s374
      %s389 = sphi 0, %s375
      %s393 = sphi 0, %s393
      %s395 = sphi 0, %s393
      %s396 = sphi 0, %s395
      %s410 = sphi 0, %s396
      %s414 = sphi 0, %s414
      %s416 = sphi 0, %s414
      %s417 = sphi 0, %s416
      %s431 = sphi 0, %s417
      %s439 = sphi 0, %s441
      %s442 = sphi 0, %s439
      %s443 = sphi 0, %s442
      %s459 = sphi 0, %s443
    $region4: #{tpu_custom_call.1} parent=1 // loop_header_branch
      %30 = sbr.rel (%p28) target = $region8
    $region5: #{tpu_custom_call.1} parent=1 // loop_body
      %s32 = ssub.s32 %s27, 1
      %s33 = ssub.s32 %s27, 2
      %s40 = sadd.s32 1, %s35
      %p41 = scmp.ge.s32.totalorder %s40, 1
      %s42 = scalar_select %p41, 0, %s40
      %s43 = sadd.s32 1, %s34
      %s44 = scalar_select %p41, %s43, %s34
      %p45 = scmp.ge.s32.totalorder %s44, 2
      %s46 = scalar_select %p45, 0, %s44
      %s47 = ssub.s32 %s34, %s46
      %p48 = scmp.eq.s32.totalorder %s47, 0
      %s50 = sadd.s32 %s49, 1
      %s51 = scalar_select %p48, %s49, %s50
      %p54 = pneg %p48
      %p55 = scmp.eq.s32.totalorder %s27, 1
      %p56 = por %p54, %p55
      %p57 = scmp.ne.s32.totalorder %s49, %s52
      %p58 = scmp.eq.s32.totalorder %s27, 0
      %p59 = por %p57, %p58
      %p60 = scmp.ne.s32.totalorder %s49, %s52
      %p61 = scmp.eq.s32.totalorder %s32, 1
      %p62 = por %p60, %p61
      %p63 = scmp.ne.s32.totalorder %s52, %s53
      %p64 = scmp.eq.s32.totalorder %s32, 0
      %p65 = por %p63, %p64
      %p66 = scmp.ne.s32.totalorder %s52, %s53
      %p67 = scmp.eq.s32.totalorder %s33, 1
      %p68 = por %p66, %p67
      %p70 = scmp.ne.s32.totalorder %s53, %s69
      %p71 = scmp.eq.s32.totalorder %s33, 0
      %p72 = por %p70, %p71
      %s73 = ssub.s32 %s34, %s46
      %p74 = scmp.eq.s32.totalorder %s73, 0
      %s76 = sadd.s32 %s75, 1
      %s77 = scalar_select %p74, %s75, %s76
      %p80 = pneg %p74
      %p81 = scmp.eq.s32.totalorder %s27, 1
      %p82 = por %p80, %p81
      %p83 = scmp.ne.s32.totalorder %s75, %s78
      %p84 = scmp.eq.s32.totalorder %s27, 0
      %p85 = por %p83, %p84
      %p86 = scmp.ne.s32.totalorder %s75, %s78
      %p87 = scmp.eq.s32.totalorder %s32, 1
      %p88 = por %p86, %p87
      %p89 = scmp.ne.s32.totalorder %s78, %s79
      %p90 = scmp.eq.s32.totalorder %s32, 0
      %p91 = por %p89, %p90
      %p92 = scmp.ne.s32.totalorder %s78, %s79
      %p93 = scmp.eq.s32.totalorder %s33, 1
      %p94 = por %p92, %p93
      %p96 = scmp.ne.s32.totalorder %s79, %s95
      %p97 = scmp.eq.s32.totalorder %s33, 0
      %p98 = por %p96, %p97
      %s100 = sadd.s32 %s99, 1
      %p103 = scmp.eq.s32.totalorder %s27, 1
      %p104 = scmp.ne.s32.totalorder %s99, %s101
      %p105 = scmp.eq.s32.totalorder %s27, 0
      %p106 = por %p104, %p105
      %p107 = scmp.ne.s32.totalorder %s99, %s101
      %p108 = scmp.eq.s32.totalorder %s32, 1
      %p109 = por %p107, %p108
      %p110 = scmp.ne.s32.totalorder %s101, %s102
      %p111 = scmp.eq.s32.totalorder %s32, 0
      %p112 = por %p110, %p111
      %p113 = scmp.ne.s32.totalorder %s101, %s102
      %p114 = scmp.eq.s32.totalorder %s33, 1
      %p115 = por %p113, %p114
      %p117 = scmp.ne.s32.totalorder %s102, %s116
      %p118 = scmp.eq.s32.totalorder %s33, 0
      %p119 = por %p117, %p118
      %s121 = sadd.s32 %s120, 1
      %p124 = scmp.eq.s32.totalorder %s27, 1
      %p125 = scmp.ne.s32.totalorder %s120, %s122
      %p126 = scmp.eq.s32.totalorder %s27, 0
      %p127 = por %p125, %p126
      %p128 = scmp.ne.s32.totalorder %s120, %s122
      %p129 = scmp.eq.s32.totalorder %s32, 1
      %p130 = por %p128, %p129
      %p131 = scmp.ne.s32.totalorder %s122, %s123
      %p132 = scmp.eq.s32.totalorder %s32, 0
      %p133 = por %p131, %p132
      %p134 = scmp.ne.s32.totalorder %s122, %s123
      %p135 = scmp.eq.s32.totalorder %s33, 1
      %p136 = por %p134, %p135
      %p138 = scmp.ne.s32.totalorder %s123, %s137
      %p139 = scmp.eq.s32.totalorder %s33, 0
      %p140 = por %p138, %p139
      %s142 = sadd.s32 %s141, 1
      %p145 = scmp.eq.s32.totalorder %s27, 1
      %p146 = scmp.ne.s32.totalorder %s141, %s143
      %p147 = scmp.eq.s32.totalorder %s27, 0
      %p148 = por %p146, %p147
      %p149 = scmp.ne.s32.totalorder %s141, %s143
      %p150 = scmp.eq.s32.totalorder %s32, 1
      %p151 = por %p149, %p150
      %p152 = scmp.ne.s32.totalorder %s143, %s144
      %p153 = scmp.eq.s32.totalorder %s32, 0
      %p154 = por %p152, %p153
      %p155 = scmp.ne.s32.totalorder %s143, %s144
      %p156 = scmp.eq.s32.totalorder %s33, 1
      %p157 = por %p155, %p156
      %p159 = scmp.ne.s32.totalorder %s144, %s158
      %p160 = scmp.eq.s32.totalorder %s33, 0
      %p161 = por %p159, %p160
      %s163 = sadd.s32 %s162, 1
      %p166 = scmp.eq.s32.totalorder %s27, 1
      %p167 = scmp.ne.s32.totalorder %s162, %s164
      %p168 = scmp.eq.s32.totalorder %s27, 0
      %p169 = por %p167, %p168
      %p170 = scmp.ne.s32.totalorder %s162, %s164
      %p171 = scmp.eq.s32.totalorder %s32, 1
      %p172 = por %p170, %p171
      %p173 = scmp.ne.s32.totalorder %s164, %s165
      %p174 = scmp.eq.s32.totalorder %s32, 0
      %p175 = por %p173, %p174
      %p176 = scmp.ne.s32.totalorder %s164, %s165
      %p177 = scmp.eq.s32.totalorder %s33, 1
      %p178 = por %p176, %p177
      %p180 = scmp.ne.s32.totalorder %s165, %s179
      %p181 = scmp.eq.s32.totalorder %s33, 0
      %p182 = por %p180, %p181
      %s184 = sadd.s32 %s183, 1
      %p187 = scmp.eq.s32.totalorder %s27, 1
      %p188 = scmp.ne.s32.totalorder %s183, %s185
      %p189 = scmp.eq.s32.totalorder %s27, 0
      %p190 = por %p188, %p189
      %p191 = scmp.ne.s32.totalorder %s183, %s185
      %p192 = scmp.eq.s32.totalorder %s32, 1
      %p193 = por %p191, %p192
      %p194 = scmp.ne.s32.totalorder %s185, %s186
      %p195 = scmp.eq.s32.totalorder %s32, 0
      %p196 = por %p194, %p195
      %p197 = scmp.ne.s32.totalorder %s185, %s186
      %p198 = scmp.eq.s32.totalorder %s33, 1
      %p199 = por %p197, %p198
      %p201 = scmp.ne.s32.totalorder %s186, %s200
      %p202 = scmp.eq.s32.totalorder %s33, 0
      %p203 = por %p201, %p202
      %s205 = sadd.s32 %s204, 1
      %p208 = scmp.eq.s32.totalorder %s27, 1
      %p209 = scmp.ne.s32.totalorder %s204, %s206
      %p210 = scmp.eq.s32.totalorder %s27, 0
      %p211 = por %p209, %p210
      %p212 = scmp.ne.s32.totalorder %s204, %s206
      %p213 = scmp.eq.s32.totalorder %s32, 1
      %p214 = por %p212, %p213
      %p215 = scmp.ne.s32.totalorder %s206, %s207
      %p216 = scmp.eq.s32.totalorder %s32, 0
      %p217 = por %p215, %p216
      %p218 = scmp.ne.s32.totalorder %s206, %s207
      %p219 = scmp.eq.s32.totalorder %s33, 1
      %p220 = por %p218, %p219
      %p222 = scmp.ne.s32.totalorder %s207, %s221
      %p223 = scmp.eq.s32.totalorder %s33, 0
      %p224 = por %p222, %p223
      %s226 = sadd.s32 %s225, 1
      %p229 = scmp.eq.s32.totalorder %s27, 1
      %p230 = scmp.ne.s32.totalorder %s225, %s227
      %p231 = scmp.eq.s32.totalorder %s27, 0
      %p232 = por %p230, %p231
      %p233 = scmp.ne.s32.totalorder %s225, %s227
      %p234 = scmp.eq.s32.totalorder %s32, 1
      %p235 = por %p233, %p234
      %p236 = scmp.ne.s32.totalorder %s227, %s228
      %p237 = scmp.eq.s32.totalorder %s32, 0
      %p238 = por %p236, %p237
      %p239 = scmp.ne.s32.totalorder %s227, %s228
      %p240 = scmp.eq.s32.totalorder %s33, 1
      %p241 = por %p239, %p240
      %p243 = scmp.ne.s32.totalorder %s228, %s242
      %p244 = scmp.eq.s32.totalorder %s33, 0
      %p245 = por %p243, %p244
      %s247 = sadd.s32 %s246, 1
      %p250 = scmp.eq.s32.totalorder %s27, 1
      %p251 = scmp.ne.s32.totalorder %s246, %s248
      %p252 = scmp.eq.s32.totalorder %s27, 0
      %p253 = por %p251, %p252
      %p254 = scmp.ne.s32.totalorder %s246, %s248
      %p255 = scmp.eq.s32.totalorder %s32, 1
      %p256 = por %p254, %p255
      %p257 = scmp.ne.s32.totalorder %s248, %s249
      %p258 = scmp.eq.s32.totalorder %s32, 0
      %p259 = por %p257, %p258
      %p260 = scmp.ne.s32.totalorder %s248, %s249
      %p261 = scmp.eq.s32.totalorder %s33, 1
      %p262 = por %p260, %p261
      %p264 = scmp.ne.s32.totalorder %s249, %s263
      %p265 = scmp.eq.s32.totalorder %s33, 0
      %p266 = por %p264, %p265
      %s268 = sadd.s32 %s267, 1
      %p271 = scmp.eq.s32.totalorder %s27, 1
      %p272 = scmp.ne.s32.totalorder %s267, %s269
      %p273 = scmp.eq.s32.totalorder %s27, 0
      %p274 = por %p272, %p273
      %p275 = scmp.ne.s32.totalorder %s267, %s269
      %p276 = scmp.eq.s32.totalorder %s32, 1
      %p277 = por %p275, %p276
      %p278 = scmp.ne.s32.totalorder %s269, %s270
      %p279 = scmp.eq.s32.totalorder %s32, 0
      %p280 = por %p278, %p279
      %p281 = scmp.ne.s32.totalorder %s269, %s270
      %p282 = scmp.eq.s32.totalorder %s33, 1
      %p283 = por %p281, %p282
      %p285 = scmp.ne.s32.totalorder %s270, %s284
      %p286 = scmp.eq.s32.totalorder %s33, 0
      %p287 = por %p285, %p286
      %s289 = sadd.s32 %s288, 1
      %p292 = scmp.eq.s32.totalorder %s27, 1
      %p293 = scmp.ne.s32.totalorder %s288, %s290
      %p294 = scmp.eq.s32.totalorder %s27, 0
      %p295 = por %p293, %p294
      %p296 = scmp.ne.s32.totalorder %s288, %s290
      %p297 = scmp.eq.s32.totalorder %s32, 1
      %p298 = por %p296, %p297
      %p299 = scmp.ne.s32.totalorder %s290, %s291
      %p300 = scmp.eq.s32.totalorder %s32, 0
      %p301 = por %p299, %p300
      %p302 = scmp.ne.s32.totalorder %s290, %s291
      %p303 = scmp.eq.s32.totalorder %s33, 1
      %p304 = por %p302, %p303
      %p306 = scmp.ne.s32.totalorder %s291, %s305
      %p307 = scmp.eq.s32.totalorder %s33, 0
      %p308 = por %p306, %p307
      %s310 = sadd.s32 %s309, 1
      %p313 = scmp.eq.s32.totalorder %s27, 1
      %p314 = scmp.ne.s32.totalorder %s309, %s311
      %p315 = scmp.eq.s32.totalorder %s27, 0
      %p316 = por %p314, %p315
      %p317 = scmp.ne.s32.totalorder %s309, %s311
      %p318 = scmp.eq.s32.totalorder %s32, 1
      %p319 = por %p317, %p318
      %p320 = scmp.ne.s32.totalorder %s311, %s312
      %p321 = scmp.eq.s32.totalorder %s32, 0
      %p322 = por %p320, %p321
      %p323 = scmp.ne.s32.totalorder %s311, %s312
      %p324 = scmp.eq.s32.totalorder %s33, 1
      %p325 = por %p323, %p324
      %p327 = scmp.ne.s32.totalorder %s312, %s326
      %p328 = scmp.eq.s32.totalorder %s33, 0
      %p329 = por %p327, %p328
      %s331 = sadd.s32 %s330, 1
      %p334 = scmp.eq.s32.totalorder %s27, 1
      %p335 = scmp.ne.s32.totalorder %s330, %s332
      %p336 = scmp.eq.s32.totalorder %s27, 0
      %p337 = por %p335, %p336
      %p338 = scmp.ne.s32.totalorder %s330, %s332
      %p339 = scmp.eq.s32.totalorder %s32, 1
      %p340 = por %p338, %p339
      %p341 = scmp.ne.s32.totalorder %s332, %s333
      %p342 = scmp.eq.s32.totalorder %s32, 0
      %p343 = por %p341, %p342
      %p344 = scmp.ne.s32.totalorder %s332, %s333
      %p345 = scmp.eq.s32.totalorder %s33, 1
      %p346 = por %p344, %p345
      %p348 = scmp.ne.s32.totalorder %s333, %s347
      %p349 = scmp.eq.s32.totalorder %s33, 0
      %p350 = por %p348, %p349
      %s352 = sadd.s32 %s351, 1
      %p355 = scmp.eq.s32.totalorder %s27, 1
      %p356 = scmp.ne.s32.totalorder %s351, %s353
      %p357 = scmp.eq.s32.totalorder %s27, 0
      %p358 = por %p356, %p357
      %p359 = scmp.ne.s32.totalorder %s351, %s353
      %p360 = scmp.eq.s32.totalorder %s32, 1
      %p361 = por %p359, %p360
      %p362 = scmp.ne.s32.totalorder %s353, %s354
      %p363 = scmp.eq.s32.totalorder %s32, 0
      %p364 = por %p362, %p363
      %p365 = scmp.ne.s32.totalorder %s353, %s354
      %p366 = scmp.eq.s32.totalorder %s33, 1
      %p367 = por %p365, %p366
      %p369 = scmp.ne.s32.totalorder %s354, %s368
      %p370 = scmp.eq.s32.totalorder %s33, 0
      %p371 = por %p369, %p370
      %s373 = sadd.s32 %s372, 1
      %p376 = scmp.eq.s32.totalorder %s27, 1
      %p377 = scmp.ne.s32.totalorder %s372, %s374
      %p378 = scmp.eq.s32.totalorder %s27, 0
      %p379 = por %p377, %p378
      %p380 = scmp.ne.s32.totalorder %s372, %s374
      %p381 = scmp.eq.s32.totalorder %s32, 1
      %p382 = por %p380, %p381
      %p383 = scmp.ne.s32.totalorder %s374, %s375
      %p384 = scmp.eq.s32.totalorder %s32, 0
      %p385 = por %p383, %p384
      %p386 = scmp.ne.s32.totalorder %s374, %s375
      %p387 = scmp.eq.s32.totalorder %s33, 1
      %p388 = por %p386, %p387
      %p390 = scmp.ne.s32.totalorder %s375, %s389
      %p391 = scmp.eq.s32.totalorder %s33, 0
      %p392 = por %p390, %p391
      %s394 = sadd.s32 %s393, 1
      %p397 = scmp.eq.s32.totalorder %s27, 1
      %p398 = scmp.ne.s32.totalorder %s393, %s395
      %p399 = scmp.eq.s32.totalorder %s27, 0
      %p400 = por %p398, %p399
      %p401 = scmp.ne.s32.totalorder %s393, %s395
      %p402 = scmp.eq.s32.totalorder %s32, 1
      %p403 = por %p401, %p402
      %p404 = scmp.ne.s32.totalorder %s395, %s396
      %p405 = scmp.eq.s32.totalorder %s32, 0
      %p406 = por %p404, %p405
      %p407 = scmp.ne.s32.totalorder %s395, %s396
      %p408 = scmp.eq.s32.totalorder %s33, 1
      %p409 = por %p407, %p408
      %p411 = scmp.ne.s32.totalorder %s396, %s410
      %p412 = scmp.eq.s32.totalorder %s33, 0
      %p413 = por %p411, %p412
      %s415 = sadd.s32 %s414, 1
      %p418 = scmp.eq.s32.totalorder %s27, 1
      %p419 = scmp.ne.s32.totalorder %s414, %s416
      %p420 = scmp.eq.s32.totalorder %s27, 0
      %p421 = por %p419, %p420
      %p422 = scmp.ne.s32.totalorder %s414, %s416
      %p423 = scmp.eq.s32.totalorder %s32, 1
      %p424 = por %p422, %p423
      %p425 = scmp.ne.s32.totalorder %s416, %s417
      %p426 = scmp.eq.s32.totalorder %s32, 0
      %p427 = por %p425, %p426
      %p428 = scmp.ne.s32.totalorder %s416, %s417
      %p429 = scmp.eq.s32.totalorder %s33, 1
      %p430 = por %p428, %p429
      %p432 = scmp.ne.s32.totalorder %s417, %s431
      %p433 = scmp.eq.s32.totalorder %s33, 0
      %p434 = por %p432, %p433
      %s435 = ssub.s32 %s34, %s46
      %s436 = ssub.s32 %s35, %s42
      %s437 = sor.u32 %s435, %s436
      %p438 = scmp.eq.s32.totalorder %s437, 0
      %s440 = sadd.s32 %s439, 1
      %s441 = scalar_select %p438, %s439, %s440
      %p444 = pneg %p438
      %p445 = scmp.eq.s32.totalorder %s27, 1
      %p446 = por %p444, %p445
      %p447 = scmp.ne.s32.totalorder %s439, %s442
      %p448 = scmp.eq.s32.totalorder %s27, 0
      %p449 = por %p447, %p448
      %p450 = scmp.ne.s32.totalorder %s439, %s442
      %p451 = scmp.eq.s32.totalorder %s32, 1
      %p452 = por %p450, %p451
      %p453 = scmp.ne.s32.totalorder %s442, %s443
      %p454 = scmp.eq.s32.totalorder %s32, 0
      %p455 = por %p453, %p454
      %p456 = scmp.ne.s32.totalorder %s442, %s443
      %p457 = scmp.eq.s32.totalorder %s33, 1
      %p458 = por %p456, %p457
      %p460 = scmp.ne.s32.totalorder %s443, %s459
      %p461 = scmp.eq.s32.totalorder %s33, 0
      %p462 = por %p460, %p461
      %p463 = scmp.le.s32.totalorder 1, %s27
      %p464 = scmp.lt.s32.totalorder %s27, 3
      %p465 = pnand %p463, %p464
      %p466 = pneg %p465
      // Predicated region
      $region9: #{tpu_custom_call.1} parent=5 // pred_check
        _
      $region10: #{tpu_custom_call.1} parent=5 // pred_check_branch
        %468 = sbr.rel (%p465) target = $region12
      $region11: #{tpu_custom_call.1} parent=5 // pred_region
        %s469 = ssub.s32 %s27, 1
        // Predicated region
        $region13: #{tpu_custom_call.1} parent=11 // pred_check
          %p470 = pneg %p112
        $region14: #{tpu_custom_call.1} parent=11 // pred_check_branch
          %472 = sbr.rel (%p470) target = $region16
        $region15: #{tpu_custom_call.1} parent=11 // pred_region
          _
        $region16: #{tpu_custom_call.1} parent=11 // pred_fallthru
          _
        // Predicated region
        $region17: #{tpu_custom_call.1} parent=11 // pred_check
          %p473 = pneg %p133
        $region18: #{tpu_custom_call.1} parent=11 // pred_check_branch
          %475 = sbr.rel (%p473) target = $region20
        $region19: #{tpu_custom_call.1} parent=11 // pred_region
          _
        $region20: #{tpu_custom_call.1} parent=11 // pred_fallthru
          _
        // Predicated region
        $region21: #{tpu_custom_call.1} parent=11 // pred_check
          %p476 = pneg %p154
        $region22: #{tpu_custom_call.1} parent=11 // pred_check_branch
          %478 = sbr.rel (%p476) target = $region24
        $region23: #{tpu_custom_call.1} parent=11 // pred_region
          _
        $region24: #{tpu_custom_call.1} parent=11 // pred_fallthru
          _
        // Predicated region
        $region25: #{tpu_custom_call.1} parent=11 // pred_check
          %p479 = pneg %p175
        $region26: #{tpu_custom_call.1} parent=11 // pred_check_branch
          %481 = sbr.rel (%p479) target = $region28
        $region27: #{tpu_custom_call.1} parent=11 // pred_region
          _
        $region28: #{tpu_custom_call.1} parent=11 // pred_fallthru
          _
        // Predicated region
        $region29: #{tpu_custom_call.1} parent=11 // pred_check
          %p482 = pneg %p196
        $region30: #{tpu_custom_call.1} parent=11 // pred_check_branch
          %484 = sbr.rel (%p482) target = $region32
        $region31: #{tpu_custom_call.1} parent=11 // pred_region
          _
        $region32: #{tpu_custom_call.1} parent=11 // pred_fallthru
          _
        // Predicated region
        $region33: #{tpu_custom_call.1} parent=11 // pred_check
          %p485 = pneg %p217
        $region34: #{tpu_custom_call.1} parent=11 // pred_check_branch
          %487 = sbr.rel (%p485) target = $region36
        $region35: #{tpu_custom_call.1} parent=11 // pred_region
          _
        $region36: #{tpu_custom_call.1} parent=11 // pred_fallthru
          _
        // Predicated region
        $region37: #{tpu_custom_call.1} parent=11 // pred_check
          %p488 = pneg %p238
        $region38: #{tpu_custom_call.1} parent=11 // pred_check_branch
          %490 = sbr.rel (%p488) target = $region40
        $region39: #{tpu_custom_call.1} parent=11 // pred_region
          _
        $region40: #{tpu_custom_call.1} parent=11 // pred_fallthru
          _
        // Predicated region
        $region41: #{tpu_custom_call.1} parent=11 // pred_check
          %p491 = pneg %p259
        $region42: #{tpu_custom_call.1} parent=11 // pred_check_branch
          %493 = sbr.rel (%p491) target = $region44
        $region43: #{tpu_custom_call.1} parent=11 // pred_region
          _
        $region44: #{tpu_custom_call.1} parent=11 // pred_fallthru
          _
        // Predicated region
        $region45: #{tpu_custom_call.1} parent=11 // pred_check
          %p494 = pneg %p280
        $region46: #{tpu_custom_call.1} parent=11 // pred_check_branch
          %496 = sbr.rel (%p494) target = $region48
        $region47: #{tpu_custom_call.1} parent=11 // pred_region
          _
        $region48: #{tpu_custom_call.1} parent=11 // pred_fallthru
          _
        // Predicated region
        $region49: #{tpu_custom_call.1} parent=11 // pred_check
          %p497 = pneg %p301
        $region50: #{tpu_custom_call.1} parent=11 // pred_check_branch
          %499 = sbr.rel (%p497) target = $region52
        $region51: #{tpu_custom_call.1} parent=11 // pred_region
          _
        $region52: #{tpu_custom_call.1} parent=11 // pred_fallthru
          _
        // Predicated region
        $region53: #{tpu_custom_call.1} parent=11 // pred_check
          %p500 = pneg %p322
        $region54: #{tpu_custom_call.1} parent=11 // pred_check_branch
          %502 = sbr.rel (%p500) target = $region56
        $region55: #{tpu_custom_call.1} parent=11 // pred_region
          _
        $region56: #{tpu_custom_call.1} parent=11 // pred_fallthru
          _
        // Predicated region
        $region57: #{tpu_custom_call.1} parent=11 // pred_check
          %p503 = pneg %p343
        $region58: #{tpu_custom_call.1} parent=11 // pred_check_branch
          %505 = sbr.rel (%p503) target = $region60
        $region59: #{tpu_custom_call.1} parent=11 // pred_region
          _
        $region60: #{tpu_custom_call.1} parent=11 // pred_fallthru
          _
        // Predicated region
        $region61: #{tpu_custom_call.1} parent=11 // pred_check
          %p506 = pneg %p364
        $region62: #{tpu_custom_call.1} parent=11 // pred_check_branch
          %508 = sbr.rel (%p506) target = $region64
        $region63: #{tpu_custom_call.1} parent=11 // pred_region
          _
        $region64: #{tpu_custom_call.1} parent=11 // pred_fallthru
          _
        // Predicated region
        $region65: #{tpu_custom_call.1} parent=11 // pred_check
          %p509 = pneg %p385
        $region66: #{tpu_custom_call.1} parent=11 // pred_check_branch
          %511 = sbr.rel (%p509) target = $region68
        $region67: #{tpu_custom_call.1} parent=11 // pred_region
          _
        $region68: #{tpu_custom_call.1} parent=11 // pred_fallthru
          _
        // Predicated region
        $region69: #{tpu_custom_call.1} parent=11 // pred_check
          %p512 = pneg %p406
        $region70: #{tpu_custom_call.1} parent=11 // pred_check_branch
          %514 = sbr.rel (%p512) target = $region72
        $region71: #{tpu_custom_call.1} parent=11 // pred_region
          _
        $region72: #{tpu_custom_call.1} parent=11 // pred_fallthru
          _
        // Predicated region
        $region73: #{tpu_custom_call.1} parent=11 // pred_check
          %p515 = pneg %p427
        $region74: #{tpu_custom_call.1} parent=11 // pred_check_branch
          %517 = sbr.rel (%p515) target = $region76
        $region75: #{tpu_custom_call.1} parent=11 // pred_region
          _
        $region76: #{tpu_custom_call.1} parent=11 // pred_fallthru
          _
      $region12: #{tpu_custom_call.1} parent=5 // pred_fallthru
        _
      %p518 = scmp.lt.s32.totalorder %s27, 2
      // Predicated region
      $region77: #{tpu_custom_call.1} parent=5 // pred_check
        %p519 = pneg %p518
      $region78: #{tpu_custom_call.1} parent=5 // pred_check_branch
        %521 = sbr.rel (%p519) target = $region80
      $region79: #{tpu_custom_call.1} parent=5 // pred_region
        // Predicated region
        $region81: #{tpu_custom_call.1} parent=79 // pred_check
          %p522 = pneg %p59
        $region82: #{tpu_custom_call.1} parent=79 // pred_check_branch
          %524 = sbr.rel (%p522) target = $region84
        $region83: #{tpu_custom_call.1} parent=79 // pred_region
          %p525 = scmp.lt.s32.totalorder %s34, 1
          %s526 = scalar_select %p525, %s34, 1
          %s527 = smul.addr %s526, 8
          %s528 = scalar_lea.vmem %s0, %s527
        $region84: #{tpu_custom_call.1} parent=79 // pred_fallthru
          _
        // Predicated region
        $region85: #{tpu_custom_call.1} parent=79 // pred_check
          %p529 = pneg %p85
        $region86: #{tpu_custom_call.1} parent=79 // pred_check_branch
          %531 = sbr.rel (%p529) target = $region88
        $region87: #{tpu_custom_call.1} parent=79 // pred_region
          %p532 = scmp.lt.s32.totalorder %s34, 1
          %s533 = scalar_select %p532, %s34, 1
          %s534 = scalar_lea.vmem %s1, %s533
        $region88: #{tpu_custom_call.1} parent=79 // pred_fallthru
          _
      $region80: #{tpu_custom_call.1} parent=5 // pred_fallthru
        _
      %p535 = scmp.le.s32.totalorder 1, %s27
      %p536 = scmp.lt.s32.totalorder %s27, 3
      %p537 = pnand %p535, %p536
      %p538 = pneg %p537
      // Predicated region
      $region89: #{tpu_custom_call.1} parent=5 // pred_check
        _
      $region90: #{tpu_custom_call.1} parent=5 // pred_check_branch
        %540 = sbr.rel (%p537) target = $region92
      $region91: #{tpu_custom_call.1} parent=5 // pred_region
        %s541 = ssub.s32 %s27, 1
        %p542 = scmp.lt.s32.totalorder %s36, 1
        %s543 = scalar_select %p542, %s36, 1
        %s544 = smul.addr %s543, 8
        %s545 = scalar_lea.vmem %s0, %s544
        %p546 = pneg %p65
        %p547 = pneg %p62
        %p548 = scmp.lt.s32.totalorder %s36, 1
        %s549 = scalar_select %p548, %s36, 1
        %s550 = scalar_lea.vmem %s1, %s549
        %p551 = pneg %p91
        %p552 = pneg %p88
        %p553 = pneg %p112
        %p554 = pneg %p109
        %p555 = pneg %p133
        %p556 = pneg %p130
        %p557 = pneg %p154
        %p558 = pneg %p151
        %p559 = pneg %p175
        %p560 = pneg %p172
        %p561 = pneg %p196
        %p562 = pneg %p193
        %p563 = pneg %p217
        %p564 = pneg %p214
        %p565 = pneg %p238
        %p566 = pneg %p235
        %p567 = pneg %p259
        %p568 = pneg %p256
        %p569 = pneg %p280
        %p570 = pneg %p277
        %p571 = pneg %p301
        %p572 = pneg %p298
        %p573 = pneg %p322
        %p574 = pneg %p319
        %p575 = pneg %p343
        %p576 = pneg %p340
        %p577 = pneg %p364
        %p578 = pneg %p361
        %p579 = pneg %p385
        %p580 = pneg %p382
        %p581 = pneg %p406
        %p582 = pneg %p403
        %p583 = pneg %p427
        %p584 = pneg %p424
        %p585 = pneg %p455
        %p586 = pneg %p452
        %s587 = sand.u32 %s442, 1
        %s588 = scalar_lea.sflag [#allocation5], %s587
        %s589 = sand.u32 %s442, 1
        %s590 = smul.addr %s589, 8
        %s591 = scalar_lea.vmem [#allocation4], %s590
        %p592 = scmp.lt.s32.totalorder %s36, 1
        %s593 = scalar_select %p592, %s36, 1
        %s594 = smul.addr %s593, 8
        %s595 = scalar_lea.vmem %s0, %s594
        %p596 = scmp.lt.s32.totalorder %s36, 1
        %s597 = scalar_select %p596, %s36, 1
        %s598 = scalar_lea.vmem %s1, %s597
        %v600 = vld [vmem:[%s10] sm:$0x1]
        %v601 = vld [vmem:[%s11] sm:$0x1]
        %p602 = scmp.eq.s32.totalorder %s37, 0
        // Predicated region
        $region93: #{tpu_custom_call.1} parent=91 // pred_check
          %p603 = pneg %p602
        $region94: #{tpu_custom_call.1} parent=91 // pred_check_branch
          %605 = sbr.rel (%p603) target = $region96
        $region95: #{tpu_custom_call.1} parent=91 // pred_region
          %v606 = vld [vmem:[%s595] sm:$0xff]
          %vm607 = vcmask 261120
          %v608 = vsel %vm607, %v606, 0.0
          %609 = vadd.xlane.f32.xlu0 %v608
          %v610 = vpop.xlane.xlu0 %609
          %v611 = vrcp.pop 32.0
          %v612 = vmul.f32 %v610, %v611
          %v613 = vsub.f32 %v606, %v612
          %v614 = vmul.f32 %v613, %v613
          %v615 = vsel %vm607, %v614, 0.0
          %616 = vadd.xlane.f32.xlu0 %v615
          %v617 = vpop.xlane.xlu0 %616
          %v618 = vmul.f32 %v617, 0.032258064
          %v619 = vrsqrt.pop %v618
          %v620 = vmul.f32 %v618, %v619
          %vm621 = vcmp.eq.f32.partialorder %v618, inf
          %v622 = vsel %vm621, %v618, %v620
          %vm623 = vcmp.eq.f32.partialorder %v618, 0.0
          %v624 = vand.u32 %v618, 2147483648
          %v625 = vsel %vm623, %v624, %v622
          %v626 = vadd.f32 %v625, 1e-06
          %v627 = vrcp.pop %v626
          %v629 = vlaneseq
          %v630 = vshrl.u32 %v629, 7
          %v631 = vsub.s32 0, %v630
          %v632 = vrot.slane %v600, %v631
          %v634 = vmul.f32 %v632, %v613
          %v635 = vmul.f32 %v634, %v627
          %v637 = vlaneseq
          %v638 = vshrl.u32 %v637, 7
          %v639 = vsub.s32 0, %v638
          %v640 = vrot.slane %v601, %v639
          %v642 = vadd.f32 %v635, %v640
          %v643 = vpack.c.bf16 %v642, %v642
          %v644 = vld [vmem:[%s4] sm:$0xf]
          %v645 = vld [vmem:[%s4 + $0x4] sm:$0xf]
          %v646 = vld [vmem:[%s4 + $0x8] sm:$0xf]
          %v647 = vld [vmem:[%s4 + $0xc] sm:$0xf]
          %v648 = vld [vmem:[%s5] sm:$0x1]
          %v650 = vlaneseq
          %v651 = vshrl.u32 %v650, 7
          %v652 = vsub.s32 0, %v651
          %v653 = vrot.slane %v648, %v652
          %v659 = vunpack.c.l.b16 %v644
          %v660 = vunpack.c.l.b16 %v645
          %v661 = vunpack.c.l.b16 %v646
          %v662 = vunpack.c.l.b16 %v647
          %v663 = vpack.c.b16 %v660, %v659
          %v664 = vpack.c.b16 %v662, %v661
          %v668 = vsel %vm607, %v643, 0
          %670 = vmatprep.subr.bf16.mxu0 0
          %671 = vmatpush1.bf16.msra.mxu0 0
          %672 = vmatprep.subr.bf16.mxu0 0
          %673 = vmatpush1.bf16.msra.mxu0 0
          %674 = vmatprep.subr.bf16.mxu0 0
          %675 = vmatpush1.bf16.msra.mxu0 0
          %676 = vmatprep.subr.bf16.mxu0 0
          %677 = vmatpush1.bf16.msra.mxu0 0
          %678 = vmatprep.subr.bf16.mxu0 0
          %679 = vmatpush1.bf16.msra.mxu0 0
          %680 = vmatprep.subr.bf16.mxu0 0
          %681 = vmatpush1.bf16.msra.mxu0 0
          %682 = vmatprep.subr.bf16.mxu0 0
          %683 = vmatpush1.bf16.msra.mxu0 %v664
          %684 = vmatprep.subr.bf16.mxu0 0
          %685 = vmatpush1.bf16.msra.mxu0 %v663
          %686 = vmatprep.subr.bf16.mxu0 0
          %687 = vmatpush2.bf16.msra.mxu0 0
          %688 = vmatprep.subr.bf16.mxu0 0
          %689 = vmatpush2.bf16.msra.mxu0 0
          %690 = vmatprep.subr.bf16.mxu0 0
          %691 = vmatpush2.bf16.msra.mxu0 0
          %692 = vmatprep.subr.bf16.mxu0 0
          %693 = vmatpush2.bf16.msra.mxu0 0
          %694 = vmatprep.subr.bf16.mxu0 0
          %695 = vmatpush2.bf16.msra.mxu0 0
          %696 = vmatprep.subr.bf16.mxu0 0
          %697 = vmatpush2.bf16.msra.mxu0 0
          %698 = vmatprep.subr.bf16.mxu0 0
          %699 = vmatpush2.bf16.msra.mxu0 0
          %700 = vmatprep.subr.bf16.mxu0 0
          %701 = vmatpush2.bf16.msra.mxu0 0
          %702 = vmatprep.mubr.bf16.mxu0 0
          %703 = vmatmul.mubr.bf16.gmra.mxu0 %v668
          %v704 = vpop.f32.mrf.mxu0
          %v705 = vadd.f32 %v653, %v704
          %v706 = vpop.f32.mrf.mxu0
          %v707 = vpop.f32.mrf.mxu0
          %v708 = vpop.f32.mrf.mxu0
          %709 = vdwg.mxu0
          %v710 = vld [vmem:[%s6] sm:$0xf]
          %v711 = vld [vmem:[%s6 + $0x4] sm:$0xf]
          %v712 = vld [vmem:[%s6 + $0x8] sm:$0xf]
          %v713 = vld [vmem:[%s6 + $0xc] sm:$0xf]
          %v714 = vld [vmem:[%s7] sm:$0x1]
          %v716 = vlaneseq
          %v717 = vshrl.u32 %v716, 7
          %v718 = vsub.s32 0, %v717
          %v719 = vrot.slane %v714, %v718
          %v725 = vunpack.c.l.b16 %v710
          %v726 = vunpack.c.l.b16 %v711
          %v727 = vunpack.c.l.b16 %v712
          %v728 = vunpack.c.l.b16 %v713
          %v729 = vpack.c.b16 %v726, %v725
          %v730 = vpack.c.b16 %v728, %v727
          %733 = vmatprep.subr.bf16.mxu0 0
          %734 = vmatpush1.bf16.msra.mxu0 0
          %735 = vmatprep.subr.bf16.mxu0 0
          %736 = vmatpush1.bf16.msra.mxu0 0
          %737 = vmatprep.subr.bf16.mxu0 0
          %738 = vmatpush1.bf16.msra.mxu0 0
          %739 = vmatprep.subr.bf16.mxu0 0
          %740 = vmatpush1.bf16.msra.mxu0 0
          %741 = vmatprep.subr.bf16.mxu0 0
          %742 = vmatpush1.bf16.msra.mxu0 0
          %743 = vmatprep.subr.bf16.mxu0 0
          %744 = vmatpush1.bf16.msra.mxu0 0
          %745 = vmatprep.subr.bf16.mxu0 0
          %746 = vmatpush1.bf16.msra.mxu0 %v730
          %747 = vmatprep.subr.bf16.mxu0 0
          %748 = vmatpush1.bf16.msra.mxu0 %v729
          %749 = vmatprep.subr.bf16.mxu0 0
          %750 = vmatpush2.bf16.msra.mxu0 0
          %751 = vmatprep.subr.bf16.mxu0 0
          %752 = vmatpush2.bf16.msra.mxu0 0
          %753 = vmatprep.subr.bf16.mxu0 0
          %754 = vmatpush2.bf16.msra.mxu0 0
          %755 = vmatprep.subr.bf16.mxu0 0
          %756 = vmatpush2.bf16.msra.mxu0 0
          %757 = vmatprep.subr.bf16.mxu0 0
          %758 = vmatpush2.bf16.msra.mxu0 0
          %759 = vmatprep.subr.bf16.mxu0 0
          %760 = vmatpush2.bf16.msra.mxu0 0
          %761 = vmatprep.subr.bf16.mxu0 0
          %762 = vmatpush2.bf16.msra.mxu0 0
          %763 = vmatprep.subr.bf16.mxu0 0
          %764 = vmatpush2.bf16.msra.mxu0 0
          %765 = vmatprep.mubr.bf16.mxu0 0
          %766 = vmatmul.mubr.bf16.gmra.mxu0 %v668
          %v767 = vpop.f32.mrf.mxu0
          %v768 = vadd.f32 %v719, %v767
          %v769 = vpop.f32.mrf.mxu0
          %v770 = vpop.f32.mrf.mxu0
          %v771 = vpop.f32.mrf.mxu0
          %772 = vdwg.mxu0
          %v773 = vpack.c.bf16 %v705, %v705
          %vm774 = vcmask 60416
          %775 = vst.msk [vmem:[#allocation2] sm:$0xf] %vm774, %v773
          %v776 = vpack.c.bf16 %v768, %v768
          %777 = vst.msk [vmem:[#allocation3] sm:$0xf] %vm774, %v776
          %s778 = scalar_lea.vmem %s4, 16
          %v779 = vld [vmem:[%s778] sm:$0xf]
          %v780 = vld [vmem:[%s778 + $0x4] sm:$0xf]
          %v781 = vld [vmem:[%s778 + $0x8] sm:$0xf]
          %v782 = vld [vmem:[%s778 + $0xc] sm:$0xf]
          %s783 = scalar_lea.vmem %s5, 1
          %v784 = vld [vmem:[%s783] sm:$0x1]
          %v786 = vlaneseq
          %v787 = vshrl.u32 %v786, 7
          %v788 = vsub.s32 0, %v787
          %v789 = vrot.slane %v784, %v788
          %v795 = vunpack.c.l.b16 %v779
          %v796 = vunpack.c.l.b16 %v780
          %v797 = vunpack.c.l.b16 %v781
          %v798 = vunpack.c.l.b16 %v782
          %v799 = vpack.c.b16 %v796, %v795
          %v800 = vpack.c.b16 %v798, %v797
          %803 = vmatprep.subr.bf16.mxu0 0
          %804 = vmatpush1.bf16.msra.mxu0 0
          %805 = vmatprep.subr.bf16.mxu0 0
          %806 = vmatpush1.bf16.msra.mxu0 0
          %807 = vmatprep.subr.bf16.mxu0 0
          %808 = vmatpush1.bf16.msra.mxu0 0
          %809 = vmatprep.subr.bf16.mxu0 0
          %810 = vmatpush1.bf16.msra.mxu0 0
          %811 = vmatprep.subr.bf16.mxu0 0
          %812 = vmatpush1.bf16.msra.mxu0 0
          %813 = vmatprep.subr.bf16.mxu0 0
          %814 = vmatpush1.bf16.msra.mxu0 0
          %815 = vmatprep.subr.bf16.mxu0 0
          %816 = vmatpush1.bf16.msra.mxu0 %v800
          %817 = vmatprep.subr.bf16.mxu0 0
          %818 = vmatpush1.bf16.msra.mxu0 %v799
          %819 = vmatprep.subr.bf16.mxu0 0
          %820 = vmatpush2.bf16.msra.mxu0 0
          %821 = vmatprep.subr.bf16.mxu0 0
          %822 = vmatpush2.bf16.msra.mxu0 0
          %823 = vmatprep.subr.bf16.mxu0 0
          %824 = vmatpush2.bf16.msra.mxu0 0
          %825 = vmatprep.subr.bf16.mxu0 0
          %826 = vmatpush2.bf16.msra.mxu0 0
          %827 = vmatprep.subr.bf16.mxu0 0
          %828 = vmatpush2.bf16.msra.mxu0 0
          %829 = vmatprep.subr.bf16.mxu0 0
          %830 = vmatpush2.bf16.msra.mxu0 0
          %831 = vmatprep.subr.bf16.mxu0 0
          %832 = vmatpush2.bf16.msra.mxu0 0
          %833 = vmatprep.subr.bf16.mxu0 0
          %834 = vmatpush2.bf16.msra.mxu0 0
          %835 = vmatprep.mubr.bf16.mxu0 0
          %836 = vmatmul.mubr.bf16.gmra.mxu0 %v668
          %v837 = vpop.f32.mrf.mxu0
          %v838 = vadd.f32 %v789, %v837
          %v839 = vpop.f32.mrf.mxu0
          %v840 = vpop.f32.mrf.mxu0
          %v841 = vpop.f32.mrf.mxu0
          %842 = vdwg.mxu0
          %s843 = scalar_lea.vmem %s6, 16
          %v844 = vld [vmem:[%s843] sm:$0xf]
          %v845 = vld [vmem:[%s843 + $0x4] sm:$0xf]
          %v846 = vld [vmem:[%s843 + $0x8] sm:$0xf]
          %v847 = vld [vmem:[%s843 + $0xc] sm:$0xf]
          %s848 = scalar_lea.vmem %s7, 1
          %v849 = vld [vmem:[%s848] sm:$0x1]
          %v851 = vlaneseq
          %v852 = vshrl.u32 %v851, 7
          %v853 = vsub.s32 0, %v852
          %v854 = vrot.slane %v849, %v853
          %v860 = vunpack.c.l.b16 %v844
          %v861 = vunpack.c.l.b16 %v845
          %v862 = vunpack.c.l.b16 %v846
          %v863 = vunpack.c.l.b16 %v847
          %v864 = vpack.c.b16 %v861, %v860
          %v865 = vpack.c.b16 %v863, %v862
          %868 = vmatprep.subr.bf16.mxu0 0
          %869 = vmatpush1.bf16.msra.mxu0 0
          %870 = vmatprep.subr.bf16.mxu0 0
          %871 = vmatpush1.bf16.msra.mxu0 0
          %872 = vmatprep.subr.bf16.mxu0 0
          %873 = vmatpush1.bf16.msra.mxu0 0
          %874 = vmatprep.subr.bf16.mxu0 0
          %875 = vmatpush1.bf16.msra.mxu0 0
          %876 = vmatprep.subr.bf16.mxu0 0
          %877 = vmatpush1.bf16.msra.mxu0 0
          %878 = vmatprep.subr.bf16.mxu0 0
          %879 = vmatpush1.bf16.msra.mxu0 0
          %880 = vmatprep.subr.bf16.mxu0 0
          %881 = vmatpush1.bf16.msra.mxu0 %v865
          %882 = vmatprep.subr.bf16.mxu0 0
          %883 = vmatpush1.bf16.msra.mxu0 %v864
          %884 = vmatprep.subr.bf16.mxu0 0
          %885 = vmatpush2.bf16.msra.mxu0 0
          %886 = vmatprep.subr.bf16.mxu0 0
          %887 = vmatpush2.bf16.msra.mxu0 0
          %888 = vmatprep.subr.bf16.mxu0 0
          %889 = vmatpush2.bf16.msra.mxu0 0
          %890 = vmatprep.subr.bf16.mxu0 0
          %891 = vmatpush2.bf16.msra.mxu0 0
          %892 = vmatprep.subr.bf16.mxu0 0
          %893 = vmatpush2.bf16.msra.mxu0 0
          %894 = vmatprep.subr.bf16.mxu0 0
          %895 = vmatpush2.bf16.msra.mxu0 0
          %896 = vmatprep.subr.bf16.mxu0 0
          %897 = vmatpush2.bf16.msra.mxu0 0
          %898 = vmatprep.subr.bf16.mxu0 0
          %899 = vmatpush2.bf16.msra.mxu0 0
          %900 = vmatprep.mubr.bf16.mxu0 0
          %901 = vmatmul.mubr.bf16.gmra.mxu0 %v668
          %v902 = vpop.f32.mrf.mxu0
          %v903 = vadd.f32 %v854, %v902
          %v904 = vpop.f32.mrf.mxu0
          %v905 = vpop.f32.mrf.mxu0
          %v906 = vpop.f32.mrf.mxu0
          %907 = vdwg.mxu0
          %v908 = vpack.c.bf16 %v838, %v838
          %s909 = scalar_lea.vmem [#allocation2], 4
          %910 = vst.msk [vmem:[%s909] sm:$0xf] %vm774, %v908
          %v911 = vpack.c.bf16 %v903, %v903
          %s912 = scalar_lea.vmem [#allocation3], 4
          %913 = vst.msk [vmem:[%s912] sm:$0xf] %vm774, %v911
          %s914 = scalar_lea.vmem %s4, 32
          %v915 = vld [vmem:[%s914] sm:$0xf]
          %v916 = vld [vmem:[%s914 + $0x4] sm:$0xf]
          %v917 = vld [vmem:[%s914 + $0x8] sm:$0xf]
          %v918 = vld [vmem:[%s914 + $0xc] sm:$0xf]
          %s919 = scalar_lea.vmem %s5, 2
          %v920 = vld [vmem:[%s919] sm:$0x1]
          %v922 = vlaneseq
          %v923 = vshrl.u32 %v922, 7
          %v924 = vsub.s32 0, %v923
          %v925 = vrot.slane %v920, %v924
          %v931 = vunpack.c.l.b16 %v915
          %v932 = vunpack.c.l.b16 %v916
          %v933 = vunpack.c.l.b16 %v917
          %v934 = vunpack.c.l.b16 %v918
          %v935 = vpack.c.b16 %v932, %v931
          %v936 = vpack.c.b16 %v934, %v933
          %939 = vmatprep.subr.bf16.mxu0 0
          %940 = vmatpush1.bf16.msra.mxu0 0
          %941 = vmatprep.subr.bf16.mxu0 0
          %942 = vmatpush1.bf16.msra.mxu0 0
          %943 = vmatprep.subr.bf16.mxu0 0
          %944 = vmatpush1.bf16.msra.mxu0 0
          %945 = vmatprep.subr.bf16.mxu0 0
          %946 = vmatpush1.bf16.msra.mxu0 0
          %947 = vmatprep.subr.bf16.mxu0 0
          %948 = vmatpush1.bf16.msra.mxu0 0
          %949 = vmatprep.subr.bf16.mxu0 0
          %950 = vmatpush1.bf16.msra.mxu0 0
          %951 = vmatprep.subr.bf16.mxu0 0
          %952 = vmatpush1.bf16.msra.mxu0 %v936
          %953 = vmatprep.subr.bf16.mxu0 0
          %954 = vmatpush1.bf16.msra.mxu0 %v935
          %955 = vmatprep.subr.bf16.mxu0 0
          %956 = vmatpush2.bf16.msra.mxu0 0
          %957 = vmatprep.subr.bf16.mxu0 0
          %958 = vmatpush2.bf16.msra.mxu0 0
          %959 = vmatprep.subr.bf16.mxu0 0
          %960 = vmatpush2.bf16.msra.mxu0 0
          %961 = vmatprep.subr.bf16.mxu0 0
          %962 = vmatpush2.bf16.msra.mxu0 0
          %963 = vmatprep.subr.bf16.mxu0 0
          %964 = vmatpush2.bf16.msra.mxu0 0
          %965 = vmatprep.subr.bf16.mxu0 0
          %966 = vmatpush2.bf16.msra.mxu0 0
          %967 = vmatprep.subr.bf16.mxu0 0
          %968 = vmatpush2.bf16.msra.mxu0 0
          %969 = vmatprep.subr.bf16.mxu0 0
          %970 = vmatpush2.bf16.msra.mxu0 0
          %971 = vmatprep.mubr.bf16.mxu0 0
          %972 = vmatmul.mubr.bf16.gmra.mxu0 %v668
          %v973 = vpop.f32.mrf.mxu0
          %v974 = vadd.f32 %v925, %v973
          %v975 = vpop.f32.mrf.mxu0
          %v976 = vpop.f32.mrf.mxu0
          %v977 = vpop.f32.mrf.mxu0
          %978 = vdwg.mxu0
          %s979 = scalar_lea.vmem %s6, 32
          %v980 = vld [vmem:[%s979] sm:$0xf]
          %v981 = vld [vmem:[%s979 + $0x4] sm:$0xf]
          %v982 = vld [vmem:[%s979 + $0x8] sm:$0xf]
          %v983 = vld [vmem:[%s979 + $0xc] sm:$0xf]
          %s984 = scalar_lea.vmem %s7, 2
          %v985 = vld [vmem:[%s984] sm:$0x1]
          %v987 = vlaneseq
          %v988 = vshrl.u32 %v987, 7
          %v989 = vsub.s32 0, %v988
          %v990 = vrot.slane %v985, %v989
          %v996 = vunpack.c.l.b16 %v980
          %v997 = vunpack.c.l.b16 %v981
          %v998 = vunpack.c.l.b16 %v982
          %v999 = vunpack.c.l.b16 %v983
          %v1000 = vpack.c.b16 %v997, %v996
          %v1001 = vpack.c.b16 %v999, %v998
          %1004 = vmatprep.subr.bf16.mxu0 0
          %1005 = vmatpush1.bf16.msra.mxu0 0
          %1006 = vmatprep.subr.bf16.mxu0 0
          %1007 = vmatpush1.bf16.msra.mxu0 0
          %1008 = vmatprep.subr.bf16.mxu0 0
          %1009 = vmatpush1.bf16.msra.mxu0 0
          %1010 = vmatprep.subr.bf16.mxu0 0
          %1011 = vmatpush1.bf16.msra.mxu0 0
          %1012 = vmatprep.subr.bf16.mxu0 0
          %1013 = vmatpush1.bf16.msra.mxu0 0
          %1014 = vmatprep.subr.bf16.mxu0 0
          %1015 = vmatpush1.bf16.msra.mxu0 0
          %1016 = vmatprep.subr.bf16.mxu0 0
          %1017 = vmatpush1.bf16.msra.mxu0 %v1001
          %1018 = vmatprep.subr.bf16.mxu0 0
          %1019 = vmatpush1.bf16.msra.mxu0 %v1000
          %1020 = vmatprep.subr.bf16.mxu0 0
          %1021 = vmatpush2.bf16.msra.mxu0 0
          %1022 = vmatprep.subr.bf16.mxu0 0
          %1023 = vmatpush2.bf16.msra.mxu0 0
          %1024 = vmatprep.subr.bf16.mxu0 0
          %1025 = vmatpush2.bf16.msra.mxu0 0
          %1026 = vmatprep.subr.bf16.mxu0 0
          %1027 = vmatpush2.bf16.msra.mxu0 0
          %1028 = vmatprep.subr.bf16.mxu0 0
          %1029 = vmatpush2.bf16.msra.mxu0 0
          %1030 = vmatprep.subr.bf16.mxu0 0
          %1031 = vmatpush2.bf16.msra.mxu0 0
          %1032 = vmatprep.subr.bf16.mxu0 0
          %1033 = vmatpush2.bf16.msra.mxu0 0
          %1034 = vmatprep.subr.bf16.mxu0 0
          %1035 = vmatpush2.bf16.msra.mxu0 0
          %1036 = vmatprep.mubr.bf16.mxu0 0
          %1037 = vmatmul.mubr.bf16.gmra.mxu0 %v668
          %v1038 = vpop.f32.mrf.mxu0
          %v1039 = vadd.f32 %v990, %v1038
          %v1040 = vpop.f32.mrf.mxu0
          %v1041 = vpop.f32.mrf.mxu0
          %v1042 = vpop.f32.mrf.mxu0
          %1043 = vdwg.mxu0
          %v1044 = vpack.c.bf16 %v974, %v974
          %s1045 = scalar_lea.vmem [#allocation2], 8
          %1046 = vst.msk [vmem:[%s1045] sm:$0xf] %vm774, %v1044
          %v1047 = vpack.c.bf16 %v1039, %v1039
          %s1048 = scalar_lea.vmem [#allocation3], 8
          %1049 = vst.msk [vmem:[%s1048] sm:$0xf] %vm774, %v1047
          %s1050 = scalar_lea.vmem %s4, 48
          %v1051 = vld [vmem:[%s1050] sm:$0xf]
          %v1052 = vld [vmem:[%s1050 + $0x4] sm:$0xf]
          %v1053 = vld [vmem:[%s1050 + $0x8] sm:$0xf]
          %v1054 = vld [vmem:[%s1050 + $0xc] sm:$0xf]
          %s1055 = scalar_lea.vmem %s5, 3
          %v1056 = vld [vmem:[%s1055] sm:$0x1]
          %v1058 = vlaneseq
          %v1059 = vshrl.u32 %v1058, 7
          %v1060 = vsub.s32 0, %v1059
          %v1061 = vrot.slane %v1056, %v1060
          %v1067 = vunpack.c.l.b16 %v1051
          %v1068 = vunpack.c.l.b16 %v1052
          %v1069 = vunpack.c.l.b16 %v1053
          %v1070 = vunpack.c.l.b16 %v1054
          %v1071 = vpack.c.b16 %v1068, %v1067
          %v1072 = vpack.c.b16 %v1070, %v1069
          %1075 = vmatprep.subr.bf16.mxu0 0
          %1076 = vmatpush1.bf16.msra.mxu0 0
          %1077 = vmatprep.subr.bf16.mxu0 0
          %1078 = vmatpush1.bf16.msra.mxu0 0
          %1079 = vmatprep.subr.bf16.mxu0 0
          %1080 = vmatpush1.bf16.msra.mxu0 0
          %1081 = vmatprep.subr.bf16.mxu0 0
          %1082 = vmatpush1.bf16.msra.mxu0 0
          %1083 = vmatprep.subr.bf16.mxu0 0
          %1084 = vmatpush1.bf16.msra.mxu0 0
          %1085 = vmatprep.subr.bf16.mxu0 0
          %1086 = vmatpush1.bf16.msra.mxu0 0
          %1087 = vmatprep.subr.bf16.mxu0 0
          %1088 = vmatpush1.bf16.msra.mxu0 %v1072
          %1089 = vmatprep.subr.bf16.mxu0 0
          %1090 = vmatpush1.bf16.msra.mxu0 %v1071
          %1091 = vmatprep.subr.bf16.mxu0 0
          %1092 = vmatpush2.bf16.msra.mxu0 0
          %1093 = vmatprep.subr.bf16.mxu0 0
          %1094 = vmatpush2.bf16.msra.mxu0 0
          %1095 = vmatprep.subr.bf16.mxu0 0
          %1096 = vmatpush2.bf16.msra.mxu0 0
          %1097 = vmatprep.subr.bf16.mxu0 0
          %1098 = vmatpush2.bf16.msra.mxu0 0
          %1099 = vmatprep.subr.bf16.mxu0 0
          %1100 = vmatpush2.bf16.msra.mxu0 0
          %1101 = vmatprep.subr.bf16.mxu0 0
          %1102 = vmatpush2.bf16.msra.mxu0 0
          %1103 = vmatprep.subr.bf16.mxu0 0
          %1104 = vmatpush2.bf16.msra.mxu0 0
          %1105 = vmatprep.subr.bf16.mxu0 0
          %1106 = vmatpush2.bf16.msra.mxu0 0
          %1107 = vmatprep.mubr.bf16.mxu0 0
          %1108 = vmatmul.mubr.bf16.gmra.mxu0 %v668
          %v1109 = vpop.f32.mrf.mxu0
          %v1110 = vadd.f32 %v1061, %v1109
          %v1111 = vpop.f32.mrf.mxu0
          %v1112 = vpop.f32.mrf.mxu0
          %v1113 = vpop.f32.mrf.mxu0
          %1114 = vdwg.mxu0
          %s1115 = scalar_lea.vmem %s6, 48
          %v1116 = vld [vmem:[%s1115] sm:$0xf]
          %v1117 = vld [vmem:[%s1115 + $0x4] sm:$0xf]
          %v1118 = vld [vmem:[%s1115 + $0x8] sm:$0xf]
          %v1119 = vld [vmem:[%s1115 + $0xc] sm:$0xf]
          %s1120 = scalar_lea.vmem %s7, 3
          %v1121 = vld [vmem:[%s1120] sm:$0x1]
          %v1123 = vlaneseq
          %v1124 = vshrl.u32 %v1123, 7
          %v1125 = vsub.s32 0, %v1124
          %v1126 = vrot.slane %v1121, %v1125
          %v1132 = vunpack.c.l.b16 %v1116
          %v1133 = vunpack.c.l.b16 %v1117
          %v1134 = vunpack.c.l.b16 %v1118
          %v1135 = vunpack.c.l.b16 %v1119
          %v1136 = vpack.c.b16 %v1133, %v1132
          %v1137 = vpack.c.b16 %v1135, %v1134
          %1140 = vmatprep.subr.bf16.mxu0 0
          %1141 = vmatpush1.bf16.msra.mxu0 0
          %1142 = vmatprep.subr.bf16.mxu0 0
          %1143 = vmatpush1.bf16.msra.mxu0 0
          %1144 = vmatprep.subr.bf16.mxu0 0
          %1145 = vmatpush1.bf16.msra.mxu0 0
          %1146 = vmatprep.subr.bf16.mxu0 0
          %1147 = vmatpush1.bf16.msra.mxu0 0
          %1148 = vmatprep.subr.bf16.mxu0 0
          %1149 = vmatpush1.bf16.msra.mxu0 0
          %1150 = vmatprep.subr.bf16.mxu0 0
          %1151 = vmatpush1.bf16.msra.mxu0 0
          %1152 = vmatprep.subr.bf16.mxu0 0
          %1153 = vmatpush1.bf16.msra.mxu0 %v1137
          %1154 = vmatprep.subr.bf16.mxu0 0
          %1155 = vmatpush1.bf16.msra.mxu0 %v1136
          %1156 = vmatprep.subr.bf16.mxu0 0
          %1157 = vmatpush2.bf16.msra.mxu0 0
          %1158 = vmatprep.subr.bf16.mxu0 0
          %1159 = vmatpush2.bf16.msra.mxu0 0
          %1160 = vmatprep.subr.bf16.mxu0 0
          %1161 = vmatpush2.bf16.msra.mxu0 0
          %1162 = vmatprep.subr.bf16.mxu0 0
          %1163 = vmatpush2.bf16.msra.mxu0 0
          %1164 = vmatprep.subr.bf16.mxu0 0
          %1165 = vmatpush2.bf16.msra.mxu0 0
          %1166 = vmatprep.subr.bf16.mxu0 0
          %1167 = vmatpush2.bf16.msra.mxu0 0
          %1168 = vmatprep.subr.bf16.mxu0 0
          %1169 = vmatpush2.bf16.msra.mxu0 0
          %1170 = vmatprep.subr.bf16.mxu0 0
          %1171 = vmatpush2.bf16.msra.mxu0 0
          %1172 = vmatprep.mubr.bf16.mxu0 0
          %1173 = vmatmul.mubr.bf16.gmra.mxu0 %v668
          %v1174 = vpop.f32.mrf.mxu0
          %v1175 = vadd.f32 %v1126, %v1174
          %v1176 = vpop.f32.mrf.mxu0
          %v1177 = vpop.f32.mrf.mxu0
          %v1178 = vpop.f32.mrf.mxu0
          %1179 = vdwg.mxu0
          %v1180 = vpack.c.bf16 %v1110, %v1110
          %s1181 = scalar_lea.vmem [#allocation2], 12
          %1182 = vst.msk [vmem:[%s1181] sm:$0xf] %vm774, %v1180
          %v1183 = vpack.c.bf16 %v1175, %v1175
          %s1184 = scalar_lea.vmem [#allocation3], 12
          %1185 = vst.msk [vmem:[%s1184] sm:$0xf] %vm774, %v1183
        $region96: #{tpu_custom_call.1} parent=91 // pred_fallthru
          _
        %s1186 = smul.u32 %s37, 8
        %s1187 = scalar_lea.vmem %s595, %s1186
        %v1188 = vld [vmem:[%s1187] sm:$0xff]
        %vm1189 = vcmask 261120
        %v1190 = vsel %vm1189, %v1188, 0.0
        %1191 = vadd.xlane.f32.xlu0 %v1190
        %v1192 = vpop.xlane.xlu0 %1191
        %v1193 = vrcp.pop 32.0
        %v1194 = vmul.f32 %v1192, %v1193
        %v1195 = vsub.f32 %v1188, %v1194
        %v1196 = vmul.f32 %v1195, %v1195
        %v1197 = vsel %vm1189, %v1196, 0.0
        %1198 = vadd.xlane.f32.xlu0 %v1197
        %v1199 = vpop.xlane.xlu0 %1198
        %v1200 = vmul.f32 %v1199, 0.032258064
        %v1201 = vrsqrt.pop %v1200
        %v1202 = vmul.f32 %v1200, %v1201
        %vm1203 = vcmp.eq.f32.partialorder %v1200, inf
        %v1204 = vsel %vm1203, %v1200, %v1202
        %vm1205 = vcmp.eq.f32.partialorder %v1200, 0.0
        %v1206 = vand.u32 %v1200, 2147483648
        %v1207 = vsel %vm1205, %v1206, %v1204
        %v1208 = vadd.f32 %v1207, 1e-06
        %v1209 = vrcp.pop %v1208
        %v1211 = vlaneseq
        %v1212 = vshrl.u32 %v1211, 7
        %v1213 = vsub.s32 0, %v1212
        %v1214 = vrot.slane %v600, %v1213
        %v1216 = vmul.f32 %v1214, %v1195
        %v1217 = vmul.f32 %v1216, %v1209
        %v1219 = vlaneseq
        %v1220 = vshrl.u32 %v1219, 7
        %v1221 = vsub.s32 0, %v1220
        %v1222 = vrot.slane %v601, %v1221
        %v1224 = vadd.f32 %v1217, %v1222
        %v1225 = vpack.c.bf16 %v1224, %v1224
        %v1226 = vld [vmem:[%s598] sm:$0x1]
        %vm1227 = vcmp.eq.s32.totalorder %v1226, 0
        %v1228 = vsel %vm1227, -1e+09, 0.0
        %v1229 = vld [vmem:[%s2] sm:$0xf]
        %v1230 = vld [vmem:[%s2 + $0x4] sm:$0xf]
        %v1231 = vld [vmem:[%s2 + $0x8] sm:$0xf]
        %v1232 = vld [vmem:[%s2 + $0xc] sm:$0xf]
        %v1233 = vld [vmem:[%s3] sm:$0x1]
        %v1235 = vlaneseq
        %v1236 = vshrl.u32 %v1235, 7
        %v1237 = vsub.s32 0, %v1236
        %v1238 = vrot.slane %v1233, %v1237
        %v1244 = vunpack.c.l.b16 %v1229
        %v1245 = vunpack.c.l.b16 %v1230
        %v1246 = vunpack.c.l.b16 %v1231
        %v1247 = vunpack.c.l.b16 %v1232
        %v1248 = vpack.c.b16 %v1245, %v1244
        %v1249 = vpack.c.b16 %v1247, %v1246
        %v1253 = vsel %vm1189, %v1225, 0
        %1255 = vmatprep.subr.bf16.mxu0 0
        %1256 = vmatpush1.bf16.msra.mxu0 0
        %1257 = vmatprep.subr.bf16.mxu0 0
        %1258 = vmatpush1.bf16.msra.mxu0 0
        %1259 = vmatprep.subr.bf16.mxu0 0
        %1260 = vmatpush1.bf16.msra.mxu0 0
        %1261 = vmatprep.subr.bf16.mxu0 0
        %1262 = vmatpush1.bf16.msra.mxu0 0
        %1263 = vmatprep.subr.bf16.mxu0 0
        %1264 = vmatpush1.bf16.msra.mxu0 0
        %1265 = vmatprep.subr.bf16.mxu0 0
        %1266 = vmatpush1.bf16.msra.mxu0 0
        %1267 = vmatprep.subr.bf16.mxu0 0
        %1268 = vmatpush1.bf16.msra.mxu0 %v1249
        %1269 = vmatprep.subr.bf16.mxu0 0
        %1270 = vmatpush1.bf16.msra.mxu0 %v1248
        %1271 = vmatprep.subr.bf16.mxu0 0
        %1272 = vmatpush2.bf16.msra.mxu0 0
        %1273 = vmatprep.subr.bf16.mxu0 0
        %1274 = vmatpush2.bf16.msra.mxu0 0
        %1275 = vmatprep.subr.bf16.mxu0 0
        %1276 = vmatpush2.bf16.msra.mxu0 0
        %1277 = vmatprep.subr.bf16.mxu0 0
        %1278 = vmatpush2.bf16.msra.mxu0 0
        %1279 = vmatprep.subr.bf16.mxu0 0
        %1280 = vmatpush2.bf16.msra.mxu0 0
        %1281 = vmatprep.subr.bf16.mxu0 0
        %1282 = vmatpush2.bf16.msra.mxu0 0
        %1283 = vmatprep.subr.bf16.mxu0 0
        %1284 = vmatpush2.bf16.msra.mxu0 0
        %1285 = vmatprep.subr.bf16.mxu0 0
        %1286 = vmatpush2.bf16.msra.mxu0 0
        %1287 = vmatprep.mubr.bf16.mxu0 0
        %1288 = vmatmul.mubr.bf16.gmra.mxu0 %v1253
        %v1289 = vpop.f32.mrf.mxu0
        %v1290 = vadd.f32 %v1238, %v1289
        %v1291 = vpop.f32.mrf.mxu0
        %v1292 = vpop.f32.mrf.mxu0
        %v1293 = vpop.f32.mrf.mxu0
        %1294 = vdwg.mxu0
        %v1295 = vmul.f32 %v1290, 0.35355338
        %v1296 = vpack.c.bf16 %v1295, %v1295
        %v1297 = vld [vmem:[#allocation2] sm:$0xf]
        %v1299 = vlaneseq
        %v1300 = vshrl.u32 %v1299, 7
        %v1301 = vsub.s32 0, %v1300
        %v1302 = vrot.slane %v1228, %v1301
        %vm1304 = vcmask 64512
        %v1306 = vsel %vm1304, %v1296, 0
        %v1309 = vsel %vm1304, %v1297, 0
        %1311 = vmatprep.subr.bf16.mxu0 0
        %1312 = vmatpush1.bf16.xpose.msra.mxu0 0
        %1313 = vmatprep.subr.bf16.mxu0 0
        %1314 = vmatpush1.bf16.xpose.msra.mxu0 0
        %1315 = vmatprep.subr.bf16.mxu0 0
        %1316 = vmatpush1.bf16.xpose.msra.mxu0 0
        %1317 = vmatprep.subr.bf16.mxu0 0
        %1318 = vmatpush1.bf16.xpose.msra.mxu0 0
        %1319 = vmatprep.subr.bf16.mxu0 0
        %1320 = vmatpush1.bf16.xpose.msra.mxu0 0
        %1321 = vmatprep.subr.bf16.mxu0 0
        %1322 = vmatpush1.bf16.xpose.msra.mxu0 0
        %1323 = vmatprep.subr.bf16.mxu0 0
        %1324 = vmatpush1.bf16.xpose.msra.mxu0 0
        %1325 = vmatprep.subr.bf16.mxu0 0
        %1326 = vmatpush1.bf16.xpose.msra.mxu0 %v1309
        %1327 = vmatprep.subr.bf16.mxu0 0
        %1328 = vmatpush2.bf16.xpose.msra.mxu0 0
        %1329 = vmatprep.subr.bf16.mxu0 0
        %1330 = vmatpush2.bf16.xpose.msra.mxu0 0
        %1331 = vmatprep.subr.bf16.mxu0 0
        %1332 = vmatpush2.bf16.xpose.msra.mxu0 0
        %1333 = vmatprep.subr.bf16.mxu0 0
        %1334 = vmatpush2.bf16.xpose.msra.mxu0 0
        %1335 = vmatprep.subr.bf16.mxu0 0
        %1336 = vmatpush2.bf16.xpose.msra.mxu0 0
        %1337 = vmatprep.subr.bf16.mxu0 0
        %1338 = vmatpush2.bf16.xpose.msra.mxu0 0
        %1339 = vmatprep.subr.bf16.mxu0 0
        %1340 = vmatpush2.bf16.xpose.msra.mxu0 0
        %1341 = vmatprep.subr.bf16.mxu0 0
        %1342 = vmatpush2.bf16.xpose.msra.mxu0 0
        %1343 = vmatprep.mubr.bf16.mxu0 0
        %1344 = vmatmul.mubr.bf16.gmra.mxu0 %v1306
        %v1345 = vpop.f32.mrf.mxu0
        %v1346 = vadd.f32 %v1302, %v1345
        %v1347 = vpop.f32.mrf.mxu0
        %v1348 = vpop.f32.mrf.mxu0
        %v1349 = vpop.f32.mrf.mxu0
        %1350 = vdwg.mxu0
        %v1351 = vsel %vm1304, %v1346, -inf
        %1352 = vmax.xlane.f32.xlu0 %v1351
        %v1353 = vpop.xlane.xlu0 %1352
        %v1354 = vsub.f32 %v1346, %v1353
        %v1355 = vmul.f32 %v1354, 1.442695
        %v1356 = vpow.pop %v1355
        %v1357 = vsel %vm1304, %v1356, 0.0
        %1358 = vadd.xlane.f32.xlu0 %v1357
        %v1359 = vpop.xlane.xlu0 %1358
        %v1360 = vpack.c.bf16 %v1356, %v1356
        %v1361 = vld [vmem:[#allocation3] sm:$0xf]
        %v1363 = vsel %vm1304, %v1360, 0
        %vm1365 = vcmask 1043456
        %v1367 = vsel %vm1365, %v1361, 0
        %1369 = vmatprep.subr.bf16.mxu0 0
        %1370 = vmatpush1.bf16.msra.mxu0 0
        %1371 = vmatprep.subr.bf16.mxu0 0
        %1372 = vmatpush1.bf16.msra.mxu0 0
        %1373 = vmatprep.subr.bf16.mxu0 0
        %1374 = vmatpush1.bf16.msra.mxu0 0
        %1375 = vmatprep.subr.bf16.mxu0 0
        %1376 = vmatpush1.bf16.msra.mxu0 0
        %1377 = vmatprep.subr.bf16.mxu0 0
        %1378 = vmatpush1.bf16.msra.mxu0 0
        %1379 = vmatprep.subr.bf16.mxu0 0
        %1380 = vmatpush1.bf16.msra.mxu0 0
        %1381 = vmatprep.subr.bf16.mxu0 0
        %1382 = vmatpush1.bf16.msra.mxu0 0
        %1383 = vmatprep.subr.bf16.mxu0 0
        %1384 = vmatpush1.bf16.msra.mxu0 %v1367
        %1385 = vmatprep.subr.bf16.mxu0 0
        %1386 = vmatpush2.bf16.msra.mxu0 0
        %1387 = vmatprep.subr.bf16.mxu0 0
        %1388 = vmatpush2.bf16.msra.mxu0 0
        %1389 = vmatprep.subr.bf16.mxu0 0
        %1390 = vmatpush2.bf16.msra.mxu0 0
        %1391 = vmatprep.subr.bf16.mxu0 0
        %1392 = vmatpush2.bf16.msra.mxu0 0
        %1393 = vmatprep.subr.bf16.mxu0 0
        %1394 = vmatpush2.bf16.msra.mxu0 0
        %1395 = vmatprep.subr.bf16.mxu0 0
        %1396 = vmatpush2.bf16.msra.mxu0 0
        %1397 = vmatprep.subr.bf16.mxu0 0
        %1398 = vmatpush2.bf16.msra.mxu0 0
        %1399 = vmatprep.subr.bf16.mxu0 0
        %1400 = vmatpush2.bf16.msra.mxu0 0
        %1401 = vmatprep.mubr.bf16.mxu0 0
        %1402 = vmatmul.mubr.bf16.gmra.mxu0 %v1363
        %v1403 = vpop.f32.mrf.mxu0
        %v1404 = vadd.f32 0.0, %v1403
        %v1405 = vpop.f32.mrf.mxu0
        %v1406 = vpop.f32.mrf.mxu0
        %v1407 = vpop.f32.mrf.mxu0
        %1408 = vdwg.mxu0
        %v1409 = vrcp.pop %v1359
        %v1410 = vmul.f32 %v1404, %v1409
        %v1411 = vpack.c.bf16 %v1410, %v1410
        %v1412 = vld [vmem:[%s8] sm:$0xf]
        %s1413 = scalar_lea.vmem %s2, 16
        %v1414 = vld [vmem:[%s1413] sm:$0xf]
        %v1415 = vld [vmem:[%s1413 + $0x4] sm:$0xf]
        %v1416 = vld [vmem:[%s1413 + $0x8] sm:$0xf]
        %v1417 = vld [vmem:[%s1413 + $0xc] sm:$0xf]
        %s1418 = scalar_lea.vmem %s3, 1
        %v1419 = vld [vmem:[%s1418] sm:$0x1]
        %v1421 = vlaneseq
        %v1422 = vshrl.u32 %v1421, 7
        %v1423 = vsub.s32 0, %v1422
        %v1424 = vrot.slane %v1419, %v1423
        %v1430 = vunpack.c.l.b16 %v1414
        %v1431 = vunpack.c.l.b16 %v1415
        %v1432 = vunpack.c.l.b16 %v1416
        %v1433 = vunpack.c.l.b16 %v1417
        %v1434 = vpack.c.b16 %v1431, %v1430
        %v1435 = vpack.c.b16 %v1433, %v1432
        %1438 = vmatprep.subr.bf16.mxu0 0
        %1439 = vmatpush1.bf16.msra.mxu0 0
        %1440 = vmatprep.subr.bf16.mxu0 0
        %1441 = vmatpush1.bf16.msra.mxu0 0
        %1442 = vmatprep.subr.bf16.mxu0 0
        %1443 = vmatpush1.bf16.msra.mxu0 0
        %1444 = vmatprep.subr.bf16.mxu0 0
        %1445 = vmatpush1.bf16.msra.mxu0 0
        %1446 = vmatprep.subr.bf16.mxu0 0
        %1447 = vmatpush1.bf16.msra.mxu0 0
        %1448 = vmatprep.subr.bf16.mxu0 0
        %1449 = vmatpush1.bf16.msra.mxu0 0
        %1450 = vmatprep.subr.bf16.mxu0 0
        %1451 = vmatpush1.bf16.msra.mxu0 %v1435
        %1452 = vmatprep.subr.bf16.mxu0 0
        %1453 = vmatpush1.bf16.msra.mxu0 %v1434
        %1454 = vmatprep.subr.bf16.mxu0 0
        %1455 = vmatpush2.bf16.msra.mxu0 0
        %1456 = vmatprep.subr.bf16.mxu0 0
        %1457 = vmatpush2.bf16.msra.mxu0 0
        %1458 = vmatprep.subr.bf16.mxu0 0
        %1459 = vmatpush2.bf16.msra.mxu0 0
        %1460 = vmatprep.subr.bf16.mxu0 0
        %1461 = vmatpush2.bf16.msra.mxu0 0
        %1462 = vmatprep.subr.bf16.mxu0 0
        %1463 = vmatpush2.bf16.msra.mxu0 0
        %1464 = vmatprep.subr.bf16.mxu0 0
        %1465 = vmatpush2.bf16.msra.mxu0 0
        %1466 = vmatprep.subr.bf16.mxu0 0
        %1467 = vmatpush2.bf16.msra.mxu0 0
        %1468 = vmatprep.subr.bf16.mxu0 0
        %1469 = vmatpush2.bf16.msra.mxu0 0
        %1470 = vmatprep.mubr.bf16.mxu0 0
        %1471 = vmatmul.mubr.bf16.gmra.mxu0 %v1253
        %v1472 = vpop.f32.mrf.mxu0
        %v1473 = vadd.f32 %v1424, %v1472
        %v1474 = vpop.f32.mrf.mxu0
        %v1475 = vpop.f32.mrf.mxu0
        %v1476 = vpop.f32.mrf.mxu0
        %1477 = vdwg.mxu0
        %v1478 = vmul.f32 %v1473, 0.35355338
        %v1479 = vpack.c.bf16 %v1478, %v1478
        %s1480 = scalar_lea.vmem [#allocation2], 4
        %v1481 = vld [vmem:[%s1480] sm:$0xf]
        %v1483 = vsel %vm1304, %v1479, 0
        %v1486 = vsel %vm1304, %v1481, 0
        %1488 = vmatprep.subr.bf16.mxu0 0
        %1489 = vmatpush1.bf16.xpose.msra.mxu0 0
        %1490 = vmatprep.subr.bf16.mxu0 0
        %1491 = vmatpush1.bf16.xpose.msra.mxu0 0
        %1492 = vmatprep.subr.bf16.mxu0 0
        %1493 = vmatpush1.bf16.xpose.msra.mxu0 0
        %1494 = vmatprep.subr.bf16.mxu0 0
        %1495 = vmatpush1.bf16.xpose.msra.mxu0 0
        %1496 = vmatprep.subr.bf16.mxu0 0
        %1497 = vmatpush1.bf16.xpose.msra.mxu0 0
        %1498 = vmatprep.subr.bf16.mxu0 0
        %1499 = vmatpush1.bf16.xpose.msra.mxu0 0
        %1500 = vmatprep.subr.bf16.mxu0 0
        %1501 = vmatpush1.bf16.xpose.msra.mxu0 0
        %1502 = vmatprep.subr.bf16.mxu0 0
        %1503 = vmatpush1.bf16.xpose.msra.mxu0 %v1486
        %1504 = vmatprep.subr.bf16.mxu0 0
        %1505 = vmatpush2.bf16.xpose.msra.mxu0 0
        %1506 = vmatprep.subr.bf16.mxu0 0
        %1507 = vmatpush2.bf16.xpose.msra.mxu0 0
        %1508 = vmatprep.subr.bf16.mxu0 0
        %1509 = vmatpush2.bf16.xpose.msra.mxu0 0
        %1510 = vmatprep.subr.bf16.mxu0 0
        %1511 = vmatpush2.bf16.xpose.msra.mxu0 0
        %1512 = vmatprep.subr.bf16.mxu0 0
        %1513 = vmatpush2.bf16.xpose.msra.mxu0 0
        %1514 = vmatprep.subr.bf16.mxu0 0
        %1515 = vmatpush2.bf16.xpose.msra.mxu0 0
        %1516 = vmatprep.subr.bf16.mxu0 0
        %1517 = vmatpush2.bf16.xpose.msra.mxu0 0
        %1518 = vmatprep.subr.bf16.mxu0 0
        %1519 = vmatpush2.bf16.xpose.msra.mxu0 0
        %1520 = vmatprep.mubr.bf16.mxu0 0
        %1521 = vmatmul.mubr.bf16.gmra.mxu0 %v1483
        %v1522 = vpop.f32.mrf.mxu0
        %v1523 = vadd.f32 %v1302, %v1522
        %v1524 = vpop.f32.mrf.mxu0
        %v1525 = vpop.f32.mrf.mxu0
        %v1526 = vpop.f32.mrf.mxu0
        %1527 = vdwg.mxu0
        %v1528 = vsel %vm1304, %v1523, -inf
        %1529 = vmax.xlane.f32.xlu0 %v1528
        %v1530 = vpop.xlane.xlu0 %1529
        %v1531 = vsub.f32 %v1523, %v1530
        %v1532 = vmul.f32 %v1531, 1.442695
        %v1533 = vpow.pop %v1532
        %v1534 = vsel %vm1304, %v1533, 0.0
        %1535 = vadd.xlane.f32.xlu0 %v1534
        %v1536 = vpop.xlane.xlu0 %1535
        %v1537 = vpack.c.bf16 %v1533, %v1533
        %s1538 = scalar_lea.vmem [#allocation3], 4
        %v1539 = vld [vmem:[%s1538] sm:$0xf]
        %v1541 = vsel %vm1304, %v1537, 0
        %v1544 = vsel %vm1365, %v1539, 0
        %1546 = vmatprep.subr.bf16.mxu0 0
        %1547 = vmatpush1.bf16.msra.mxu0 0
        %1548 = vmatprep.subr.bf16.mxu0 0
        %1549 = vmatpush1.bf16.msra.mxu0 0
        %1550 = vmatprep.subr.bf16.mxu0 0
        %1551 = vmatpush1.bf16.msra.mxu0 0
        %1552 = vmatprep.subr.bf16.mxu0 0
        %1553 = vmatpush1.bf16.msra.mxu0 0
        %1554 = vmatprep.subr.bf16.mxu0 0
        %1555 = vmatpush1.bf16.msra.mxu0 0
        %1556 = vmatprep.subr.bf16.mxu0 0
        %1557 = vmatpush1.bf16.msra.mxu0 0
        %1558 = vmatprep.subr.bf16.mxu0 0
        %1559 = vmatpush1.bf16.msra.mxu0 0
        %1560 = vmatprep.subr.bf16.mxu0 0
        %1561 = vmatpush1.bf16.msra.mxu0 %v1544
        %1562 = vmatprep.subr.bf16.mxu0 0
        %1563 = vmatpush2.bf16.msra.mxu0 0
        %1564 = vmatprep.subr.bf16.mxu0 0
        %1565 = vmatpush2.bf16.msra.mxu0 0
        %1566 = vmatprep.subr.bf16.mxu0 0
        %1567 = vmatpush2.bf16.msra.mxu0 0
        %1568 = vmatprep.subr.bf16.mxu0 0
        %1569 = vmatpush2.bf16.msra.mxu0 0
        %1570 = vmatprep.subr.bf16.mxu0 0
        %1571 = vmatpush2.bf16.msra.mxu0 0
        %1572 = vmatprep.subr.bf16.mxu0 0
        %1573 = vmatpush2.bf16.msra.mxu0 0
        %1574 = vmatprep.subr.bf16.mxu0 0
        %1575 = vmatpush2.bf16.msra.mxu0 0
        %1576 = vmatprep.subr.bf16.mxu0 0
        %1577 = vmatpush2.bf16.msra.mxu0 0
        %1578 = vmatprep.mubr.bf16.mxu0 0
        %1579 = vmatmul.mubr.bf16.gmra.mxu0 %v1541
        %v1580 = vpop.f32.mrf.mxu0
        %v1581 = vadd.f32 0.0, %v1580
        %v1582 = vpop.f32.mrf.mxu0
        %v1583 = vpop.f32.mrf.mxu0
        %v1584 = vpop.f32.mrf.mxu0
        %1585 = vdwg.mxu0
        %v1586 = vrcp.pop %v1536
        %v1587 = vmul.f32 %v1581, %v1586
        %v1588 = vpack.c.bf16 %v1587, %v1587
        %s1589 = scalar_lea.vmem %s8, 4
        %v1590 = vld [vmem:[%s1589] sm:$0xf]
        %v1592 = vsel %vm1304, %v1588, 0
        %v1595 = vsel %vm1365, %v1590, 0
        %1597 = vmatprep.subr.bf16.mxu0 0
        %1598 = vmatpush1.bf16.msra.mxu0 0
        %1599 = vmatprep.subr.bf16.mxu0 0
        %1600 = vmatpush1.bf16.msra.mxu0 0
        %1601 = vmatprep.subr.bf16.mxu0 0
        %1602 = vmatpush1.bf16.msra.mxu0 0
        %1603 = vmatprep.subr.bf16.mxu0 0
        %1604 = vmatpush1.bf16.msra.mxu0 0
        %1605 = vmatprep.subr.bf16.mxu0 0
        %1606 = vmatpush1.bf16.msra.mxu0 0
        %1607 = vmatprep.subr.bf16.mxu0 0
        %1608 = vmatpush1.bf16.msra.mxu0 0
        %1609 = vmatprep.subr.bf16.mxu0 0
        %1610 = vmatpush1.bf16.msra.mxu0 0
        %1611 = vmatprep.subr.bf16.mxu0 0
        %1612 = vmatpush1.bf16.msra.mxu0 %v1595
        %1613 = vmatprep.subr.bf16.mxu0 0
        %1614 = vmatpush2.bf16.msra.mxu0 0
        %1615 = vmatprep.subr.bf16.mxu0 0
        %1616 = vmatpush2.bf16.msra.mxu0 0
        %1617 = vmatprep.subr.bf16.mxu0 0
        %1618 = vmatpush2.bf16.msra.mxu0 0
        %1619 = vmatprep.subr.bf16.mxu0 0
        %1620 = vmatpush2.bf16.msra.mxu0 0
        %1621 = vmatprep.subr.bf16.mxu0 0
        %1622 = vmatpush2.bf16.msra.mxu0 0
        %1623 = vmatprep.subr.bf16.mxu0 0
        %1624 = vmatpush2.bf16.msra.mxu0 0
        %1625 = vmatprep.subr.bf16.mxu0 0
        %1626 = vmatpush2.bf16.msra.mxu0 0
        %1627 = vmatprep.subr.bf16.mxu0 0
        %1628 = vmatpush2.bf16.msra.mxu0 0
        %1629 = vmatprep.mubr.bf16.mxu0 0
        %1630 = vmatmul.mubr.bf16.gmra.mxu0 %v1592
        %v1631 = vpop.f32.mrf.mxu0
        %v1632 = vadd.f32 0.0, %v1631
        %v1633 = vpop.f32.mrf.mxu0
        %v1634 = vpop.f32.mrf.mxu0
        %v1635 = vpop.f32.mrf.mxu0
        %1636 = vdwg.mxu0
        %v1638 = vsel %vm1304, %v1411, 0
        %v1641 = vsel %vm1365, %v1412, 0
        %1643 = vmatprep.subr.bf16.mxu0 0
        %1644 = vmatpush1.bf16.msra.mxu0 0
        %1645 = vmatprep.subr.bf16.mxu0 0
        %1646 = vmatpush1.bf16.msra.mxu0 0
        %1647 = vmatprep.subr.bf16.mxu0 0
        %1648 = vmatpush1.bf16.msra.mxu0 0
        %1649 = vmatprep.subr.bf16.mxu0 0
        %1650 = vmatpush1.bf16.msra.mxu0 0
        %1651 = vmatprep.subr.bf16.mxu0 0
        %1652 = vmatpush1.bf16.msra.mxu0 0
        %1653 = vmatprep.subr.bf16.mxu0 0
        %1654 = vmatpush1.bf16.msra.mxu0 0
        %1655 = vmatprep.subr.bf16.mxu0 0
        %1656 = vmatpush1.bf16.msra.mxu0 0
        %1657 = vmatprep.subr.bf16.mxu0 0
        %1658 = vmatpush1.bf16.msra.mxu0 %v1641
        %1659 = vmatprep.subr.bf16.mxu0 0
        %1660 = vmatpush2.bf16.msra.mxu0 0
        %1661 = vmatprep.subr.bf16.mxu0 0
        %1662 = vmatpush2.bf16.msra.mxu0 0
        %1663 = vmatprep.subr.bf16.mxu0 0
        %1664 = vmatpush2.bf16.msra.mxu0 0
        %1665 = vmatprep.subr.bf16.mxu0 0
        %1666 = vmatpush2.bf16.msra.mxu0 0
        %1667 = vmatprep.subr.bf16.mxu0 0
        %1668 = vmatpush2.bf16.msra.mxu0 0
        %1669 = vmatprep.subr.bf16.mxu0 0
        %1670 = vmatpush2.bf16.msra.mxu0 0
        %1671 = vmatprep.subr.bf16.mxu0 0
        %1672 = vmatpush2.bf16.msra.mxu0 0
        %1673 = vmatprep.subr.bf16.mxu0 0
        %1674 = vmatpush2.bf16.msra.mxu0 0
        %1675 = vmatprep.mubr.bf16.mxu0 0
        %1676 = vmatmul.mubr.bf16.gmra.mxu0 %v1638
        %v1677 = vpop.f32.mrf.mxu0
        %v1678 = vadd.f32 %v1632, %v1677
        %v1679 = vpop.f32.mrf.mxu0
        %v1680 = vpop.f32.mrf.mxu0
        %v1681 = vpop.f32.mrf.mxu0
        %1682 = vdwg.mxu0
        %s1683 = scalar_lea.vmem %s2, 32
        %v1684 = vld [vmem:[%s1683] sm:$0xf]
        %v1685 = vld [vmem:[%s1683 + $0x4] sm:$0xf]
        %v1686 = vld [vmem:[%s1683 + $0x8] sm:$0xf]
        %v1687 = vld [vmem:[%s1683 + $0xc] sm:$0xf]
        %s1688 = scalar_lea.vmem %s3, 2
        %v1689 = vld [vmem:[%s1688] sm:$0x1]
        %v1691 = vlaneseq
        %v1692 = vshrl.u32 %v1691, 7
        %v1693 = vsub.s32 0, %v1692
        %v1694 = vrot.slane %v1689, %v1693
        %v1700 = vunpack.c.l.b16 %v1684
        %v1701 = vunpack.c.l.b16 %v1685
        %v1702 = vunpack.c.l.b16 %v1686
        %v1703 = vunpack.c.l.b16 %v1687
        %v1704 = vpack.c.b16 %v1701, %v1700
        %v1705 = vpack.c.b16 %v1703, %v1702
        %1708 = vmatprep.subr.bf16.mxu0 0
        %1709 = vmatpush1.bf16.msra.mxu0 0
        %1710 = vmatprep.subr.bf16.mxu0 0
        %1711 = vmatpush1.bf16.msra.mxu0 0
        %1712 = vmatprep.subr.bf16.mxu0 0
        %1713 = vmatpush1.bf16.msra.mxu0 0
        %1714 = vmatprep.subr.bf16.mxu0 0
        %1715 = vmatpush1.bf16.msra.mxu0 0
        %1716 = vmatprep.subr.bf16.mxu0 0
        %1717 = vmatpush1.bf16.msra.mxu0 0
        %1718 = vmatprep.subr.bf16.mxu0 0
        %1719 = vmatpush1.bf16.msra.mxu0 0
        %1720 = vmatprep.subr.bf16.mxu0 0
        %1721 = vmatpush1.bf16.msra.mxu0 %v1705
        %1722 = vmatprep.subr.bf16.mxu0 0
        %1723 = vmatpush1.bf16.msra.mxu0 %v1704
        %1724 = vmatprep.subr.bf16.mxu0 0
        %1725 = vmatpush2.bf16.msra.mxu0 0
        %1726 = vmatprep.subr.bf16.mxu0 0
        %1727 = vmatpush2.bf16.msra.mxu0 0
        %1728 = vmatprep.subr.bf16.mxu0 0
        %1729 = vmatpush2.bf16.msra.mxu0 0
        %1730 = vmatprep.subr.bf16.mxu0 0
        %1731 = vmatpush2.bf16.msra.mxu0 0
        %1732 = vmatprep.subr.bf16.mxu0 0
        %1733 = vmatpush2.bf16.msra.mxu0 0
        %1734 = vmatprep.subr.bf16.mxu0 0
        %1735 = vmatpush2.bf16.msra.mxu0 0
        %1736 = vmatprep.subr.bf16.mxu0 0
        %1737 = vmatpush2.bf16.msra.mxu0 0
        %1738 = vmatprep.subr.bf16.mxu0 0
        %1739 = vmatpush2.bf16.msra.mxu0 0
        %1740 = vmatprep.mubr.bf16.mxu0 0
        %1741 = vmatmul.mubr.bf16.gmra.mxu0 %v1253
        %v1742 = vpop.f32.mrf.mxu0
        %v1743 = vadd.f32 %v1694, %v1742
        %v1744 = vpop.f32.mrf.mxu0
        %v1745 = vpop.f32.mrf.mxu0
        %v1746 = vpop.f32.mrf.mxu0
        %1747 = vdwg.mxu0
        %v1748 = vmul.f32 %v1743, 0.35355338
        %v1749 = vpack.c.bf16 %v1748, %v1748
        %s1750 = scalar_lea.vmem [#allocation2], 8
        %v1751 = vld [vmem:[%s1750] sm:$0xf]
        %v1753 = vsel %vm1304, %v1749, 0
        %v1756 = vsel %vm1304, %v1751, 0
        %1758 = vmatprep.subr.bf16.mxu0 0
        %1759 = vmatpush1.bf16.xpose.msra.mxu0 0
        %1760 = vmatprep.subr.bf16.mxu0 0
        %1761 = vmatpush1.bf16.xpose.msra.mxu0 0
        %1762 = vmatprep.subr.bf16.mxu0 0
        %1763 = vmatpush1.bf16.xpose.msra.mxu0 0
        %1764 = vmatprep.subr.bf16.mxu0 0
        %1765 = vmatpush1.bf16.xpose.msra.mxu0 0
        %1766 = vmatprep.subr.bf16.mxu0 0
        %1767 = vmatpush1.bf16.xpose.msra.mxu0 0
        %1768 = vmatprep.subr.bf16.mxu0 0
        %1769 = vmatpush1.bf16.xpose.msra.mxu0 0
        %1770 = vmatprep.subr.bf16.mxu0 0
        %1771 = vmatpush1.bf16.xpose.msra.mxu0 0
        %1772 = vmatprep.subr.bf16.mxu0 0
        %1773 = vmatpush1.bf16.xpose.msra.mxu0 %v1756
        %1774 = vmatprep.subr.bf16.mxu0 0
        %1775 = vmatpush2.bf16.xpose.msra.mxu0 0
        %1776 = vmatprep.subr.bf16.mxu0 0
        %1777 = vmatpush2.bf16.xpose.msra.mxu0 0
        %1778 = vmatprep.subr.bf16.mxu0 0
        %1779 = vmatpush2.bf16.xpose.msra.mxu0 0
        %1780 = vmatprep.subr.bf16.mxu0 0
        %1781 = vmatpush2.bf16.xpose.msra.mxu0 0
        %1782 = vmatprep.subr.bf16.mxu0 0
        %1783 = vmatpush2.bf16.xpose.msra.mxu0 0
        %1784 = vmatprep.subr.bf16.mxu0 0
        %1785 = vmatpush2.bf16.xpose.msra.mxu0 0
        %1786 = vmatprep.subr.bf16.mxu0 0
        %1787 = vmatpush2.bf16.xpose.msra.mxu0 0
        %1788 = vmatprep.subr.bf16.mxu0 0
        %1789 = vmatpush2.bf16.xpose.msra.mxu0 0
        %1790 = vmatprep.mubr.bf16.mxu0 0
        %1791 = vmatmul.mubr.bf16.gmra.mxu0 %v1753
        %v1792 = vpop.f32.mrf.mxu0
        %v1793 = vadd.f32 %v1302, %v1792
        %v1794 = vpop.f32.mrf.mxu0
        %v1795 = vpop.f32.mrf.mxu0
        %v1796 = vpop.f32.mrf.mxu0
        %1797 = vdwg.mxu0
        %v1798 = vsel %vm1304, %v1793, -inf
        %1799 = vmax.xlane.f32.xlu0 %v1798
        %v1800 = vpop.xlane.xlu0 %1799
        %v1801 = vsub.f32 %v1793, %v1800
        %v1802 = vmul.f32 %v1801, 1.442695
        %v1803 = vpow.pop %v1802
        %v1804 = vsel %vm1304, %v1803, 0.0
        %1805 = vadd.xlane.f32.xlu0 %v1804
        %v1806 = vpop.xlane.xlu0 %1805
        %v1807 = vpack.c.bf16 %v1803, %v1803
        %s1808 = scalar_lea.vmem [#allocation3], 8
        %v1809 = vld [vmem:[%s1808] sm:$0xf]
        %v1811 = vsel %vm1304, %v1807, 0
        %v1814 = vsel %vm1365, %v1809, 0
        %1816 = vmatprep.subr.bf16.mxu0 0
        %1817 = vmatpush1.bf16.msra.mxu0 0
        %1818 = vmatprep.subr.bf16.mxu0 0
        %1819 = vmatpush1.bf16.msra.mxu0 0
        %1820 = vmatprep.subr.bf16.mxu0 0
        %1821 = vmatpush1.bf16.msra.mxu0 0
        %1822 = vmatprep.subr.bf16.mxu0 0
        %1823 = vmatpush1.bf16.msra.mxu0 0
        %1824 = vmatprep.subr.bf16.mxu0 0
        %1825 = vmatpush1.bf16.msra.mxu0 0
        %1826 = vmatprep.subr.bf16.mxu0 0
        %1827 = vmatpush1.bf16.msra.mxu0 0
        %1828 = vmatprep.subr.bf16.mxu0 0
        %1829 = vmatpush1.bf16.msra.mxu0 0
        %1830 = vmatprep.subr.bf16.mxu0 0
        %1831 = vmatpush1.bf16.msra.mxu0 %v1814
        %1832 = vmatprep.subr.bf16.mxu0 0
        %1833 = vmatpush2.bf16.msra.mxu0 0
        %1834 = vmatprep.subr.bf16.mxu0 0
        %1835 = vmatpush2.bf16.msra.mxu0 0
        %1836 = vmatprep.subr.bf16.mxu0 0
        %1837 = vmatpush2.bf16.msra.mxu0 0
        %1838 = vmatprep.subr.bf16.mxu0 0
        %1839 = vmatpush2.bf16.msra.mxu0 0
        %1840 = vmatprep.subr.bf16.mxu0 0
        %1841 = vmatpush2.bf16.msra.mxu0 0
        %1842 = vmatprep.subr.bf16.mxu0 0
        %1843 = vmatpush2.bf16.msra.mxu0 0
        %1844 = vmatprep.subr.bf16.mxu0 0
        %1845 = vmatpush2.bf16.msra.mxu0 0
        %1846 = vmatprep.subr.bf16.mxu0 0
        %1847 = vmatpush2.bf16.msra.mxu0 0
        %1848 = vmatprep.mubr.bf16.mxu0 0
        %1849 = vmatmul.mubr.bf16.gmra.mxu0 %v1811
        %v1850 = vpop.f32.mrf.mxu0
        %v1851 = vadd.f32 0.0, %v1850
        %v1852 = vpop.f32.mrf.mxu0
        %v1853 = vpop.f32.mrf.mxu0
        %v1854 = vpop.f32.mrf.mxu0
        %1855 = vdwg.mxu0
        %v1856 = vrcp.pop %v1806
        %v1857 = vmul.f32 %v1851, %v1856
        %v1858 = vpack.c.bf16 %v1857, %v1857
        %s1859 = scalar_lea.vmem %s8, 8
        %v1860 = vld [vmem:[%s1859] sm:$0xf]
        %v1862 = vsel %vm1304, %v1858, 0
        %v1865 = vsel %vm1365, %v1860, 0
        %1867 = vmatprep.subr.bf16.mxu0 0
        %1868 = vmatpush1.bf16.msra.mxu0 0
        %1869 = vmatprep.subr.bf16.mxu0 0
        %1870 = vmatpush1.bf16.msra.mxu0 0
        %1871 = vmatprep.subr.bf16.mxu0 0
        %1872 = vmatpush1.bf16.msra.mxu0 0
        %1873 = vmatprep.subr.bf16.mxu0 0
        %1874 = vmatpush1.bf16.msra.mxu0 0
        %1875 = vmatprep.subr.bf16.mxu0 0
        %1876 = vmatpush1.bf16.msra.mxu0 0
        %1877 = vmatprep.subr.bf16.mxu0 0
        %1878 = vmatpush1.bf16.msra.mxu0 0
        %1879 = vmatprep.subr.bf16.mxu0 0
        %1880 = vmatpush1.bf16.msra.mxu0 0
        %1881 = vmatprep.subr.bf16.mxu0 0
        %1882 = vmatpush1.bf16.msra.mxu0 %v1865
        %1883 = vmatprep.subr.bf16.mxu0 0
        %1884 = vmatpush2.bf16.msra.mxu0 0
        %1885 = vmatprep.subr.bf16.mxu0 0
        %1886 = vmatpush2.bf16.msra.mxu0 0
        %1887 = vmatprep.subr.bf16.mxu0 0
        %1888 = vmatpush2.bf16.msra.mxu0 0
        %1889 = vmatprep.subr.bf16.mxu0 0
        %1890 = vmatpush2.bf16.msra.mxu0 0
        %1891 = vmatprep.subr.bf16.mxu0 0
        %1892 = vmatpush2.bf16.msra.mxu0 0
        %1893 = vmatprep.subr.bf16.mxu0 0
        %1894 = vmatpush2.bf16.msra.mxu0 0
        %1895 = vmatprep.subr.bf16.mxu0 0
        %1896 = vmatpush2.bf16.msra.mxu0 0
        %1897 = vmatprep.subr.bf16.mxu0 0
        %1898 = vmatpush2.bf16.msra.mxu0 0
        %1899 = vmatprep.mubr.bf16.mxu0 0
        %1900 = vmatmul.mubr.bf16.gmra.mxu0 %v1862
        %v1901 = vpop.f32.mrf.mxu0
        %v1902 = vadd.f32 0.0, %v1901
        %v1903 = vpop.f32.mrf.mxu0
        %v1904 = vpop.f32.mrf.mxu0
        %v1905 = vpop.f32.mrf.mxu0
        %1906 = vdwg.mxu0
        %v1907 = vadd.f32 %v1678, %v1902
        %s1908 = scalar_lea.vmem %s2, 48
        %v1909 = vld [vmem:[%s1908] sm:$0xf]
        %v1910 = vld [vmem:[%s1908 + $0x4] sm:$0xf]
        %v1911 = vld [vmem:[%s1908 + $0x8] sm:$0xf]
        %v1912 = vld [vmem:[%s1908 + $0xc] sm:$0xf]
        %s1913 = scalar_lea.vmem %s3, 3
        %v1914 = vld [vmem:[%s1913] sm:$0x1]
        %v1916 = vlaneseq
        %v1917 = vshrl.u32 %v1916, 7
        %v1918 = vsub.s32 0, %v1917
        %v1919 = vrot.slane %v1914, %v1918
        %v1925 = vunpack.c.l.b16 %v1909
        %v1926 = vunpack.c.l.b16 %v1910
        %v1927 = vunpack.c.l.b16 %v1911
        %v1928 = vunpack.c.l.b16 %v1912
        %v1929 = vpack.c.b16 %v1926, %v1925
        %v1930 = vpack.c.b16 %v1928, %v1927
        %1933 = vmatprep.subr.bf16.mxu0 0
        %1934 = vmatpush1.bf16.msra.mxu0 0
        %1935 = vmatprep.subr.bf16.mxu0 0
        %1936 = vmatpush1.bf16.msra.mxu0 0
        %1937 = vmatprep.subr.bf16.mxu0 0
        %1938 = vmatpush1.bf16.msra.mxu0 0
        %1939 = vmatprep.subr.bf16.mxu0 0
        %1940 = vmatpush1.bf16.msra.mxu0 0
        %1941 = vmatprep.subr.bf16.mxu0 0
        %1942 = vmatpush1.bf16.msra.mxu0 0
        %1943 = vmatprep.subr.bf16.mxu0 0
        %1944 = vmatpush1.bf16.msra.mxu0 0
        %1945 = vmatprep.subr.bf16.mxu0 0
        %1946 = vmatpush1.bf16.msra.mxu0 %v1930
        %1947 = vmatprep.subr.bf16.mxu0 0
        %1948 = vmatpush1.bf16.msra.mxu0 %v1929
        %1949 = vmatprep.subr.bf16.mxu0 0
        %1950 = vmatpush2.bf16.msra.mxu0 0
        %1951 = vmatprep.subr.bf16.mxu0 0
        %1952 = vmatpush2.bf16.msra.mxu0 0
        %1953 = vmatprep.subr.bf16.mxu0 0
        %1954 = vmatpush2.bf16.msra.mxu0 0
        %1955 = vmatprep.subr.bf16.mxu0 0
        %1956 = vmatpush2.bf16.msra.mxu0 0
        %1957 = vmatprep.subr.bf16.mxu0 0
        %1958 = vmatpush2.bf16.msra.mxu0 0
        %1959 = vmatprep.subr.bf16.mxu0 0
        %1960 = vmatpush2.bf16.msra.mxu0 0
        %1961 = vmatprep.subr.bf16.mxu0 0
        %1962 = vmatpush2.bf16.msra.mxu0 0
        %1963 = vmatprep.subr.bf16.mxu0 0
        %1964 = vmatpush2.bf16.msra.mxu0 0
        %1965 = vmatprep.mubr.bf16.mxu0 0
        %1966 = vmatmul.mubr.bf16.gmra.mxu0 %v1253
        %v1967 = vpop.f32.mrf.mxu0
        %v1968 = vadd.f32 %v1919, %v1967
        %v1969 = vpop.f32.mrf.mxu0
        %v1970 = vpop.f32.mrf.mxu0
        %v1971 = vpop.f32.mrf.mxu0
        %1972 = vdwg.mxu0
        %v1973 = vmul.f32 %v1968, 0.35355338
        %v1974 = vpack.c.bf16 %v1973, %v1973
        %s1975 = scalar_lea.vmem [#allocation2], 12
        %v1976 = vld [vmem:[%s1975] sm:$0xf]
        %v1978 = vsel %vm1304, %v1974, 0
        %v1981 = vsel %vm1304, %v1976, 0
        %1983 = vmatprep.subr.bf16.mxu0 0
        %1984 = vmatpush1.bf16.xpose.msra.mxu0 0
        %1985 = vmatprep.subr.bf16.mxu0 0
        %1986 = vmatpush1.bf16.xpose.msra.mxu0 0
        %1987 = vmatprep.subr.bf16.mxu0 0
        %1988 = vmatpush1.bf16.xpose.msra.mxu0 0
        %1989 = vmatprep.subr.bf16.mxu0 0
        %1990 = vmatpush1.bf16.xpose.msra.mxu0 0
        %1991 = vmatprep.subr.bf16.mxu0 0
        %1992 = vmatpush1.bf16.xpose.msra.mxu0 0
        %1993 = vmatprep.subr.bf16.mxu0 0
        %1994 = vmatpush1.bf16.xpose.msra.mxu0 0
        %1995 = vmatprep.subr.bf16.mxu0 0
        %1996 = vmatpush1.bf16.xpose.msra.mxu0 0
        %1997 = vmatprep.subr.bf16.mxu0 0
        %1998 = vmatpush1.bf16.xpose.msra.mxu0 %v1981
        %1999 = vmatprep.subr.bf16.mxu0 0
        %2000 = vmatpush2.bf16.xpose.msra.mxu0 0
        %2001 = vmatprep.subr.bf16.mxu0 0
        %2002 = vmatpush2.bf16.xpose.msra.mxu0 0
        %2003 = vmatprep.subr.bf16.mxu0 0
        %2004 = vmatpush2.bf16.xpose.msra.mxu0 0
        %2005 = vmatprep.subr.bf16.mxu0 0
        %2006 = vmatpush2.bf16.xpose.msra.mxu0 0
        %2007 = vmatprep.subr.bf16.mxu0 0
        %2008 = vmatpush2.bf16.xpose.msra.mxu0 0
        %2009 = vmatprep.subr.bf16.mxu0 0
        %2010 = vmatpush2.bf16.xpose.msra.mxu0 0
        %2011 = vmatprep.subr.bf16.mxu0 0
        %2012 = vmatpush2.bf16.xpose.msra.mxu0 0
        %2013 = vmatprep.subr.bf16.mxu0 0
        %2014 = vmatpush2.bf16.xpose.msra.mxu0 0
        %2015 = vmatprep.mubr.bf16.mxu0 0
        %2016 = vmatmul.mubr.bf16.gmra.mxu0 %v1978
        %v2017 = vpop.f32.mrf.mxu0
        %v2018 = vadd.f32 %v1302, %v2017
        %v2019 = vpop.f32.mrf.mxu0
        %v2020 = vpop.f32.mrf.mxu0
        %v2021 = vpop.f32.mrf.mxu0
        %2022 = vdwg.mxu0
        %v2023 = vsel %vm1304, %v2018, -inf
        %2024 = vmax.xlane.f32.xlu0 %v2023
        %v2025 = vpop.xlane.xlu0 %2024
        %v2026 = vsub.f32 %v2018, %v2025
        %v2027 = vmul.f32 %v2026, 1.442695
        %v2028 = vpow.pop %v2027
        %v2029 = vsel %vm1304, %v2028, 0.0
        %2030 = vadd.xlane.f32.xlu0 %v2029
        %v2031 = vpop.xlane.xlu0 %2030
        %v2032 = vpack.c.bf16 %v2028, %v2028
        %s2033 = scalar_lea.vmem [#allocation3], 12
        %v2034 = vld [vmem:[%s2033] sm:$0xf]
        %v2036 = vsel %vm1304, %v2032, 0
        %v2039 = vsel %vm1365, %v2034, 0
        %2041 = vmatprep.subr.bf16.mxu0 0
        %2042 = vmatpush1.bf16.msra.mxu0 0
        %2043 = vmatprep.subr.bf16.mxu0 0
        %2044 = vmatpush1.bf16.msra.mxu0 0
        %2045 = vmatprep.subr.bf16.mxu0 0
        %2046 = vmatpush1.bf16.msra.mxu0 0
        %2047 = vmatprep.subr.bf16.mxu0 0
        %2048 = vmatpush1.bf16.msra.mxu0 0
        %2049 = vmatprep.subr.bf16.mxu0 0
        %2050 = vmatpush1.bf16.msra.mxu0 0
        %2051 = vmatprep.subr.bf16.mxu0 0
        %2052 = vmatpush1.bf16.msra.mxu0 0
        %2053 = vmatprep.subr.bf16.mxu0 0
        %2054 = vmatpush1.bf16.msra.mxu0 0
        %2055 = vmatprep.subr.bf16.mxu0 0
        %2056 = vmatpush1.bf16.msra.mxu0 %v2039
        %2057 = vmatprep.subr.bf16.mxu0 0
        %2058 = vmatpush2.bf16.msra.mxu0 0
        %2059 = vmatprep.subr.bf16.mxu0 0
        %2060 = vmatpush2.bf16.msra.mxu0 0
        %2061 = vmatprep.subr.bf16.mxu0 0
        %2062 = vmatpush2.bf16.msra.mxu0 0
        %2063 = vmatprep.subr.bf16.mxu0 0
        %2064 = vmatpush2.bf16.msra.mxu0 0
        %2065 = vmatprep.subr.bf16.mxu0 0
        %2066 = vmatpush2.bf16.msra.mxu0 0
        %2067 = vmatprep.subr.bf16.mxu0 0
        %2068 = vmatpush2.bf16.msra.mxu0 0
        %2069 = vmatprep.subr.bf16.mxu0 0
        %2070 = vmatpush2.bf16.msra.mxu0 0
        %2071 = vmatprep.subr.bf16.mxu0 0
        %2072 = vmatpush2.bf16.msra.mxu0 0
        %2073 = vmatprep.mubr.bf16.mxu0 0
        %2074 = vmatmul.mubr.bf16.gmra.mxu0 %v2036
        %v2075 = vpop.f32.mrf.mxu0
        %v2076 = vadd.f32 0.0, %v2075
        %v2077 = vpop.f32.mrf.mxu0
        %v2078 = vpop.f32.mrf.mxu0
        %v2079 = vpop.f32.mrf.mxu0
        %2080 = vdwg.mxu0
        %v2081 = vrcp.pop %v2031
        %v2082 = vmul.f32 %v2076, %v2081
        %v2083 = vpack.c.bf16 %v2082, %v2082
        %s2084 = scalar_lea.vmem %s8, 12
        %v2085 = vld [vmem:[%s2084] sm:$0xf]
        %v2087 = vsel %vm1304, %v2083, 0
        %v2090 = vsel %vm1365, %v2085, 0
        %2092 = vmatprep.subr.bf16.mxu0 0
        %2093 = vmatpush1.bf16.msra.mxu0 0
        %2094 = vmatprep.subr.bf16.mxu0 0
        %2095 = vmatpush1.bf16.msra.mxu0 0
        %2096 = vmatprep.subr.bf16.mxu0 0
        %2097 = vmatpush1.bf16.msra.mxu0 0
        %2098 = vmatprep.subr.bf16.mxu0 0
        %2099 = vmatpush1.bf16.msra.mxu0 0
        %2100 = vmatprep.subr.bf16.mxu0 0
        %2101 = vmatpush1.bf16.msra.mxu0 0
        %2102 = vmatprep.subr.bf16.mxu0 0
        %2103 = vmatpush1.bf16.msra.mxu0 0
        %2104 = vmatprep.subr.bf16.mxu0 0
        %2105 = vmatpush1.bf16.msra.mxu0 0
        %2106 = vmatprep.subr.bf16.mxu0 0
        %2107 = vmatpush1.bf16.msra.mxu0 %v2090
        %2108 = vmatprep.subr.bf16.mxu0 0
        %2109 = vmatpush2.bf16.msra.mxu0 0
        %2110 = vmatprep.subr.bf16.mxu0 0
        %2111 = vmatpush2.bf16.msra.mxu0 0
        %2112 = vmatprep.subr.bf16.mxu0 0
        %2113 = vmatpush2.bf16.msra.mxu0 0
        %2114 = vmatprep.subr.bf16.mxu0 0
        %2115 = vmatpush2.bf16.msra.mxu0 0
        %2116 = vmatprep.subr.bf16.mxu0 0
        %2117 = vmatpush2.bf16.msra.mxu0 0
        %2118 = vmatprep.subr.bf16.mxu0 0
        %2119 = vmatpush2.bf16.msra.mxu0 0
        %2120 = vmatprep.subr.bf16.mxu0 0
        %2121 = vmatpush2.bf16.msra.mxu0 0
        %2122 = vmatprep.subr.bf16.mxu0 0
        %2123 = vmatpush2.bf16.msra.mxu0 0
        %2124 = vmatprep.mubr.bf16.mxu0 0
        %2125 = vmatmul.mubr.bf16.gmra.mxu0 %v2087
        %v2126 = vpop.f32.mrf.mxu0
        %v2127 = vadd.f32 0.0, %v2126
        %v2128 = vpop.f32.mrf.mxu0
        %v2129 = vpop.f32.mrf.mxu0
        %v2130 = vpop.f32.mrf.mxu0
        %2131 = vdwg.mxu0
        %v2132 = vadd.f32 %v1907, %v2127
        %v2133 = vadd.f32 %v1188, %v2132
        %v2134 = vld [vmem:[%s9] sm:$0x1]
        %v2136 = vlaneseq
        %v2137 = vshrl.u32 %v2136, 7
        %v2138 = vsub.s32 0, %v2137
        %v2139 = vrot.slane %v2134, %v2138
        %v2141 = vadd.f32 %v2133, %v2139
        %v2142 = vld [vmem:[%s16] sm:$0x1]
        %v2143 = vld [vmem:[%s17] sm:$0x1]
        %v2144 = vsel %vm1189, %v2141, 0.0
        %2145 = vadd.xlane.f32.xlu0 %v2144
        %v2146 = vpop.xlane.xlu0 %2145
        %v2147 = vmul.f32 %v2146, %v1193
        %v2148 = vsub.f32 %v2141, %v2147
        %v2149 = vmul.f32 %v2148, %v2148
        %v2150 = vsel %vm1189, %v2149, 0.0
        %2151 = vadd.xlane.f32.xlu0 %v2150
        %v2152 = vpop.xlane.xlu0 %2151
        %v2153 = vmul.f32 %v2152, 0.032258064
        %v2154 = vrsqrt.pop %v2153
        %v2155 = vmul.f32 %v2153, %v2154
        %vm2156 = vcmp.eq.f32.partialorder %v2153, inf
        %v2157 = vsel %vm2156, %v2153, %v2155
        %vm2158 = vcmp.eq.f32.partialorder %v2153, 0.0
        %v2159 = vand.u32 %v2153, 2147483648
        %v2160 = vsel %vm2158, %v2159, %v2157
        %v2161 = vadd.f32 %v2160, 1e-06
        %v2162 = vrcp.pop %v2161
        %v2164 = vlaneseq
        %v2165 = vshrl.u32 %v2164, 7
        %v2166 = vsub.s32 0, %v2165
        %v2167 = vrot.slane %v2142, %v2166
        %v2169 = vmul.f32 %v2167, %v2148
        %v2170 = vmul.f32 %v2169, %v2162
        %v2172 = vlaneseq
        %v2173 = vshrl.u32 %v2172, 7
        %v2174 = vsub.s32 0, %v2173
        %v2175 = vrot.slane %v2143, %v2174
        %v2177 = vadd.f32 %v2170, %v2175
        %v2178 = vpack.c.bf16 %v2177, %v2177
        %v2179 = vld [vmem:[%s12] sm:$0xf]
        %v2180 = vld [vmem:[%s12 + $0x4] sm:$0xf]
        %v2181 = vld [vmem:[%s12 + $0x8] sm:$0xf]
        %v2182 = vld [vmem:[%s12 + $0xc] sm:$0xf]
        %v2183 = vld [vmem:[%s13] sm:$0x1]
        %v2185 = vlaneseq
        %v2186 = vshrl.u32 %v2185, 7
        %v2187 = vsub.s32 0, %v2186
        %v2188 = vrot.slane %v2183, %v2187
        %v2194 = vunpack.c.l.b16 %v2179
        %v2195 = vunpack.c.l.b16 %v2180
        %v2196 = vunpack.c.l.b16 %v2181
        %v2197 = vunpack.c.l.b16 %v2182
        %v2198 = vpack.c.b16 %v2195, %v2194
        %v2199 = vpack.c.b16 %v2197, %v2196
        %v2203 = vsel %vm1189, %v2178, 0
        %2205 = vmatprep.subr.bf16.mxu0 0
        %2206 = vmatpush1.bf16.msra.mxu0 0
        %2207 = vmatprep.subr.bf16.mxu0 0
        %2208 = vmatpush1.bf16.msra.mxu0 0
        %2209 = vmatprep.subr.bf16.mxu0 0
        %2210 = vmatpush1.bf16.msra.mxu0 0
        %2211 = vmatprep.subr.bf16.mxu0 0
        %2212 = vmatpush1.bf16.msra.mxu0 0
        %2213 = vmatprep.subr.bf16.mxu0 0
        %2214 = vmatpush1.bf16.msra.mxu0 0
        %2215 = vmatprep.subr.bf16.mxu0 0
        %2216 = vmatpush1.bf16.msra.mxu0 0
        %2217 = vmatprep.subr.bf16.mxu0 0
        %2218 = vmatpush1.bf16.msra.mxu0 %v2199
        %2219 = vmatprep.subr.bf16.mxu0 0
        %2220 = vmatpush1.bf16.msra.mxu0 %v2198
        %2221 = vmatprep.subr.bf16.mxu0 0
        %2222 = vmatpush2.bf16.msra.mxu0 0
        %2223 = vmatprep.subr.bf16.mxu0 0
        %2224 = vmatpush2.bf16.msra.mxu0 0
        %2225 = vmatprep.subr.bf16.mxu0 0
        %2226 = vmatpush2.bf16.msra.mxu0 0
        %2227 = vmatprep.subr.bf16.mxu0 0
        %2228 = vmatpush2.bf16.msra.mxu0 0
        %2229 = vmatprep.subr.bf16.mxu0 0
        %2230 = vmatpush2.bf16.msra.mxu0 0
        %2231 = vmatprep.subr.bf16.mxu0 0
        %2232 = vmatpush2.bf16.msra.mxu0 0
        %2233 = vmatprep.subr.bf16.mxu0 0
        %2234 = vmatpush2.bf16.msra.mxu0 0
        %2235 = vmatprep.subr.bf16.mxu0 0
        %2236 = vmatpush2.bf16.msra.mxu0 0
        %2237 = vmatprep.mubr.bf16.mxu0 0
        %2238 = vmatmul.mubr.bf16.gmra.mxu0 %v2203
        %v2239 = vpop.f32.mrf.mxu0
        %v2240 = vadd.f32 %v2188, %v2239
        %v2241 = vpop.f32.mrf.mxu0
        %v2242 = vpop.f32.mrf.mxu0
        %v2243 = vpop.f32.mrf.mxu0
        %2244 = vdwg.mxu0
        %v2245 = vmax.f32 %v2240, 0.0
        %v2246 = vpack.c.bf16 %v2245, %v2245
        %v2247 = vld [vmem:[%s14] sm:$0xf]
        %v2248 = vld [vmem:[%s14 + $0x4] sm:$0xf]
        %v2249 = vld [vmem:[%s14 + $0x8] sm:$0xf]
        %v2250 = vld [vmem:[%s14 + $0xc] sm:$0xf]
        %v2251 = vld [vmem:[%s14 + $0x10] sm:$0xf]
        %v2252 = vld [vmem:[%s14 + $0x14] sm:$0xf]
        %v2253 = vld [vmem:[%s14 + $0x18] sm:$0xf]
        %v2254 = vld [vmem:[%s14 + $0x1c] sm:$0xf]
        %v2255 = vld [vmem:[%s15] sm:$0x1]
        %v2257 = vlaneseq
        %v2258 = vshrl.u32 %v2257, 7
        %v2259 = vsub.s32 0, %v2258
        %v2260 = vrot.slane %v2255, %v2259
        %v2270 = vunpack.c.l.b16 %v2247
        %v2271 = vunpack.c.l.b16 %v2248
        %v2272 = vunpack.c.l.b16 %v2249
        %v2273 = vunpack.c.l.b16 %v2250
        %v2274 = vunpack.c.l.b16 %v2251
        %v2275 = vunpack.c.l.b16 %v2252
        %v2276 = vunpack.c.l.b16 %v2253
        %v2277 = vunpack.c.l.b16 %v2254
        %v2278 = vpack.c.b16 %v2271, %v2270
        %v2279 = vpack.c.b16 %v2273, %v2272
        %v2280 = vpack.c.b16 %v2275, %v2274
        %v2281 = vpack.c.b16 %v2277, %v2276
        %vm2286 = vcmask 523264
        %v2288 = vsel %vm2286, %v2246, 0
        %2290 = vmatprep.subr.bf16.mxu0 0
        %2291 = vmatpush1.bf16.msra.mxu0 0
        %2292 = vmatprep.subr.bf16.mxu0 0
        %2293 = vmatpush1.bf16.msra.mxu0 0
        %2294 = vmatprep.subr.bf16.mxu0 0
        %2295 = vmatpush1.bf16.msra.mxu0 0
        %2296 = vmatprep.subr.bf16.mxu0 0
        %2297 = vmatpush1.bf16.msra.mxu0 0
        %2298 = vmatprep.subr.bf16.mxu0 0
        %2299 = vmatpush1.bf16.msra.mxu0 %v2281
        %2300 = vmatprep.subr.bf16.mxu0 0
        %2301 = vmatpush1.bf16.msra.mxu0 %v2280
        %2302 = vmatprep.subr.bf16.mxu0 0
        %2303 = vmatpush1.bf16.msra.mxu0 %v2279
        %2304 = vmatprep.subr.bf16.mxu0 0
        %2305 = vmatpush1.bf16.msra.mxu0 %v2278
        %2306 = vmatprep.subr.bf16.mxu0 0
        %2307 = vmatpush2.bf16.msra.mxu0 0
        %2308 = vmatprep.subr.bf16.mxu0 0
        %2309 = vmatpush2.bf16.msra.mxu0 0
        %2310 = vmatprep.subr.bf16.mxu0 0
        %2311 = vmatpush2.bf16.msra.mxu0 0
        %2312 = vmatprep.subr.bf16.mxu0 0
        %2313 = vmatpush2.bf16.msra.mxu0 0
        %2314 = vmatprep.subr.bf16.mxu0 0
        %2315 = vmatpush2.bf16.msra.mxu0 0
        %2316 = vmatprep.subr.bf16.mxu0 0
        %2317 = vmatpush2.bf16.msra.mxu0 0
        %2318 = vmatprep.subr.bf16.mxu0 0
        %2319 = vmatpush2.bf16.msra.mxu0 0
        %2320 = vmatprep.subr.bf16.mxu0 0
        %2321 = vmatpush2.bf16.msra.mxu0 0
        %2322 = vmatprep.mubr.bf16.mxu0 0
        %2323 = vmatmul.mubr.bf16.gmra.mxu0 %v2288
        %v2324 = vpop.f32.mrf.mxu0
        %v2325 = vadd.f32 %v2260, %v2324
        %v2326 = vpop.f32.mrf.mxu0
        %v2327 = vpop.f32.mrf.mxu0
        %v2328 = vpop.f32.mrf.mxu0
        %2329 = vdwg.mxu0
        %v2330 = vadd.f32 %v2141, %v2325
        %2331 = vst.msk [vmem:[%s591] sm:$0xff] %vm1189, %v2330
        %s2332 = sand.u32 %s442, 1
        %s2333 = scalar_lea.sflag [#allocation5], %s2332
        %s2334 = sand.u32 %s442, 1
        %s2335 = smul.addr %s2334, 8
        %s2336 = scalar_lea.vmem [#allocation4], %s2335
        // Predicated region
        $region97: #{tpu_custom_call.1} parent=91 // pred_check
          %p2337 = pneg %p452
        $region98: #{tpu_custom_call.1} parent=91 // pred_check_branch
          %2339 = sbr.rel (%p2337) target = $region100
        $region99: #{tpu_custom_call.1} parent=91 // pred_region
          %s2341 = ssub.s32 128, 128
          %2342 = vsyncadd %s2333, %s2341
          %s2343 = sadd.s32 %s37, %s36
          %s2344 = smul.addr %s2343, 128
          %s2345 = scalar_lea.hbm %s18, %s2344
          %s2347 = sshll.u32 %s2336, 4
          %s2348 = int_to_ptr.vmem [resolvable:$true] %s2347
          %2350 = dma.vmem_to_hbm [thread:$0]  %s2348, 128, %s2345, %s2333
        $region100: #{tpu_custom_call.1} parent=91 // pred_fallthru
          _
      $region92: #{tpu_custom_call.1} parent=5 // pred_fallthru
        _
      %p2351 = scmp.le.s32.totalorder 2, %s27
      // Predicated region
      $region101: #{tpu_custom_call.1} parent=5 // pred_check
        %p2352 = pneg %p2351
      $region102: #{tpu_custom_call.1} parent=5 // pred_check_branch
        %2354 = sbr.rel (%p2352) target = $region104
      $region103: #{tpu_custom_call.1} parent=5 // pred_region
        %s2355 = ssub.s32 %s27, 2
        // Predicated region
        $region105: #{tpu_custom_call.1} parent=103 // pred_check
          %p2356 = pneg %p458
        $region106: #{tpu_custom_call.1} parent=103 // pred_check_branch
          %2358 = sbr.rel (%p2356) target = $region108
        $region107: #{tpu_custom_call.1} parent=103 // pred_region
          %s2359 = sand.u32 %s443, 1
          %s2360 = scalar_lea.sflag [#allocation5], %s2359
          %s2361 = sand.u32 %s443, 1
          %s2362 = smul.addr %s2361, 8
          %s2363 = scalar_lea.vmem [#allocation4], %s2362
          %2364 = dma.done %s2360, 128
        $region108: #{tpu_custom_call.1} parent=103 // pred_fallthru
          _
      $region104: #{tpu_custom_call.1} parent=5 // pred_fallthru
        _
    $region6: #{tpu_custom_call.1} parent=1 // loop_footer
      %s31 = sadd.s32 1, %s27
    $region7: #{tpu_custom_call.1} parent=1 // loop_footer_branch
      %26 = sbr.rel target = $region3
    $region8: #{tpu_custom_call.1} parent=1 // loop_exit
      _
    %2365 = vsyncpa [#allocation5], 1
    %s2366 = scalar_lea.sflag [#allocation5], 1
    %2367 = vsyncpa %s2366, 1

</llo_original>
